<compile_context>
chip_gen: v6e
topology: v6e:2x2x1
jax: 0.10.0
libtpu: 0.0.40
codegen_flags: <defaults>
</compile_context>

<pallas_src>
import functools

import jax
import jax.numpy as jnp
from jax.experimental import pallas as pl
from jax.experimental.pallas import tpu as pltpu


def _gru_kernel(gx_ref, whh_ref, bhh_ref, out_ref, *, seq_len, num_dir,
                batch_size, hidden_size):
    """Fused (bi)directional GRU recurrence, single kernel invocation.

    gx_ref : (D, T, 3, B, H)  precomputed input projection, gate-major (r,z,n)
    whh_ref: (D, 3, H, H)     recurrent weights, pre-transposed: gh = h @ W
    bhh_ref: (D, 3, 1, H)     recurrent biases
    out_ref: (D, T, B, H)     per-direction hidden states (original time order)
    """
    B, H = batch_size, hidden_size
    # Hidden state carried in vregs; nn.GRU default initial state is zeros.
    h = [jnp.zeros((B, H), jnp.float32) for _ in range(num_dir)]

    # Fully static unroll over time (T is small here).  Forward direction
    # reads/writes time t; backward direction reads/writes time T-1-t, which
    # removes any wrapper-side reversals.
    for t in range(seq_len):
        for d in range(num_dir):
            td = t if d == 0 else seq_len - 1 - t

            # Gate-major static loads: no lane-axis slicing at H boundaries.
            gx_r = gx_ref[d, td, 0]
            gx_z = gx_ref[d, td, 1]
            gx_n = gx_ref[d, td, 2]

            gh_r = jnp.dot(h[d], whh_ref[d, 0],
                           preferred_element_type=jnp.float32) + bhh_ref[d, 0]
            gh_z = jnp.dot(h[d], whh_ref[d, 1],
                           preferred_element_type=jnp.float32) + bhh_ref[d, 1]
            gh_n = jnp.dot(h[d], whh_ref[d, 2],
                           preferred_element_type=jnp.float32) + bhh_ref[d, 2]

            # PyTorch GRU gate order/equations: r, z, n.
            r = jax.nn.sigmoid(gx_r + gh_r)
            z = jax.nn.sigmoid(gx_z + gh_z)
            n = jnp.tanh(gx_n + r * gh_n)
            h[d] = (1.0 - z) * n + z * h[d]

            out_ref[d, td] = h[d].astype(out_ref.dtype)


def init_block_rnn_params(key, in_size, hidden_size, bidirectional):
    """Params matching nn.GRU layout: uniform(-1/sqrt(H), 1/sqrt(H))."""
    H = hidden_size
    bound = 1.0 / jnp.sqrt(jnp.float32(H))
    num_dir = 2 if bidirectional else 1
    params = []
    for _ in range(num_dir):
        key, k1, k2, k3, k4 = jax.random.split(key, 5)
        params.append(dict(
            w_ih=jax.random.uniform(k1, (3 * H, in_size), jnp.float32, -bound, bound),
            w_hh=jax.random.uniform(k2, (3 * H, H), jnp.float32, -bound, bound),
            b_ih=jax.random.uniform(k3, (3 * H,), jnp.float32, -bound, bound),
            b_hh=jax.random.uniform(k4, (3 * H,), jnp.float32, -bound, bound),
        ))
    return params


def block_rnn_forward(batch, params, hidden_size, bidirectional, add=False):
    """Forward pass of blockRNN.

    batch: (seq_len, batch_size, in_size)   (time-major, PyTorch default)
    returns: (seq_len, batch_size, D*hidden), or the two feature halves summed
             when add=True (exactly as the PyTorch module does).
    """
    T, B, I = batch.shape
    H = hidden_size
    D = 2 if bidirectional else 1

    x = batch.astype(jnp.float32)  # dropout == identity (eval mode)

    w_ih = jnp.stack([p["w_ih"] for p in params]).astype(jnp.float32)  # (D,3H,I)
    b_ih = jnp.stack([p["b_ih"] for p in params]).astype(jnp.float32)  # (D,3H)
    w_hh = jnp.stack([p["w_hh"] for p in params]).astype(jnp.float32)  # (D,3H,H)
    b_hh = jnp.stack([p["b_hh"] for p in params]).astype(jnp.float32)  # (D,3H)

    # (1) Hoisted input projection: one batched matmul over all timesteps and
    #     directions (it has no time dependence), gate-major result.
    w_ih_g = w_ih.reshape(D, 3, H, I)
    gx = jnp.einsum("tbi,dghi->dtgbh", x, w_ih_g,
                    preferred_element_type=jnp.float32)
    gx = gx + b_ih.reshape(D, 1, 3, 1, H)                 # (D, T, 3, B, H)

    # (2) Pre-transpose recurrent weights once: gh_g = h @ w_hh_g[d, g].
    w_hh_g = jnp.transpose(w_hh.reshape(D, 3, H, H), (0, 1, 3, 2))  # (D,3,H,H)
    b_hh_g = b_hh.reshape(D, 3, 1, H)

    kernel = functools.partial(_gru_kernel, seq_len=T, num_dir=D,
                               batch_size=B, hidden_size=H)

    out = pl.pallas_call(
        kernel,
        out_shape=jax.ShapeDtypeStruct((D, T, B, H), jnp.float32),
        in_specs=[pl.BlockSpec(memory_space=pltpu.MemorySpace.VMEM)] * 3,
        out_specs=pl.BlockSpec(memory_space=pltpu.MemorySpace.VMEM),
    )(gx, w_hh_g, b_hh_g)                                  # (D, T, B, H)

    if add:
        if bidirectional:
            # == outputs[:, :, :H] + outputs[:, :, H:] with fwd features first.
            return out[0] + out[1]
        # Replicates the PyTorch module literally (it splits the feature dim
        # in half unconditionally).
        outputs = jnp.transpose(out, (1, 2, 0, 3)).reshape(T, B, D * H)
        half = (D * H) // 2
        return outputs[:, :, :half] + outputs[:, :, half:]

    # (D, T, B, H) -> (T, B, D*H), forward features first (nn.GRU layout).
    return jnp.transpose(out, (1, 2, 0, 3)).reshape(T, B, D * H)


def _gru_reference(x, params, hidden_size, bidirectional):
    """Pure-JAX reference GRU (PyTorch semantics) for correctness checking."""
    T, B, _ = x.shape
    H = hidden_size

    def run(p, xs):
        def step(h, xt):
            gxr = xt @ p["w_ih"].T + p["b_ih"]
            ghr = h @ p["w_hh"].T + p["b_hh"]
            r = jax.nn.sigmoid(gxr[:, :H] + ghr[:, :H])
            z = jax.nn.sigmoid(gxr[:, H:2 * H] + ghr[:, H:2 * H])
            n = jnp.tanh(gxr[:, 2 * H:] + r * ghr[:, 2 * H:])
            h = (1.0 - z) * n + z * h
            return h, h

        h0 = jnp.zeros((B, H), jnp.float32)
        _, ys = jax.lax.scan(step, h0, xs)
        return ys

    out = run(params[0], x)
    if bidirectional:
        out_b = run(params[1], x[::-1])[::-1]
        out = jnp.concatenate([out, out_b], axis=-1)
    return out


if __name__ == "__main__":
    seq_len, batch_size, in_size, hidden_size = 8, 2, 16, 32
    bidirectional = True

    key = jax.random.PRNGKey(0)
    key_x, key_p = jax.random.split(key)
    x = jax.random.normal(key_x, (seq_len, batch_size, in_size), jnp.float32)
    params = init_block_rnn_params(key_p, in_size, hidden_size, bidirectional)

    out = block_rnn_forward(x, params, hidden_size, bidirectional, add=False)
    out = jax.block_until_ready(out)
    assert out.shape == (seq_len, batch_size, 2 * hidden_size), out.shape

    ref = jax.block_until_ready(_gru_reference(x, params, hidden_size, True))
    assert jnp.allclose(out, ref, atol=1e-4, rtol=1e-4), "mismatch vs reference"

    # add=True branch (sums fwd/bwd halves).
    out_add = jax.block_until_ready(
        block_rnn_forward(x, params, hidden_size, bidirectional, add=True))
    assert out_add.shape == (seq_len, batch_size, hidden_size), out_add.shape
    assert jnp.allclose(out_add, ref[:, :, :hidden_size] + ref[:, :, hidden_size:],
                        atol=1e-4, rtol=1e-4)

    # Unidirectional path.
    params_uni = init_block_rnn_params(key_p, in_size, hidden_size, False)
    out_uni = jax.block_until_ready(
        block_rnn_forward(x, params_uni, hidden_size, False, add=False))
    assert out_uni.shape == (seq_len, batch_size, hidden_size), out_uni.shape
    ref_uni = _gru_reference(x, params_uni, hidden_size, False)
    assert jnp.allclose(out_uni, ref_uni, atol=1e-4, rtol=1e-4)

    print("KERNEL_OK")
</pallas_src>

<mosaic_0001>
module attributes {stable_mosaic.version = 11 : i64} {
  func.func @_gru_kernel(%arg0: memref<2x8x3x2x32xf32, #tpu.memory_space<vmem>>, %arg1: memref<2x3x32x32xf32, #tpu.memory_space<vmem>>, %arg2: memref<2x3x1x32xf32, #tpu.memory_space<vmem>>, %arg3: memref<2x8x2x32xf32, #tpu.memory_space<vmem>>) attributes {dimension_semantics = [], scalar_prefetch = 0 : i64, scratch_operands = 0 : i64, tpu.core_type = #tpu.core_type<tc>} {
    %cst = arith.constant 0.000000e+00 : f32
    %0 = vector.broadcast %cst : f32 to vector<2x32xf32>
    %cst_0 = arith.constant 0.000000e+00 : f32
    %1 = vector.broadcast %cst_0 : f32 to vector<2x32xf32>
    %c0 = arith.constant 0 : index
    %c0_1 = arith.constant 0 : index
    %c0_2 = arith.constant 0 : index
    %c0_3 = arith.constant 0 : index
    %c0_4 = arith.constant 0 : index
    %2 = vector.load %arg0[%c0, %c0_1, %c0_2, %c0_3, %c0_4] : memref<2x8x3x2x32xf32, #tpu.memory_space<vmem>>, vector<1x1x1x2x32xf32>
    %3 = vector.shape_cast %2 : vector<1x1x1x2x32xf32> to vector<2x32xf32>
    %c0_5 = arith.constant 0 : index
    %c0_6 = arith.constant 0 : index
    %c1 = arith.constant 1 : index
    %c0_7 = arith.constant 0 : index
    %c0_8 = arith.constant 0 : index
    %4 = vector.load %arg0[%c0_5, %c0_6, %c1, %c0_7, %c0_8] : memref<2x8x3x2x32xf32, #tpu.memory_space<vmem>>, vector<1x1x1x2x32xf32>
    %5 = vector.shape_cast %4 : vector<1x1x1x2x32xf32> to vector<2x32xf32>
    %c0_9 = arith.constant 0 : index
    %c0_10 = arith.constant 0 : index
    %c2 = arith.constant 2 : index
    %c0_11 = arith.constant 0 : index
    %c0_12 = arith.constant 0 : index
    %6 = vector.load %arg0[%c0_9, %c0_10, %c2, %c0_11, %c0_12] : memref<2x8x3x2x32xf32, #tpu.memory_space<vmem>>, vector<1x1x1x2x32xf32>
    %7 = vector.shape_cast %6 : vector<1x1x1x2x32xf32> to vector<2x32xf32>
    %c0_13 = arith.constant 0 : index
    %c0_14 = arith.constant 0 : index
    %c0_15 = arith.constant 0 : index
    %c0_16 = arith.constant 0 : index
    %8 = vector.load %arg1[%c0_13, %c0_14, %c0_15, %c0_16] : memref<2x3x32x32xf32, #tpu.memory_space<vmem>>, vector<1x1x32x32xf32>
    %9 = vector.shape_cast %8 : vector<1x1x32x32xf32> to vector<32x32xf32>
    %cst_17 = arith.constant dense<0.000000e+00> : vector<2x32xf32>
    %10 = tpu.matmul %0, %9, %cst_17 {dimension_numbers = #tpu.dot_dimension_numbers<[1], [0], [0], [1], [0, 0, 1, 1], [], []>} : vector<2x32xf32>, vector<32x32xf32>, vector<2x32xf32> -> vector<2x32xf32>
    %c0_18 = arith.constant 0 : index
    %c0_19 = arith.constant 0 : index
    %c0_20 = arith.constant 0 : index
    %c0_21 = arith.constant 0 : index
    %11 = vector.load %arg2[%c0_18, %c0_19, %c0_20, %c0_21] : memref<2x3x1x32xf32, #tpu.memory_space<vmem>>, vector<1x1x1x32xf32>
    %12 = vector.shape_cast %11 : vector<1x1x1x32xf32> to vector<1x32xf32>
    %13 = vector.broadcast %12 : vector<1x32xf32> to vector<2x32xf32>
    %14 = arith.addf %10, %13 : vector<2x32xf32>
    %c0_22 = arith.constant 0 : index
    %c1_23 = arith.constant 1 : index
    %c0_24 = arith.constant 0 : index
    %c0_25 = arith.constant 0 : index
    %15 = vector.load %arg1[%c0_22, %c1_23, %c0_24, %c0_25] : memref<2x3x32x32xf32, #tpu.memory_space<vmem>>, vector<1x1x32x32xf32>
    %16 = vector.shape_cast %15 : vector<1x1x32x32xf32> to vector<32x32xf32>
    %cst_26 = arith.constant dense<0.000000e+00> : vector<2x32xf32>
    %17 = tpu.matmul %0, %16, %cst_26 {dimension_numbers = #tpu.dot_dimension_numbers<[1], [0], [0], [1], [0, 0, 1, 1], [], []>} : vector<2x32xf32>, vector<32x32xf32>, vector<2x32xf32> -> vector<2x32xf32>
    %c0_27 = arith.constant 0 : index
    %c1_28 = arith.constant 1 : index
    %c0_29 = arith.constant 0 : index
    %c0_30 = arith.constant 0 : index
    %18 = vector.load %arg2[%c0_27, %c1_28, %c0_29, %c0_30] : memref<2x3x1x32xf32, #tpu.memory_space<vmem>>, vector<1x1x1x32xf32>
    %19 = vector.shape_cast %18 : vector<1x1x1x32xf32> to vector<1x32xf32>
    %20 = vector.broadcast %19 : vector<1x32xf32> to vector<2x32xf32>
    %21 = arith.addf %17, %20 : vector<2x32xf32>
    %c0_31 = arith.constant 0 : index
    %c2_32 = arith.constant 2 : index
    %c0_33 = arith.constant 0 : index
    %c0_34 = arith.constant 0 : index
    %22 = vector.load %arg1[%c0_31, %c2_32, %c0_33, %c0_34] : memref<2x3x32x32xf32, #tpu.memory_space<vmem>>, vector<1x1x32x32xf32>
    %23 = vector.shape_cast %22 : vector<1x1x32x32xf32> to vector<32x32xf32>
    %cst_35 = arith.constant dense<0.000000e+00> : vector<2x32xf32>
    %24 = tpu.matmul %0, %23, %cst_35 {dimension_numbers = #tpu.dot_dimension_numbers<[1], [0], [0], [1], [0, 0, 1, 1], [], []>} : vector<2x32xf32>, vector<32x32xf32>, vector<2x32xf32> -> vector<2x32xf32>
    %c0_36 = arith.constant 0 : index
    %c2_37 = arith.constant 2 : index
    %c0_38 = arith.constant 0 : index
    %c0_39 = arith.constant 0 : index
    %25 = vector.load %arg2[%c0_36, %c2_37, %c0_38, %c0_39] : memref<2x3x1x32xf32, #tpu.memory_space<vmem>>, vector<1x1x1x32xf32>
    %26 = vector.shape_cast %25 : vector<1x1x1x32xf32> to vector<1x32xf32>
    %27 = vector.broadcast %26 : vector<1x32xf32> to vector<2x32xf32>
    %28 = arith.addf %24, %27 : vector<2x32xf32>
    %29 = arith.addf %3, %14 : vector<2x32xf32>
    %30 = arith.negf %29 : vector<2x32xf32>
    %31 = math.exp %30 : vector<2x32xf32>
    %cst_40 = arith.constant 1.000000e+00 : f32
    %32 = vector.broadcast %cst_40 : f32 to vector<2x32xf32>
    %33 = arith.addf %32, %31 : vector<2x32xf32>
    %34 = arith.divf %32, %33 : vector<2x32xf32>
    %35 = arith.addf %5, %21 : vector<2x32xf32>
    %36 = arith.negf %35 : vector<2x32xf32>
    %37 = math.exp %36 : vector<2x32xf32>
    %cst_41 = arith.constant 1.000000e+00 : f32
    %38 = vector.broadcast %cst_41 : f32 to vector<2x32xf32>
    %39 = arith.addf %38, %37 : vector<2x32xf32>
    %40 = arith.divf %38, %39 : vector<2x32xf32>
    %41 = arith.mulf %34, %28 : vector<2x32xf32>
    %42 = arith.addf %7, %41 : vector<2x32xf32>
    %43 = math.tanh %42 : vector<2x32xf32>
    %cst_42 = arith.constant 1.000000e+00 : f32
    %44 = vector.broadcast %cst_42 : f32 to vector<2x32xf32>
    %45 = arith.subf %44, %40 : vector<2x32xf32>
    %46 = arith.mulf %45, %43 : vector<2x32xf32>
    %47 = arith.mulf %40, %0 : vector<2x32xf32>
    %48 = arith.addf %46, %47 : vector<2x32xf32>
    %c0_43 = arith.constant 0 : index
    %c0_44 = arith.constant 0 : index
    %c0_45 = arith.constant 0 : index
    %c0_46 = arith.constant 0 : index
    %49 = vector.load %arg3[%c0_43, %c0_44, %c0_45, %c0_46] : memref<2x8x2x32xf32, #tpu.memory_space<vmem>>, vector<1x1x2x32xf32>
    %50 = vector.shape_cast %49 : vector<1x1x2x32xf32> to vector<2x32xf32>
    %51 = vector.shape_cast %48 : vector<2x32xf32> to vector<1x1x2x32xf32>
    tpu.vector_store %arg3[%c0_43, %c0_44, %c0_45, %c0_46], %51 {strides = array<i32>} : memref<2x8x2x32xf32, #tpu.memory_space<vmem>>, vector<1x1x2x32xf32>,
    %c1_47 = arith.constant 1 : index
    %c7 = arith.constant 7 : index
    %c0_48 = arith.constant 0 : index
    %c0_49 = arith.constant 0 : index
    %c0_50 = arith.constant 0 : index
    %52 = vector.load %arg0[%c1_47, %c7, %c0_48, %c0_49, %c0_50] : memref<2x8x3x2x32xf32, #tpu.memory_space<vmem>>, vector<1x1x1x2x32xf32>
    %53 = vector.shape_cast %52 : vector<1x1x1x2x32xf32> to vector<2x32xf32>
    %c1_51 = arith.constant 1 : index
    %c7_52 = arith.constant 7 : index
    %c1_53 = arith.constant 1 : index
    %c0_54 = arith.constant 0 : index
    %c0_55 = arith.constant 0 : index
    %54 = vector.load %arg0[%c1_51, %c7_52, %c1_53, %c0_54, %c0_55] : memref<2x8x3x2x32xf32, #tpu.memory_space<vmem>>, vector<1x1x1x2x32xf32>
    %55 = vector.shape_cast %54 : vector<1x1x1x2x32xf32> to vector<2x32xf32>
    %c1_56 = arith.constant 1 : index
    %c7_57 = arith.constant 7 : index
    %c2_58 = arith.constant 2 : index
    %c0_59 = arith.constant 0 : index
    %c0_60 = arith.constant 0 : index
    %56 = vector.load %arg0[%c1_56, %c7_57, %c2_58, %c0_59, %c0_60] : memref<2x8x3x2x32xf32, #tpu.memory_space<vmem>>, vector<1x1x1x2x32xf32>
    %57 = vector.shape_cast %56 : vector<1x1x1x2x32xf32> to vector<2x32xf32>
    %c1_61 = arith.constant 1 : index
    %c0_62 = arith.constant 0 : index
    %c0_63 = arith.constant 0 : index
    %c0_64 = arith.constant 0 : index
    %58 = vector.load %arg1[%c1_61, %c0_62, %c0_63, %c0_64] : memref<2x3x32x32xf32, #tpu.memory_space<vmem>>, vector<1x1x32x32xf32>
    %59 = vector.shape_cast %58 : vector<1x1x32x32xf32> to vector<32x32xf32>
    %cst_65 = arith.constant dense<0.000000e+00> : vector<2x32xf32>
    %60 = tpu.matmul %1, %59, %cst_65 {dimension_numbers = #tpu.dot_dimension_numbers<[1], [0], [0], [1], [0, 0, 1, 1], [], []>} : vector<2x32xf32>, vector<32x32xf32>, vector<2x32xf32> -> vector<2x32xf32>
    %c1_66 = arith.constant 1 : index
    %c0_67 = arith.constant 0 : index
    %c0_68 = arith.constant 0 : index
    %c0_69 = arith.constant 0 : index
    %61 = vector.load %arg2[%c1_66, %c0_67, %c0_68, %c0_69] : memref<2x3x1x32xf32, #tpu.memory_space<vmem>>, vector<1x1x1x32xf32>
    %62 = vector.shape_cast %61 : vector<1x1x1x32xf32> to vector<1x32xf32>
    %63 = vector.broadcast %62 : vector<1x32xf32> to vector<2x32xf32>
    %64 = arith.addf %60, %63 : vector<2x32xf32>
    %c1_70 = arith.constant 1 : index
    %c1_71 = arith.constant 1 : index
    %c0_72 = arith.constant 0 : index
    %c0_73 = arith.constant 0 : index
    %65 = vector.load %arg1[%c1_70, %c1_71, %c0_72, %c0_73] : memref<2x3x32x32xf32, #tpu.memory_space<vmem>>, vector<1x1x32x32xf32>
    %66 = vector.shape_cast %65 : vector<1x1x32x32xf32> to vector<32x32xf32>
    %cst_74 = arith.constant dense<0.000000e+00> : vector<2x32xf32>
    %67 = tpu.matmul %1, %66, %cst_74 {dimension_numbers = #tpu.dot_dimension_numbers<[1], [0], [0], [1], [0, 0, 1, 1], [], []>} : vector<2x32xf32>, vector<32x32xf32>, vector<2x32xf32> -> vector<2x32xf32>
    %c1_75 = arith.constant 1 : index
    %c1_76 = arith.constant 1 : index
    %c0_77 = arith.constant 0 : index
    %c0_78 = arith.constant 0 : index
    %68 = vector.load %arg2[%c1_75, %c1_76, %c0_77, %c0_78] : memref<2x3x1x32xf32, #tpu.memory_space<vmem>>, vector<1x1x1x32xf32>
    %69 = vector.shape_cast %68 : vector<1x1x1x32xf32> to vector<1x32xf32>
    %70 = vector.broadcast %69 : vector<1x32xf32> to vector<2x32xf32>
    %71 = arith.addf %67, %70 : vector<2x32xf32>
    %c1_79 = arith.constant 1 : index
    %c2_80 = arith.constant 2 : index
    %c0_81 = arith.constant 0 : index
    %c0_82 = arith.constant 0 : index
    %72 = vector.load %arg1[%c1_79, %c2_80, %c0_81, %c0_82] : memref<2x3x32x32xf32, #tpu.memory_space<vmem>>, vector<1x1x32x32xf32>
    %73 = vector.shape_cast %72 : vector<1x1x32x32xf32> to vector<32x32xf32>
    %cst_83 = arith.constant dense<0.000000e+00> : vector<2x32xf32>
    %74 = tpu.matmul %1, %73, %cst_83 {dimension_numbers = #tpu.dot_dimension_numbers<[1], [0], [0], [1], [0, 0, 1, 1], [], []>} : vector<2x32xf32>, vector<32x32xf32>, vector<2x32xf32> -> vector<2x32xf32>
    %c1_84 = arith.constant 1 : index
    %c2_85 = arith.constant 2 : index
    %c0_86 = arith.constant 0 : index
    %c0_87 = arith.constant 0 : index
    %75 = vector.load %arg2[%c1_84, %c2_85, %c0_86, %c0_87] : memref<2x3x1x32xf32, #tpu.memory_space<vmem>>, vector<1x1x1x32xf32>
    %76 = vector.shape_cast %75 : vector<1x1x1x32xf32> to vector<1x32xf32>
    %77 = vector.broadcast %76 : vector<1x32xf32> to vector<2x32xf32>
    %78 = arith.addf %74, %77 : vector<2x32xf32>
    %79 = arith.addf %53, %64 : vector<2x32xf32>
    %80 = arith.negf %79 : vector<2x32xf32>
    %81 = math.exp %80 : vector<2x32xf32>
    %cst_88 = arith.constant 1.000000e+00 : f32
    %82 = vector.broadcast %cst_88 : f32 to vector<2x32xf32>
    %83 = arith.addf %82, %81 : vector<2x32xf32>
    %84 = arith.divf %82, %83 : vector<2x32xf32>
    %85 = arith.addf %55, %71 : vector<2x32xf32>
    %86 = arith.negf %85 : vector<2x32xf32>
    %87 = math.exp %86 : vector<2x32xf32>
    %cst_89 = arith.constant 1.000000e+00 : f32
    %88 = vector.broadcast %cst_89 : f32 to vector<2x32xf32>
    %89 = arith.addf %88, %87 : vector<2x32xf32>
    %90 = arith.divf %88, %89 : vector<2x32xf32>
    %91 = arith.mulf %84, %78 : vector<2x32xf32>
    %92 = arith.addf %57, %91 : vector<2x32xf32>
    %93 = math.tanh %92 : vector<2x32xf32>
    %cst_90 = arith.constant 1.000000e+00 : f32
    %94 = vector.broadcast %cst_90 : f32 to vector<2x32xf32>
    %95 = arith.subf %94, %90 : vector<2x32xf32>
    %96 = arith.mulf %95, %93 : vector<2x32xf32>
    %97 = arith.mulf %90, %1 : vector<2x32xf32>
    %98 = arith.addf %96, %97 : vector<2x32xf32>
    %c1_91 = arith.constant 1 : index
    %c7_92 = arith.constant 7 : index
    %c0_93 = arith.constant 0 : index
    %c0_94 = arith.constant 0 : index
    %99 = vector.load %arg3[%c1_91, %c7_92, %c0_93, %c0_94] : memref<2x8x2x32xf32, #tpu.memory_space<vmem>>, vector<1x1x2x32xf32>
    %100 = vector.shape_cast %99 : vector<1x1x2x32xf32> to vector<2x32xf32>
    %101 = vector.shape_cast %98 : vector<2x32xf32> to vector<1x1x2x32xf32>
    tpu.vector_store %arg3[%c1_91, %c7_92, %c0_93, %c0_94], %101 {strides = array<i32>} : memref<2x8x2x32xf32, #tpu.memory_space<vmem>>, vector<1x1x2x32xf32>,
    %c0_95 = arith.constant 0 : index
    %c1_96 = arith.constant 1 : index
    %c0_97 = arith.constant 0 : index
    %c0_98 = arith.constant 0 : index
    %c0_99 = arith.constant 0 : index
    %102 = vector.load %arg0[%c0_95, %c1_96, %c0_97, %c0_98, %c0_99] : memref<2x8x3x2x32xf32, #tpu.memory_space<vmem>>, vector<1x1x1x2x32xf32>
    %103 = vector.shape_cast %102 : vector<1x1x1x2x32xf32> to vector<2x32xf32>
    %c0_100 = arith.constant 0 : index
    %c1_101 = arith.constant 1 : index
    %c1_102 = arith.constant 1 : index
    %c0_103 = arith.constant 0 : index
    %c0_104 = arith.constant 0 : index
    %104 = vector.load %arg0[%c0_100, %c1_101, %c1_102, %c0_103, %c0_104] : memref<2x8x3x2x32xf32, #tpu.memory_space<vmem>>, vector<1x1x1x2x32xf32>
    %105 = vector.shape_cast %104 : vector<1x1x1x2x32xf32> to vector<2x32xf32>
    %c0_105 = arith.constant 0 : index
    %c1_106 = arith.constant 1 : index
    %c2_107 = arith.constant 2 : index
    %c0_108 = arith.constant 0 : index
    %c0_109 = arith.constant 0 : index
    %106 = vector.load %arg0[%c0_105, %c1_106, %c2_107, %c0_108, %c0_109] : memref<2x8x3x2x32xf32, #tpu.memory_space<vmem>>, vector<1x1x1x2x32xf32>
    %107 = vector.shape_cast %106 : vector<1x1x1x2x32xf32> to vector<2x32xf32>
    %c0_110 = arith.constant 0 : index
    %c0_111 = arith.constant 0 : index
    %c0_112 = arith.constant 0 : index
    %c0_113 = arith.constant 0 : index
    %108 = vector.load %arg1[%c0_110, %c0_111, %c0_112, %c0_113] : memref<2x3x32x32xf32, #tpu.memory_space<vmem>>, vector<1x1x32x32xf32>
    %109 = vector.shape_cast %108 : vector<1x1x32x32xf32> to vector<32x32xf32>
    %cst_114 = arith.constant dense<0.000000e+00> : vector<2x32xf32>
    %110 = tpu.matmul %48, %109, %cst_114 {dimension_numbers = #tpu.dot_dimension_numbers<[1], [0], [0], [1], [0, 0, 1, 1], [], []>} : vector<2x32xf32>, vector<32x32xf32>, vector<2x32xf32> -> vector<2x32xf32>
    %c0_115 = arith.constant 0 : index
    %c0_116 = arith.constant 0 : index
    %c0_117 = arith.constant 0 : index
    %c0_118 = arith.constant 0 : index
    %111 = vector.load %arg2[%c0_115, %c0_116, %c0_117, %c0_118] : memref<2x3x1x32xf32, #tpu.memory_space<vmem>>, vector<1x1x1x32xf32>
    %112 = vector.shape_cast %111 : vector<1x1x1x32xf32> to vector<1x32xf32>
    %113 = vector.broadcast %112 : vector<1x32xf32> to vector<2x32xf32>
    %114 = arith.addf %110, %113 : vector<2x32xf32>
    %c0_119 = arith.constant 0 : index
    %c1_120 = arith.constant 1 : index
    %c0_121 = arith.constant 0 : index
    %c0_122 = arith.constant 0 : index
    %115 = vector.load %arg1[%c0_119, %c1_120, %c0_121, %c0_122] : memref<2x3x32x32xf32, #tpu.memory_space<vmem>>, vector<1x1x32x32xf32>
    %116 = vector.shape_cast %115 : vector<1x1x32x32xf32> to vector<32x32xf32>
    %cst_123 = arith.constant dense<0.000000e+00> : vector<2x32xf32>
    %117 = tpu.matmul %48, %116, %cst_123 {dimension_numbers = #tpu.dot_dimension_numbers<[1], [0], [0], [1], [0, 0, 1, 1], [], []>} : vector<2x32xf32>, vector<32x32xf32>, vector<2x32xf32> -> vector<2x32xf32>
    %c0_124 = arith.constant 0 : index
    %c1_125 = arith.constant 1 : index
    %c0_126 = arith.constant 0 : index
    %c0_127 = arith.constant 0 : index
    %118 = vector.load %arg2[%c0_124, %c1_125, %c0_126, %c0_127] : memref<2x3x1x32xf32, #tpu.memory_space<vmem>>, vector<1x1x1x32xf32>
    %119 = vector.shape_cast %118 : vector<1x1x1x32xf32> to vector<1x32xf32>
    %120 = vector.broadcast %119 : vector<1x32xf32> to vector<2x32xf32>
    %121 = arith.addf %117, %120 : vector<2x32xf32>
    %c0_128 = arith.constant 0 : index
    %c2_129 = arith.constant 2 : index
    %c0_130 = arith.constant 0 : index
    %c0_131 = arith.constant 0 : index
    %122 = vector.load %arg1[%c0_128, %c2_129, %c0_130, %c0_131] : memref<2x3x32x32xf32, #tpu.memory_space<vmem>>, vector<1x1x32x32xf32>
    %123 = vector.shape_cast %122 : vector<1x1x32x32xf32> to vector<32x32xf32>
    %cst_132 = arith.constant dense<0.000000e+00> : vector<2x32xf32>
    %124 = tpu.matmul %48, %123, %cst_132 {dimension_numbers = #tpu.dot_dimension_numbers<[1], [0], [0], [1], [0, 0, 1, 1], [], []>} : vector<2x32xf32>, vector<32x32xf32>, vector<2x32xf32> -> vector<2x32xf32>
    %c0_133 = arith.constant 0 : index
    %c2_134 = arith.constant 2 : index
    %c0_135 = arith.constant 0 : index
    %c0_136 = arith.constant 0 : index
    %125 = vector.load %arg2[%c0_133, %c2_134, %c0_135, %c0_136] : memref<2x3x1x32xf32, #tpu.memory_space<vmem>>, vector<1x1x1x32xf32>
    %126 = vector.shape_cast %125 : vector<1x1x1x32xf32> to vector<1x32xf32>
    %127 = vector.broadcast %126 : vector<1x32xf32> to vector<2x32xf32>
    %128 = arith.addf %124, %127 : vector<2x32xf32>
    %129 = arith.addf %103, %114 : vector<2x32xf32>
    %130 = arith.negf %129 : vector<2x32xf32>
    %131 = math.exp %130 : vector<2x32xf32>
    %cst_137 = arith.constant 1.000000e+00 : f32
    %132 = vector.broadcast %cst_137 : f32 to vector<2x32xf32>
    %133 = arith.addf %132, %131 : vector<2x32xf32>
    %134 = arith.divf %132, %133 : vector<2x32xf32>
    %135 = arith.addf %105, %121 : vector<2x32xf32>
    %136 = arith.negf %135 : vector<2x32xf32>
    %137 = math.exp %136 : vector<2x32xf32>
    %cst_138 = arith.constant 1.000000e+00 : f32
    %138 = vector.broadcast %cst_138 : f32 to vector<2x32xf32>
    %139 = arith.addf %138, %137 : vector<2x32xf32>
    %140 = arith.divf %138, %139 : vector<2x32xf32>
    %141 = arith.mulf %134, %128 : vector<2x32xf32>
    %142 = arith.addf %107, %141 : vector<2x32xf32>
    %143 = math.tanh %142 : vector<2x32xf32>
    %cst_139 = arith.constant 1.000000e+00 : f32
    %144 = vector.broadcast %cst_139 : f32 to vector<2x32xf32>
    %145 = arith.subf %144, %140 : vector<2x32xf32>
    %146 = arith.mulf %145, %143 : vector<2x32xf32>
    %147 = arith.mulf %140, %48 : vector<2x32xf32>
    %148 = arith.addf %146, %147 : vector<2x32xf32>
    %c0_140 = arith.constant 0 : index
    %c1_141 = arith.constant 1 : index
    %c0_142 = arith.constant 0 : index
    %c0_143 = arith.constant 0 : index
    %149 = vector.load %arg3[%c0_140, %c1_141, %c0_142, %c0_143] : memref<2x8x2x32xf32, #tpu.memory_space<vmem>>, vector<1x1x2x32xf32>
    %150 = vector.shape_cast %149 : vector<1x1x2x32xf32> to vector<2x32xf32>
    %151 = vector.shape_cast %148 : vector<2x32xf32> to vector<1x1x2x32xf32>
    tpu.vector_store %arg3[%c0_140, %c1_141, %c0_142, %c0_143], %151 {strides = array<i32>} : memref<2x8x2x32xf32, #tpu.memory_space<vmem>>, vector<1x1x2x32xf32>,
    %c1_144 = arith.constant 1 : index
    %c6 = arith.constant 6 : index
    %c0_145 = arith.constant 0 : index
    %c0_146 = arith.constant 0 : index
    %c0_147 = arith.constant 0 : index
    %152 = vector.load %arg0[%c1_144, %c6, %c0_145, %c0_146, %c0_147] : memref<2x8x3x2x32xf32, #tpu.memory_space<vmem>>, vector<1x1x1x2x32xf32>
    %153 = vector.shape_cast %152 : vector<1x1x1x2x32xf32> to vector<2x32xf32>
    %c1_148 = arith.constant 1 : index
    %c6_149 = arith.constant 6 : index
    %c1_150 = arith.constant 1 : index
    %c0_151 = arith.constant 0 : index
    %c0_152 = arith.constant 0 : index
    %154 = vector.load %arg0[%c1_148, %c6_149, %c1_150, %c0_151, %c0_152] : memref<2x8x3x2x32xf32, #tpu.memory_space<vmem>>, vector<1x1x1x2x32xf32>
    %155 = vector.shape_cast %154 : vector<1x1x1x2x32xf32> to vector<2x32xf32>
    %c1_153 = arith.constant 1 : index
    %c6_154 = arith.constant 6 : index
    %c2_155 = arith.constant 2 : index
    %c0_156 = arith.constant 0 : index
    %c0_157 = arith.constant 0 : index
    %156 = vector.load %arg0[%c1_153, %c6_154, %c2_155, %c0_156, %c0_157] : memref<2x8x3x2x32xf32, #tpu.memory_space<vmem>>, vector<1x1x1x2x32xf32>
    %157 = vector.shape_cast %156 : vector<1x1x1x2x32xf32> to vector<2x32xf32>
    %c1_158 = arith.constant 1 : index
    %c0_159 = arith.constant 0 : index
    %c0_160 = arith.constant 0 : index
    %c0_161 = arith.constant 0 : index
    %158 = vector.load %arg1[%c1_158, %c0_159, %c0_160, %c0_161] : memref<2x3x32x32xf32, #tpu.memory_space<vmem>>, vector<1x1x32x32xf32>
    %159 = vector.shape_cast %158 : vector<1x1x32x32xf32> to vector<32x32xf32>
    %cst_162 = arith.constant dense<0.000000e+00> : vector<2x32xf32>
    %160 = tpu.matmul %98, %159, %cst_162 {dimension_numbers = #tpu.dot_dimension_numbers<[1], [0], [0], [1], [0, 0, 1, 1], [], []>} : vector<2x32xf32>, vector<32x32xf32>, vector<2x32xf32> -> vector<2x32xf32>
    %c1_163 = arith.constant 1 : index
    %c0_164 = arith.constant 0 : index
    %c0_165 = arith.constant 0 : index
    %c0_166 = arith.constant 0 : index
    %161 = vector.load %arg2[%c1_163, %c0_164, %c0_165, %c0_166] : memref<2x3x1x32xf32, #tpu.memory_space<vmem>>, vector<1x1x1x32xf32>
    %162 = vector.shape_cast %161 : vector<1x1x1x32xf32> to vector<1x32xf32>
    %163 = vector.broadcast %162 : vector<1x32xf32> to vector<2x32xf32>
    %164 = arith.addf %160, %163 : vector<2x32xf32>
    %c1_167 = arith.constant 1 : index
    %c1_168 = arith.constant 1 : index
    %c0_169 = arith.constant 0 : index
    %c0_170 = arith.constant 0 : index
    %165 = vector.load %arg1[%c1_167, %c1_168, %c0_169, %c0_170] : memref<2x3x32x32xf32, #tpu.memory_space<vmem>>, vector<1x1x32x32xf32>
    %166 = vector.shape_cast %165 : vector<1x1x32x32xf32> to vector<32x32xf32>
    %cst_171 = arith.constant dense<0.000000e+00> : vector<2x32xf32>
    %167 = tpu.matmul %98, %166, %cst_171 {dimension_numbers = #tpu.dot_dimension_numbers<[1], [0], [0], [1], [0, 0, 1, 1], [], []>} : vector<2x32xf32>, vector<32x32xf32>, vector<2x32xf32> -> vector<2x32xf32>
    %c1_172 = arith.constant 1 : index
    %c1_173 = arith.constant 1 : index
    %c0_174 = arith.constant 0 : index
    %c0_175 = arith.constant 0 : index
    %168 = vector.load %arg2[%c1_172, %c1_173, %c0_174, %c0_175] : memref<2x3x1x32xf32, #tpu.memory_space<vmem>>, vector<1x1x1x32xf32>
    %169 = vector.shape_cast %168 : vector<1x1x1x32xf32> to vector<1x32xf32>
    %170 = vector.broadcast %169 : vector<1x32xf32> to vector<2x32xf32>
    %171 = arith.addf %167, %170 : vector<2x32xf32>
    %c1_176 = arith.constant 1 : index
    %c2_177 = arith.constant 2 : index
    %c0_178 = arith.constant 0 : index
    %c0_179 = arith.constant 0 : index
    %172 = vector.load %arg1[%c1_176, %c2_177, %c0_178, %c0_179] : memref<2x3x32x32xf32, #tpu.memory_space<vmem>>, vector<1x1x32x32xf32>
    %173 = vector.shape_cast %172 : vector<1x1x32x32xf32> to vector<32x32xf32>
    %cst_180 = arith.constant dense<0.000000e+00> : vector<2x32xf32>
    %174 = tpu.matmul %98, %173, %cst_180 {dimension_numbers = #tpu.dot_dimension_numbers<[1], [0], [0], [1], [0, 0, 1, 1], [], []>} : vector<2x32xf32>, vector<32x32xf32>, vector<2x32xf32> -> vector<2x32xf32>
    %c1_181 = arith.constant 1 : index
    %c2_182 = arith.constant 2 : index
    %c0_183 = arith.constant 0 : index
    %c0_184 = arith.constant 0 : index
    %175 = vector.load %arg2[%c1_181, %c2_182, %c0_183, %c0_184] : memref<2x3x1x32xf32, #tpu.memory_space<vmem>>, vector<1x1x1x32xf32>
    %176 = vector.shape_cast %175 : vector<1x1x1x32xf32> to vector<1x32xf32>
    %177 = vector.broadcast %176 : vector<1x32xf32> to vector<2x32xf32>
    %178 = arith.addf %174, %177 : vector<2x32xf32>
    %179 = arith.addf %153, %164 : vector<2x32xf32>
    %180 = arith.negf %179 : vector<2x32xf32>
    %181 = math.exp %180 : vector<2x32xf32>
    %cst_185 = arith.constant 1.000000e+00 : f32
    %182 = vector.broadcast %cst_185 : f32 to vector<2x32xf32>
    %183 = arith.addf %182, %181 : vector<2x32xf32>
    %184 = arith.divf %182, %183 : vector<2x32xf32>
    %185 = arith.addf %155, %171 : vector<2x32xf32>
    %186 = arith.negf %185 : vector<2x32xf32>
    %187 = math.exp %186 : vector<2x32xf32>
    %cst_186 = arith.constant 1.000000e+00 : f32
    %188 = vector.broadcast %cst_186 : f32 to vector<2x32xf32>
    %189 = arith.addf %188, %187 : vector<2x32xf32>
    %190 = arith.divf %188, %189 : vector<2x32xf32>
    %191 = arith.mulf %184, %178 : vector<2x32xf32>
    %192 = arith.addf %157, %191 : vector<2x32xf32>
    %193 = math.tanh %192 : vector<2x32xf32>
    %cst_187 = arith.constant 1.000000e+00 : f32
    %194 = vector.broadcast %cst_187 : f32 to vector<2x32xf32>
    %195 = arith.subf %194, %190 : vector<2x32xf32>
    %196 = arith.mulf %195, %193 : vector<2x32xf32>
    %197 = arith.mulf %190, %98 : vector<2x32xf32>
    %198 = arith.addf %196, %197 : vector<2x32xf32>
    %c1_188 = arith.constant 1 : index
    %c6_189 = arith.constant 6 : index
    %c0_190 = arith.constant 0 : index
    %c0_191 = arith.constant 0 : index
    %199 = vector.load %arg3[%c1_188, %c6_189, %c0_190, %c0_191] : memref<2x8x2x32xf32, #tpu.memory_space<vmem>>, vector<1x1x2x32xf32>
    %200 = vector.shape_cast %199 : vector<1x1x2x32xf32> to vector<2x32xf32>
    %201 = vector.shape_cast %198 : vector<2x32xf32> to vector<1x1x2x32xf32>
    tpu.vector_store %arg3[%c1_188, %c6_189, %c0_190, %c0_191], %201 {strides = array<i32>} : memref<2x8x2x32xf32, #tpu.memory_space<vmem>>, vector<1x1x2x32xf32>,
    %c0_192 = arith.constant 0 : index
    %c2_193 = arith.constant 2 : index
    %c0_194 = arith.constant 0 : index
    %c0_195 = arith.constant 0 : index
    %c0_196 = arith.constant 0 : index
    %202 = vector.load %arg0[%c0_192, %c2_193, %c0_194, %c0_195, %c0_196] : memref<2x8x3x2x32xf32, #tpu.memory_space<vmem>>, vector<1x1x1x2x32xf32>
    %203 = vector.shape_cast %202 : vector<1x1x1x2x32xf32> to vector<2x32xf32>
    %c0_197 = arith.constant 0 : index
    %c2_198 = arith.constant 2 : index
    %c1_199 = arith.constant 1 : index
    %c0_200 = arith.constant 0 : index
    %c0_201 = arith.constant 0 : index
    %204 = vector.load %arg0[%c0_197, %c2_198, %c1_199, %c0_200, %c0_201] : memref<2x8x3x2x32xf32, #tpu.memory_space<vmem>>, vector<1x1x1x2x32xf32>
    %205 = vector.shape_cast %204 : vector<1x1x1x2x32xf32> to vector<2x32xf32>
    %c0_202 = arith.constant 0 : index
    %c2_203 = arith.constant 2 : index
    %c2_204 = arith.constant 2 : index
    %c0_205 = arith.constant 0 : index
    %c0_206 = arith.constant 0 : index
    %206 = vector.load %arg0[%c0_202, %c2_203, %c2_204, %c0_205, %c0_206] : memref<2x8x3x2x32xf32, #tpu.memory_space<vmem>>, vector<1x1x1x2x32xf32>
    %207 = vector.shape_cast %206 : vector<1x1x1x2x32xf32> to vector<2x32xf32>
    %c0_207 = arith.constant 0 : index
    %c0_208 = arith.constant 0 : index
    %c0_209 = arith.constant 0 : index
    %c0_210 = arith.constant 0 : index
    %208 = vector.load %arg1[%c0_207, %c0_208, %c0_209, %c0_210] : memref<2x3x32x32xf32, #tpu.memory_space<vmem>>, vector<1x1x32x32xf32>
    %209 = vector.shape_cast %208 : vector<1x1x32x32xf32> to vector<32x32xf32>
    %cst_211 = arith.constant dense<0.000000e+00> : vector<2x32xf32>
    %210 = tpu.matmul %148, %209, %cst_211 {dimension_numbers = #tpu.dot_dimension_numbers<[1], [0], [0], [1], [0, 0, 1, 1], [], []>} : vector<2x32xf32>, vector<32x32xf32>, vector<2x32xf32> -> vector<2x32xf32>
    %c0_212 = arith.constant 0 : index
    %c0_213 = arith.constant 0 : index
    %c0_214 = arith.constant 0 : index
    %c0_215 = arith.constant 0 : index
    %211 = vector.load %arg2[%c0_212, %c0_213, %c0_214, %c0_215] : memref<2x3x1x32xf32, #tpu.memory_space<vmem>>, vector<1x1x1x32xf32>
    %212 = vector.shape_cast %211 : vector<1x1x1x32xf32> to vector<1x32xf32>
    %213 = vector.broadcast %212 : vector<1x32xf32> to vector<2x32xf32>
    %214 = arith.addf %210, %213 : vector<2x32xf32>
    %c0_216 = arith.constant 0 : index
    %c1_217 = arith.constant 1 : index
    %c0_218 = arith.constant 0 : index
    %c0_219 = arith.constant 0 : index
    %215 = vector.load %arg1[%c0_216, %c1_217, %c0_218, %c0_219] : memref<2x3x32x32xf32, #tpu.memory_space<vmem>>, vector<1x1x32x32xf32>
    %216 = vector.shape_cast %215 : vector<1x1x32x32xf32> to vector<32x32xf32>
    %cst_220 = arith.constant dense<0.000000e+00> : vector<2x32xf32>
    %217 = tpu.matmul %148, %216, %cst_220 {dimension_numbers = #tpu.dot_dimension_numbers<[1], [0], [0], [1], [0, 0, 1, 1], [], []>} : vector<2x32xf32>, vector<32x32xf32>, vector<2x32xf32> -> vector<2x32xf32>
    %c0_221 = arith.constant 0 : index
    %c1_222 = arith.constant 1 : index
    %c0_223 = arith.constant 0 : index
    %c0_224 = arith.constant 0 : index
    %218 = vector.load %arg2[%c0_221, %c1_222, %c0_223, %c0_224] : memref<2x3x1x32xf32, #tpu.memory_space<vmem>>, vector<1x1x1x32xf32>
    %219 = vector.shape_cast %218 : vector<1x1x1x32xf32> to vector<1x32xf32>
    %220 = vector.broadcast %219 : vector<1x32xf32> to vector<2x32xf32>
    %221 = arith.addf %217, %220 : vector<2x32xf32>
    %c0_225 = arith.constant 0 : index
    %c2_226 = arith.constant 2 : index
    %c0_227 = arith.constant 0 : index
    %c0_228 = arith.constant 0 : index
    %222 = vector.load %arg1[%c0_225, %c2_226, %c0_227, %c0_228] : memref<2x3x32x32xf32, #tpu.memory_space<vmem>>, vector<1x1x32x32xf32>
    %223 = vector.shape_cast %222 : vector<1x1x32x32xf32> to vector<32x32xf32>
    %cst_229 = arith.constant dense<0.000000e+00> : vector<2x32xf32>
    %224 = tpu.matmul %148, %223, %cst_229 {dimension_numbers = #tpu.dot_dimension_numbers<[1], [0], [0], [1], [0, 0, 1, 1], [], []>} : vector<2x32xf32>, vector<32x32xf32>, vector<2x32xf32> -> vector<2x32xf32>
    %c0_230 = arith.constant 0 : index
    %c2_231 = arith.constant 2 : index
    %c0_232 = arith.constant 0 : index
    %c0_233 = arith.constant 0 : index
    %225 = vector.load %arg2[%c0_230, %c2_231, %c0_232, %c0_233] : memref<2x3x1x32xf32, #tpu.memory_space<vmem>>, vector<1x1x1x32xf32>
    %226 = vector.shape_cast %225 : vector<1x1x1x32xf32> to vector<1x32xf32>
    %227 = vector.broadcast %226 : vector<1x32xf32> to vector<2x32xf32>
    %228 = arith.addf %224, %227 : vector<2x32xf32>
    %229 = arith.addf %203, %214 : vector<2x32xf32>
    %230 = arith.negf %229 : vector<2x32xf32>
    %231 = math.exp %230 : vector<2x32xf32>
    %cst_234 = arith.constant 1.000000e+00 : f32
    %232 = vector.broadcast %cst_234 : f32 to vector<2x32xf32>
    %233 = arith.addf %232, %231 : vector<2x32xf32>
    %234 = arith.divf %232, %233 : vector<2x32xf32>
    %235 = arith.addf %205, %221 : vector<2x32xf32>
    %236 = arith.negf %235 : vector<2x32xf32>
    %237 = math.exp %236 : vector<2x32xf32>
    %cst_235 = arith.constant 1.000000e+00 : f32
    %238 = vector.broadcast %cst_235 : f32 to vector<2x32xf32>
    %239 = arith.addf %238, %237 : vector<2x32xf32>
    %240 = arith.divf %238, %239 : vector<2x32xf32>
    %241 = arith.mulf %234, %228 : vector<2x32xf32>
    %242 = arith.addf %207, %241 : vector<2x32xf32>
    %243 = math.tanh %242 : vector<2x32xf32>
    %cst_236 = arith.constant 1.000000e+00 : f32
    %244 = vector.broadcast %cst_236 : f32 to vector<2x32xf32>
    %245 = arith.subf %244, %240 : vector<2x32xf32>
    %246 = arith.mulf %245, %243 : vector<2x32xf32>
    %247 = arith.mulf %240, %148 : vector<2x32xf32>
    %248 = arith.addf %246, %247 : vector<2x32xf32>
    %c0_237 = arith.constant 0 : index
    %c2_238 = arith.constant 2 : index
    %c0_239 = arith.constant 0 : index
    %c0_240 = arith.constant 0 : index
    %249 = vector.load %arg3[%c0_237, %c2_238, %c0_239, %c0_240] : memref<2x8x2x32xf32, #tpu.memory_space<vmem>>, vector<1x1x2x32xf32>
    %250 = vector.shape_cast %249 : vector<1x1x2x32xf32> to vector<2x32xf32>
    %251 = vector.shape_cast %248 : vector<2x32xf32> to vector<1x1x2x32xf32>
    tpu.vector_store %arg3[%c0_237, %c2_238, %c0_239, %c0_240], %251 {strides = array<i32>} : memref<2x8x2x32xf32, #tpu.memory_space<vmem>>, vector<1x1x2x32xf32>,
    %c1_241 = arith.constant 1 : index
    %c5 = arith.constant 5 : index
    %c0_242 = arith.constant 0 : index
    %c0_243 = arith.constant 0 : index
    %c0_244 = arith.constant 0 : index
    %252 = vector.load %arg0[%c1_241, %c5, %c0_242, %c0_243, %c0_244] : memref<2x8x3x2x32xf32, #tpu.memory_space<vmem>>, vector<1x1x1x2x32xf32>
    %253 = vector.shape_cast %252 : vector<1x1x1x2x32xf32> to vector<2x32xf32>
    %c1_245 = arith.constant 1 : index
    %c5_246 = arith.constant 5 : index
    %c1_247 = arith.constant 1 : index
    %c0_248 = arith.constant 0 : index
    %c0_249 = arith.constant 0 : index
    %254 = vector.load %arg0[%c1_245, %c5_246, %c1_247, %c0_248, %c0_249] : memref<2x8x3x2x32xf32, #tpu.memory_space<vmem>>, vector<1x1x1x2x32xf32>
    %255 = vector.shape_cast %254 : vector<1x1x1x2x32xf32> to vector<2x32xf32>
    %c1_250 = arith.constant 1 : index
    %c5_251 = arith.constant 5 : index
    %c2_252 = arith.constant 2 : index
    %c0_253 = arith.constant 0 : index
    %c0_254 = arith.constant 0 : index
    %256 = vector.load %arg0[%c1_250, %c5_251, %c2_252, %c0_253, %c0_254] : memref<2x8x3x2x32xf32, #tpu.memory_space<vmem>>, vector<1x1x1x2x32xf32>
    %257 = vector.shape_cast %256 : vector<1x1x1x2x32xf32> to vector<2x32xf32>
    %c1_255 = arith.constant 1 : index
    %c0_256 = arith.constant 0 : index
    %c0_257 = arith.constant 0 : index
    %c0_258 = arith.constant 0 : index
    %258 = vector.load %arg1[%c1_255, %c0_256, %c0_257, %c0_258] : memref<2x3x32x32xf32, #tpu.memory_space<vmem>>, vector<1x1x32x32xf32>
    %259 = vector.shape_cast %258 : vector<1x1x32x32xf32> to vector<32x32xf32>
    %cst_259 = arith.constant dense<0.000000e+00> : vector<2x32xf32>
    %260 = tpu.matmul %198, %259, %cst_259 {dimension_numbers = #tpu.dot_dimension_numbers<[1], [0], [0], [1], [0, 0, 1, 1], [], []>} : vector<2x32xf32>, vector<32x32xf32>, vector<2x32xf32> -> vector<2x32xf32>
    %c1_260 = arith.constant 1 : index
    %c0_261 = arith.constant 0 : index
    %c0_262 = arith.constant 0 : index
    %c0_263 = arith.constant 0 : index
    %261 = vector.load %arg2[%c1_260, %c0_261, %c0_262, %c0_263] : memref<2x3x1x32xf32, #tpu.memory_space<vmem>>, vector<1x1x1x32xf32>
    %262 = vector.shape_cast %261 : vector<1x1x1x32xf32> to vector<1x32xf32>
    %263 = vector.broadcast %262 : vector<1x32xf32> to vector<2x32xf32>
    %264 = arith.addf %260, %263 : vector<2x32xf32>
    %c1_264 = arith.constant 1 : index
    %c1_265 = arith.constant 1 : index
    %c0_266 = arith.constant 0 : index
    %c0_267 = arith.constant 0 : index
    %265 = vector.load %arg1[%c1_264, %c1_265, %c0_266, %c0_267] : memref<2x3x32x32xf32, #tpu.memory_space<vmem>>, vector<1x1x32x32xf32>
    %266 = vector.shape_cast %265 : vector<1x1x32x32xf32> to vector<32x32xf32>
    %cst_268 = arith.constant dense<0.000000e+00> : vector<2x32xf32>
    %267 = tpu.matmul %198, %266, %cst_268 {dimension_numbers = #tpu.dot_dimension_numbers<[1], [0], [0], [1], [0, 0, 1, 1], [], []>} : vector<2x32xf32>, vector<32x32xf32>, vector<2x32xf32> -> vector<2x32xf32>
    %c1_269 = arith.constant 1 : index
    %c1_270 = arith.constant 1 : index
    %c0_271 = arith.constant 0 : index
    %c0_272 = arith.constant 0 : index
    %268 = vector.load %arg2[%c1_269, %c1_270, %c0_271, %c0_272] : memref<2x3x1x32xf32, #tpu.memory_space<vmem>>, vector<1x1x1x32xf32>
    %269 = vector.shape_cast %268 : vector<1x1x1x32xf32> to vector<1x32xf32>
    %270 = vector.broadcast %269 : vector<1x32xf32> to vector<2x32xf32>
    %271 = arith.addf %267, %270 : vector<2x32xf32>
    %c1_273 = arith.constant 1 : index
    %c2_274 = arith.constant 2 : index
    %c0_275 = arith.constant 0 : index
    %c0_276 = arith.constant 0 : index
    %272 = vector.load %arg1[%c1_273, %c2_274, %c0_275, %c0_276] : memref<2x3x32x32xf32, #tpu.memory_space<vmem>>, vector<1x1x32x32xf32>
    %273 = vector.shape_cast %272 : vector<1x1x32x32xf32> to vector<32x32xf32>
    %cst_277 = arith.constant dense<0.000000e+00> : vector<2x32xf32>
    %274 = tpu.matmul %198, %273, %cst_277 {dimension_numbers = #tpu.dot_dimension_numbers<[1], [0], [0], [1], [0, 0, 1, 1], [], []>} : vector<2x32xf32>, vector<32x32xf32>, vector<2x32xf32> -> vector<2x32xf32>
    %c1_278 = arith.constant 1 : index
    %c2_279 = arith.constant 2 : index
    %c0_280 = arith.constant 0 : index
    %c0_281 = arith.constant 0 : index
    %275 = vector.load %arg2[%c1_278, %c2_279, %c0_280, %c0_281] : memref<2x3x1x32xf32, #tpu.memory_space<vmem>>, vector<1x1x1x32xf32>
    %276 = vector.shape_cast %275 : vector<1x1x1x32xf32> to vector<1x32xf32>
    %277 = vector.broadcast %276 : vector<1x32xf32> to vector<2x32xf32>
    %278 = arith.addf %274, %277 : vector<2x32xf32>
    %279 = arith.addf %253, %264 : vector<2x32xf32>
    %280 = arith.negf %279 : vector<2x32xf32>
    %281 = math.exp %280 : vector<2x32xf32>
    %cst_282 = arith.constant 1.000000e+00 : f32
    %282 = vector.broadcast %cst_282 : f32 to vector<2x32xf32>
    %283 = arith.addf %282, %281 : vector<2x32xf32>
    %284 = arith.divf %282, %283 : vector<2x32xf32>
    %285 = arith.addf %255, %271 : vector<2x32xf32>
    %286 = arith.negf %285 : vector<2x32xf32>
    %287 = math.exp %286 : vector<2x32xf32>
    %cst_283 = arith.constant 1.000000e+00 : f32
    %288 = vector.broadcast %cst_283 : f32 to vector<2x32xf32>
    %289 = arith.addf %288, %287 : vector<2x32xf32>
    %290 = arith.divf %288, %289 : vector<2x32xf32>
    %291 = arith.mulf %284, %278 : vector<2x32xf32>
    %292 = arith.addf %257, %291 : vector<2x32xf32>
    %293 = math.tanh %292 : vector<2x32xf32>
    %cst_284 = arith.constant 1.000000e+00 : f32
    %294 = vector.broadcast %cst_284 : f32 to vector<2x32xf32>
    %295 = arith.subf %294, %290 : vector<2x32xf32>
    %296 = arith.mulf %295, %293 : vector<2x32xf32>
    %297 = arith.mulf %290, %198 : vector<2x32xf32>
    %298 = arith.addf %296, %297 : vector<2x32xf32>
    %c1_285 = arith.constant 1 : index
    %c5_286 = arith.constant 5 : index
    %c0_287 = arith.constant 0 : index
    %c0_288 = arith.constant 0 : index
    %299 = vector.load %arg3[%c1_285, %c5_286, %c0_287, %c0_288] : memref<2x8x2x32xf32, #tpu.memory_space<vmem>>, vector<1x1x2x32xf32>
    %300 = vector.shape_cast %299 : vector<1x1x2x32xf32> to vector<2x32xf32>
    %301 = vector.shape_cast %298 : vector<2x32xf32> to vector<1x1x2x32xf32>
    tpu.vector_store %arg3[%c1_285, %c5_286, %c0_287, %c0_288], %301 {strides = array<i32>} : memref<2x8x2x32xf32, #tpu.memory_space<vmem>>, vector<1x1x2x32xf32>,
    %c0_289 = arith.constant 0 : index
    %c3 = arith.constant 3 : index
    %c0_290 = arith.constant 0 : index
    %c0_291 = arith.constant 0 : index
    %c0_292 = arith.constant 0 : index
    %302 = vector.load %arg0[%c0_289, %c3, %c0_290, %c0_291, %c0_292] : memref<2x8x3x2x32xf32, #tpu.memory_space<vmem>>, vector<1x1x1x2x32xf32>
    %303 = vector.shape_cast %302 : vector<1x1x1x2x32xf32> to vector<2x32xf32>
    %c0_293 = arith.constant 0 : index
    %c3_294 = arith.constant 3 : index
    %c1_295 = arith.constant 1 : index
    %c0_296 = arith.constant 0 : index
    %c0_297 = arith.constant 0 : index
    %304 = vector.load %arg0[%c0_293, %c3_294, %c1_295, %c0_296, %c0_297] : memref<2x8x3x2x32xf32, #tpu.memory_space<vmem>>, vector<1x1x1x2x32xf32>
    %305 = vector.shape_cast %304 : vector<1x1x1x2x32xf32> to vector<2x32xf32>
    %c0_298 = arith.constant 0 : index
    %c3_299 = arith.constant 3 : index
    %c2_300 = arith.constant 2 : index
    %c0_301 = arith.constant 0 : index
    %c0_302 = arith.constant 0 : index
    %306 = vector.load %arg0[%c0_298, %c3_299, %c2_300, %c0_301, %c0_302] : memref<2x8x3x2x32xf32, #tpu.memory_space<vmem>>, vector<1x1x1x2x32xf32>
    %307 = vector.shape_cast %306 : vector<1x1x1x2x32xf32> to vector<2x32xf32>
    %c0_303 = arith.constant 0 : index
    %c0_304 = arith.constant 0 : index
    %c0_305 = arith.constant 0 : index
    %c0_306 = arith.constant 0 : index
    %308 = vector.load %arg1[%c0_303, %c0_304, %c0_305, %c0_306] : memref<2x3x32x32xf32, #tpu.memory_space<vmem>>, vector<1x1x32x32xf32>
    %309 = vector.shape_cast %308 : vector<1x1x32x32xf32> to vector<32x32xf32>
    %cst_307 = arith.constant dense<0.000000e+00> : vector<2x32xf32>
    %310 = tpu.matmul %248, %309, %cst_307 {dimension_numbers = #tpu.dot_dimension_numbers<[1], [0], [0], [1], [0, 0, 1, 1], [], []>} : vector<2x32xf32>, vector<32x32xf32>, vector<2x32xf32> -> vector<2x32xf32>
    %c0_308 = arith.constant 0 : index
    %c0_309 = arith.constant 0 : index
    %c0_310 = arith.constant 0 : index
    %c0_311 = arith.constant 0 : index
    %311 = vector.load %arg2[%c0_308, %c0_309, %c0_310, %c0_311] : memref<2x3x1x32xf32, #tpu.memory_space<vmem>>, vector<1x1x1x32xf32>
    %312 = vector.shape_cast %311 : vector<1x1x1x32xf32> to vector<1x32xf32>
    %313 = vector.broadcast %312 : vector<1x32xf32> to vector<2x32xf32>
    %314 = arith.addf %310, %313 : vector<2x32xf32>
    %c0_312 = arith.constant 0 : index
    %c1_313 = arith.constant 1 : index
    %c0_314 = arith.constant 0 : index
    %c0_315 = arith.constant 0 : index
    %315 = vector.load %arg1[%c0_312, %c1_313, %c0_314, %c0_315] : memref<2x3x32x32xf32, #tpu.memory_space<vmem>>, vector<1x1x32x32xf32>
    %316 = vector.shape_cast %315 : vector<1x1x32x32xf32> to vector<32x32xf32>
    %cst_316 = arith.constant dense<0.000000e+00> : vector<2x32xf32>
    %317 = tpu.matmul %248, %316, %cst_316 {dimension_numbers = #tpu.dot_dimension_numbers<[1], [0], [0], [1], [0, 0, 1, 1], [], []>} : vector<2x32xf32>, vector<32x32xf32>, vector<2x32xf32> -> vector<2x32xf32>
    %c0_317 = arith.constant 0 : index
    %c1_318 = arith.constant 1 : index
    %c0_319 = arith.constant 0 : index
    %c0_320 = arith.constant 0 : index
    %318 = vector.load %arg2[%c0_317, %c1_318, %c0_319, %c0_320] : memref<2x3x1x32xf32, #tpu.memory_space<vmem>>, vector<1x1x1x32xf32>
    %319 = vector.shape_cast %318 : vector<1x1x1x32xf32> to vector<1x32xf32>
    %320 = vector.broadcast %319 : vector<1x32xf32> to vector<2x32xf32>
    %321 = arith.addf %317, %320 : vector<2x32xf32>
    %c0_321 = arith.constant 0 : index
    %c2_322 = arith.constant 2 : index
    %c0_323 = arith.constant 0 : index
    %c0_324 = arith.constant 0 : index
    %322 = vector.load %arg1[%c0_321, %c2_322, %c0_323, %c0_324] : memref<2x3x32x32xf32, #tpu.memory_space<vmem>>, vector<1x1x32x32xf32>
    %323 = vector.shape_cast %322 : vector<1x1x32x32xf32> to vector<32x32xf32>
    %cst_325 = arith.constant dense<0.000000e+00> : vector<2x32xf32>
    %324 = tpu.matmul %248, %323, %cst_325 {dimension_numbers = #tpu.dot_dimension_numbers<[1], [0], [0], [1], [0, 0, 1, 1], [], []>} : vector<2x32xf32>, vector<32x32xf32>, vector<2x32xf32> -> vector<2x32xf32>
    %c0_326 = arith.constant 0 : index
    %c2_327 = arith.constant 2 : index
    %c0_328 = arith.constant 0 : index
    %c0_329 = arith.constant 0 : index
    %325 = vector.load %arg2[%c0_326, %c2_327, %c0_328, %c0_329] : memref<2x3x1x32xf32, #tpu.memory_space<vmem>>, vector<1x1x1x32xf32>
    %326 = vector.shape_cast %325 : vector<1x1x1x32xf32> to vector<1x32xf32>
    %327 = vector.broadcast %326 : vector<1x32xf32> to vector<2x32xf32>
    %328 = arith.addf %324, %327 : vector<2x32xf32>
    %329 = arith.addf %303, %314 : vector<2x32xf32>
    %330 = arith.negf %329 : vector<2x32xf32>
    %331 = math.exp %330 : vector<2x32xf32>
    %cst_330 = arith.constant 1.000000e+00 : f32
    %332 = vector.broadcast %cst_330 : f32 to vector<2x32xf32>
    %333 = arith.addf %332, %331 : vector<2x32xf32>
    %334 = arith.divf %332, %333 : vector<2x32xf32>
    %335 = arith.addf %305, %321 : vector<2x32xf32>
    %336 = arith.negf %335 : vector<2x32xf32>
    %337 = math.exp %336 : vector<2x32xf32>
    %cst_331 = arith.constant 1.000000e+00 : f32
    %338 = vector.broadcast %cst_331 : f32 to vector<2x32xf32>
    %339 = arith.addf %338, %337 : vector<2x32xf32>
    %340 = arith.divf %338, %339 : vector<2x32xf32>
    %341 = arith.mulf %334, %328 : vector<2x32xf32>
    %342 = arith.addf %307, %341 : vector<2x32xf32>
    %343 = math.tanh %342 : vector<2x32xf32>
    %cst_332 = arith.constant 1.000000e+00 : f32
    %344 = vector.broadcast %cst_332 : f32 to vector<2x32xf32>
    %345 = arith.subf %344, %340 : vector<2x32xf32>
    %346 = arith.mulf %345, %343 : vector<2x32xf32>
    %347 = arith.mulf %340, %248 : vector<2x32xf32>
    %348 = arith.addf %346, %347 : vector<2x32xf32>
    %c0_333 = arith.constant 0 : index
    %c3_334 = arith.constant 3 : index
    %c0_335 = arith.constant 0 : index
    %c0_336 = arith.constant 0 : index
    %349 = vector.load %arg3[%c0_333, %c3_334, %c0_335, %c0_336] : memref<2x8x2x32xf32, #tpu.memory_space<vmem>>, vector<1x1x2x32xf32>
    %350 = vector.shape_cast %349 : vector<1x1x2x32xf32> to vector<2x32xf32>
    %351 = vector.shape_cast %348 : vector<2x32xf32> to vector<1x1x2x32xf32>
    tpu.vector_store %arg3[%c0_333, %c3_334, %c0_335, %c0_336], %351 {strides = array<i32>} : memref<2x8x2x32xf32, #tpu.memory_space<vmem>>, vector<1x1x2x32xf32>,
    %c1_337 = arith.constant 1 : index
    %c4 = arith.constant 4 : index
    %c0_338 = arith.constant 0 : index
    %c0_339 = arith.constant 0 : index
    %c0_340 = arith.constant 0 : index
    %352 = vector.load %arg0[%c1_337, %c4, %c0_338, %c0_339, %c0_340] : memref<2x8x3x2x32xf32, #tpu.memory_space<vmem>>, vector<1x1x1x2x32xf32>
    %353 = vector.shape_cast %352 : vector<1x1x1x2x32xf32> to vector<2x32xf32>
    %c1_341 = arith.constant 1 : index
    %c4_342 = arith.constant 4 : index
    %c1_343 = arith.constant 1 : index
    %c0_344 = arith.constant 0 : index
    %c0_345 = arith.constant 0 : index
    %354 = vector.load %arg0[%c1_341, %c4_342, %c1_343, %c0_344, %c0_345] : memref<2x8x3x2x32xf32, #tpu.memory_space<vmem>>, vector<1x1x1x2x32xf32>
    %355 = vector.shape_cast %354 : vector<1x1x1x2x32xf32> to vector<2x32xf32>
    %c1_346 = arith.constant 1 : index
    %c4_347 = arith.constant 4 : index
    %c2_348 = arith.constant 2 : index
    %c0_349 = arith.constant 0 : index
    %c0_350 = arith.constant 0 : index
    %356 = vector.load %arg0[%c1_346, %c4_347, %c2_348, %c0_349, %c0_350] : memref<2x8x3x2x32xf32, #tpu.memory_space<vmem>>, vector<1x1x1x2x32xf32>
    %357 = vector.shape_cast %356 : vector<1x1x1x2x32xf32> to vector<2x32xf32>
    %c1_351 = arith.constant 1 : index
    %c0_352 = arith.constant 0 : index
    %c0_353 = arith.constant 0 : index
    %c0_354 = arith.constant 0 : index
    %358 = vector.load %arg1[%c1_351, %c0_352, %c0_353, %c0_354] : memref<2x3x32x32xf32, #tpu.memory_space<vmem>>, vector<1x1x32x32xf32>
    %359 = vector.shape_cast %358 : vector<1x1x32x32xf32> to vector<32x32xf32>
    %cst_355 = arith.constant dense<0.000000e+00> : vector<2x32xf32>
    %360 = tpu.matmul %298, %359, %cst_355 {dimension_numbers = #tpu.dot_dimension_numbers<[1], [0], [0], [1], [0, 0, 1, 1], [], []>} : vector<2x32xf32>, vector<32x32xf32>, vector<2x32xf32> -> vector<2x32xf32>
    %c1_356 = arith.constant 1 : index
    %c0_357 = arith.constant 0 : index
    %c0_358 = arith.constant 0 : index
    %c0_359 = arith.constant 0 : index
    %361 = vector.load %arg2[%c1_356, %c0_357, %c0_358, %c0_359] : memref<2x3x1x32xf32, #tpu.memory_space<vmem>>, vector<1x1x1x32xf32>
    %362 = vector.shape_cast %361 : vector<1x1x1x32xf32> to vector<1x32xf32>
    %363 = vector.broadcast %362 : vector<1x32xf32> to vector<2x32xf32>
    %364 = arith.addf %360, %363 : vector<2x32xf32>
    %c1_360 = arith.constant 1 : index
    %c1_361 = arith.constant 1 : index
    %c0_362 = arith.constant 0 : index
    %c0_363 = arith.constant 0 : index
    %365 = vector.load %arg1[%c1_360, %c1_361, %c0_362, %c0_363] : memref<2x3x32x32xf32, #tpu.memory_space<vmem>>, vector<1x1x32x32xf32>
    %366 = vector.shape_cast %365 : vector<1x1x32x32xf32> to vector<32x32xf32>
    %cst_364 = arith.constant dense<0.000000e+00> : vector<2x32xf32>
    %367 = tpu.matmul %298, %366, %cst_364 {dimension_numbers = #tpu.dot_dimension_numbers<[1], [0], [0], [1], [0, 0, 1, 1], [], []>} : vector<2x32xf32>, vector<32x32xf32>, vector<2x32xf32> -> vector<2x32xf32>
    %c1_365 = arith.constant 1 : index
    %c1_366 = arith.constant 1 : index
    %c0_367 = arith.constant 0 : index
    %c0_368 = arith.constant 0 : index
    %368 = vector.load %arg2[%c1_365, %c1_366, %c0_367, %c0_368] : memref<2x3x1x32xf32, #tpu.memory_space<vmem>>, vector<1x1x1x32xf32>
    %369 = vector.shape_cast %368 : vector<1x1x1x32xf32> to vector<1x32xf32>
    %370 = vector.broadcast %369 : vector<1x32xf32> to vector<2x32xf32>
    %371 = arith.addf %367, %370 : vector<2x32xf32>
    %c1_369 = arith.constant 1 : index
    %c2_370 = arith.constant 2 : index
    %c0_371 = arith.constant 0 : index
    %c0_372 = arith.constant 0 : index
    %372 = vector.load %arg1[%c1_369, %c2_370, %c0_371, %c0_372] : memref<2x3x32x32xf32, #tpu.memory_space<vmem>>, vector<1x1x32x32xf32>
    %373 = vector.shape_cast %372 : vector<1x1x32x32xf32> to vector<32x32xf32>
    %cst_373 = arith.constant dense<0.000000e+00> : vector<2x32xf32>
    %374 = tpu.matmul %298, %373, %cst_373 {dimension_numbers = #tpu.dot_dimension_numbers<[1], [0], [0], [1], [0, 0, 1, 1], [], []>} : vector<2x32xf32>, vector<32x32xf32>, vector<2x32xf32> -> vector<2x32xf32>
    %c1_374 = arith.constant 1 : index
    %c2_375 = arith.constant 2 : index
    %c0_376 = arith.constant 0 : index
    %c0_377 = arith.constant 0 : index
    %375 = vector.load %arg2[%c1_374, %c2_375, %c0_376, %c0_377] : memref<2x3x1x32xf32, #tpu.memory_space<vmem>>, vector<1x1x1x32xf32>
    %376 = vector.shape_cast %375 : vector<1x1x1x32xf32> to vector<1x32xf32>
    %377 = vector.broadcast %376 : vector<1x32xf32> to vector<2x32xf32>
    %378 = arith.addf %374, %377 : vector<2x32xf32>
    %379 = arith.addf %353, %364 : vector<2x32xf32>
    %380 = arith.negf %379 : vector<2x32xf32>
    %381 = math.exp %380 : vector<2x32xf32>
    %cst_378 = arith.constant 1.000000e+00 : f32
    %382 = vector.broadcast %cst_378 : f32 to vector<2x32xf32>
    %383 = arith.addf %382, %381 : vector<2x32xf32>
    %384 = arith.divf %382, %383 : vector<2x32xf32>
    %385 = arith.addf %355, %371 : vector<2x32xf32>
    %386 = arith.negf %385 : vector<2x32xf32>
    %387 = math.exp %386 : vector<2x32xf32>
    %cst_379 = arith.constant 1.000000e+00 : f32
    %388 = vector.broadcast %cst_379 : f32 to vector<2x32xf32>
    %389 = arith.addf %388, %387 : vector<2x32xf32>
    %390 = arith.divf %388, %389 : vector<2x32xf32>
    %391 = arith.mulf %384, %378 : vector<2x32xf32>
    %392 = arith.addf %357, %391 : vector<2x32xf32>
    %393 = math.tanh %392 : vector<2x32xf32>
    %cst_380 = arith.constant 1.000000e+00 : f32
    %394 = vector.broadcast %cst_380 : f32 to vector<2x32xf32>
    %395 = arith.subf %394, %390 : vector<2x32xf32>
    %396 = arith.mulf %395, %393 : vector<2x32xf32>
    %397 = arith.mulf %390, %298 : vector<2x32xf32>
    %398 = arith.addf %396, %397 : vector<2x32xf32>
    %c1_381 = arith.constant 1 : index
    %c4_382 = arith.constant 4 : index
    %c0_383 = arith.constant 0 : index
    %c0_384 = arith.constant 0 : index
    %399 = vector.load %arg3[%c1_381, %c4_382, %c0_383, %c0_384] : memref<2x8x2x32xf32, #tpu.memory_space<vmem>>, vector<1x1x2x32xf32>
    %400 = vector.shape_cast %399 : vector<1x1x2x32xf32> to vector<2x32xf32>
    %401 = vector.shape_cast %398 : vector<2x32xf32> to vector<1x1x2x32xf32>
    tpu.vector_store %arg3[%c1_381, %c4_382, %c0_383, %c0_384], %401 {strides = array<i32>} : memref<2x8x2x32xf32, #tpu.memory_space<vmem>>, vector<1x1x2x32xf32>,
    %c0_385 = arith.constant 0 : index
    %c4_386 = arith.constant 4 : index
    %c0_387 = arith.constant 0 : index
    %c0_388 = arith.constant 0 : index
    %c0_389 = arith.constant 0 : index
    %402 = vector.load %arg0[%c0_385, %c4_386, %c0_387, %c0_388, %c0_389] : memref<2x8x3x2x32xf32, #tpu.memory_space<vmem>>, vector<1x1x1x2x32xf32>
    %403 = vector.shape_cast %402 : vector<1x1x1x2x32xf32> to vector<2x32xf32>
    %c0_390 = arith.constant 0 : index
    %c4_391 = arith.constant 4 : index
    %c1_392 = arith.constant 1 : index
    %c0_393 = arith.constant 0 : index
    %c0_394 = arith.constant 0 : index
    %404 = vector.load %arg0[%c0_390, %c4_391, %c1_392, %c0_393, %c0_394] : memref<2x8x3x2x32xf32, #tpu.memory_space<vmem>>, vector<1x1x1x2x32xf32>
    %405 = vector.shape_cast %404 : vector<1x1x1x2x32xf32> to vector<2x32xf32>
    %c0_395 = arith.constant 0 : index
    %c4_396 = arith.constant 4 : index
    %c2_397 = arith.constant 2 : index
    %c0_398 = arith.constant 0 : index
    %c0_399 = arith.constant 0 : index
    %406 = vector.load %arg0[%c0_395, %c4_396, %c2_397, %c0_398, %c0_399] : memref<2x8x3x2x32xf32, #tpu.memory_space<vmem>>, vector<1x1x1x2x32xf32>
    %407 = vector.shape_cast %406 : vector<1x1x1x2x32xf32> to vector<2x32xf32>
    %c0_400 = arith.constant 0 : index
    %c0_401 = arith.constant 0 : index
    %c0_402 = arith.constant 0 : index
    %c0_403 = arith.constant 0 : index
    %408 = vector.load %arg1[%c0_400, %c0_401, %c0_402, %c0_403] : memref<2x3x32x32xf32, #tpu.memory_space<vmem>>, vector<1x1x32x32xf32>
    %409 = vector.shape_cast %408 : vector<1x1x32x32xf32> to vector<32x32xf32>
    %cst_404 = arith.constant dense<0.000000e+00> : vector<2x32xf32>
    %410 = tpu.matmul %348, %409, %cst_404 {dimension_numbers = #tpu.dot_dimension_numbers<[1], [0], [0], [1], [0, 0, 1, 1], [], []>} : vector<2x32xf32>, vector<32x32xf32>, vector<2x32xf32> -> vector<2x32xf32>
    %c0_405 = arith.constant 0 : index
    %c0_406 = arith.constant 0 : index
    %c0_407 = arith.constant 0 : index
    %c0_408 = arith.constant 0 : index
    %411 = vector.load %arg2[%c0_405, %c0_406, %c0_407, %c0_408] : memref<2x3x1x32xf32, #tpu.memory_space<vmem>>, vector<1x1x1x32xf32>
    %412 = vector.shape_cast %411 : vector<1x1x1x32xf32> to vector<1x32xf32>
    %413 = vector.broadcast %412 : vector<1x32xf32> to vector<2x32xf32>
    %414 = arith.addf %410, %413 : vector<2x32xf32>
    %c0_409 = arith.constant 0 : index
    %c1_410 = arith.constant 1 : index
    %c0_411 = arith.constant 0 : index
    %c0_412 = arith.constant 0 : index
    %415 = vector.load %arg1[%c0_409, %c1_410, %c0_411, %c0_412] : memref<2x3x32x32xf32, #tpu.memory_space<vmem>>, vector<1x1x32x32xf32>
    %416 = vector.shape_cast %415 : vector<1x1x32x32xf32> to vector<32x32xf32>
    %cst_413 = arith.constant dense<0.000000e+00> : vector<2x32xf32>
    %417 = tpu.matmul %348, %416, %cst_413 {dimension_numbers = #tpu.dot_dimension_numbers<[1], [0], [0], [1], [0, 0, 1, 1], [], []>} : vector<2x32xf32>, vector<32x32xf32>, vector<2x32xf32> -> vector<2x32xf32>
    %c0_414 = arith.constant 0 : index
    %c1_415 = arith.constant 1 : index
    %c0_416 = arith.constant 0 : index
    %c0_417 = arith.constant 0 : index
    %418 = vector.load %arg2[%c0_414, %c1_415, %c0_416, %c0_417] : memref<2x3x1x32xf32, #tpu.memory_space<vmem>>, vector<1x1x1x32xf32>
    %419 = vector.shape_cast %418 : vector<1x1x1x32xf32> to vector<1x32xf32>
    %420 = vector.broadcast %419 : vector<1x32xf32> to vector<2x32xf32>
    %421 = arith.addf %417, %420 : vector<2x32xf32>
    %c0_418 = arith.constant 0 : index
    %c2_419 = arith.constant 2 : index
    %c0_420 = arith.constant 0 : index
    %c0_421 = arith.constant 0 : index
    %422 = vector.load %arg1[%c0_418, %c2_419, %c0_420, %c0_421] : memref<2x3x32x32xf32, #tpu.memory_space<vmem>>, vector<1x1x32x32xf32>
    %423 = vector.shape_cast %422 : vector<1x1x32x32xf32> to vector<32x32xf32>
    %cst_422 = arith.constant dense<0.000000e+00> : vector<2x32xf32>
    %424 = tpu.matmul %348, %423, %cst_422 {dimension_numbers = #tpu.dot_dimension_numbers<[1], [0], [0], [1], [0, 0, 1, 1], [], []>} : vector<2x32xf32>, vector<32x32xf32>, vector<2x32xf32> -> vector<2x32xf32>
    %c0_423 = arith.constant 0 : index
    %c2_424 = arith.constant 2 : index
    %c0_425 = arith.constant 0 : index
    %c0_426 = arith.constant 0 : index
    %425 = vector.load %arg2[%c0_423, %c2_424, %c0_425, %c0_426] : memref<2x3x1x32xf32, #tpu.memory_space<vmem>>, vector<1x1x1x32xf32>
    %426 = vector.shape_cast %425 : vector<1x1x1x32xf32> to vector<1x32xf32>
    %427 = vector.broadcast %426 : vector<1x32xf32> to vector<2x32xf32>
    %428 = arith.addf %424, %427 : vector<2x32xf32>
    %429 = arith.addf %403, %414 : vector<2x32xf32>
    %430 = arith.negf %429 : vector<2x32xf32>
    %431 = math.exp %430 : vector<2x32xf32>
    %cst_427 = arith.constant 1.000000e+00 : f32
    %432 = vector.broadcast %cst_427 : f32 to vector<2x32xf32>
    %433 = arith.addf %432, %431 : vector<2x32xf32>
    %434 = arith.divf %432, %433 : vector<2x32xf32>
    %435 = arith.addf %405, %421 : vector<2x32xf32>
    %436 = arith.negf %435 : vector<2x32xf32>
    %437 = math.exp %436 : vector<2x32xf32>
    %cst_428 = arith.constant 1.000000e+00 : f32
    %438 = vector.broadcast %cst_428 : f32 to vector<2x32xf32>
    %439 = arith.addf %438, %437 : vector<2x32xf32>
    %440 = arith.divf %438, %439 : vector<2x32xf32>
    %441 = arith.mulf %434, %428 : vector<2x32xf32>
    %442 = arith.addf %407, %441 : vector<2x32xf32>
    %443 = math.tanh %442 : vector<2x32xf32>
    %cst_429 = arith.constant 1.000000e+00 : f32
    %444 = vector.broadcast %cst_429 : f32 to vector<2x32xf32>
    %445 = arith.subf %444, %440 : vector<2x32xf32>
    %446 = arith.mulf %445, %443 : vector<2x32xf32>
    %447 = arith.mulf %440, %348 : vector<2x32xf32>
    %448 = arith.addf %446, %447 : vector<2x32xf32>
    %c0_430 = arith.constant 0 : index
    %c4_431 = arith.constant 4 : index
    %c0_432 = arith.constant 0 : index
    %c0_433 = arith.constant 0 : index
    %449 = vector.load %arg3[%c0_430, %c4_431, %c0_432, %c0_433] : memref<2x8x2x32xf32, #tpu.memory_space<vmem>>, vector<1x1x2x32xf32>
    %450 = vector.shape_cast %449 : vector<1x1x2x32xf32> to vector<2x32xf32>
    %451 = vector.shape_cast %448 : vector<2x32xf32> to vector<1x1x2x32xf32>
    tpu.vector_store %arg3[%c0_430, %c4_431, %c0_432, %c0_433], %451 {strides = array<i32>} : memref<2x8x2x32xf32, #tpu.memory_space<vmem>>, vector<1x1x2x32xf32>,
    %c1_434 = arith.constant 1 : index
    %c3_435 = arith.constant 3 : index
    %c0_436 = arith.constant 0 : index
    %c0_437 = arith.constant 0 : index
    %c0_438 = arith.constant 0 : index
    %452 = vector.load %arg0[%c1_434, %c3_435, %c0_436, %c0_437, %c0_438] : memref<2x8x3x2x32xf32, #tpu.memory_space<vmem>>, vector<1x1x1x2x32xf32>
    %453 = vector.shape_cast %452 : vector<1x1x1x2x32xf32> to vector<2x32xf32>
    %c1_439 = arith.constant 1 : index
    %c3_440 = arith.constant 3 : index
    %c1_441 = arith.constant 1 : index
    %c0_442 = arith.constant 0 : index
    %c0_443 = arith.constant 0 : index
    %454 = vector.load %arg0[%c1_439, %c3_440, %c1_441, %c0_442, %c0_443] : memref<2x8x3x2x32xf32, #tpu.memory_space<vmem>>, vector<1x1x1x2x32xf32>
    %455 = vector.shape_cast %454 : vector<1x1x1x2x32xf32> to vector<2x32xf32>
    %c1_444 = arith.constant 1 : index
    %c3_445 = arith.constant 3 : index
    %c2_446 = arith.constant 2 : index
    %c0_447 = arith.constant 0 : index
    %c0_448 = arith.constant 0 : index
    %456 = vector.load %arg0[%c1_444, %c3_445, %c2_446, %c0_447, %c0_448] : memref<2x8x3x2x32xf32, #tpu.memory_space<vmem>>, vector<1x1x1x2x32xf32>
    %457 = vector.shape_cast %456 : vector<1x1x1x2x32xf32> to vector<2x32xf32>
    %c1_449 = arith.constant 1 : index
    %c0_450 = arith.constant 0 : index
    %c0_451 = arith.constant 0 : index
    %c0_452 = arith.constant 0 : index
    %458 = vector.load %arg1[%c1_449, %c0_450, %c0_451, %c0_452] : memref<2x3x32x32xf32, #tpu.memory_space<vmem>>, vector<1x1x32x32xf32>
    %459 = vector.shape_cast %458 : vector<1x1x32x32xf32> to vector<32x32xf32>
    %cst_453 = arith.constant dense<0.000000e+00> : vector<2x32xf32>
    %460 = tpu.matmul %398, %459, %cst_453 {dimension_numbers = #tpu.dot_dimension_numbers<[1], [0], [0], [1], [0, 0, 1, 1], [], []>} : vector<2x32xf32>, vector<32x32xf32>, vector<2x32xf32> -> vector<2x32xf32>
    %c1_454 = arith.constant 1 : index
    %c0_455 = arith.constant 0 : index
    %c0_456 = arith.constant 0 : index
    %c0_457 = arith.constant 0 : index
    %461 = vector.load %arg2[%c1_454, %c0_455, %c0_456, %c0_457] : memref<2x3x1x32xf32, #tpu.memory_space<vmem>>, vector<1x1x1x32xf32>
    %462 = vector.shape_cast %461 : vector<1x1x1x32xf32> to vector<1x32xf32>
    %463 = vector.broadcast %462 : vector<1x32xf32> to vector<2x32xf32>
    %464 = arith.addf %460, %463 : vector<2x32xf32>
    %c1_458 = arith.constant 1 : index
    %c1_459 = arith.constant 1 : index
    %c0_460 = arith.constant 0 : index
    %c0_461 = arith.constant 0 : index
    %465 = vector.load %arg1[%c1_458, %c1_459, %c0_460, %c0_461] : memref<2x3x32x32xf32, #tpu.memory_space<vmem>>, vector<1x1x32x32xf32>
    %466 = vector.shape_cast %465 : vector<1x1x32x32xf32> to vector<32x32xf32>
    %cst_462 = arith.constant dense<0.000000e+00> : vector<2x32xf32>
    %467 = tpu.matmul %398, %466, %cst_462 {dimension_numbers = #tpu.dot_dimension_numbers<[1], [0], [0], [1], [0, 0, 1, 1], [], []>} : vector<2x32xf32>, vector<32x32xf32>, vector<2x32xf32> -> vector<2x32xf32>
    %c1_463 = arith.constant 1 : index
    %c1_464 = arith.constant 1 : index
    %c0_465 = arith.constant 0 : index
    %c0_466 = arith.constant 0 : index
    %468 = vector.load %arg2[%c1_463, %c1_464, %c0_465, %c0_466] : memref<2x3x1x32xf32, #tpu.memory_space<vmem>>, vector<1x1x1x32xf32>
    %469 = vector.shape_cast %468 : vector<1x1x1x32xf32> to vector<1x32xf32>
    %470 = vector.broadcast %469 : vector<1x32xf32> to vector<2x32xf32>
    %471 = arith.addf %467, %470 : vector<2x32xf32>
    %c1_467 = arith.constant 1 : index
    %c2_468 = arith.constant 2 : index
    %c0_469 = arith.constant 0 : index
    %c0_470 = arith.constant 0 : index
    %472 = vector.load %arg1[%c1_467, %c2_468, %c0_469, %c0_470] : memref<2x3x32x32xf32, #tpu.memory_space<vmem>>, vector<1x1x32x32xf32>
    %473 = vector.shape_cast %472 : vector<1x1x32x32xf32> to vector<32x32xf32>
    %cst_471 = arith.constant dense<0.000000e+00> : vector<2x32xf32>
    %474 = tpu.matmul %398, %473, %cst_471 {dimension_numbers = #tpu.dot_dimension_numbers<[1], [0], [0], [1], [0, 0, 1, 1], [], []>} : vector<2x32xf32>, vector<32x32xf32>, vector<2x32xf32> -> vector<2x32xf32>
    %c1_472 = arith.constant 1 : index
    %c2_473 = arith.constant 2 : index
    %c0_474 = arith.constant 0 : index
    %c0_475 = arith.constant 0 : index
    %475 = vector.load %arg2[%c1_472, %c2_473, %c0_474, %c0_475] : memref<2x3x1x32xf32, #tpu.memory_space<vmem>>, vector<1x1x1x32xf32>
    %476 = vector.shape_cast %475 : vector<1x1x1x32xf32> to vector<1x32xf32>
    %477 = vector.broadcast %476 : vector<1x32xf32> to vector<2x32xf32>
    %478 = arith.addf %474, %477 : vector<2x32xf32>
    %479 = arith.addf %453, %464 : vector<2x32xf32>
    %480 = arith.negf %479 : vector<2x32xf32>
    %481 = math.exp %480 : vector<2x32xf32>
    %cst_476 = arith.constant 1.000000e+00 : f32
    %482 = vector.broadcast %cst_476 : f32 to vector<2x32xf32>
    %483 = arith.addf %482, %481 : vector<2x32xf32>
    %484 = arith.divf %482, %483 : vector<2x32xf32>
    %485 = arith.addf %455, %471 : vector<2x32xf32>
    %486 = arith.negf %485 : vector<2x32xf32>
    %487 = math.exp %486 : vector<2x32xf32>
    %cst_477 = arith.constant 1.000000e+00 : f32
    %488 = vector.broadcast %cst_477 : f32 to vector<2x32xf32>
    %489 = arith.addf %488, %487 : vector<2x32xf32>
    %490 = arith.divf %488, %489 : vector<2x32xf32>
    %491 = arith.mulf %484, %478 : vector<2x32xf32>
    %492 = arith.addf %457, %491 : vector<2x32xf32>
    %493 = math.tanh %492 : vector<2x32xf32>
    %cst_478 = arith.constant 1.000000e+00 : f32
    %494 = vector.broadcast %cst_478 : f32 to vector<2x32xf32>
    %495 = arith.subf %494, %490 : vector<2x32xf32>
    %496 = arith.mulf %495, %493 : vector<2x32xf32>
    %497 = arith.mulf %490, %398 : vector<2x32xf32>
    %498 = arith.addf %496, %497 : vector<2x32xf32>
    %c1_479 = arith.constant 1 : index
    %c3_480 = arith.constant 3 : index
    %c0_481 = arith.constant 0 : index
    %c0_482 = arith.constant 0 : index
    %499 = vector.load %arg3[%c1_479, %c3_480, %c0_481, %c0_482] : memref<2x8x2x32xf32, #tpu.memory_space<vmem>>, vector<1x1x2x32xf32>
    %500 = vector.shape_cast %499 : vector<1x1x2x32xf32> to vector<2x32xf32>
    %501 = vector.shape_cast %498 : vector<2x32xf32> to vector<1x1x2x32xf32>
    tpu.vector_store %arg3[%c1_479, %c3_480, %c0_481, %c0_482], %501 {strides = array<i32>} : memref<2x8x2x32xf32, #tpu.memory_space<vmem>>, vector<1x1x2x32xf32>,
    %c0_483 = arith.constant 0 : index
    %c5_484 = arith.constant 5 : index
    %c0_485 = arith.constant 0 : index
    %c0_486 = arith.constant 0 : index
    %c0_487 = arith.constant 0 : index
    %502 = vector.load %arg0[%c0_483, %c5_484, %c0_485, %c0_486, %c0_487] : memref<2x8x3x2x32xf32, #tpu.memory_space<vmem>>, vector<1x1x1x2x32xf32>
    %503 = vector.shape_cast %502 : vector<1x1x1x2x32xf32> to vector<2x32xf32>
    %c0_488 = arith.constant 0 : index
    %c5_489 = arith.constant 5 : index
    %c1_490 = arith.constant 1 : index
    %c0_491 = arith.constant 0 : index
    %c0_492 = arith.constant 0 : index
    %504 = vector.load %arg0[%c0_488, %c5_489, %c1_490, %c0_491, %c0_492] : memref<2x8x3x2x32xf32, #tpu.memory_space<vmem>>, vector<1x1x1x2x32xf32>
    %505 = vector.shape_cast %504 : vector<1x1x1x2x32xf32> to vector<2x32xf32>
    %c0_493 = arith.constant 0 : index
    %c5_494 = arith.constant 5 : index
    %c2_495 = arith.constant 2 : index
    %c0_496 = arith.constant 0 : index
    %c0_497 = arith.constant 0 : index
    %506 = vector.load %arg0[%c0_493, %c5_494, %c2_495, %c0_496, %c0_497] : memref<2x8x3x2x32xf32, #tpu.memory_space<vmem>>, vector<1x1x1x2x32xf32>
    %507 = vector.shape_cast %506 : vector<1x1x1x2x32xf32> to vector<2x32xf32>
    %c0_498 = arith.constant 0 : index
    %c0_499 = arith.constant 0 : index
    %c0_500 = arith.constant 0 : index
    %c0_501 = arith.constant 0 : index
    %508 = vector.load %arg1[%c0_498, %c0_499, %c0_500, %c0_501] : memref<2x3x32x32xf32, #tpu.memory_space<vmem>>, vector<1x1x32x32xf32>
    %509 = vector.shape_cast %508 : vector<1x1x32x32xf32> to vector<32x32xf32>
    %cst_502 = arith.constant dense<0.000000e+00> : vector<2x32xf32>
    %510 = tpu.matmul %448, %509, %cst_502 {dimension_numbers = #tpu.dot_dimension_numbers<[1], [0], [0], [1], [0, 0, 1, 1], [], []>} : vector<2x32xf32>, vector<32x32xf32>, vector<2x32xf32> -> vector<2x32xf32>
    %c0_503 = arith.constant 0 : index
    %c0_504 = arith.constant 0 : index
    %c0_505 = arith.constant 0 : index
    %c0_506 = arith.constant 0 : index
    %511 = vector.load %arg2[%c0_503, %c0_504, %c0_505, %c0_506] : memref<2x3x1x32xf32, #tpu.memory_space<vmem>>, vector<1x1x1x32xf32>
    %512 = vector.shape_cast %511 : vector<1x1x1x32xf32> to vector<1x32xf32>
    %513 = vector.broadcast %512 : vector<1x32xf32> to vector<2x32xf32>
    %514 = arith.addf %510, %513 : vector<2x32xf32>
    %c0_507 = arith.constant 0 : index
    %c1_508 = arith.constant 1 : index
    %c0_509 = arith.constant 0 : index
    %c0_510 = arith.constant 0 : index
    %515 = vector.load %arg1[%c0_507, %c1_508, %c0_509, %c0_510] : memref<2x3x32x32xf32, #tpu.memory_space<vmem>>, vector<1x1x32x32xf32>
    %516 = vector.shape_cast %515 : vector<1x1x32x32xf32> to vector<32x32xf32>
    %cst_511 = arith.constant dense<0.000000e+00> : vector<2x32xf32>
    %517 = tpu.matmul %448, %516, %cst_511 {dimension_numbers = #tpu.dot_dimension_numbers<[1], [0], [0], [1], [0, 0, 1, 1], [], []>} : vector<2x32xf32>, vector<32x32xf32>, vector<2x32xf32> -> vector<2x32xf32>
    %c0_512 = arith.constant 0 : index
    %c1_513 = arith.constant 1 : index
    %c0_514 = arith.constant 0 : index
    %c0_515 = arith.constant 0 : index
    %518 = vector.load %arg2[%c0_512, %c1_513, %c0_514, %c0_515] : memref<2x3x1x32xf32, #tpu.memory_space<vmem>>, vector<1x1x1x32xf32>
    %519 = vector.shape_cast %518 : vector<1x1x1x32xf32> to vector<1x32xf32>
    %520 = vector.broadcast %519 : vector<1x32xf32> to vector<2x32xf32>
    %521 = arith.addf %517, %520 : vector<2x32xf32>
    %c0_516 = arith.constant 0 : index
    %c2_517 = arith.constant 2 : index
    %c0_518 = arith.constant 0 : index
    %c0_519 = arith.constant 0 : index
    %522 = vector.load %arg1[%c0_516, %c2_517, %c0_518, %c0_519] : memref<2x3x32x32xf32, #tpu.memory_space<vmem>>, vector<1x1x32x32xf32>
    %523 = vector.shape_cast %522 : vector<1x1x32x32xf32> to vector<32x32xf32>
    %cst_520 = arith.constant dense<0.000000e+00> : vector<2x32xf32>
    %524 = tpu.matmul %448, %523, %cst_520 {dimension_numbers = #tpu.dot_dimension_numbers<[1], [0], [0], [1], [0, 0, 1, 1], [], []>} : vector<2x32xf32>, vector<32x32xf32>, vector<2x32xf32> -> vector<2x32xf32>
    %c0_521 = arith.constant 0 : index
    %c2_522 = arith.constant 2 : index
    %c0_523 = arith.constant 0 : index
    %c0_524 = arith.constant 0 : index
    %525 = vector.load %arg2[%c0_521, %c2_522, %c0_523, %c0_524] : memref<2x3x1x32xf32, #tpu.memory_space<vmem>>, vector<1x1x1x32xf32>
    %526 = vector.shape_cast %525 : vector<1x1x1x32xf32> to vector<1x32xf32>
    %527 = vector.broadcast %526 : vector<1x32xf32> to vector<2x32xf32>
    %528 = arith.addf %524, %527 : vector<2x32xf32>
    %529 = arith.addf %503, %514 : vector<2x32xf32>
    %530 = arith.negf %529 : vector<2x32xf32>
    %531 = math.exp %530 : vector<2x32xf32>
    %cst_525 = arith.constant 1.000000e+00 : f32
    %532 = vector.broadcast %cst_525 : f32 to vector<2x32xf32>
    %533 = arith.addf %532, %531 : vector<2x32xf32>
    %534 = arith.divf %532, %533 : vector<2x32xf32>
    %535 = arith.addf %505, %521 : vector<2x32xf32>
    %536 = arith.negf %535 : vector<2x32xf32>
    %537 = math.exp %536 : vector<2x32xf32>
    %cst_526 = arith.constant 1.000000e+00 : f32
    %538 = vector.broadcast %cst_526 : f32 to vector<2x32xf32>
    %539 = arith.addf %538, %537 : vector<2x32xf32>
    %540 = arith.divf %538, %539 : vector<2x32xf32>
    %541 = arith.mulf %534, %528 : vector<2x32xf32>
    %542 = arith.addf %507, %541 : vector<2x32xf32>
    %543 = math.tanh %542 : vector<2x32xf32>
    %cst_527 = arith.constant 1.000000e+00 : f32
    %544 = vector.broadcast %cst_527 : f32 to vector<2x32xf32>
    %545 = arith.subf %544, %540 : vector<2x32xf32>
    %546 = arith.mulf %545, %543 : vector<2x32xf32>
    %547 = arith.mulf %540, %448 : vector<2x32xf32>
    %548 = arith.addf %546, %547 : vector<2x32xf32>
    %c0_528 = arith.constant 0 : index
    %c5_529 = arith.constant 5 : index
    %c0_530 = arith.constant 0 : index
    %c0_531 = arith.constant 0 : index
    %549 = vector.load %arg3[%c0_528, %c5_529, %c0_530, %c0_531] : memref<2x8x2x32xf32, #tpu.memory_space<vmem>>, vector<1x1x2x32xf32>
    %550 = vector.shape_cast %549 : vector<1x1x2x32xf32> to vector<2x32xf32>
    %551 = vector.shape_cast %548 : vector<2x32xf32> to vector<1x1x2x32xf32>
    tpu.vector_store %arg3[%c0_528, %c5_529, %c0_530, %c0_531], %551 {strides = array<i32>} : memref<2x8x2x32xf32, #tpu.memory_space<vmem>>, vector<1x1x2x32xf32>,
    %c1_532 = arith.constant 1 : index
    %c2_533 = arith.constant 2 : index
    %c0_534 = arith.constant 0 : index
    %c0_535 = arith.constant 0 : index
    %c0_536 = arith.constant 0 : index
    %552 = vector.load %arg0[%c1_532, %c2_533, %c0_534, %c0_535, %c0_536] : memref<2x8x3x2x32xf32, #tpu.memory_space<vmem>>, vector<1x1x1x2x32xf32>
    %553 = vector.shape_cast %552 : vector<1x1x1x2x32xf32> to vector<2x32xf32>
    %c1_537 = arith.constant 1 : index
    %c2_538 = arith.constant 2 : index
    %c1_539 = arith.constant 1 : index
    %c0_540 = arith.constant 0 : index
    %c0_541 = arith.constant 0 : index
    %554 = vector.load %arg0[%c1_537, %c2_538, %c1_539, %c0_540, %c0_541] : memref<2x8x3x2x32xf32, #tpu.memory_space<vmem>>, vector<1x1x1x2x32xf32>
    %555 = vector.shape_cast %554 : vector<1x1x1x2x32xf32> to vector<2x32xf32>
    %c1_542 = arith.constant 1 : index
    %c2_543 = arith.constant 2 : index
    %c2_544 = arith.constant 2 : index
    %c0_545 = arith.constant 0 : index
    %c0_546 = arith.constant 0 : index
    %556 = vector.load %arg0[%c1_542, %c2_543, %c2_544, %c0_545, %c0_546] : memref<2x8x3x2x32xf32, #tpu.memory_space<vmem>>, vector<1x1x1x2x32xf32>
    %557 = vector.shape_cast %556 : vector<1x1x1x2x32xf32> to vector<2x32xf32>
    %c1_547 = arith.constant 1 : index
    %c0_548 = arith.constant 0 : index
    %c0_549 = arith.constant 0 : index
    %c0_550 = arith.constant 0 : index
    %558 = vector.load %arg1[%c1_547, %c0_548, %c0_549, %c0_550] : memref<2x3x32x32xf32, #tpu.memory_space<vmem>>, vector<1x1x32x32xf32>
    %559 = vector.shape_cast %558 : vector<1x1x32x32xf32> to vector<32x32xf32>
    %cst_551 = arith.constant dense<0.000000e+00> : vector<2x32xf32>
    %560 = tpu.matmul %498, %559, %cst_551 {dimension_numbers = #tpu.dot_dimension_numbers<[1], [0], [0], [1], [0, 0, 1, 1], [], []>} : vector<2x32xf32>, vector<32x32xf32>, vector<2x32xf32> -> vector<2x32xf32>
    %c1_552 = arith.constant 1 : index
    %c0_553 = arith.constant 0 : index
    %c0_554 = arith.constant 0 : index
    %c0_555 = arith.constant 0 : index
    %561 = vector.load %arg2[%c1_552, %c0_553, %c0_554, %c0_555] : memref<2x3x1x32xf32, #tpu.memory_space<vmem>>, vector<1x1x1x32xf32>
    %562 = vector.shape_cast %561 : vector<1x1x1x32xf32> to vector<1x32xf32>
    %563 = vector.broadcast %562 : vector<1x32xf32> to vector<2x32xf32>
    %564 = arith.addf %560, %563 : vector<2x32xf32>
    %c1_556 = arith.constant 1 : index
    %c1_557 = arith.constant 1 : index
    %c0_558 = arith.constant 0 : index
    %c0_559 = arith.constant 0 : index
    %565 = vector.load %arg1[%c1_556, %c1_557, %c0_558, %c0_559] : memref<2x3x32x32xf32, #tpu.memory_space<vmem>>, vector<1x1x32x32xf32>
    %566 = vector.shape_cast %565 : vector<1x1x32x32xf32> to vector<32x32xf32>
    %cst_560 = arith.constant dense<0.000000e+00> : vector<2x32xf32>
    %567 = tpu.matmul %498, %566, %cst_560 {dimension_numbers = #tpu.dot_dimension_numbers<[1], [0], [0], [1], [0, 0, 1, 1], [], []>} : vector<2x32xf32>, vector<32x32xf32>, vector<2x32xf32> -> vector<2x32xf32>
    %c1_561 = arith.constant 1 : index
    %c1_562 = arith.constant 1 : index
    %c0_563 = arith.constant 0 : index
    %c0_564 = arith.constant 0 : index
    %568 = vector.load %arg2[%c1_561, %c1_562, %c0_563, %c0_564] : memref<2x3x1x32xf32, #tpu.memory_space<vmem>>, vector<1x1x1x32xf32>
    %569 = vector.shape_cast %568 : vector<1x1x1x32xf32> to vector<1x32xf32>
    %570 = vector.broadcast %569 : vector<1x32xf32> to vector<2x32xf32>
    %571 = arith.addf %567, %570 : vector<2x32xf32>
    %c1_565 = arith.constant 1 : index
    %c2_566 = arith.constant 2 : index
    %c0_567 = arith.constant 0 : index
    %c0_568 = arith.constant 0 : index
    %572 = vector.load %arg1[%c1_565, %c2_566, %c0_567, %c0_568] : memref<2x3x32x32xf32, #tpu.memory_space<vmem>>, vector<1x1x32x32xf32>
    %573 = vector.shape_cast %572 : vector<1x1x32x32xf32> to vector<32x32xf32>
    %cst_569 = arith.constant dense<0.000000e+00> : vector<2x32xf32>
    %574 = tpu.matmul %498, %573, %cst_569 {dimension_numbers = #tpu.dot_dimension_numbers<[1], [0], [0], [1], [0, 0, 1, 1], [], []>} : vector<2x32xf32>, vector<32x32xf32>, vector<2x32xf32> -> vector<2x32xf32>
    %c1_570 = arith.constant 1 : index
    %c2_571 = arith.constant 2 : index
    %c0_572 = arith.constant 0 : index
    %c0_573 = arith.constant 0 : index
    %575 = vector.load %arg2[%c1_570, %c2_571, %c0_572, %c0_573] : memref<2x3x1x32xf32, #tpu.memory_space<vmem>>, vector<1x1x1x32xf32>
    %576 = vector.shape_cast %575 : vector<1x1x1x32xf32> to vector<1x32xf32>
    %577 = vector.broadcast %576 : vector<1x32xf32> to vector<2x32xf32>
    %578 = arith.addf %574, %577 : vector<2x32xf32>
    %579 = arith.addf %553, %564 : vector<2x32xf32>
    %580 = arith.negf %579 : vector<2x32xf32>
    %581 = math.exp %580 : vector<2x32xf32>
    %cst_574 = arith.constant 1.000000e+00 : f32
    %582 = vector.broadcast %cst_574 : f32 to vector<2x32xf32>
    %583 = arith.addf %582, %581 : vector<2x32xf32>
    %584 = arith.divf %582, %583 : vector<2x32xf32>
    %585 = arith.addf %555, %571 : vector<2x32xf32>
    %586 = arith.negf %585 : vector<2x32xf32>
    %587 = math.exp %586 : vector<2x32xf32>
    %cst_575 = arith.constant 1.000000e+00 : f32
    %588 = vector.broadcast %cst_575 : f32 to vector<2x32xf32>
    %589 = arith.addf %588, %587 : vector<2x32xf32>
    %590 = arith.divf %588, %589 : vector<2x32xf32>
    %591 = arith.mulf %584, %578 : vector<2x32xf32>
    %592 = arith.addf %557, %591 : vector<2x32xf32>
    %593 = math.tanh %592 : vector<2x32xf32>
    %cst_576 = arith.constant 1.000000e+00 : f32
    %594 = vector.broadcast %cst_576 : f32 to vector<2x32xf32>
    %595 = arith.subf %594, %590 : vector<2x32xf32>
    %596 = arith.mulf %595, %593 : vector<2x32xf32>
    %597 = arith.mulf %590, %498 : vector<2x32xf32>
    %598 = arith.addf %596, %597 : vector<2x32xf32>
    %c1_577 = arith.constant 1 : index
    %c2_578 = arith.constant 2 : index
    %c0_579 = arith.constant 0 : index
    %c0_580 = arith.constant 0 : index
    %599 = vector.load %arg3[%c1_577, %c2_578, %c0_579, %c0_580] : memref<2x8x2x32xf32, #tpu.memory_space<vmem>>, vector<1x1x2x32xf32>
    %600 = vector.shape_cast %599 : vector<1x1x2x32xf32> to vector<2x32xf32>
    %601 = vector.shape_cast %598 : vector<2x32xf32> to vector<1x1x2x32xf32>
    tpu.vector_store %arg3[%c1_577, %c2_578, %c0_579, %c0_580], %601 {strides = array<i32>} : memref<2x8x2x32xf32, #tpu.memory_space<vmem>>, vector<1x1x2x32xf32>,
    %c0_581 = arith.constant 0 : index
    %c6_582 = arith.constant 6 : index
    %c0_583 = arith.constant 0 : index
    %c0_584 = arith.constant 0 : index
    %c0_585 = arith.constant 0 : index
    %602 = vector.load %arg0[%c0_581, %c6_582, %c0_583, %c0_584, %c0_585] : memref<2x8x3x2x32xf32, #tpu.memory_space<vmem>>, vector<1x1x1x2x32xf32>
    %603 = vector.shape_cast %602 : vector<1x1x1x2x32xf32> to vector<2x32xf32>
    %c0_586 = arith.constant 0 : index
    %c6_587 = arith.constant 6 : index
    %c1_588 = arith.constant 1 : index
    %c0_589 = arith.constant 0 : index
    %c0_590 = arith.constant 0 : index
    %604 = vector.load %arg0[%c0_586, %c6_587, %c1_588, %c0_589, %c0_590] : memref<2x8x3x2x32xf32, #tpu.memory_space<vmem>>, vector<1x1x1x2x32xf32>
    %605 = vector.shape_cast %604 : vector<1x1x1x2x32xf32> to vector<2x32xf32>
    %c0_591 = arith.constant 0 : index
    %c6_592 = arith.constant 6 : index
    %c2_593 = arith.constant 2 : index
    %c0_594 = arith.constant 0 : index
    %c0_595 = arith.constant 0 : index
    %606 = vector.load %arg0[%c0_591, %c6_592, %c2_593, %c0_594, %c0_595] : memref<2x8x3x2x32xf32, #tpu.memory_space<vmem>>, vector<1x1x1x2x32xf32>
    %607 = vector.shape_cast %606 : vector<1x1x1x2x32xf32> to vector<2x32xf32>
    %c0_596 = arith.constant 0 : index
    %c0_597 = arith.constant 0 : index
    %c0_598 = arith.constant 0 : index
    %c0_599 = arith.constant 0 : index
    %608 = vector.load %arg1[%c0_596, %c0_597, %c0_598, %c0_599] : memref<2x3x32x32xf32, #tpu.memory_space<vmem>>, vector<1x1x32x32xf32>
    %609 = vector.shape_cast %608 : vector<1x1x32x32xf32> to vector<32x32xf32>
    %cst_600 = arith.constant dense<0.000000e+00> : vector<2x32xf32>
    %610 = tpu.matmul %548, %609, %cst_600 {dimension_numbers = #tpu.dot_dimension_numbers<[1], [0], [0], [1], [0, 0, 1, 1], [], []>} : vector<2x32xf32>, vector<32x32xf32>, vector<2x32xf32> -> vector<2x32xf32>
    %c0_601 = arith.constant 0 : index
    %c0_602 = arith.constant 0 : index
    %c0_603 = arith.constant 0 : index
    %c0_604 = arith.constant 0 : index
    %611 = vector.load %arg2[%c0_601, %c0_602, %c0_603, %c0_604] : memref<2x3x1x32xf32, #tpu.memory_space<vmem>>, vector<1x1x1x32xf32>
    %612 = vector.shape_cast %611 : vector<1x1x1x32xf32> to vector<1x32xf32>
    %613 = vector.broadcast %612 : vector<1x32xf32> to vector<2x32xf32>
    %614 = arith.addf %610, %613 : vector<2x32xf32>
    %c0_605 = arith.constant 0 : index
    %c1_606 = arith.constant 1 : index
    %c0_607 = arith.constant 0 : index
    %c0_608 = arith.constant 0 : index
    %615 = vector.load %arg1[%c0_605, %c1_606, %c0_607, %c0_608] : memref<2x3x32x32xf32, #tpu.memory_space<vmem>>, vector<1x1x32x32xf32>
    %616 = vector.shape_cast %615 : vector<1x1x32x32xf32> to vector<32x32xf32>
    %cst_609 = arith.constant dense<0.000000e+00> : vector<2x32xf32>
    %617 = tpu.matmul %548, %616, %cst_609 {dimension_numbers = #tpu.dot_dimension_numbers<[1], [0], [0], [1], [0, 0, 1, 1], [], []>} : vector<2x32xf32>, vector<32x32xf32>, vector<2x32xf32> -> vector<2x32xf32>
    %c0_610 = arith.constant 0 : index
    %c1_611 = arith.constant 1 : index
    %c0_612 = arith.constant 0 : index
    %c0_613 = arith.constant 0 : index
    %618 = vector.load %arg2[%c0_610, %c1_611, %c0_612, %c0_613] : memref<2x3x1x32xf32, #tpu.memory_space<vmem>>, vector<1x1x1x32xf32>
    %619 = vector.shape_cast %618 : vector<1x1x1x32xf32> to vector<1x32xf32>
    %620 = vector.broadcast %619 : vector<1x32xf32> to vector<2x32xf32>
    %621 = arith.addf %617, %620 : vector<2x32xf32>
    %c0_614 = arith.constant 0 : index
    %c2_615 = arith.constant 2 : index
    %c0_616 = arith.constant 0 : index
    %c0_617 = arith.constant 0 : index
    %622 = vector.load %arg1[%c0_614, %c2_615, %c0_616, %c0_617] : memref<2x3x32x32xf32, #tpu.memory_space<vmem>>, vector<1x1x32x32xf32>
    %623 = vector.shape_cast %622 : vector<1x1x32x32xf32> to vector<32x32xf32>
    %cst_618 = arith.constant dense<0.000000e+00> : vector<2x32xf32>
    %624 = tpu.matmul %548, %623, %cst_618 {dimension_numbers = #tpu.dot_dimension_numbers<[1], [0], [0], [1], [0, 0, 1, 1], [], []>} : vector<2x32xf32>, vector<32x32xf32>, vector<2x32xf32> -> vector<2x32xf32>
    %c0_619 = arith.constant 0 : index
    %c2_620 = arith.constant 2 : index
    %c0_621 = arith.constant 0 : index
    %c0_622 = arith.constant 0 : index
    %625 = vector.load %arg2[%c0_619, %c2_620, %c0_621, %c0_622] : memref<2x3x1x32xf32, #tpu.memory_space<vmem>>, vector<1x1x1x32xf32>
    %626 = vector.shape_cast %625 : vector<1x1x1x32xf32> to vector<1x32xf32>
    %627 = vector.broadcast %626 : vector<1x32xf32> to vector<2x32xf32>
    %628 = arith.addf %624, %627 : vector<2x32xf32>
    %629 = arith.addf %603, %614 : vector<2x32xf32>
    %630 = arith.negf %629 : vector<2x32xf32>
    %631 = math.exp %630 : vector<2x32xf32>
    %cst_623 = arith.constant 1.000000e+00 : f32
    %632 = vector.broadcast %cst_623 : f32 to vector<2x32xf32>
    %633 = arith.addf %632, %631 : vector<2x32xf32>
    %634 = arith.divf %632, %633 : vector<2x32xf32>
    %635 = arith.addf %605, %621 : vector<2x32xf32>
    %636 = arith.negf %635 : vector<2x32xf32>
    %637 = math.exp %636 : vector<2x32xf32>
    %cst_624 = arith.constant 1.000000e+00 : f32
    %638 = vector.broadcast %cst_624 : f32 to vector<2x32xf32>
    %639 = arith.addf %638, %637 : vector<2x32xf32>
    %640 = arith.divf %638, %639 : vector<2x32xf32>
    %641 = arith.mulf %634, %628 : vector<2x32xf32>
    %642 = arith.addf %607, %641 : vector<2x32xf32>
    %643 = math.tanh %642 : vector<2x32xf32>
    %cst_625 = arith.constant 1.000000e+00 : f32
    %644 = vector.broadcast %cst_625 : f32 to vector<2x32xf32>
    %645 = arith.subf %644, %640 : vector<2x32xf32>
    %646 = arith.mulf %645, %643 : vector<2x32xf32>
    %647 = arith.mulf %640, %548 : vector<2x32xf32>
    %648 = arith.addf %646, %647 : vector<2x32xf32>
    %c0_626 = arith.constant 0 : index
    %c6_627 = arith.constant 6 : index
    %c0_628 = arith.constant 0 : index
    %c0_629 = arith.constant 0 : index
    %649 = vector.load %arg3[%c0_626, %c6_627, %c0_628, %c0_629] : memref<2x8x2x32xf32, #tpu.memory_space<vmem>>, vector<1x1x2x32xf32>
    %650 = vector.shape_cast %649 : vector<1x1x2x32xf32> to vector<2x32xf32>
    %651 = vector.shape_cast %648 : vector<2x32xf32> to vector<1x1x2x32xf32>
    tpu.vector_store %arg3[%c0_626, %c6_627, %c0_628, %c0_629], %651 {strides = array<i32>} : memref<2x8x2x32xf32, #tpu.memory_space<vmem>>, vector<1x1x2x32xf32>,
    %c1_630 = arith.constant 1 : index
    %c1_631 = arith.constant 1 : index
    %c0_632 = arith.constant 0 : index
    %c0_633 = arith.constant 0 : index
    %c0_634 = arith.constant 0 : index
    %652 = vector.load %arg0[%c1_630, %c1_631, %c0_632, %c0_633, %c0_634] : memref<2x8x3x2x32xf32, #tpu.memory_space<vmem>>, vector<1x1x1x2x32xf32>
    %653 = vector.shape_cast %652 : vector<1x1x1x2x32xf32> to vector<2x32xf32>
    %c1_635 = arith.constant 1 : index
    %c1_636 = arith.constant 1 : index
    %c1_637 = arith.constant 1 : index
    %c0_638 = arith.constant 0 : index
    %c0_639 = arith.constant 0 : index
    %654 = vector.load %arg0[%c1_635, %c1_636, %c1_637, %c0_638, %c0_639] : memref<2x8x3x2x32xf32, #tpu.memory_space<vmem>>, vector<1x1x1x2x32xf32>
    %655 = vector.shape_cast %654 : vector<1x1x1x2x32xf32> to vector<2x32xf32>
    %c1_640 = arith.constant 1 : index
    %c1_641 = arith.constant 1 : index
    %c2_642 = arith.constant 2 : index
    %c0_643 = arith.constant 0 : index
    %c0_644 = arith.constant 0 : index
    %656 = vector.load %arg0[%c1_640, %c1_641, %c2_642, %c0_643, %c0_644] : memref<2x8x3x2x32xf32, #tpu.memory_space<vmem>>, vector<1x1x1x2x32xf32>
    %657 = vector.shape_cast %656 : vector<1x1x1x2x32xf32> to vector<2x32xf32>
    %c1_645 = arith.constant 1 : index
    %c0_646 = arith.constant 0 : index
    %c0_647 = arith.constant 0 : index
    %c0_648 = arith.constant 0 : index
    %658 = vector.load %arg1[%c1_645, %c0_646, %c0_647, %c0_648] : memref<2x3x32x32xf32, #tpu.memory_space<vmem>>, vector<1x1x32x32xf32>
    %659 = vector.shape_cast %658 : vector<1x1x32x32xf32> to vector<32x32xf32>
    %cst_649 = arith.constant dense<0.000000e+00> : vector<2x32xf32>
    %660 = tpu.matmul %598, %659, %cst_649 {dimension_numbers = #tpu.dot_dimension_numbers<[1], [0], [0], [1], [0, 0, 1, 1], [], []>} : vector<2x32xf32>, vector<32x32xf32>, vector<2x32xf32> -> vector<2x32xf32>
    %c1_650 = arith.constant 1 : index
    %c0_651 = arith.constant 0 : index
    %c0_652 = arith.constant 0 : index
    %c0_653 = arith.constant 0 : index
    %661 = vector.load %arg2[%c1_650, %c0_651, %c0_652, %c0_653] : memref<2x3x1x32xf32, #tpu.memory_space<vmem>>, vector<1x1x1x32xf32>
    %662 = vector.shape_cast %661 : vector<1x1x1x32xf32> to vector<1x32xf32>
    %663 = vector.broadcast %662 : vector<1x32xf32> to vector<2x32xf32>
    %664 = arith.addf %660, %663 : vector<2x32xf32>
    %c1_654 = arith.constant 1 : index
    %c1_655 = arith.constant 1 : index
    %c0_656 = arith.constant 0 : index
    %c0_657 = arith.constant 0 : index
    %665 = vector.load %arg1[%c1_654, %c1_655, %c0_656, %c0_657] : memref<2x3x32x32xf32, #tpu.memory_space<vmem>>, vector<1x1x32x32xf32>
    %666 = vector.shape_cast %665 : vector<1x1x32x32xf32> to vector<32x32xf32>
    %cst_658 = arith.constant dense<0.000000e+00> : vector<2x32xf32>
    %667 = tpu.matmul %598, %666, %cst_658 {dimension_numbers = #tpu.dot_dimension_numbers<[1], [0], [0], [1], [0, 0, 1, 1], [], []>} : vector<2x32xf32>, vector<32x32xf32>, vector<2x32xf32> -> vector<2x32xf32>
    %c1_659 = arith.constant 1 : index
    %c1_660 = arith.constant 1 : index
    %c0_661 = arith.constant 0 : index
    %c0_662 = arith.constant 0 : index
    %668 = vector.load %arg2[%c1_659, %c1_660, %c0_661, %c0_662] : memref<2x3x1x32xf32, #tpu.memory_space<vmem>>, vector<1x1x1x32xf32>
    %669 = vector.shape_cast %668 : vector<1x1x1x32xf32> to vector<1x32xf32>
    %670 = vector.broadcast %669 : vector<1x32xf32> to vector<2x32xf32>
    %671 = arith.addf %667, %670 : vector<2x32xf32>
    %c1_663 = arith.constant 1 : index
    %c2_664 = arith.constant 2 : index
    %c0_665 = arith.constant 0 : index
    %c0_666 = arith.constant 0 : index
    %672 = vector.load %arg1[%c1_663, %c2_664, %c0_665, %c0_666] : memref<2x3x32x32xf32, #tpu.memory_space<vmem>>, vector<1x1x32x32xf32>
    %673 = vector.shape_cast %672 : vector<1x1x32x32xf32> to vector<32x32xf32>
    %cst_667 = arith.constant dense<0.000000e+00> : vector<2x32xf32>
    %674 = tpu.matmul %598, %673, %cst_667 {dimension_numbers = #tpu.dot_dimension_numbers<[1], [0], [0], [1], [0, 0, 1, 1], [], []>} : vector<2x32xf32>, vector<32x32xf32>, vector<2x32xf32> -> vector<2x32xf32>
    %c1_668 = arith.constant 1 : index
    %c2_669 = arith.constant 2 : index
    %c0_670 = arith.constant 0 : index
    %c0_671 = arith.constant 0 : index
    %675 = vector.load %arg2[%c1_668, %c2_669, %c0_670, %c0_671] : memref<2x3x1x32xf32, #tpu.memory_space<vmem>>, vector<1x1x1x32xf32>
    %676 = vector.shape_cast %675 : vector<1x1x1x32xf32> to vector<1x32xf32>
    %677 = vector.broadcast %676 : vector<1x32xf32> to vector<2x32xf32>
    %678 = arith.addf %674, %677 : vector<2x32xf32>
    %679 = arith.addf %653, %664 : vector<2x32xf32>
    %680 = arith.negf %679 : vector<2x32xf32>
    %681 = math.exp %680 : vector<2x32xf32>
    %cst_672 = arith.constant 1.000000e+00 : f32
    %682 = vector.broadcast %cst_672 : f32 to vector<2x32xf32>
    %683 = arith.addf %682, %681 : vector<2x32xf32>
    %684 = arith.divf %682, %683 : vector<2x32xf32>
    %685 = arith.addf %655, %671 : vector<2x32xf32>
    %686 = arith.negf %685 : vector<2x32xf32>
    %687 = math.exp %686 : vector<2x32xf32>
    %cst_673 = arith.constant 1.000000e+00 : f32
    %688 = vector.broadcast %cst_673 : f32 to vector<2x32xf32>
    %689 = arith.addf %688, %687 : vector<2x32xf32>
    %690 = arith.divf %688, %689 : vector<2x32xf32>
    %691 = arith.mulf %684, %678 : vector<2x32xf32>
    %692 = arith.addf %657, %691 : vector<2x32xf32>
    %693 = math.tanh %692 : vector<2x32xf32>
    %cst_674 = arith.constant 1.000000e+00 : f32
    %694 = vector.broadcast %cst_674 : f32 to vector<2x32xf32>
    %695 = arith.subf %694, %690 : vector<2x32xf32>
    %696 = arith.mulf %695, %693 : vector<2x32xf32>
    %697 = arith.mulf %690, %598 : vector<2x32xf32>
    %698 = arith.addf %696, %697 : vector<2x32xf32>
    %c1_675 = arith.constant 1 : index
    %c1_676 = arith.constant 1 : index
    %c0_677 = arith.constant 0 : index
    %c0_678 = arith.constant 0 : index
    %699 = vector.load %arg3[%c1_675, %c1_676, %c0_677, %c0_678] : memref<2x8x2x32xf32, #tpu.memory_space<vmem>>, vector<1x1x2x32xf32>
    %700 = vector.shape_cast %699 : vector<1x1x2x32xf32> to vector<2x32xf32>
    %701 = vector.shape_cast %698 : vector<2x32xf32> to vector<1x1x2x32xf32>
    tpu.vector_store %arg3[%c1_675, %c1_676, %c0_677, %c0_678], %701 {strides = array<i32>} : memref<2x8x2x32xf32, #tpu.memory_space<vmem>>, vector<1x1x2x32xf32>,
    %c0_679 = arith.constant 0 : index
    %c7_680 = arith.constant 7 : index
    %c0_681 = arith.constant 0 : index
    %c0_682 = arith.constant 0 : index
    %c0_683 = arith.constant 0 : index
    %702 = vector.load %arg0[%c0_679, %c7_680, %c0_681, %c0_682, %c0_683] : memref<2x8x3x2x32xf32, #tpu.memory_space<vmem>>, vector<1x1x1x2x32xf32>
    %703 = vector.shape_cast %702 : vector<1x1x1x2x32xf32> to vector<2x32xf32>
    %c0_684 = arith.constant 0 : index
    %c7_685 = arith.constant 7 : index
    %c1_686 = arith.constant 1 : index
    %c0_687 = arith.constant 0 : index
    %c0_688 = arith.constant 0 : index
    %704 = vector.load %arg0[%c0_684, %c7_685, %c1_686, %c0_687, %c0_688] : memref<2x8x3x2x32xf32, #tpu.memory_space<vmem>>, vector<1x1x1x2x32xf32>
    %705 = vector.shape_cast %704 : vector<1x1x1x2x32xf32> to vector<2x32xf32>
    %c0_689 = arith.constant 0 : index
    %c7_690 = arith.constant 7 : index
    %c2_691 = arith.constant 2 : index
    %c0_692 = arith.constant 0 : index
    %c0_693 = arith.constant 0 : index
    %706 = vector.load %arg0[%c0_689, %c7_690, %c2_691, %c0_692, %c0_693] : memref<2x8x3x2x32xf32, #tpu.memory_space<vmem>>, vector<1x1x1x2x32xf32>
    %707 = vector.shape_cast %706 : vector<1x1x1x2x32xf32> to vector<2x32xf32>
    %c0_694 = arith.constant 0 : index
    %c0_695 = arith.constant 0 : index
    %c0_696 = arith.constant 0 : index
    %c0_697 = arith.constant 0 : index
    %708 = vector.load %arg1[%c0_694, %c0_695, %c0_696, %c0_697] : memref<2x3x32x32xf32, #tpu.memory_space<vmem>>, vector<1x1x32x32xf32>
    %709 = vector.shape_cast %708 : vector<1x1x32x32xf32> to vector<32x32xf32>
    %cst_698 = arith.constant dense<0.000000e+00> : vector<2x32xf32>
    %710 = tpu.matmul %648, %709, %cst_698 {dimension_numbers = #tpu.dot_dimension_numbers<[1], [0], [0], [1], [0, 0, 1, 1], [], []>} : vector<2x32xf32>, vector<32x32xf32>, vector<2x32xf32> -> vector<2x32xf32>
    %c0_699 = arith.constant 0 : index
    %c0_700 = arith.constant 0 : index
    %c0_701 = arith.constant 0 : index
    %c0_702 = arith.constant 0 : index
    %711 = vector.load %arg2[%c0_699, %c0_700, %c0_701, %c0_702] : memref<2x3x1x32xf32, #tpu.memory_space<vmem>>, vector<1x1x1x32xf32>
    %712 = vector.shape_cast %711 : vector<1x1x1x32xf32> to vector<1x32xf32>
    %713 = vector.broadcast %712 : vector<1x32xf32> to vector<2x32xf32>
    %714 = arith.addf %710, %713 : vector<2x32xf32>
    %c0_703 = arith.constant 0 : index
    %c1_704 = arith.constant 1 : index
    %c0_705 = arith.constant 0 : index
    %c0_706 = arith.constant 0 : index
    %715 = vector.load %arg1[%c0_703, %c1_704, %c0_705, %c0_706] : memref<2x3x32x32xf32, #tpu.memory_space<vmem>>, vector<1x1x32x32xf32>
    %716 = vector.shape_cast %715 : vector<1x1x32x32xf32> to vector<32x32xf32>
    %cst_707 = arith.constant dense<0.000000e+00> : vector<2x32xf32>
    %717 = tpu.matmul %648, %716, %cst_707 {dimension_numbers = #tpu.dot_dimension_numbers<[1], [0], [0], [1], [0, 0, 1, 1], [], []>} : vector<2x32xf32>, vector<32x32xf32>, vector<2x32xf32> -> vector<2x32xf32>
    %c0_708 = arith.constant 0 : index
    %c1_709 = arith.constant 1 : index
    %c0_710 = arith.constant 0 : index
    %c0_711 = arith.constant 0 : index
    %718 = vector.load %arg2[%c0_708, %c1_709, %c0_710, %c0_711] : memref<2x3x1x32xf32, #tpu.memory_space<vmem>>, vector<1x1x1x32xf32>
    %719 = vector.shape_cast %718 : vector<1x1x1x32xf32> to vector<1x32xf32>
    %720 = vector.broadcast %719 : vector<1x32xf32> to vector<2x32xf32>
    %721 = arith.addf %717, %720 : vector<2x32xf32>
    %c0_712 = arith.constant 0 : index
    %c2_713 = arith.constant 2 : index
    %c0_714 = arith.constant 0 : index
    %c0_715 = arith.constant 0 : index
    %722 = vector.load %arg1[%c0_712, %c2_713, %c0_714, %c0_715] : memref<2x3x32x32xf32, #tpu.memory_space<vmem>>, vector<1x1x32x32xf32>
    %723 = vector.shape_cast %722 : vector<1x1x32x32xf32> to vector<32x32xf32>
    %cst_716 = arith.constant dense<0.000000e+00> : vector<2x32xf32>
    %724 = tpu.matmul %648, %723, %cst_716 {dimension_numbers = #tpu.dot_dimension_numbers<[1], [0], [0], [1], [0, 0, 1, 1], [], []>} : vector<2x32xf32>, vector<32x32xf32>, vector<2x32xf32> -> vector<2x32xf32>
    %c0_717 = arith.constant 0 : index
    %c2_718 = arith.constant 2 : index
    %c0_719 = arith.constant 0 : index
    %c0_720 = arith.constant 0 : index
    %725 = vector.load %arg2[%c0_717, %c2_718, %c0_719, %c0_720] : memref<2x3x1x32xf32, #tpu.memory_space<vmem>>, vector<1x1x1x32xf32>
    %726 = vector.shape_cast %725 : vector<1x1x1x32xf32> to vector<1x32xf32>
    %727 = vector.broadcast %726 : vector<1x32xf32> to vector<2x32xf32>
    %728 = arith.addf %724, %727 : vector<2x32xf32>
    %729 = arith.addf %703, %714 : vector<2x32xf32>
    %730 = arith.negf %729 : vector<2x32xf32>
    %731 = math.exp %730 : vector<2x32xf32>
    %cst_721 = arith.constant 1.000000e+00 : f32
    %732 = vector.broadcast %cst_721 : f32 to vector<2x32xf32>
    %733 = arith.addf %732, %731 : vector<2x32xf32>
    %734 = arith.divf %732, %733 : vector<2x32xf32>
    %735 = arith.addf %705, %721 : vector<2x32xf32>
    %736 = arith.negf %735 : vector<2x32xf32>
    %737 = math.exp %736 : vector<2x32xf32>
    %cst_722 = arith.constant 1.000000e+00 : f32
    %738 = vector.broadcast %cst_722 : f32 to vector<2x32xf32>
    %739 = arith.addf %738, %737 : vector<2x32xf32>
    %740 = arith.divf %738, %739 : vector<2x32xf32>
    %741 = arith.mulf %734, %728 : vector<2x32xf32>
    %742 = arith.addf %707, %741 : vector<2x32xf32>
    %743 = math.tanh %742 : vector<2x32xf32>
    %cst_723 = arith.constant 1.000000e+00 : f32
    %744 = vector.broadcast %cst_723 : f32 to vector<2x32xf32>
    %745 = arith.subf %744, %740 : vector<2x32xf32>
    %746 = arith.mulf %745, %743 : vector<2x32xf32>
    %747 = arith.mulf %740, %648 : vector<2x32xf32>
    %748 = arith.addf %746, %747 : vector<2x32xf32>
    %c0_724 = arith.constant 0 : index
    %c7_725 = arith.constant 7 : index
    %c0_726 = arith.constant 0 : index
    %c0_727 = arith.constant 0 : index
    %749 = vector.load %arg3[%c0_724, %c7_725, %c0_726, %c0_727] : memref<2x8x2x32xf32, #tpu.memory_space<vmem>>, vector<1x1x2x32xf32>
    %750 = vector.shape_cast %749 : vector<1x1x2x32xf32> to vector<2x32xf32>
    %751 = vector.shape_cast %748 : vector<2x32xf32> to vector<1x1x2x32xf32>
    tpu.vector_store %arg3[%c0_724, %c7_725, %c0_726, %c0_727], %751 {strides = array<i32>} : memref<2x8x2x32xf32, #tpu.memory_space<vmem>>, vector<1x1x2x32xf32>,
    %c1_728 = arith.constant 1 : index
    %c0_729 = arith.constant 0 : index
    %c0_730 = arith.constant 0 : index
    %c0_731 = arith.constant 0 : index
    %c0_732 = arith.constant 0 : index
    %752 = vector.load %arg0[%c1_728, %c0_729, %c0_730, %c0_731, %c0_732] : memref<2x8x3x2x32xf32, #tpu.memory_space<vmem>>, vector<1x1x1x2x32xf32>
    %753 = vector.shape_cast %752 : vector<1x1x1x2x32xf32> to vector<2x32xf32>
    %c1_733 = arith.constant 1 : index
    %c0_734 = arith.constant 0 : index
    %c1_735 = arith.constant 1 : index
    %c0_736 = arith.constant 0 : index
    %c0_737 = arith.constant 0 : index
    %754 = vector.load %arg0[%c1_733, %c0_734, %c1_735, %c0_736, %c0_737] : memref<2x8x3x2x32xf32, #tpu.memory_space<vmem>>, vector<1x1x1x2x32xf32>
    %755 = vector.shape_cast %754 : vector<1x1x1x2x32xf32> to vector<2x32xf32>
    %c1_738 = arith.constant 1 : index
    %c0_739 = arith.constant 0 : index
    %c2_740 = arith.constant 2 : index
    %c0_741 = arith.constant 0 : index
    %c0_742 = arith.constant 0 : index
    %756 = vector.load %arg0[%c1_738, %c0_739, %c2_740, %c0_741, %c0_742] : memref<2x8x3x2x32xf32, #tpu.memory_space<vmem>>, vector<1x1x1x2x32xf32>
    %757 = vector.shape_cast %756 : vector<1x1x1x2x32xf32> to vector<2x32xf32>
    %c1_743 = arith.constant 1 : index
    %c0_744 = arith.constant 0 : index
    %c0_745 = arith.constant 0 : index
    %c0_746 = arith.constant 0 : index
    %758 = vector.load %arg1[%c1_743, %c0_744, %c0_745, %c0_746] : memref<2x3x32x32xf32, #tpu.memory_space<vmem>>, vector<1x1x32x32xf32>
    %759 = vector.shape_cast %758 : vector<1x1x32x32xf32> to vector<32x32xf32>
    %cst_747 = arith.constant dense<0.000000e+00> : vector<2x32xf32>
    %760 = tpu.matmul %698, %759, %cst_747 {dimension_numbers = #tpu.dot_dimension_numbers<[1], [0], [0], [1], [0, 0, 1, 1], [], []>} : vector<2x32xf32>, vector<32x32xf32>, vector<2x32xf32> -> vector<2x32xf32>
    %c1_748 = arith.constant 1 : index
    %c0_749 = arith.constant 0 : index
    %c0_750 = arith.constant 0 : index
    %c0_751 = arith.constant 0 : index
    %761 = vector.load %arg2[%c1_748, %c0_749, %c0_750, %c0_751] : memref<2x3x1x32xf32, #tpu.memory_space<vmem>>, vector<1x1x1x32xf32>
    %762 = vector.shape_cast %761 : vector<1x1x1x32xf32> to vector<1x32xf32>
    %763 = vector.broadcast %762 : vector<1x32xf32> to vector<2x32xf32>
    %764 = arith.addf %760, %763 : vector<2x32xf32>
    %c1_752 = arith.constant 1 : index
    %c1_753 = arith.constant 1 : index
    %c0_754 = arith.constant 0 : index
    %c0_755 = arith.constant 0 : index
    %765 = vector.load %arg1[%c1_752, %c1_753, %c0_754, %c0_755] : memref<2x3x32x32xf32, #tpu.memory_space<vmem>>, vector<1x1x32x32xf32>
    %766 = vector.shape_cast %765 : vector<1x1x32x32xf32> to vector<32x32xf32>
    %cst_756 = arith.constant dense<0.000000e+00> : vector<2x32xf32>
    %767 = tpu.matmul %698, %766, %cst_756 {dimension_numbers = #tpu.dot_dimension_numbers<[1], [0], [0], [1], [0, 0, 1, 1], [], []>} : vector<2x32xf32>, vector<32x32xf32>, vector<2x32xf32> -> vector<2x32xf32>
    %c1_757 = arith.constant 1 : index
    %c1_758 = arith.constant 1 : index
    %c0_759 = arith.constant 0 : index
    %c0_760 = arith.constant 0 : index
    %768 = vector.load %arg2[%c1_757, %c1_758, %c0_759, %c0_760] : memref<2x3x1x32xf32, #tpu.memory_space<vmem>>, vector<1x1x1x32xf32>
    %769 = vector.shape_cast %768 : vector<1x1x1x32xf32> to vector<1x32xf32>
    %770 = vector.broadcast %769 : vector<1x32xf32> to vector<2x32xf32>
    %771 = arith.addf %767, %770 : vector<2x32xf32>
    %c1_761 = arith.constant 1 : index
    %c2_762 = arith.constant 2 : index
    %c0_763 = arith.constant 0 : index
    %c0_764 = arith.constant 0 : index
    %772 = vector.load %arg1[%c1_761, %c2_762, %c0_763, %c0_764] : memref<2x3x32x32xf32, #tpu.memory_space<vmem>>, vector<1x1x32x32xf32>
    %773 = vector.shape_cast %772 : vector<1x1x32x32xf32> to vector<32x32xf32>
    %cst_765 = arith.constant dense<0.000000e+00> : vector<2x32xf32>
    %774 = tpu.matmul %698, %773, %cst_765 {dimension_numbers = #tpu.dot_dimension_numbers<[1], [0], [0], [1], [0, 0, 1, 1], [], []>} : vector<2x32xf32>, vector<32x32xf32>, vector<2x32xf32> -> vector<2x32xf32>
    %c1_766 = arith.constant 1 : index
    %c2_767 = arith.constant 2 : index
    %c0_768 = arith.constant 0 : index
    %c0_769 = arith.constant 0 : index
    %775 = vector.load %arg2[%c1_766, %c2_767, %c0_768, %c0_769] : memref<2x3x1x32xf32, #tpu.memory_space<vmem>>, vector<1x1x1x32xf32>
    %776 = vector.shape_cast %775 : vector<1x1x1x32xf32> to vector<1x32xf32>
    %777 = vector.broadcast %776 : vector<1x32xf32> to vector<2x32xf32>
    %778 = arith.addf %774, %777 : vector<2x32xf32>
    %779 = arith.addf %753, %764 : vector<2x32xf32>
    %780 = arith.negf %779 : vector<2x32xf32>
    %781 = math.exp %780 : vector<2x32xf32>
    %cst_770 = arith.constant 1.000000e+00 : f32
    %782 = vector.broadcast %cst_770 : f32 to vector<2x32xf32>
    %783 = arith.addf %782, %781 : vector<2x32xf32>
    %784 = arith.divf %782, %783 : vector<2x32xf32>
    %785 = arith.addf %755, %771 : vector<2x32xf32>
    %786 = arith.negf %785 : vector<2x32xf32>
    %787 = math.exp %786 : vector<2x32xf32>
    %cst_771 = arith.constant 1.000000e+00 : f32
    %788 = vector.broadcast %cst_771 : f32 to vector<2x32xf32>
    %789 = arith.addf %788, %787 : vector<2x32xf32>
    %790 = arith.divf %788, %789 : vector<2x32xf32>
    %791 = arith.mulf %784, %778 : vector<2x32xf32>
    %792 = arith.addf %757, %791 : vector<2x32xf32>
    %793 = math.tanh %792 : vector<2x32xf32>
    %cst_772 = arith.constant 1.000000e+00 : f32
    %794 = vector.broadcast %cst_772 : f32 to vector<2x32xf32>
    %795 = arith.subf %794, %790 : vector<2x32xf32>
    %796 = arith.mulf %795, %793 : vector<2x32xf32>
    %797 = arith.mulf %790, %698 : vector<2x32xf32>
    %798 = arith.addf %796, %797 : vector<2x32xf32>
    %c1_773 = arith.constant 1 : index
    %c0_774 = arith.constant 0 : index
    %c0_775 = arith.constant 0 : index
    %c0_776 = arith.constant 0 : index
    %799 = vector.load %arg3[%c1_773, %c0_774, %c0_775, %c0_776] : memref<2x8x2x32xf32, #tpu.memory_space<vmem>>, vector<1x1x2x32xf32>
    %800 = vector.shape_cast %799 : vector<1x1x2x32xf32> to vector<2x32xf32>
    %801 = vector.shape_cast %798 : vector<2x32xf32> to vector<1x1x2x32xf32>
    tpu.vector_store %arg3[%c1_773, %c0_774, %c0_775, %c0_776], %801 {strides = array<i32>} : memref<2x8x2x32xf32, #tpu.memory_space<vmem>>, vector<1x1x2x32xf32>,
    return
  }
}

</mosaic_0001>

<llo_original>
// kernel: tpu_custom_call.1
$region0: #{tpu_custom_call.1}
  #allocation0 [shape = 'u32[]', space=smem, size = 0x4, offset = 0x4, fixed_abs, tag = 'smem constant byte address 0x4 - core index']
  #allocation1 [shape = 'u32[144,128]{1,0:T(1,128)}', space=vmem, size = 0x12000, scoped, tag = 'internal scratch']
  %s0 = inlined_call_operand.hbm [shape: f32[2,8,3,2,32], index: 0, kind: input, shape index: {}]
  %s1 = inlined_call_operand.hbm [shape: f32[2,3,32,32], index: 1, kind: input, shape index: {}]
  %s2 = inlined_call_operand.hbm [shape: f32[2,3,1,32], index: 2, kind: input, shape index: {}]
  %s3 = inlined_call_operand.hbm [shape: f32[2,8,2,32], index: 3, kind: output, shape index: {}]
  %s4 = sld [smem:[#allocation0]]
  $region34: #{tpu_custom_call.1} parent=0
    _
  %s6 = ssub.s32 1, %s4
  %s7 = scalar_select 0, %s6, %s4
  $region1: #{tpu_custom_call.1} parent=0
    #allocation2 [shape = 'u8[49152]{0}', space=vmem, size = 0xc000, scoped, tag = 'input window, operand 0, single buffered']
    #allocation3 [shape = 's32[1]{0}', space=sflag, size = 0x4, scoped, tag = 'scoped memory for tpu_custom_call.1']
    #allocation4 [shape = 's32[1]{0}', space=sflag, size = 0x4, scoped, tag = 'scoped memory for tpu_custom_call.1']
    #allocation5 [shape = 'u8[98304]{0}', space=vmem, size = 0x18000, scoped, tag = 'input window, operand 1, single buffered']
    #allocation6 [shape = 's32[1]{0}', space=sflag, size = 0x4, scoped, tag = 'scoped memory for tpu_custom_call.1']
    #allocation7 [shape = 'u8[3072]{0}', space=vmem, size = 0xc00, scoped, tag = 'input window, operand 2, single buffered']
    #allocation8 [shape = 'u8[16384]{0}', space=vmem, size = 0x4000, scoped, tag = 'output window, operand 0, single buffered']
    %8 = vsyncpa [#allocation3], 0
    %9 = vsyncpa [#allocation6], 0
    %10 = vsyncpa [#allocation4], 0
    // Predicated region
    $region2: #{tpu_custom_call.1} parent=1 // pred_check
      _
    $region3: #{tpu_custom_call.1} parent=1 // pred_check_branch
      %12 = sbr.rel (0) target = $region5
    $region4: #{tpu_custom_call.1} parent=1 // pred_region
      %s14 = ssub.s32 1536, 1536
      %15 = vsyncadd [#allocation3], %s14
      %s16 = sshll.u32 [#allocation2], 4
      %s17 = int_to_ptr.vmem [resolvable:$true] %s16
      %22 = dma.hbm_to_vmem [thread:$0]  %s0, 1536, %s17, [#allocation3], 32, 32, 2
    $region5: #{tpu_custom_call.1} parent=1 // pred_fallthru
      _
    // Predicated region
    $region6: #{tpu_custom_call.1} parent=1 // pred_check
      _
    $region7: #{tpu_custom_call.1} parent=1 // pred_check_branch
      %24 = sbr.rel (0) target = $region9
    $region8: #{tpu_custom_call.1} parent=1 // pred_region
      %s26 = ssub.s32 3072, 3072
      %27 = vsyncadd [#allocation6], %s26
      %s28 = sshll.u32 [#allocation5], 4
      %s29 = int_to_ptr.vmem [resolvable:$true] %s28
      %34 = dma.hbm_to_vmem [thread:$0]  %s1, 3072, %s29, [#allocation6], 128, 128, 8
    $region9: #{tpu_custom_call.1} parent=1 // pred_fallthru
      _
    // Predicated region
    $region10: #{tpu_custom_call.1} parent=1 // pred_check
      _
    $region11: #{tpu_custom_call.1} parent=1 // pred_check_branch
      %36 = sbr.rel (0) target = $region13
    $region12: #{tpu_custom_call.1} parent=1 // pred_region
      %s38 = ssub.s32 96, 96
      %39 = vsyncadd [#allocation6], %s38
      %s40 = sshll.u32 [#allocation7], 4
      %s41 = int_to_ptr.vmem [resolvable:$true] %s40
      %46 = dma.hbm_to_vmem [thread:$0]  %s2, 96, %s41, [#allocation6], 16, 16, 1
    $region13: #{tpu_custom_call.1} parent=1 // pred_fallthru
      _
    // Predicated region
    $region14: #{tpu_custom_call.1} parent=1 // pred_check
      _
    $region15: #{tpu_custom_call.1} parent=1 // pred_check_branch
      %48 = sbr.rel (0) target = $region17
    $region16: #{tpu_custom_call.1} parent=1 // pred_region
      %49 = dma.done [#allocation3], 1536
    $region17: #{tpu_custom_call.1} parent=1 // pred_fallthru
      _
    // Predicated region
    $region18: #{tpu_custom_call.1} parent=1 // pred_check
      _
    $region19: #{tpu_custom_call.1} parent=1 // pred_check_branch
      %51 = sbr.rel (0) target = $region21
    $region20: #{tpu_custom_call.1} parent=1 // pred_region
      %52 = dma.done [#allocation6], 3072
    $region21: #{tpu_custom_call.1} parent=1 // pred_fallthru
      _
    // Predicated region
    $region22: #{tpu_custom_call.1} parent=1 // pred_check
      _
    $region23: #{tpu_custom_call.1} parent=1 // pred_check_branch
      %54 = sbr.rel (0) target = $region25
    $region24: #{tpu_custom_call.1} parent=1 // pred_region
      %55 = dma.done [#allocation6], 96
    $region25: #{tpu_custom_call.1} parent=1 // pred_fallthru
      _
    %v56 = vld [vmem:[#allocation2] sm:$0x3]
    %s57 = scalar_lea.vmem [#allocation2], 2
    %v58 = vld [vmem:[%s57] sm:$0x3]
    %s59 = scalar_lea.vmem [#allocation2], 4
    %v60 = vld [vmem:[%s59] sm:$0x3]
    %v61 = vld [vmem:[#allocation5] sm:$0xff]
    %v62 = vld [vmem:[#allocation5 + $0x8] sm:$0xff]
    %v63 = vld [vmem:[#allocation5 + $0x10] sm:$0xff]
    %v64 = vld [vmem:[#allocation5 + $0x18] sm:$0xff]
    %v65 = vld [vmem:[#allocation7] sm:$0x1]
    %v67 = vlaneseq
    %v68 = vshrl.u32 %v67, 7
    %v69 = vsub.s32 0, %v68
    %v70 = vrot.slane %v65, %v69
    %vm72 = vcmask 261120
    %v74 = vsel %vm72, 0.0, 0
    %76 = vmatprep.subr.mxu0 0.0
    %77 = vmatpush1.msra.mxu0 0.0
    %78 = vmatprep.subr.mxu0 0.0
    %79 = vmatpush1.msra.mxu0 0.0
    %80 = vmatprep.subr.mxu0 0.0
    %81 = vmatpush1.msra.mxu0 0.0
    %82 = vmatprep.subr.mxu0 0.0
    %83 = vmatpush1.msra.mxu0 0.0
    %84 = vmatprep.subr.mxu0 0.0
    %85 = vmatpush1.msra.mxu0 0.0
    %86 = vmatprep.subr.mxu0 0.0
    %87 = vmatpush1.msra.mxu0 0.0
    %88 = vmatprep.subr.mxu0 0.0
    %89 = vmatpush1.msra.mxu0 0.0
    %90 = vmatprep.subr.mxu0 0.0
    %91 = vmatpush1.msra.mxu0 0.0
    %92 = vmatprep.subr.mxu0 0.0
    %93 = vmatpush1.msra.mxu0 0.0
    %94 = vmatprep.subr.mxu0 0.0
    %95 = vmatpush1.msra.mxu0 0.0
    %96 = vmatprep.subr.mxu0 0.0
    %97 = vmatpush1.msra.mxu0 0.0
    %98 = vmatprep.subr.mxu0 0.0
    %99 = vmatpush1.msra.mxu0 0.0
    %100 = vmatprep.subr.mxu0 0.0
    %101 = vmatpush1.msra.mxu0 %v64
    %102 = vmatprep.subr.mxu0 0.0
    %103 = vmatpush1.msra.mxu0 %v63
    %104 = vmatprep.subr.mxu0 0.0
    %105 = vmatpush1.msra.mxu0 %v62
    %106 = vmatprep.subr.mxu0 0.0
    %107 = vmatpush1.msra.mxu0 %v61
    %108 = vmatprep.subr.mxu0 0.0
    %109 = vmatpush2.msra.mxu0 0.0
    %110 = vmatprep.subr.mxu0 0.0
    %111 = vmatpush2.msra.mxu0 0.0
    %112 = vmatprep.subr.mxu0 0.0
    %113 = vmatpush2.msra.mxu0 0.0
    %114 = vmatprep.subr.mxu0 0.0
    %115 = vmatpush2.msra.mxu0 0.0
    %116 = vmatprep.subr.mxu0 0.0
    %117 = vmatpush2.msra.mxu0 0.0
    %118 = vmatprep.subr.mxu0 0.0
    %119 = vmatpush2.msra.mxu0 0.0
    %120 = vmatprep.subr.mxu0 0.0
    %121 = vmatpush2.msra.mxu0 0.0
    %122 = vmatprep.subr.mxu0 0.0
    %123 = vmatpush2.msra.mxu0 0.0
    %124 = vmatprep.subr.mxu0 0.0
    %125 = vmatpush2.msra.mxu0 0.0
    %126 = vmatprep.subr.mxu0 0.0
    %127 = vmatpush2.msra.mxu0 0.0
    %128 = vmatprep.subr.mxu0 0.0
    %129 = vmatpush2.msra.mxu0 0.0
    %130 = vmatprep.subr.mxu0 0.0
    %131 = vmatpush2.msra.mxu0 0.0
    %132 = vmatprep.subr.mxu0 0.0
    %133 = vmatpush2.msra.mxu0 0.0
    %134 = vmatprep.subr.mxu0 0.0
    %135 = vmatpush2.msra.mxu0 0.0
    %136 = vmatprep.subr.mxu0 0.0
    %137 = vmatpush2.msra.mxu0 0.0
    %138 = vmatprep.subr.mxu0 0.0
    %139 = vmatpush2.msra.mxu0 0.0
    %140 = vmatprep.mubr.f32.mxu0 0.0
    %141 = vmatmul.mubr.f32.gmra.mxu0 %v74
    %v142 = vpop.f32.mrf.mxu0
    %v143 = vadd.f32 %v70, %v142
    %v144 = vpop.f32.mrf.mxu0
    %145 = vdwg.mxu0
    %s146 = scalar_lea.vmem [#allocation5], 32
    %v147 = vld [vmem:[%s146] sm:$0xff]
    %v148 = vld [vmem:[%s146 + $0x8] sm:$0xff]
    %v149 = vld [vmem:[%s146 + $0x10] sm:$0xff]
    %v150 = vld [vmem:[%s146 + $0x18] sm:$0xff]
    %s151 = scalar_lea.vmem [#allocation7], 1
    %v152 = vld [vmem:[%s151] sm:$0x1]
    %v154 = vlaneseq
    %v155 = vshrl.u32 %v154, 7
    %v156 = vsub.s32 0, %v155
    %v157 = vrot.slane %v152, %v156
    %159 = vmatprep.subr.mxu0 0.0
    %160 = vmatpush1.msra.mxu0 0.0
    %161 = vmatprep.subr.mxu0 0.0
    %162 = vmatpush1.msra.mxu0 0.0
    %163 = vmatprep.subr.mxu0 0.0
    %164 = vmatpush1.msra.mxu0 0.0
    %165 = vmatprep.subr.mxu0 0.0
    %166 = vmatpush1.msra.mxu0 0.0
    %167 = vmatprep.subr.mxu0 0.0
    %168 = vmatpush1.msra.mxu0 0.0
    %169 = vmatprep.subr.mxu0 0.0
    %170 = vmatpush1.msra.mxu0 0.0
    %171 = vmatprep.subr.mxu0 0.0
    %172 = vmatpush1.msra.mxu0 0.0
    %173 = vmatprep.subr.mxu0 0.0
    %174 = vmatpush1.msra.mxu0 0.0
    %175 = vmatprep.subr.mxu0 0.0
    %176 = vmatpush1.msra.mxu0 0.0
    %177 = vmatprep.subr.mxu0 0.0
    %178 = vmatpush1.msra.mxu0 0.0
    %179 = vmatprep.subr.mxu0 0.0
    %180 = vmatpush1.msra.mxu0 0.0
    %181 = vmatprep.subr.mxu0 0.0
    %182 = vmatpush1.msra.mxu0 0.0
    %183 = vmatprep.subr.mxu0 0.0
    %184 = vmatpush1.msra.mxu0 %v150
    %185 = vmatprep.subr.mxu0 0.0
    %186 = vmatpush1.msra.mxu0 %v149
    %187 = vmatprep.subr.mxu0 0.0
    %188 = vmatpush1.msra.mxu0 %v148
    %189 = vmatprep.subr.mxu0 0.0
    %190 = vmatpush1.msra.mxu0 %v147
    %191 = vmatprep.subr.mxu0 0.0
    %192 = vmatpush2.msra.mxu0 0.0
    %193 = vmatprep.subr.mxu0 0.0
    %194 = vmatpush2.msra.mxu0 0.0
    %195 = vmatprep.subr.mxu0 0.0
    %196 = vmatpush2.msra.mxu0 0.0
    %197 = vmatprep.subr.mxu0 0.0
    %198 = vmatpush2.msra.mxu0 0.0
    %199 = vmatprep.subr.mxu0 0.0
    %200 = vmatpush2.msra.mxu0 0.0
    %201 = vmatprep.subr.mxu0 0.0
    %202 = vmatpush2.msra.mxu0 0.0
    %203 = vmatprep.subr.mxu0 0.0
    %204 = vmatpush2.msra.mxu0 0.0
    %205 = vmatprep.subr.mxu0 0.0
    %206 = vmatpush2.msra.mxu0 0.0
    %207 = vmatprep.subr.mxu0 0.0
    %208 = vmatpush2.msra.mxu0 0.0
    %209 = vmatprep.subr.mxu0 0.0
    %210 = vmatpush2.msra.mxu0 0.0
    %211 = vmatprep.subr.mxu0 0.0
    %212 = vmatpush2.msra.mxu0 0.0
    %213 = vmatprep.subr.mxu0 0.0
    %214 = vmatpush2.msra.mxu0 0.0
    %215 = vmatprep.subr.mxu0 0.0
    %216 = vmatpush2.msra.mxu0 0.0
    %217 = vmatprep.subr.mxu0 0.0
    %218 = vmatpush2.msra.mxu0 0.0
    %219 = vmatprep.subr.mxu0 0.0
    %220 = vmatpush2.msra.mxu0 0.0
    %221 = vmatprep.subr.mxu0 0.0
    %222 = vmatpush2.msra.mxu0 0.0
    %223 = vmatprep.mubr.f32.mxu0 0.0
    %224 = vmatmul.mubr.f32.gmra.mxu0 %v74
    %v225 = vpop.f32.mrf.mxu0
    %v226 = vadd.f32 %v157, %v225
    %v227 = vpop.f32.mrf.mxu0
    %228 = vdwg.mxu0
    %s229 = scalar_lea.vmem [#allocation5], 64
    %v230 = vld [vmem:[%s229] sm:$0xff]
    %v231 = vld [vmem:[%s229 + $0x8] sm:$0xff]
    %v232 = vld [vmem:[%s229 + $0x10] sm:$0xff]
    %v233 = vld [vmem:[%s229 + $0x18] sm:$0xff]
    %s234 = scalar_lea.vmem [#allocation7], 2
    %v235 = vld [vmem:[%s234] sm:$0x1]
    %v237 = vlaneseq
    %v238 = vshrl.u32 %v237, 7
    %v239 = vsub.s32 0, %v238
    %v240 = vrot.slane %v235, %v239
    %242 = vmatprep.subr.mxu0 0.0
    %243 = vmatpush1.msra.mxu0 0.0
    %244 = vmatprep.subr.mxu0 0.0
    %245 = vmatpush1.msra.mxu0 0.0
    %246 = vmatprep.subr.mxu0 0.0
    %247 = vmatpush1.msra.mxu0 0.0
    %248 = vmatprep.subr.mxu0 0.0
    %249 = vmatpush1.msra.mxu0 0.0
    %250 = vmatprep.subr.mxu0 0.0
    %251 = vmatpush1.msra.mxu0 0.0
    %252 = vmatprep.subr.mxu0 0.0
    %253 = vmatpush1.msra.mxu0 0.0
    %254 = vmatprep.subr.mxu0 0.0
    %255 = vmatpush1.msra.mxu0 0.0
    %256 = vmatprep.subr.mxu0 0.0
    %257 = vmatpush1.msra.mxu0 0.0
    %258 = vmatprep.subr.mxu0 0.0
    %259 = vmatpush1.msra.mxu0 0.0
    %260 = vmatprep.subr.mxu0 0.0
    %261 = vmatpush1.msra.mxu0 0.0
    %262 = vmatprep.subr.mxu0 0.0
    %263 = vmatpush1.msra.mxu0 0.0
    %264 = vmatprep.subr.mxu0 0.0
    %265 = vmatpush1.msra.mxu0 0.0
    %266 = vmatprep.subr.mxu0 0.0
    %267 = vmatpush1.msra.mxu0 %v233
    %268 = vmatprep.subr.mxu0 0.0
    %269 = vmatpush1.msra.mxu0 %v232
    %270 = vmatprep.subr.mxu0 0.0
    %271 = vmatpush1.msra.mxu0 %v231
    %272 = vmatprep.subr.mxu0 0.0
    %273 = vmatpush1.msra.mxu0 %v230
    %274 = vmatprep.subr.mxu0 0.0
    %275 = vmatpush2.msra.mxu0 0.0
    %276 = vmatprep.subr.mxu0 0.0
    %277 = vmatpush2.msra.mxu0 0.0
    %278 = vmatprep.subr.mxu0 0.0
    %279 = vmatpush2.msra.mxu0 0.0
    %280 = vmatprep.subr.mxu0 0.0
    %281 = vmatpush2.msra.mxu0 0.0
    %282 = vmatprep.subr.mxu0 0.0
    %283 = vmatpush2.msra.mxu0 0.0
    %284 = vmatprep.subr.mxu0 0.0
    %285 = vmatpush2.msra.mxu0 0.0
    %286 = vmatprep.subr.mxu0 0.0
    %287 = vmatpush2.msra.mxu0 0.0
    %288 = vmatprep.subr.mxu0 0.0
    %289 = vmatpush2.msra.mxu0 0.0
    %290 = vmatprep.subr.mxu0 0.0
    %291 = vmatpush2.msra.mxu0 0.0
    %292 = vmatprep.subr.mxu0 0.0
    %293 = vmatpush2.msra.mxu0 0.0
    %294 = vmatprep.subr.mxu0 0.0
    %295 = vmatpush2.msra.mxu0 0.0
    %296 = vmatprep.subr.mxu0 0.0
    %297 = vmatpush2.msra.mxu0 0.0
    %298 = vmatprep.subr.mxu0 0.0
    %299 = vmatpush2.msra.mxu0 0.0
    %300 = vmatprep.subr.mxu0 0.0
    %301 = vmatpush2.msra.mxu0 0.0
    %302 = vmatprep.subr.mxu0 0.0
    %303 = vmatpush2.msra.mxu0 0.0
    %304 = vmatprep.subr.mxu0 0.0
    %305 = vmatpush2.msra.mxu0 0.0
    %306 = vmatprep.mubr.f32.mxu0 0.0
    %307 = vmatmul.mubr.f32.gmra.mxu0 %v74
    %v308 = vpop.f32.mrf.mxu0
    %v309 = vadd.f32 %v240, %v308
    %v310 = vpop.f32.mrf.mxu0
    %311 = vdwg.mxu0
    %v312 = vadd.f32 %v56, %v143
    %v313 = vxor.u32 %v312, 2147483648
    %v314 = vmul.f32 %v313, 1.442695
    %v315 = vpow.pop %v314
    %v316 = vadd.f32 %v315, 1.0
    %v317 = vrcp.pop %v316
    %v318 = vmul.f32 1.0, %v317
    %v319 = vadd.f32 %v58, %v226
    %v320 = vxor.u32 %v319, 2147483648
    %v321 = vmul.f32 %v320, 1.442695
    %v322 = vpow.pop %v321
    %v323 = vadd.f32 %v322, 1.0
    %v324 = vrcp.pop %v323
    %v325 = vmul.f32 1.0, %v324
    %v326 = vmul.f32 %v318, %v309
    %v327 = vadd.f32 %v60, %v326
    %v328 = vtanh.pop %v327
    %v329 = vsub.f32 1.0, %v325
    %v330 = vmul.f32 %v329, %v328
    %v331 = vmul.f32 %v325, 0.0
    %v332 = vadd.f32 %v330, %v331
    %vm333 = vcmask 254976
    %334 = vst.msk [vmem:[#allocation8] sm:$0x3] %vm333, %v332
    %s335 = scalar_lea.vmem [#allocation2], 90
    %v336 = vld [vmem:[%s335] sm:$0x3]
    %s337 = scalar_lea.vmem [#allocation2], 92
    %v338 = vld [vmem:[%s337] sm:$0x3]
    %s339 = scalar_lea.vmem [#allocation2], 94
    %v340 = vld [vmem:[%s339] sm:$0x3]
    %s341 = scalar_lea.vmem [#allocation5], 96
    %v342 = vld [vmem:[%s341] sm:$0xff]
    %v343 = vld [vmem:[%s341 + $0x8] sm:$0xff]
    %v344 = vld [vmem:[%s341 + $0x10] sm:$0xff]
    %v345 = vld [vmem:[%s341 + $0x18] sm:$0xff]
    %s346 = scalar_lea.vmem [#allocation7], 3
    %v347 = vld [vmem:[%s346] sm:$0x1]
    %v349 = vlaneseq
    %v350 = vshrl.u32 %v349, 7
    %v351 = vsub.s32 0, %v350
    %v352 = vrot.slane %v347, %v351
    %354 = vmatprep.subr.mxu0 0.0
    %355 = vmatpush1.msra.mxu0 0.0
    %356 = vmatprep.subr.mxu0 0.0
    %357 = vmatpush1.msra.mxu0 0.0
    %358 = vmatprep.subr.mxu0 0.0
    %359 = vmatpush1.msra.mxu0 0.0
    %360 = vmatprep.subr.mxu0 0.0
    %361 = vmatpush1.msra.mxu0 0.0
    %362 = vmatprep.subr.mxu0 0.0
    %363 = vmatpush1.msra.mxu0 0.0
    %364 = vmatprep.subr.mxu0 0.0
    %365 = vmatpush1.msra.mxu0 0.0
    %366 = vmatprep.subr.mxu0 0.0
    %367 = vmatpush1.msra.mxu0 0.0
    %368 = vmatprep.subr.mxu0 0.0
    %369 = vmatpush1.msra.mxu0 0.0
    %370 = vmatprep.subr.mxu0 0.0
    %371 = vmatpush1.msra.mxu0 0.0
    %372 = vmatprep.subr.mxu0 0.0
    %373 = vmatpush1.msra.mxu0 0.0
    %374 = vmatprep.subr.mxu0 0.0
    %375 = vmatpush1.msra.mxu0 0.0
    %376 = vmatprep.subr.mxu0 0.0
    %377 = vmatpush1.msra.mxu0 0.0
    %378 = vmatprep.subr.mxu0 0.0
    %379 = vmatpush1.msra.mxu0 %v345
    %380 = vmatprep.subr.mxu0 0.0
    %381 = vmatpush1.msra.mxu0 %v344
    %382 = vmatprep.subr.mxu0 0.0
    %383 = vmatpush1.msra.mxu0 %v343
    %384 = vmatprep.subr.mxu0 0.0
    %385 = vmatpush1.msra.mxu0 %v342
    %386 = vmatprep.subr.mxu0 0.0
    %387 = vmatpush2.msra.mxu0 0.0
    %388 = vmatprep.subr.mxu0 0.0
    %389 = vmatpush2.msra.mxu0 0.0
    %390 = vmatprep.subr.mxu0 0.0
    %391 = vmatpush2.msra.mxu0 0.0
    %392 = vmatprep.subr.mxu0 0.0
    %393 = vmatpush2.msra.mxu0 0.0
    %394 = vmatprep.subr.mxu0 0.0
    %395 = vmatpush2.msra.mxu0 0.0
    %396 = vmatprep.subr.mxu0 0.0
    %397 = vmatpush2.msra.mxu0 0.0
    %398 = vmatprep.subr.mxu0 0.0
    %399 = vmatpush2.msra.mxu0 0.0
    %400 = vmatprep.subr.mxu0 0.0
    %401 = vmatpush2.msra.mxu0 0.0
    %402 = vmatprep.subr.mxu0 0.0
    %403 = vmatpush2.msra.mxu0 0.0
    %404 = vmatprep.subr.mxu0 0.0
    %405 = vmatpush2.msra.mxu0 0.0
    %406 = vmatprep.subr.mxu0 0.0
    %407 = vmatpush2.msra.mxu0 0.0
    %408 = vmatprep.subr.mxu0 0.0
    %409 = vmatpush2.msra.mxu0 0.0
    %410 = vmatprep.subr.mxu0 0.0
    %411 = vmatpush2.msra.mxu0 0.0
    %412 = vmatprep.subr.mxu0 0.0
    %413 = vmatpush2.msra.mxu0 0.0
    %414 = vmatprep.subr.mxu0 0.0
    %415 = vmatpush2.msra.mxu0 0.0
    %416 = vmatprep.subr.mxu0 0.0
    %417 = vmatpush2.msra.mxu0 0.0
    %418 = vmatprep.mubr.f32.mxu0 0.0
    %419 = vmatmul.mubr.f32.gmra.mxu0 %v74
    %v420 = vpop.f32.mrf.mxu0
    %v421 = vadd.f32 %v352, %v420
    %v422 = vpop.f32.mrf.mxu0
    %423 = vdwg.mxu0
    %s424 = scalar_lea.vmem [#allocation5], 128
    %v425 = vld [vmem:[%s424] sm:$0xff]
    %v426 = vld [vmem:[%s424 + $0x8] sm:$0xff]
    %v427 = vld [vmem:[%s424 + $0x10] sm:$0xff]
    %v428 = vld [vmem:[%s424 + $0x18] sm:$0xff]
    %s429 = scalar_lea.vmem [#allocation7], 4
    %v430 = vld [vmem:[%s429] sm:$0x1]
    %v432 = vlaneseq
    %v433 = vshrl.u32 %v432, 7
    %v434 = vsub.s32 0, %v433
    %v435 = vrot.slane %v430, %v434
    %437 = vmatprep.subr.mxu0 0.0
    %438 = vmatpush1.msra.mxu0 0.0
    %439 = vmatprep.subr.mxu0 0.0
    %440 = vmatpush1.msra.mxu0 0.0
    %441 = vmatprep.subr.mxu0 0.0
    %442 = vmatpush1.msra.mxu0 0.0
    %443 = vmatprep.subr.mxu0 0.0
    %444 = vmatpush1.msra.mxu0 0.0
    %445 = vmatprep.subr.mxu0 0.0
    %446 = vmatpush1.msra.mxu0 0.0
    %447 = vmatprep.subr.mxu0 0.0
    %448 = vmatpush1.msra.mxu0 0.0
    %449 = vmatprep.subr.mxu0 0.0
    %450 = vmatpush1.msra.mxu0 0.0
    %451 = vmatprep.subr.mxu0 0.0
    %452 = vmatpush1.msra.mxu0 0.0
    %453 = vmatprep.subr.mxu0 0.0
    %454 = vmatpush1.msra.mxu0 0.0
    %455 = vmatprep.subr.mxu0 0.0
    %456 = vmatpush1.msra.mxu0 0.0
    %457 = vmatprep.subr.mxu0 0.0
    %458 = vmatpush1.msra.mxu0 0.0
    %459 = vmatprep.subr.mxu0 0.0
    %460 = vmatpush1.msra.mxu0 0.0
    %461 = vmatprep.subr.mxu0 0.0
    %462 = vmatpush1.msra.mxu0 %v428
    %463 = vmatprep.subr.mxu0 0.0
    %464 = vmatpush1.msra.mxu0 %v427
    %465 = vmatprep.subr.mxu0 0.0
    %466 = vmatpush1.msra.mxu0 %v426
    %467 = vmatprep.subr.mxu0 0.0
    %468 = vmatpush1.msra.mxu0 %v425
    %469 = vmatprep.subr.mxu0 0.0
    %470 = vmatpush2.msra.mxu0 0.0
    %471 = vmatprep.subr.mxu0 0.0
    %472 = vmatpush2.msra.mxu0 0.0
    %473 = vmatprep.subr.mxu0 0.0
    %474 = vmatpush2.msra.mxu0 0.0
    %475 = vmatprep.subr.mxu0 0.0
    %476 = vmatpush2.msra.mxu0 0.0
    %477 = vmatprep.subr.mxu0 0.0
    %478 = vmatpush2.msra.mxu0 0.0
    %479 = vmatprep.subr.mxu0 0.0
    %480 = vmatpush2.msra.mxu0 0.0
    %481 = vmatprep.subr.mxu0 0.0
    %482 = vmatpush2.msra.mxu0 0.0
    %483 = vmatprep.subr.mxu0 0.0
    %484 = vmatpush2.msra.mxu0 0.0
    %485 = vmatprep.subr.mxu0 0.0
    %486 = vmatpush2.msra.mxu0 0.0
    %487 = vmatprep.subr.mxu0 0.0
    %488 = vmatpush2.msra.mxu0 0.0
    %489 = vmatprep.subr.mxu0 0.0
    %490 = vmatpush2.msra.mxu0 0.0
    %491 = vmatprep.subr.mxu0 0.0
    %492 = vmatpush2.msra.mxu0 0.0
    %493 = vmatprep.subr.mxu0 0.0
    %494 = vmatpush2.msra.mxu0 0.0
    %495 = vmatprep.subr.mxu0 0.0
    %496 = vmatpush2.msra.mxu0 0.0
    %497 = vmatprep.subr.mxu0 0.0
    %498 = vmatpush2.msra.mxu0 0.0
    %499 = vmatprep.subr.mxu0 0.0
    %500 = vmatpush2.msra.mxu0 0.0
    %501 = vmatprep.mubr.f32.mxu0 0.0
    %502 = vmatmul.mubr.f32.gmra.mxu0 %v74
    %v503 = vpop.f32.mrf.mxu0
    %v504 = vadd.f32 %v435, %v503
    %v505 = vpop.f32.mrf.mxu0
    %506 = vdwg.mxu0
    %s507 = scalar_lea.vmem [#allocation5], 160
    %v508 = vld [vmem:[%s507] sm:$0xff]
    %v509 = vld [vmem:[%s507 + $0x8] sm:$0xff]
    %v510 = vld [vmem:[%s507 + $0x10] sm:$0xff]
    %v511 = vld [vmem:[%s507 + $0x18] sm:$0xff]
    %s512 = scalar_lea.vmem [#allocation7], 5
    %v513 = vld [vmem:[%s512] sm:$0x1]
    %v515 = vlaneseq
    %v516 = vshrl.u32 %v515, 7
    %v517 = vsub.s32 0, %v516
    %v518 = vrot.slane %v513, %v517
    %520 = vmatprep.subr.mxu0 0.0
    %521 = vmatpush1.msra.mxu0 0.0
    %522 = vmatprep.subr.mxu0 0.0
    %523 = vmatpush1.msra.mxu0 0.0
    %524 = vmatprep.subr.mxu0 0.0
    %525 = vmatpush1.msra.mxu0 0.0
    %526 = vmatprep.subr.mxu0 0.0
    %527 = vmatpush1.msra.mxu0 0.0
    %528 = vmatprep.subr.mxu0 0.0
    %529 = vmatpush1.msra.mxu0 0.0
    %530 = vmatprep.subr.mxu0 0.0
    %531 = vmatpush1.msra.mxu0 0.0
    %532 = vmatprep.subr.mxu0 0.0
    %533 = vmatpush1.msra.mxu0 0.0
    %534 = vmatprep.subr.mxu0 0.0
    %535 = vmatpush1.msra.mxu0 0.0
    %536 = vmatprep.subr.mxu0 0.0
    %537 = vmatpush1.msra.mxu0 0.0
    %538 = vmatprep.subr.mxu0 0.0
    %539 = vmatpush1.msra.mxu0 0.0
    %540 = vmatprep.subr.mxu0 0.0
    %541 = vmatpush1.msra.mxu0 0.0
    %542 = vmatprep.subr.mxu0 0.0
    %543 = vmatpush1.msra.mxu0 0.0
    %544 = vmatprep.subr.mxu0 0.0
    %545 = vmatpush1.msra.mxu0 %v511
    %546 = vmatprep.subr.mxu0 0.0
    %547 = vmatpush1.msra.mxu0 %v510
    %548 = vmatprep.subr.mxu0 0.0
    %549 = vmatpush1.msra.mxu0 %v509
    %550 = vmatprep.subr.mxu0 0.0
    %551 = vmatpush1.msra.mxu0 %v508
    %552 = vmatprep.subr.mxu0 0.0
    %553 = vmatpush2.msra.mxu0 0.0
    %554 = vmatprep.subr.mxu0 0.0
    %555 = vmatpush2.msra.mxu0 0.0
    %556 = vmatprep.subr.mxu0 0.0
    %557 = vmatpush2.msra.mxu0 0.0
    %558 = vmatprep.subr.mxu0 0.0
    %559 = vmatpush2.msra.mxu0 0.0
    %560 = vmatprep.subr.mxu0 0.0
    %561 = vmatpush2.msra.mxu0 0.0
    %562 = vmatprep.subr.mxu0 0.0
    %563 = vmatpush2.msra.mxu0 0.0
    %564 = vmatprep.subr.mxu0 0.0
    %565 = vmatpush2.msra.mxu0 0.0
    %566 = vmatprep.subr.mxu0 0.0
    %567 = vmatpush2.msra.mxu0 0.0
    %568 = vmatprep.subr.mxu0 0.0
    %569 = vmatpush2.msra.mxu0 0.0
    %570 = vmatprep.subr.mxu0 0.0
    %571 = vmatpush2.msra.mxu0 0.0
    %572 = vmatprep.subr.mxu0 0.0
    %573 = vmatpush2.msra.mxu0 0.0
    %574 = vmatprep.subr.mxu0 0.0
    %575 = vmatpush2.msra.mxu0 0.0
    %576 = vmatprep.subr.mxu0 0.0
    %577 = vmatpush2.msra.mxu0 0.0
    %578 = vmatprep.subr.mxu0 0.0
    %579 = vmatpush2.msra.mxu0 0.0
    %580 = vmatprep.subr.mxu0 0.0
    %581 = vmatpush2.msra.mxu0 0.0
    %582 = vmatprep.subr.mxu0 0.0
    %583 = vmatpush2.msra.mxu0 0.0
    %584 = vmatprep.mubr.f32.mxu0 0.0
    %585 = vmatmul.mubr.f32.gmra.mxu0 %v74
    %v586 = vpop.f32.mrf.mxu0
    %v587 = vadd.f32 %v518, %v586
    %v588 = vpop.f32.mrf.mxu0
    %589 = vdwg.mxu0
    %v590 = vadd.f32 %v336, %v421
    %v591 = vxor.u32 %v590, 2147483648
    %v592 = vmul.f32 %v591, 1.442695
    %v593 = vpow.pop %v592
    %v594 = vadd.f32 %v593, 1.0
    %v595 = vrcp.pop %v594
    %v596 = vmul.f32 1.0, %v595
    %v597 = vadd.f32 %v338, %v504
    %v598 = vxor.u32 %v597, 2147483648
    %v599 = vmul.f32 %v598, 1.442695
    %v600 = vpow.pop %v599
    %v601 = vadd.f32 %v600, 1.0
    %v602 = vrcp.pop %v601
    %v603 = vmul.f32 1.0, %v602
    %v604 = vmul.f32 %v596, %v587
    %v605 = vadd.f32 %v340, %v604
    %v606 = vtanh.pop %v605
    %v607 = vsub.f32 1.0, %v603
    %v608 = vmul.f32 %v607, %v606
    %v609 = vmul.f32 %v603, 0.0
    %v610 = vadd.f32 %v608, %v609
    %s611 = scalar_lea.vmem [#allocation8], 30
    %612 = vst.msk [vmem:[%s611] sm:$0x3] %vm333, %v610
    %s613 = scalar_lea.vmem [#allocation2], 6
    %v614 = vld [vmem:[%s613] sm:$0x3]
    %s615 = scalar_lea.vmem [#allocation2], 8
    %v616 = vld [vmem:[%s615] sm:$0x3]
    %s617 = scalar_lea.vmem [#allocation2], 10
    %v618 = vld [vmem:[%s617] sm:$0x3]
    %v619 = vld [vmem:[#allocation5] sm:$0xff]
    %v620 = vld [vmem:[#allocation5 + $0x8] sm:$0xff]
    %v621 = vld [vmem:[#allocation5 + $0x10] sm:$0xff]
    %v622 = vld [vmem:[#allocation5 + $0x18] sm:$0xff]
    %v623 = vld [vmem:[#allocation7] sm:$0x1]
    %v625 = vlaneseq
    %v626 = vshrl.u32 %v625, 7
    %v627 = vsub.s32 0, %v626
    %v628 = vrot.slane %v623, %v627
    %v631 = vsel %vm72, %v332, 0
    %633 = vmatprep.subr.mxu0 0.0
    %634 = vmatpush1.msra.mxu0 0.0
    %635 = vmatprep.subr.mxu0 0.0
    %636 = vmatpush1.msra.mxu0 0.0
    %637 = vmatprep.subr.mxu0 0.0
    %638 = vmatpush1.msra.mxu0 0.0
    %639 = vmatprep.subr.mxu0 0.0
    %640 = vmatpush1.msra.mxu0 0.0
    %641 = vmatprep.subr.mxu0 0.0
    %642 = vmatpush1.msra.mxu0 0.0
    %643 = vmatprep.subr.mxu0 0.0
    %644 = vmatpush1.msra.mxu0 0.0
    %645 = vmatprep.subr.mxu0 0.0
    %646 = vmatpush1.msra.mxu0 0.0
    %647 = vmatprep.subr.mxu0 0.0
    %648 = vmatpush1.msra.mxu0 0.0
    %649 = vmatprep.subr.mxu0 0.0
    %650 = vmatpush1.msra.mxu0 0.0
    %651 = vmatprep.subr.mxu0 0.0
    %652 = vmatpush1.msra.mxu0 0.0
    %653 = vmatprep.subr.mxu0 0.0
    %654 = vmatpush1.msra.mxu0 0.0
    %655 = vmatprep.subr.mxu0 0.0
    %656 = vmatpush1.msra.mxu0 0.0
    %657 = vmatprep.subr.mxu0 0.0
    %658 = vmatpush1.msra.mxu0 %v622
    %659 = vmatprep.subr.mxu0 0.0
    %660 = vmatpush1.msra.mxu0 %v621
    %661 = vmatprep.subr.mxu0 0.0
    %662 = vmatpush1.msra.mxu0 %v620
    %663 = vmatprep.subr.mxu0 0.0
    %664 = vmatpush1.msra.mxu0 %v619
    %665 = vmatprep.subr.mxu0 0.0
    %666 = vmatpush2.msra.mxu0 0.0
    %667 = vmatprep.subr.mxu0 0.0
    %668 = vmatpush2.msra.mxu0 0.0
    %669 = vmatprep.subr.mxu0 0.0
    %670 = vmatpush2.msra.mxu0 0.0
    %671 = vmatprep.subr.mxu0 0.0
    %672 = vmatpush2.msra.mxu0 0.0
    %673 = vmatprep.subr.mxu0 0.0
    %674 = vmatpush2.msra.mxu0 0.0
    %675 = vmatprep.subr.mxu0 0.0
    %676 = vmatpush2.msra.mxu0 0.0
    %677 = vmatprep.subr.mxu0 0.0
    %678 = vmatpush2.msra.mxu0 0.0
    %679 = vmatprep.subr.mxu0 0.0
    %680 = vmatpush2.msra.mxu0 0.0
    %681 = vmatprep.subr.mxu0 0.0
    %682 = vmatpush2.msra.mxu0 0.0
    %683 = vmatprep.subr.mxu0 0.0
    %684 = vmatpush2.msra.mxu0 0.0
    %685 = vmatprep.subr.mxu0 0.0
    %686 = vmatpush2.msra.mxu0 0.0
    %687 = vmatprep.subr.mxu0 0.0
    %688 = vmatpush2.msra.mxu0 0.0
    %689 = vmatprep.subr.mxu0 0.0
    %690 = vmatpush2.msra.mxu0 0.0
    %691 = vmatprep.subr.mxu0 0.0
    %692 = vmatpush2.msra.mxu0 0.0
    %693 = vmatprep.subr.mxu0 0.0
    %694 = vmatpush2.msra.mxu0 0.0
    %695 = vmatprep.subr.mxu0 0.0
    %696 = vmatpush2.msra.mxu0 0.0
    %697 = vmatprep.mubr.f32.mxu0 0.0
    %698 = vmatmul.mubr.f32.gmra.mxu0 %v631
    %v699 = vpop.f32.mrf.mxu0
    %v700 = vadd.f32 %v628, %v699
    %v701 = vpop.f32.mrf.mxu0
    %702 = vdwg.mxu0
    %v703 = vld [vmem:[%s146] sm:$0xff]
    %v704 = vld [vmem:[%s146 + $0x8] sm:$0xff]
    %v705 = vld [vmem:[%s146 + $0x10] sm:$0xff]
    %v706 = vld [vmem:[%s146 + $0x18] sm:$0xff]
    %v707 = vld [vmem:[%s151] sm:$0x1]
    %v709 = vlaneseq
    %v710 = vshrl.u32 %v709, 7
    %v711 = vsub.s32 0, %v710
    %v712 = vrot.slane %v707, %v711
    %714 = vmatprep.subr.mxu0 0.0
    %715 = vmatpush1.msra.mxu0 0.0
    %716 = vmatprep.subr.mxu0 0.0
    %717 = vmatpush1.msra.mxu0 0.0
    %718 = vmatprep.subr.mxu0 0.0
    %719 = vmatpush1.msra.mxu0 0.0
    %720 = vmatprep.subr.mxu0 0.0
    %721 = vmatpush1.msra.mxu0 0.0
    %722 = vmatprep.subr.mxu0 0.0
    %723 = vmatpush1.msra.mxu0 0.0
    %724 = vmatprep.subr.mxu0 0.0
    %725 = vmatpush1.msra.mxu0 0.0
    %726 = vmatprep.subr.mxu0 0.0
    %727 = vmatpush1.msra.mxu0 0.0
    %728 = vmatprep.subr.mxu0 0.0
    %729 = vmatpush1.msra.mxu0 0.0
    %730 = vmatprep.subr.mxu0 0.0
    %731 = vmatpush1.msra.mxu0 0.0
    %732 = vmatprep.subr.mxu0 0.0
    %733 = vmatpush1.msra.mxu0 0.0
    %734 = vmatprep.subr.mxu0 0.0
    %735 = vmatpush1.msra.mxu0 0.0
    %736 = vmatprep.subr.mxu0 0.0
    %737 = vmatpush1.msra.mxu0 0.0
    %738 = vmatprep.subr.mxu0 0.0
    %739 = vmatpush1.msra.mxu0 %v706
    %740 = vmatprep.subr.mxu0 0.0
    %741 = vmatpush1.msra.mxu0 %v705
    %742 = vmatprep.subr.mxu0 0.0
    %743 = vmatpush1.msra.mxu0 %v704
    %744 = vmatprep.subr.mxu0 0.0
    %745 = vmatpush1.msra.mxu0 %v703
    %746 = vmatprep.subr.mxu0 0.0
    %747 = vmatpush2.msra.mxu0 0.0
    %748 = vmatprep.subr.mxu0 0.0
    %749 = vmatpush2.msra.mxu0 0.0
    %750 = vmatprep.subr.mxu0 0.0
    %751 = vmatpush2.msra.mxu0 0.0
    %752 = vmatprep.subr.mxu0 0.0
    %753 = vmatpush2.msra.mxu0 0.0
    %754 = vmatprep.subr.mxu0 0.0
    %755 = vmatpush2.msra.mxu0 0.0
    %756 = vmatprep.subr.mxu0 0.0
    %757 = vmatpush2.msra.mxu0 0.0
    %758 = vmatprep.subr.mxu0 0.0
    %759 = vmatpush2.msra.mxu0 0.0
    %760 = vmatprep.subr.mxu0 0.0
    %761 = vmatpush2.msra.mxu0 0.0
    %762 = vmatprep.subr.mxu0 0.0
    %763 = vmatpush2.msra.mxu0 0.0
    %764 = vmatprep.subr.mxu0 0.0
    %765 = vmatpush2.msra.mxu0 0.0
    %766 = vmatprep.subr.mxu0 0.0
    %767 = vmatpush2.msra.mxu0 0.0
    %768 = vmatprep.subr.mxu0 0.0
    %769 = vmatpush2.msra.mxu0 0.0
    %770 = vmatprep.subr.mxu0 0.0
    %771 = vmatpush2.msra.mxu0 0.0
    %772 = vmatprep.subr.mxu0 0.0
    %773 = vmatpush2.msra.mxu0 0.0
    %774 = vmatprep.subr.mxu0 0.0
    %775 = vmatpush2.msra.mxu0 0.0
    %776 = vmatprep.subr.mxu0 0.0
    %777 = vmatpush2.msra.mxu0 0.0
    %778 = vmatprep.mubr.f32.mxu0 0.0
    %779 = vmatmul.mubr.f32.gmra.mxu0 %v631
    %v780 = vpop.f32.mrf.mxu0
    %v781 = vadd.f32 %v712, %v780
    %v782 = vpop.f32.mrf.mxu0
    %783 = vdwg.mxu0
    %v784 = vld [vmem:[%s229] sm:$0xff]
    %v785 = vld [vmem:[%s229 + $0x8] sm:$0xff]
    %v786 = vld [vmem:[%s229 + $0x10] sm:$0xff]
    %v787 = vld [vmem:[%s229 + $0x18] sm:$0xff]
    %v788 = vld [vmem:[%s234] sm:$0x1]
    %v790 = vlaneseq
    %v791 = vshrl.u32 %v790, 7
    %v792 = vsub.s32 0, %v791
    %v793 = vrot.slane %v788, %v792
    %795 = vmatprep.subr.mxu0 0.0
    %796 = vmatpush1.msra.mxu0 0.0
    %797 = vmatprep.subr.mxu0 0.0
    %798 = vmatpush1.msra.mxu0 0.0
    %799 = vmatprep.subr.mxu0 0.0
    %800 = vmatpush1.msra.mxu0 0.0
    %801 = vmatprep.subr.mxu0 0.0
    %802 = vmatpush1.msra.mxu0 0.0
    %803 = vmatprep.subr.mxu0 0.0
    %804 = vmatpush1.msra.mxu0 0.0
    %805 = vmatprep.subr.mxu0 0.0
    %806 = vmatpush1.msra.mxu0 0.0
    %807 = vmatprep.subr.mxu0 0.0
    %808 = vmatpush1.msra.mxu0 0.0
    %809 = vmatprep.subr.mxu0 0.0
    %810 = vmatpush1.msra.mxu0 0.0
    %811 = vmatprep.subr.mxu0 0.0
    %812 = vmatpush1.msra.mxu0 0.0
    %813 = vmatprep.subr.mxu0 0.0
    %814 = vmatpush1.msra.mxu0 0.0
    %815 = vmatprep.subr.mxu0 0.0
    %816 = vmatpush1.msra.mxu0 0.0
    %817 = vmatprep.subr.mxu0 0.0
    %818 = vmatpush1.msra.mxu0 0.0
    %819 = vmatprep.subr.mxu0 0.0
    %820 = vmatpush1.msra.mxu0 %v787
    %821 = vmatprep.subr.mxu0 0.0
    %822 = vmatpush1.msra.mxu0 %v786
    %823 = vmatprep.subr.mxu0 0.0
    %824 = vmatpush1.msra.mxu0 %v785
    %825 = vmatprep.subr.mxu0 0.0
    %826 = vmatpush1.msra.mxu0 %v784
    %827 = vmatprep.subr.mxu0 0.0
    %828 = vmatpush2.msra.mxu0 0.0
    %829 = vmatprep.subr.mxu0 0.0
    %830 = vmatpush2.msra.mxu0 0.0
    %831 = vmatprep.subr.mxu0 0.0
    %832 = vmatpush2.msra.mxu0 0.0
    %833 = vmatprep.subr.mxu0 0.0
    %834 = vmatpush2.msra.mxu0 0.0
    %835 = vmatprep.subr.mxu0 0.0
    %836 = vmatpush2.msra.mxu0 0.0
    %837 = vmatprep.subr.mxu0 0.0
    %838 = vmatpush2.msra.mxu0 0.0
    %839 = vmatprep.subr.mxu0 0.0
    %840 = vmatpush2.msra.mxu0 0.0
    %841 = vmatprep.subr.mxu0 0.0
    %842 = vmatpush2.msra.mxu0 0.0
    %843 = vmatprep.subr.mxu0 0.0
    %844 = vmatpush2.msra.mxu0 0.0
    %845 = vmatprep.subr.mxu0 0.0
    %846 = vmatpush2.msra.mxu0 0.0
    %847 = vmatprep.subr.mxu0 0.0
    %848 = vmatpush2.msra.mxu0 0.0
    %849 = vmatprep.subr.mxu0 0.0
    %850 = vmatpush2.msra.mxu0 0.0
    %851 = vmatprep.subr.mxu0 0.0
    %852 = vmatpush2.msra.mxu0 0.0
    %853 = vmatprep.subr.mxu0 0.0
    %854 = vmatpush2.msra.mxu0 0.0
    %855 = vmatprep.subr.mxu0 0.0
    %856 = vmatpush2.msra.mxu0 0.0
    %857 = vmatprep.subr.mxu0 0.0
    %858 = vmatpush2.msra.mxu0 0.0
    %859 = vmatprep.mubr.f32.mxu0 0.0
    %860 = vmatmul.mubr.f32.gmra.mxu0 %v631
    %v861 = vpop.f32.mrf.mxu0
    %v862 = vadd.f32 %v793, %v861
    %v863 = vpop.f32.mrf.mxu0
    %864 = vdwg.mxu0
    %v865 = vadd.f32 %v614, %v700
    %v866 = vxor.u32 %v865, 2147483648
    %v867 = vmul.f32 %v866, 1.442695
    %v868 = vpow.pop %v867
    %v869 = vadd.f32 %v868, 1.0
    %v870 = vrcp.pop %v869
    %v871 = vmul.f32 1.0, %v870
    %v872 = vadd.f32 %v616, %v781
    %v873 = vxor.u32 %v872, 2147483648
    %v874 = vmul.f32 %v873, 1.442695
    %v875 = vpow.pop %v874
    %v876 = vadd.f32 %v875, 1.0
    %v877 = vrcp.pop %v876
    %v878 = vmul.f32 1.0, %v877
    %v879 = vmul.f32 %v871, %v862
    %v880 = vadd.f32 %v618, %v879
    %v881 = vtanh.pop %v880
    %v882 = vsub.f32 1.0, %v878
    %v883 = vmul.f32 %v882, %v881
    %v884 = vmul.f32 %v878, %v332
    %v885 = vadd.f32 %v883, %v884
    %s886 = scalar_lea.vmem [#allocation8], 2
    %887 = vst.msk [vmem:[%s886] sm:$0x3] %vm333, %v885
    %s888 = scalar_lea.vmem [#allocation2], 84
    %v889 = vld [vmem:[%s888] sm:$0x3]
    %s890 = scalar_lea.vmem [#allocation2], 86
    %v891 = vld [vmem:[%s890] sm:$0x3]
    %s892 = scalar_lea.vmem [#allocation2], 88
    %v893 = vld [vmem:[%s892] sm:$0x3]
    %v894 = vld [vmem:[%s341] sm:$0xff]
    %v895 = vld [vmem:[%s341 + $0x8] sm:$0xff]
    %v896 = vld [vmem:[%s341 + $0x10] sm:$0xff]
    %v897 = vld [vmem:[%s341 + $0x18] sm:$0xff]
    %v898 = vld [vmem:[%s346] sm:$0x1]
    %v900 = vlaneseq
    %v901 = vshrl.u32 %v900, 7
    %v902 = vsub.s32 0, %v901
    %v903 = vrot.slane %v898, %v902
    %v906 = vsel %vm72, %v610, 0
    %908 = vmatprep.subr.mxu0 0.0
    %909 = vmatpush1.msra.mxu0 0.0
    %910 = vmatprep.subr.mxu0 0.0
    %911 = vmatpush1.msra.mxu0 0.0
    %912 = vmatprep.subr.mxu0 0.0
    %913 = vmatpush1.msra.mxu0 0.0
    %914 = vmatprep.subr.mxu0 0.0
    %915 = vmatpush1.msra.mxu0 0.0
    %916 = vmatprep.subr.mxu0 0.0
    %917 = vmatpush1.msra.mxu0 0.0
    %918 = vmatprep.subr.mxu0 0.0
    %919 = vmatpush1.msra.mxu0 0.0
    %920 = vmatprep.subr.mxu0 0.0
    %921 = vmatpush1.msra.mxu0 0.0
    %922 = vmatprep.subr.mxu0 0.0
    %923 = vmatpush1.msra.mxu0 0.0
    %924 = vmatprep.subr.mxu0 0.0
    %925 = vmatpush1.msra.mxu0 0.0
    %926 = vmatprep.subr.mxu0 0.0
    %927 = vmatpush1.msra.mxu0 0.0
    %928 = vmatprep.subr.mxu0 0.0
    %929 = vmatpush1.msra.mxu0 0.0
    %930 = vmatprep.subr.mxu0 0.0
    %931 = vmatpush1.msra.mxu0 0.0
    %932 = vmatprep.subr.mxu0 0.0
    %933 = vmatpush1.msra.mxu0 %v897
    %934 = vmatprep.subr.mxu0 0.0
    %935 = vmatpush1.msra.mxu0 %v896
    %936 = vmatprep.subr.mxu0 0.0
    %937 = vmatpush1.msra.mxu0 %v895
    %938 = vmatprep.subr.mxu0 0.0
    %939 = vmatpush1.msra.mxu0 %v894
    %940 = vmatprep.subr.mxu0 0.0
    %941 = vmatpush2.msra.mxu0 0.0
    %942 = vmatprep.subr.mxu0 0.0
    %943 = vmatpush2.msra.mxu0 0.0
    %944 = vmatprep.subr.mxu0 0.0
    %945 = vmatpush2.msra.mxu0 0.0
    %946 = vmatprep.subr.mxu0 0.0
    %947 = vmatpush2.msra.mxu0 0.0
    %948 = vmatprep.subr.mxu0 0.0
    %949 = vmatpush2.msra.mxu0 0.0
    %950 = vmatprep.subr.mxu0 0.0
    %951 = vmatpush2.msra.mxu0 0.0
    %952 = vmatprep.subr.mxu0 0.0
    %953 = vmatpush2.msra.mxu0 0.0
    %954 = vmatprep.subr.mxu0 0.0
    %955 = vmatpush2.msra.mxu0 0.0
    %956 = vmatprep.subr.mxu0 0.0
    %957 = vmatpush2.msra.mxu0 0.0
    %958 = vmatprep.subr.mxu0 0.0
    %959 = vmatpush2.msra.mxu0 0.0
    %960 = vmatprep.subr.mxu0 0.0
    %961 = vmatpush2.msra.mxu0 0.0
    %962 = vmatprep.subr.mxu0 0.0
    %963 = vmatpush2.msra.mxu0 0.0
    %964 = vmatprep.subr.mxu0 0.0
    %965 = vmatpush2.msra.mxu0 0.0
    %966 = vmatprep.subr.mxu0 0.0
    %967 = vmatpush2.msra.mxu0 0.0
    %968 = vmatprep.subr.mxu0 0.0
    %969 = vmatpush2.msra.mxu0 0.0
    %970 = vmatprep.subr.mxu0 0.0
    %971 = vmatpush2.msra.mxu0 0.0
    %972 = vmatprep.mubr.f32.mxu0 0.0
    %973 = vmatmul.mubr.f32.gmra.mxu0 %v906
    %v974 = vpop.f32.mrf.mxu0
    %v975 = vadd.f32 %v903, %v974
    %v976 = vpop.f32.mrf.mxu0
    %977 = vdwg.mxu0
    %v978 = vld [vmem:[%s424] sm:$0xff]
    %v979 = vld [vmem:[%s424 + $0x8] sm:$0xff]
    %v980 = vld [vmem:[%s424 + $0x10] sm:$0xff]
    %v981 = vld [vmem:[%s424 + $0x18] sm:$0xff]
    %v982 = vld [vmem:[%s429] sm:$0x1]
    %v984 = vlaneseq
    %v985 = vshrl.u32 %v984, 7
    %v986 = vsub.s32 0, %v985
    %v987 = vrot.slane %v982, %v986
    %989 = vmatprep.subr.mxu0 0.0
    %990 = vmatpush1.msra.mxu0 0.0
    %991 = vmatprep.subr.mxu0 0.0
    %992 = vmatpush1.msra.mxu0 0.0
    %993 = vmatprep.subr.mxu0 0.0
    %994 = vmatpush1.msra.mxu0 0.0
    %995 = vmatprep.subr.mxu0 0.0
    %996 = vmatpush1.msra.mxu0 0.0
    %997 = vmatprep.subr.mxu0 0.0
    %998 = vmatpush1.msra.mxu0 0.0
    %999 = vmatprep.subr.mxu0 0.0
    %1000 = vmatpush1.msra.mxu0 0.0
    %1001 = vmatprep.subr.mxu0 0.0
    %1002 = vmatpush1.msra.mxu0 0.0
    %1003 = vmatprep.subr.mxu0 0.0
    %1004 = vmatpush1.msra.mxu0 0.0
    %1005 = vmatprep.subr.mxu0 0.0
    %1006 = vmatpush1.msra.mxu0 0.0
    %1007 = vmatprep.subr.mxu0 0.0
    %1008 = vmatpush1.msra.mxu0 0.0
    %1009 = vmatprep.subr.mxu0 0.0
    %1010 = vmatpush1.msra.mxu0 0.0
    %1011 = vmatprep.subr.mxu0 0.0
    %1012 = vmatpush1.msra.mxu0 0.0
    %1013 = vmatprep.subr.mxu0 0.0
    %1014 = vmatpush1.msra.mxu0 %v981
    %1015 = vmatprep.subr.mxu0 0.0
    %1016 = vmatpush1.msra.mxu0 %v980
    %1017 = vmatprep.subr.mxu0 0.0
    %1018 = vmatpush1.msra.mxu0 %v979
    %1019 = vmatprep.subr.mxu0 0.0
    %1020 = vmatpush1.msra.mxu0 %v978
    %1021 = vmatprep.subr.mxu0 0.0
    %1022 = vmatpush2.msra.mxu0 0.0
    %1023 = vmatprep.subr.mxu0 0.0
    %1024 = vmatpush2.msra.mxu0 0.0
    %1025 = vmatprep.subr.mxu0 0.0
    %1026 = vmatpush2.msra.mxu0 0.0
    %1027 = vmatprep.subr.mxu0 0.0
    %1028 = vmatpush2.msra.mxu0 0.0
    %1029 = vmatprep.subr.mxu0 0.0
    %1030 = vmatpush2.msra.mxu0 0.0
    %1031 = vmatprep.subr.mxu0 0.0
    %1032 = vmatpush2.msra.mxu0 0.0
    %1033 = vmatprep.subr.mxu0 0.0
    %1034 = vmatpush2.msra.mxu0 0.0
    %1035 = vmatprep.subr.mxu0 0.0
    %1036 = vmatpush2.msra.mxu0 0.0
    %1037 = vmatprep.subr.mxu0 0.0
    %1038 = vmatpush2.msra.mxu0 0.0
    %1039 = vmatprep.subr.mxu0 0.0
    %1040 = vmatpush2.msra.mxu0 0.0
    %1041 = vmatprep.subr.mxu0 0.0
    %1042 = vmatpush2.msra.mxu0 0.0
    %1043 = vmatprep.subr.mxu0 0.0
    %1044 = vmatpush2.msra.mxu0 0.0
    %1045 = vmatprep.subr.mxu0 0.0
    %1046 = vmatpush2.msra.mxu0 0.0
    %1047 = vmatprep.subr.mxu0 0.0
    %1048 = vmatpush2.msra.mxu0 0.0
    %1049 = vmatprep.subr.mxu0 0.0
    %1050 = vmatpush2.msra.mxu0 0.0
    %1051 = vmatprep.subr.mxu0 0.0
    %1052 = vmatpush2.msra.mxu0 0.0
    %1053 = vmatprep.mubr.f32.mxu0 0.0
    %1054 = vmatmul.mubr.f32.gmra.mxu0 %v906
    %v1055 = vpop.f32.mrf.mxu0
    %v1056 = vadd.f32 %v987, %v1055
    %v1057 = vpop.f32.mrf.mxu0
    %1058 = vdwg.mxu0
    %v1059 = vld [vmem:[%s507] sm:$0xff]
    %v1060 = vld [vmem:[%s507 + $0x8] sm:$0xff]
    %v1061 = vld [vmem:[%s507 + $0x10] sm:$0xff]
    %v1062 = vld [vmem:[%s507 + $0x18] sm:$0xff]
    %v1063 = vld [vmem:[%s512] sm:$0x1]
    %v1065 = vlaneseq
    %v1066 = vshrl.u32 %v1065, 7
    %v1067 = vsub.s32 0, %v1066
    %v1068 = vrot.slane %v1063, %v1067
    %1070 = vmatprep.subr.mxu0 0.0
    %1071 = vmatpush1.msra.mxu0 0.0
    %1072 = vmatprep.subr.mxu0 0.0
    %1073 = vmatpush1.msra.mxu0 0.0
    %1074 = vmatprep.subr.mxu0 0.0
    %1075 = vmatpush1.msra.mxu0 0.0
    %1076 = vmatprep.subr.mxu0 0.0
    %1077 = vmatpush1.msra.mxu0 0.0
    %1078 = vmatprep.subr.mxu0 0.0
    %1079 = vmatpush1.msra.mxu0 0.0
    %1080 = vmatprep.subr.mxu0 0.0
    %1081 = vmatpush1.msra.mxu0 0.0
    %1082 = vmatprep.subr.mxu0 0.0
    %1083 = vmatpush1.msra.mxu0 0.0
    %1084 = vmatprep.subr.mxu0 0.0
    %1085 = vmatpush1.msra.mxu0 0.0
    %1086 = vmatprep.subr.mxu0 0.0
    %1087 = vmatpush1.msra.mxu0 0.0
    %1088 = vmatprep.subr.mxu0 0.0
    %1089 = vmatpush1.msra.mxu0 0.0
    %1090 = vmatprep.subr.mxu0 0.0
    %1091 = vmatpush1.msra.mxu0 0.0
    %1092 = vmatprep.subr.mxu0 0.0
    %1093 = vmatpush1.msra.mxu0 0.0
    %1094 = vmatprep.subr.mxu0 0.0
    %1095 = vmatpush1.msra.mxu0 %v1062
    %1096 = vmatprep.subr.mxu0 0.0
    %1097 = vmatpush1.msra.mxu0 %v1061
    %1098 = vmatprep.subr.mxu0 0.0
    %1099 = vmatpush1.msra.mxu0 %v1060
    %1100 = vmatprep.subr.mxu0 0.0
    %1101 = vmatpush1.msra.mxu0 %v1059
    %1102 = vmatprep.subr.mxu0 0.0
    %1103 = vmatpush2.msra.mxu0 0.0
    %1104 = vmatprep.subr.mxu0 0.0
    %1105 = vmatpush2.msra.mxu0 0.0
    %1106 = vmatprep.subr.mxu0 0.0
    %1107 = vmatpush2.msra.mxu0 0.0
    %1108 = vmatprep.subr.mxu0 0.0
    %1109 = vmatpush2.msra.mxu0 0.0
    %1110 = vmatprep.subr.mxu0 0.0
    %1111 = vmatpush2.msra.mxu0 0.0
    %1112 = vmatprep.subr.mxu0 0.0
    %1113 = vmatpush2.msra.mxu0 0.0
    %1114 = vmatprep.subr.mxu0 0.0
    %1115 = vmatpush2.msra.mxu0 0.0
    %1116 = vmatprep.subr.mxu0 0.0
    %1117 = vmatpush2.msra.mxu0 0.0
    %1118 = vmatprep.subr.mxu0 0.0
    %1119 = vmatpush2.msra.mxu0 0.0
    %1120 = vmatprep.subr.mxu0 0.0
    %1121 = vmatpush2.msra.mxu0 0.0
    %1122 = vmatprep.subr.mxu0 0.0
    %1123 = vmatpush2.msra.mxu0 0.0
    %1124 = vmatprep.subr.mxu0 0.0
    %1125 = vmatpush2.msra.mxu0 0.0
    %1126 = vmatprep.subr.mxu0 0.0
    %1127 = vmatpush2.msra.mxu0 0.0
    %1128 = vmatprep.subr.mxu0 0.0
    %1129 = vmatpush2.msra.mxu0 0.0
    %1130 = vmatprep.subr.mxu0 0.0
    %1131 = vmatpush2.msra.mxu0 0.0
    %1132 = vmatprep.subr.mxu0 0.0
    %1133 = vmatpush2.msra.mxu0 0.0
    %1134 = vmatprep.mubr.f32.mxu0 0.0
    %1135 = vmatmul.mubr.f32.gmra.mxu0 %v906
    %v1136 = vpop.f32.mrf.mxu0
    %v1137 = vadd.f32 %v1068, %v1136
    %v1138 = vpop.f32.mrf.mxu0
    %1139 = vdwg.mxu0
    %v1140 = vadd.f32 %v889, %v975
    %v1141 = vxor.u32 %v1140, 2147483648
    %v1142 = vmul.f32 %v1141, 1.442695
    %v1143 = vpow.pop %v1142
    %v1144 = vadd.f32 %v1143, 1.0
    %v1145 = vrcp.pop %v1144
    %v1146 = vmul.f32 1.0, %v1145
    %v1147 = vadd.f32 %v891, %v1056
    %v1148 = vxor.u32 %v1147, 2147483648
    %v1149 = vmul.f32 %v1148, 1.442695
    %v1150 = vpow.pop %v1149
    %v1151 = vadd.f32 %v1150, 1.0
    %v1152 = vrcp.pop %v1151
    %v1153 = vmul.f32 1.0, %v1152
    %v1154 = vmul.f32 %v1146, %v1137
    %v1155 = vadd.f32 %v893, %v1154
    %v1156 = vtanh.pop %v1155
    %v1157 = vsub.f32 1.0, %v1153
    %v1158 = vmul.f32 %v1157, %v1156
    %v1159 = vmul.f32 %v1153, %v610
    %v1160 = vadd.f32 %v1158, %v1159
    %s1161 = scalar_lea.vmem [#allocation8], 28
    %1162 = vst.msk [vmem:[%s1161] sm:$0x3] %vm333, %v1160
    %s1163 = scalar_lea.vmem [#allocation2], 12
    %v1164 = vld [vmem:[%s1163] sm:$0x3]
    %s1165 = scalar_lea.vmem [#allocation2], 14
    %v1166 = vld [vmem:[%s1165] sm:$0x3]
    %s1167 = scalar_lea.vmem [#allocation2], 16
    %v1168 = vld [vmem:[%s1167] sm:$0x3]
    %v1169 = vld [vmem:[#allocation5] sm:$0xff]
    %v1170 = vld [vmem:[#allocation5 + $0x8] sm:$0xff]
    %v1171 = vld [vmem:[#allocation5 + $0x10] sm:$0xff]
    %v1172 = vld [vmem:[#allocation5 + $0x18] sm:$0xff]
    %v1173 = vld [vmem:[#allocation7] sm:$0x1]
    %v1175 = vlaneseq
    %v1176 = vshrl.u32 %v1175, 7
    %v1177 = vsub.s32 0, %v1176
    %v1178 = vrot.slane %v1173, %v1177
    %v1181 = vsel %vm72, %v885, 0
    %1183 = vmatprep.subr.mxu0 0.0
    %1184 = vmatpush1.msra.mxu0 0.0
    %1185 = vmatprep.subr.mxu0 0.0
    %1186 = vmatpush1.msra.mxu0 0.0
    %1187 = vmatprep.subr.mxu0 0.0
    %1188 = vmatpush1.msra.mxu0 0.0
    %1189 = vmatprep.subr.mxu0 0.0
    %1190 = vmatpush1.msra.mxu0 0.0
    %1191 = vmatprep.subr.mxu0 0.0
    %1192 = vmatpush1.msra.mxu0 0.0
    %1193 = vmatprep.subr.mxu0 0.0
    %1194 = vmatpush1.msra.mxu0 0.0
    %1195 = vmatprep.subr.mxu0 0.0
    %1196 = vmatpush1.msra.mxu0 0.0
    %1197 = vmatprep.subr.mxu0 0.0
    %1198 = vmatpush1.msra.mxu0 0.0
    %1199 = vmatprep.subr.mxu0 0.0
    %1200 = vmatpush1.msra.mxu0 0.0
    %1201 = vmatprep.subr.mxu0 0.0
    %1202 = vmatpush1.msra.mxu0 0.0
    %1203 = vmatprep.subr.mxu0 0.0
    %1204 = vmatpush1.msra.mxu0 0.0
    %1205 = vmatprep.subr.mxu0 0.0
    %1206 = vmatpush1.msra.mxu0 0.0
    %1207 = vmatprep.subr.mxu0 0.0
    %1208 = vmatpush1.msra.mxu0 %v1172
    %1209 = vmatprep.subr.mxu0 0.0
    %1210 = vmatpush1.msra.mxu0 %v1171
    %1211 = vmatprep.subr.mxu0 0.0
    %1212 = vmatpush1.msra.mxu0 %v1170
    %1213 = vmatprep.subr.mxu0 0.0
    %1214 = vmatpush1.msra.mxu0 %v1169
    %1215 = vmatprep.subr.mxu0 0.0
    %1216 = vmatpush2.msra.mxu0 0.0
    %1217 = vmatprep.subr.mxu0 0.0
    %1218 = vmatpush2.msra.mxu0 0.0
    %1219 = vmatprep.subr.mxu0 0.0
    %1220 = vmatpush2.msra.mxu0 0.0
    %1221 = vmatprep.subr.mxu0 0.0
    %1222 = vmatpush2.msra.mxu0 0.0
    %1223 = vmatprep.subr.mxu0 0.0
    %1224 = vmatpush2.msra.mxu0 0.0
    %1225 = vmatprep.subr.mxu0 0.0
    %1226 = vmatpush2.msra.mxu0 0.0
    %1227 = vmatprep.subr.mxu0 0.0
    %1228 = vmatpush2.msra.mxu0 0.0
    %1229 = vmatprep.subr.mxu0 0.0
    %1230 = vmatpush2.msra.mxu0 0.0
    %1231 = vmatprep.subr.mxu0 0.0
    %1232 = vmatpush2.msra.mxu0 0.0
    %1233 = vmatprep.subr.mxu0 0.0
    %1234 = vmatpush2.msra.mxu0 0.0
    %1235 = vmatprep.subr.mxu0 0.0
    %1236 = vmatpush2.msra.mxu0 0.0
    %1237 = vmatprep.subr.mxu0 0.0
    %1238 = vmatpush2.msra.mxu0 0.0
    %1239 = vmatprep.subr.mxu0 0.0
    %1240 = vmatpush2.msra.mxu0 0.0
    %1241 = vmatprep.subr.mxu0 0.0
    %1242 = vmatpush2.msra.mxu0 0.0
    %1243 = vmatprep.subr.mxu0 0.0
    %1244 = vmatpush2.msra.mxu0 0.0
    %1245 = vmatprep.subr.mxu0 0.0
    %1246 = vmatpush2.msra.mxu0 0.0
    %1247 = vmatprep.mubr.f32.mxu0 0.0
    %1248 = vmatmul.mubr.f32.gmra.mxu0 %v1181
    %v1249 = vpop.f32.mrf.mxu0
    %v1250 = vadd.f32 %v1178, %v1249
    %v1251 = vpop.f32.mrf.mxu0
    %1252 = vdwg.mxu0
    %v1253 = vld [vmem:[%s146] sm:$0xff]
    %v1254 = vld [vmem:[%s146 + $0x8] sm:$0xff]
    %v1255 = vld [vmem:[%s146 + $0x10] sm:$0xff]
    %v1256 = vld [vmem:[%s146 + $0x18] sm:$0xff]
    %v1257 = vld [vmem:[%s151] sm:$0x1]
    %v1259 = vlaneseq
    %v1260 = vshrl.u32 %v1259, 7
    %v1261 = vsub.s32 0, %v1260
    %v1262 = vrot.slane %v1257, %v1261
    %1264 = vmatprep.subr.mxu0 0.0
    %1265 = vmatpush1.msra.mxu0 0.0
    %1266 = vmatprep.subr.mxu0 0.0
    %1267 = vmatpush1.msra.mxu0 0.0
    %1268 = vmatprep.subr.mxu0 0.0
    %1269 = vmatpush1.msra.mxu0 0.0
    %1270 = vmatprep.subr.mxu0 0.0
    %1271 = vmatpush1.msra.mxu0 0.0
    %1272 = vmatprep.subr.mxu0 0.0
    %1273 = vmatpush1.msra.mxu0 0.0
    %1274 = vmatprep.subr.mxu0 0.0
    %1275 = vmatpush1.msra.mxu0 0.0
    %1276 = vmatprep.subr.mxu0 0.0
    %1277 = vmatpush1.msra.mxu0 0.0
    %1278 = vmatprep.subr.mxu0 0.0
    %1279 = vmatpush1.msra.mxu0 0.0
    %1280 = vmatprep.subr.mxu0 0.0
    %1281 = vmatpush1.msra.mxu0 0.0
    %1282 = vmatprep.subr.mxu0 0.0
    %1283 = vmatpush1.msra.mxu0 0.0
    %1284 = vmatprep.subr.mxu0 0.0
    %1285 = vmatpush1.msra.mxu0 0.0
    %1286 = vmatprep.subr.mxu0 0.0
    %1287 = vmatpush1.msra.mxu0 0.0
    %1288 = vmatprep.subr.mxu0 0.0
    %1289 = vmatpush1.msra.mxu0 %v1256
    %1290 = vmatprep.subr.mxu0 0.0
    %1291 = vmatpush1.msra.mxu0 %v1255
    %1292 = vmatprep.subr.mxu0 0.0
    %1293 = vmatpush1.msra.mxu0 %v1254
    %1294 = vmatprep.subr.mxu0 0.0
    %1295 = vmatpush1.msra.mxu0 %v1253
    %1296 = vmatprep.subr.mxu0 0.0
    %1297 = vmatpush2.msra.mxu0 0.0
    %1298 = vmatprep.subr.mxu0 0.0
    %1299 = vmatpush2.msra.mxu0 0.0
    %1300 = vmatprep.subr.mxu0 0.0
    %1301 = vmatpush2.msra.mxu0 0.0
    %1302 = vmatprep.subr.mxu0 0.0
    %1303 = vmatpush2.msra.mxu0 0.0
    %1304 = vmatprep.subr.mxu0 0.0
    %1305 = vmatpush2.msra.mxu0 0.0
    %1306 = vmatprep.subr.mxu0 0.0
    %1307 = vmatpush2.msra.mxu0 0.0
    %1308 = vmatprep.subr.mxu0 0.0
    %1309 = vmatpush2.msra.mxu0 0.0
    %1310 = vmatprep.subr.mxu0 0.0
    %1311 = vmatpush2.msra.mxu0 0.0
    %1312 = vmatprep.subr.mxu0 0.0
    %1313 = vmatpush2.msra.mxu0 0.0
    %1314 = vmatprep.subr.mxu0 0.0
    %1315 = vmatpush2.msra.mxu0 0.0
    %1316 = vmatprep.subr.mxu0 0.0
    %1317 = vmatpush2.msra.mxu0 0.0
    %1318 = vmatprep.subr.mxu0 0.0
    %1319 = vmatpush2.msra.mxu0 0.0
    %1320 = vmatprep.subr.mxu0 0.0
    %1321 = vmatpush2.msra.mxu0 0.0
    %1322 = vmatprep.subr.mxu0 0.0
    %1323 = vmatpush2.msra.mxu0 0.0
    %1324 = vmatprep.subr.mxu0 0.0
    %1325 = vmatpush2.msra.mxu0 0.0
    %1326 = vmatprep.subr.mxu0 0.0
    %1327 = vmatpush2.msra.mxu0 0.0
    %1328 = vmatprep.mubr.f32.mxu0 0.0
    %1329 = vmatmul.mubr.f32.gmra.mxu0 %v1181
    %v1330 = vpop.f32.mrf.mxu0
    %v1331 = vadd.f32 %v1262, %v1330
    %v1332 = vpop.f32.mrf.mxu0
    %1333 = vdwg.mxu0
    %v1334 = vld [vmem:[%s229] sm:$0xff]
    %v1335 = vld [vmem:[%s229 + $0x8] sm:$0xff]
    %v1336 = vld [vmem:[%s229 + $0x10] sm:$0xff]
    %v1337 = vld [vmem:[%s229 + $0x18] sm:$0xff]
    %v1338 = vld [vmem:[%s234] sm:$0x1]
    %v1340 = vlaneseq
    %v1341 = vshrl.u32 %v1340, 7
    %v1342 = vsub.s32 0, %v1341
    %v1343 = vrot.slane %v1338, %v1342
    %1345 = vmatprep.subr.mxu0 0.0
    %1346 = vmatpush1.msra.mxu0 0.0
    %1347 = vmatprep.subr.mxu0 0.0
    %1348 = vmatpush1.msra.mxu0 0.0
    %1349 = vmatprep.subr.mxu0 0.0
    %1350 = vmatpush1.msra.mxu0 0.0
    %1351 = vmatprep.subr.mxu0 0.0
    %1352 = vmatpush1.msra.mxu0 0.0
    %1353 = vmatprep.subr.mxu0 0.0
    %1354 = vmatpush1.msra.mxu0 0.0
    %1355 = vmatprep.subr.mxu0 0.0
    %1356 = vmatpush1.msra.mxu0 0.0
    %1357 = vmatprep.subr.mxu0 0.0
    %1358 = vmatpush1.msra.mxu0 0.0
    %1359 = vmatprep.subr.mxu0 0.0
    %1360 = vmatpush1.msra.mxu0 0.0
    %1361 = vmatprep.subr.mxu0 0.0
    %1362 = vmatpush1.msra.mxu0 0.0
    %1363 = vmatprep.subr.mxu0 0.0
    %1364 = vmatpush1.msra.mxu0 0.0
    %1365 = vmatprep.subr.mxu0 0.0
    %1366 = vmatpush1.msra.mxu0 0.0
    %1367 = vmatprep.subr.mxu0 0.0
    %1368 = vmatpush1.msra.mxu0 0.0
    %1369 = vmatprep.subr.mxu0 0.0
    %1370 = vmatpush1.msra.mxu0 %v1337
    %1371 = vmatprep.subr.mxu0 0.0
    %1372 = vmatpush1.msra.mxu0 %v1336
    %1373 = vmatprep.subr.mxu0 0.0
    %1374 = vmatpush1.msra.mxu0 %v1335
    %1375 = vmatprep.subr.mxu0 0.0
    %1376 = vmatpush1.msra.mxu0 %v1334
    %1377 = vmatprep.subr.mxu0 0.0
    %1378 = vmatpush2.msra.mxu0 0.0
    %1379 = vmatprep.subr.mxu0 0.0
    %1380 = vmatpush2.msra.mxu0 0.0
    %1381 = vmatprep.subr.mxu0 0.0
    %1382 = vmatpush2.msra.mxu0 0.0
    %1383 = vmatprep.subr.mxu0 0.0
    %1384 = vmatpush2.msra.mxu0 0.0
    %1385 = vmatprep.subr.mxu0 0.0
    %1386 = vmatpush2.msra.mxu0 0.0
    %1387 = vmatprep.subr.mxu0 0.0
    %1388 = vmatpush2.msra.mxu0 0.0
    %1389 = vmatprep.subr.mxu0 0.0
    %1390 = vmatpush2.msra.mxu0 0.0
    %1391 = vmatprep.subr.mxu0 0.0
    %1392 = vmatpush2.msra.mxu0 0.0
    %1393 = vmatprep.subr.mxu0 0.0
    %1394 = vmatpush2.msra.mxu0 0.0
    %1395 = vmatprep.subr.mxu0 0.0
    %1396 = vmatpush2.msra.mxu0 0.0
    %1397 = vmatprep.subr.mxu0 0.0
    %1398 = vmatpush2.msra.mxu0 0.0
    %1399 = vmatprep.subr.mxu0 0.0
    %1400 = vmatpush2.msra.mxu0 0.0
    %1401 = vmatprep.subr.mxu0 0.0
    %1402 = vmatpush2.msra.mxu0 0.0
    %1403 = vmatprep.subr.mxu0 0.0
    %1404 = vmatpush2.msra.mxu0 0.0
    %1405 = vmatprep.subr.mxu0 0.0
    %1406 = vmatpush2.msra.mxu0 0.0
    %1407 = vmatprep.subr.mxu0 0.0
    %1408 = vmatpush2.msra.mxu0 0.0
    %1409 = vmatprep.mubr.f32.mxu0 0.0
    %1410 = vmatmul.mubr.f32.gmra.mxu0 %v1181
    %v1411 = vpop.f32.mrf.mxu0
    %v1412 = vadd.f32 %v1343, %v1411
    %v1413 = vpop.f32.mrf.mxu0
    %1414 = vdwg.mxu0
    %v1415 = vadd.f32 %v1164, %v1250
    %v1416 = vxor.u32 %v1415, 2147483648
    %v1417 = vmul.f32 %v1416, 1.442695
    %v1418 = vpow.pop %v1417
    %v1419 = vadd.f32 %v1418, 1.0
    %v1420 = vrcp.pop %v1419
    %v1421 = vmul.f32 1.0, %v1420
    %v1422 = vadd.f32 %v1166, %v1331
    %v1423 = vxor.u32 %v1422, 2147483648
    %v1424 = vmul.f32 %v1423, 1.442695
    %v1425 = vpow.pop %v1424
    %v1426 = vadd.f32 %v1425, 1.0
    %v1427 = vrcp.pop %v1426
    %v1428 = vmul.f32 1.0, %v1427
    %v1429 = vmul.f32 %v1421, %v1412
    %v1430 = vadd.f32 %v1168, %v1429
    %v1431 = vtanh.pop %v1430
    %v1432 = vsub.f32 1.0, %v1428
    %v1433 = vmul.f32 %v1432, %v1431
    %v1434 = vmul.f32 %v1428, %v885
    %v1435 = vadd.f32 %v1433, %v1434
    %s1436 = scalar_lea.vmem [#allocation8], 4
    %1437 = vst.msk [vmem:[%s1436] sm:$0x3] %vm333, %v1435
    %s1438 = scalar_lea.vmem [#allocation2], 78
    %v1439 = vld [vmem:[%s1438] sm:$0x3]
    %s1440 = scalar_lea.vmem [#allocation2], 80
    %v1441 = vld [vmem:[%s1440] sm:$0x3]
    %s1442 = scalar_lea.vmem [#allocation2], 82
    %v1443 = vld [vmem:[%s1442] sm:$0x3]
    %v1444 = vld [vmem:[%s341] sm:$0xff]
    %v1445 = vld [vmem:[%s341 + $0x8] sm:$0xff]
    %v1446 = vld [vmem:[%s341 + $0x10] sm:$0xff]
    %v1447 = vld [vmem:[%s341 + $0x18] sm:$0xff]
    %v1448 = vld [vmem:[%s346] sm:$0x1]
    %v1450 = vlaneseq
    %v1451 = vshrl.u32 %v1450, 7
    %v1452 = vsub.s32 0, %v1451
    %v1453 = vrot.slane %v1448, %v1452
    %v1456 = vsel %vm72, %v1160, 0
    %1458 = vmatprep.subr.mxu0 0.0
    %1459 = vmatpush1.msra.mxu0 0.0
    %1460 = vmatprep.subr.mxu0 0.0
    %1461 = vmatpush1.msra.mxu0 0.0
    %1462 = vmatprep.subr.mxu0 0.0
    %1463 = vmatpush1.msra.mxu0 0.0
    %1464 = vmatprep.subr.mxu0 0.0
    %1465 = vmatpush1.msra.mxu0 0.0
    %1466 = vmatprep.subr.mxu0 0.0
    %1467 = vmatpush1.msra.mxu0 0.0
    %1468 = vmatprep.subr.mxu0 0.0
    %1469 = vmatpush1.msra.mxu0 0.0
    %1470 = vmatprep.subr.mxu0 0.0
    %1471 = vmatpush1.msra.mxu0 0.0
    %1472 = vmatprep.subr.mxu0 0.0
    %1473 = vmatpush1.msra.mxu0 0.0
    %1474 = vmatprep.subr.mxu0 0.0
    %1475 = vmatpush1.msra.mxu0 0.0
    %1476 = vmatprep.subr.mxu0 0.0
    %1477 = vmatpush1.msra.mxu0 0.0
    %1478 = vmatprep.subr.mxu0 0.0
    %1479 = vmatpush1.msra.mxu0 0.0
    %1480 = vmatprep.subr.mxu0 0.0
    %1481 = vmatpush1.msra.mxu0 0.0
    %1482 = vmatprep.subr.mxu0 0.0
    %1483 = vmatpush1.msra.mxu0 %v1447
    %1484 = vmatprep.subr.mxu0 0.0
    %1485 = vmatpush1.msra.mxu0 %v1446
    %1486 = vmatprep.subr.mxu0 0.0
    %1487 = vmatpush1.msra.mxu0 %v1445
    %1488 = vmatprep.subr.mxu0 0.0
    %1489 = vmatpush1.msra.mxu0 %v1444
    %1490 = vmatprep.subr.mxu0 0.0
    %1491 = vmatpush2.msra.mxu0 0.0
    %1492 = vmatprep.subr.mxu0 0.0
    %1493 = vmatpush2.msra.mxu0 0.0
    %1494 = vmatprep.subr.mxu0 0.0
    %1495 = vmatpush2.msra.mxu0 0.0
    %1496 = vmatprep.subr.mxu0 0.0
    %1497 = vmatpush2.msra.mxu0 0.0
    %1498 = vmatprep.subr.mxu0 0.0
    %1499 = vmatpush2.msra.mxu0 0.0
    %1500 = vmatprep.subr.mxu0 0.0
    %1501 = vmatpush2.msra.mxu0 0.0
    %1502 = vmatprep.subr.mxu0 0.0
    %1503 = vmatpush2.msra.mxu0 0.0
    %1504 = vmatprep.subr.mxu0 0.0
    %1505 = vmatpush2.msra.mxu0 0.0
    %1506 = vmatprep.subr.mxu0 0.0
    %1507 = vmatpush2.msra.mxu0 0.0
    %1508 = vmatprep.subr.mxu0 0.0
    %1509 = vmatpush2.msra.mxu0 0.0
    %1510 = vmatprep.subr.mxu0 0.0
    %1511 = vmatpush2.msra.mxu0 0.0
    %1512 = vmatprep.subr.mxu0 0.0
    %1513 = vmatpush2.msra.mxu0 0.0
    %1514 = vmatprep.subr.mxu0 0.0
    %1515 = vmatpush2.msra.mxu0 0.0
    %1516 = vmatprep.subr.mxu0 0.0
    %1517 = vmatpush2.msra.mxu0 0.0
    %1518 = vmatprep.subr.mxu0 0.0
    %1519 = vmatpush2.msra.mxu0 0.0
    %1520 = vmatprep.subr.mxu0 0.0
    %1521 = vmatpush2.msra.mxu0 0.0
    %1522 = vmatprep.mubr.f32.mxu0 0.0
    %1523 = vmatmul.mubr.f32.gmra.mxu0 %v1456
    %v1524 = vpop.f32.mrf.mxu0
    %v1525 = vadd.f32 %v1453, %v1524
    %v1526 = vpop.f32.mrf.mxu0
    %1527 = vdwg.mxu0
    %v1528 = vld [vmem:[%s424] sm:$0xff]
    %v1529 = vld [vmem:[%s424 + $0x8] sm:$0xff]
    %v1530 = vld [vmem:[%s424 + $0x10] sm:$0xff]
    %v1531 = vld [vmem:[%s424 + $0x18] sm:$0xff]
    %v1532 = vld [vmem:[%s429] sm:$0x1]
    %v1534 = vlaneseq
    %v1535 = vshrl.u32 %v1534, 7
    %v1536 = vsub.s32 0, %v1535
    %v1537 = vrot.slane %v1532, %v1536
    %1539 = vmatprep.subr.mxu0 0.0
    %1540 = vmatpush1.msra.mxu0 0.0
    %1541 = vmatprep.subr.mxu0 0.0
    %1542 = vmatpush1.msra.mxu0 0.0
    %1543 = vmatprep.subr.mxu0 0.0
    %1544 = vmatpush1.msra.mxu0 0.0
    %1545 = vmatprep.subr.mxu0 0.0
    %1546 = vmatpush1.msra.mxu0 0.0
    %1547 = vmatprep.subr.mxu0 0.0
    %1548 = vmatpush1.msra.mxu0 0.0
    %1549 = vmatprep.subr.mxu0 0.0
    %1550 = vmatpush1.msra.mxu0 0.0
    %1551 = vmatprep.subr.mxu0 0.0
    %1552 = vmatpush1.msra.mxu0 0.0
    %1553 = vmatprep.subr.mxu0 0.0
    %1554 = vmatpush1.msra.mxu0 0.0
    %1555 = vmatprep.subr.mxu0 0.0
    %1556 = vmatpush1.msra.mxu0 0.0
    %1557 = vmatprep.subr.mxu0 0.0
    %1558 = vmatpush1.msra.mxu0 0.0
    %1559 = vmatprep.subr.mxu0 0.0
    %1560 = vmatpush1.msra.mxu0 0.0
    %1561 = vmatprep.subr.mxu0 0.0
    %1562 = vmatpush1.msra.mxu0 0.0
    %1563 = vmatprep.subr.mxu0 0.0
    %1564 = vmatpush1.msra.mxu0 %v1531
    %1565 = vmatprep.subr.mxu0 0.0
    %1566 = vmatpush1.msra.mxu0 %v1530
    %1567 = vmatprep.subr.mxu0 0.0
    %1568 = vmatpush1.msra.mxu0 %v1529
    %1569 = vmatprep.subr.mxu0 0.0
    %1570 = vmatpush1.msra.mxu0 %v1528
    %1571 = vmatprep.subr.mxu0 0.0
    %1572 = vmatpush2.msra.mxu0 0.0
    %1573 = vmatprep.subr.mxu0 0.0
    %1574 = vmatpush2.msra.mxu0 0.0
    %1575 = vmatprep.subr.mxu0 0.0
    %1576 = vmatpush2.msra.mxu0 0.0
    %1577 = vmatprep.subr.mxu0 0.0
    %1578 = vmatpush2.msra.mxu0 0.0
    %1579 = vmatprep.subr.mxu0 0.0
    %1580 = vmatpush2.msra.mxu0 0.0
    %1581 = vmatprep.subr.mxu0 0.0
    %1582 = vmatpush2.msra.mxu0 0.0
    %1583 = vmatprep.subr.mxu0 0.0
    %1584 = vmatpush2.msra.mxu0 0.0
    %1585 = vmatprep.subr.mxu0 0.0
    %1586 = vmatpush2.msra.mxu0 0.0
    %1587 = vmatprep.subr.mxu0 0.0
    %1588 = vmatpush2.msra.mxu0 0.0
    %1589 = vmatprep.subr.mxu0 0.0
    %1590 = vmatpush2.msra.mxu0 0.0
    %1591 = vmatprep.subr.mxu0 0.0
    %1592 = vmatpush2.msra.mxu0 0.0
    %1593 = vmatprep.subr.mxu0 0.0
    %1594 = vmatpush2.msra.mxu0 0.0
    %1595 = vmatprep.subr.mxu0 0.0
    %1596 = vmatpush2.msra.mxu0 0.0
    %1597 = vmatprep.subr.mxu0 0.0
    %1598 = vmatpush2.msra.mxu0 0.0
    %1599 = vmatprep.subr.mxu0 0.0
    %1600 = vmatpush2.msra.mxu0 0.0
    %1601 = vmatprep.subr.mxu0 0.0
    %1602 = vmatpush2.msra.mxu0 0.0
    %1603 = vmatprep.mubr.f32.mxu0 0.0
    %1604 = vmatmul.mubr.f32.gmra.mxu0 %v1456
    %v1605 = vpop.f32.mrf.mxu0
    %v1606 = vadd.f32 %v1537, %v1605
    %v1607 = vpop.f32.mrf.mxu0
    %1608 = vdwg.mxu0
    %v1609 = vld [vmem:[%s507] sm:$0xff]
    %v1610 = vld [vmem:[%s507 + $0x8] sm:$0xff]
    %v1611 = vld [vmem:[%s507 + $0x10] sm:$0xff]
    %v1612 = vld [vmem:[%s507 + $0x18] sm:$0xff]
    %v1613 = vld [vmem:[%s512] sm:$0x1]
    %v1615 = vlaneseq
    %v1616 = vshrl.u32 %v1615, 7
    %v1617 = vsub.s32 0, %v1616
    %v1618 = vrot.slane %v1613, %v1617
    %1620 = vmatprep.subr.mxu0 0.0
    %1621 = vmatpush1.msra.mxu0 0.0
    %1622 = vmatprep.subr.mxu0 0.0
    %1623 = vmatpush1.msra.mxu0 0.0
    %1624 = vmatprep.subr.mxu0 0.0
    %1625 = vmatpush1.msra.mxu0 0.0
    %1626 = vmatprep.subr.mxu0 0.0
    %1627 = vmatpush1.msra.mxu0 0.0
    %1628 = vmatprep.subr.mxu0 0.0
    %1629 = vmatpush1.msra.mxu0 0.0
    %1630 = vmatprep.subr.mxu0 0.0
    %1631 = vmatpush1.msra.mxu0 0.0
    %1632 = vmatprep.subr.mxu0 0.0
    %1633 = vmatpush1.msra.mxu0 0.0
    %1634 = vmatprep.subr.mxu0 0.0
    %1635 = vmatpush1.msra.mxu0 0.0
    %1636 = vmatprep.subr.mxu0 0.0
    %1637 = vmatpush1.msra.mxu0 0.0
    %1638 = vmatprep.subr.mxu0 0.0
    %1639 = vmatpush1.msra.mxu0 0.0
    %1640 = vmatprep.subr.mxu0 0.0
    %1641 = vmatpush1.msra.mxu0 0.0
    %1642 = vmatprep.subr.mxu0 0.0
    %1643 = vmatpush1.msra.mxu0 0.0
    %1644 = vmatprep.subr.mxu0 0.0
    %1645 = vmatpush1.msra.mxu0 %v1612
    %1646 = vmatprep.subr.mxu0 0.0
    %1647 = vmatpush1.msra.mxu0 %v1611
    %1648 = vmatprep.subr.mxu0 0.0
    %1649 = vmatpush1.msra.mxu0 %v1610
    %1650 = vmatprep.subr.mxu0 0.0
    %1651 = vmatpush1.msra.mxu0 %v1609
    %1652 = vmatprep.subr.mxu0 0.0
    %1653 = vmatpush2.msra.mxu0 0.0
    %1654 = vmatprep.subr.mxu0 0.0
    %1655 = vmatpush2.msra.mxu0 0.0
    %1656 = vmatprep.subr.mxu0 0.0
    %1657 = vmatpush2.msra.mxu0 0.0
    %1658 = vmatprep.subr.mxu0 0.0
    %1659 = vmatpush2.msra.mxu0 0.0
    %1660 = vmatprep.subr.mxu0 0.0
    %1661 = vmatpush2.msra.mxu0 0.0
    %1662 = vmatprep.subr.mxu0 0.0
    %1663 = vmatpush2.msra.mxu0 0.0
    %1664 = vmatprep.subr.mxu0 0.0
    %1665 = vmatpush2.msra.mxu0 0.0
    %1666 = vmatprep.subr.mxu0 0.0
    %1667 = vmatpush2.msra.mxu0 0.0
    %1668 = vmatprep.subr.mxu0 0.0
    %1669 = vmatpush2.msra.mxu0 0.0
    %1670 = vmatprep.subr.mxu0 0.0
    %1671 = vmatpush2.msra.mxu0 0.0
    %1672 = vmatprep.subr.mxu0 0.0
    %1673 = vmatpush2.msra.mxu0 0.0
    %1674 = vmatprep.subr.mxu0 0.0
    %1675 = vmatpush2.msra.mxu0 0.0
    %1676 = vmatprep.subr.mxu0 0.0
    %1677 = vmatpush2.msra.mxu0 0.0
    %1678 = vmatprep.subr.mxu0 0.0
    %1679 = vmatpush2.msra.mxu0 0.0
    %1680 = vmatprep.subr.mxu0 0.0
    %1681 = vmatpush2.msra.mxu0 0.0
    %1682 = vmatprep.subr.mxu0 0.0
    %1683 = vmatpush2.msra.mxu0 0.0
    %1684 = vmatprep.mubr.f32.mxu0 0.0
    %1685 = vmatmul.mubr.f32.gmra.mxu0 %v1456
    %v1686 = vpop.f32.mrf.mxu0
    %v1687 = vadd.f32 %v1618, %v1686
    %v1688 = vpop.f32.mrf.mxu0
    %1689 = vdwg.mxu0
    %v1690 = vadd.f32 %v1439, %v1525
    %v1691 = vxor.u32 %v1690, 2147483648
    %v1692 = vmul.f32 %v1691, 1.442695
    %v1693 = vpow.pop %v1692
    %v1694 = vadd.f32 %v1693, 1.0
    %v1695 = vrcp.pop %v1694
    %v1696 = vmul.f32 1.0, %v1695
    %v1697 = vadd.f32 %v1441, %v1606
    %v1698 = vxor.u32 %v1697, 2147483648
    %v1699 = vmul.f32 %v1698, 1.442695
    %v1700 = vpow.pop %v1699
    %v1701 = vadd.f32 %v1700, 1.0
    %v1702 = vrcp.pop %v1701
    %v1703 = vmul.f32 1.0, %v1702
    %v1704 = vmul.f32 %v1696, %v1687
    %v1705 = vadd.f32 %v1443, %v1704
    %v1706 = vtanh.pop %v1705
    %v1707 = vsub.f32 1.0, %v1703
    %v1708 = vmul.f32 %v1707, %v1706
    %v1709 = vmul.f32 %v1703, %v1160
    %v1710 = vadd.f32 %v1708, %v1709
    %s1711 = scalar_lea.vmem [#allocation8], 26
    %1712 = vst.msk [vmem:[%s1711] sm:$0x3] %vm333, %v1710
    %s1713 = scalar_lea.vmem [#allocation2], 18
    %v1714 = vld [vmem:[%s1713] sm:$0x3]
    %s1715 = scalar_lea.vmem [#allocation2], 20
    %v1716 = vld [vmem:[%s1715] sm:$0x3]
    %s1717 = scalar_lea.vmem [#allocation2], 22
    %v1718 = vld [vmem:[%s1717] sm:$0x3]
    %v1719 = vld [vmem:[#allocation5] sm:$0xff]
    %v1720 = vld [vmem:[#allocation5 + $0x8] sm:$0xff]
    %v1721 = vld [vmem:[#allocation5 + $0x10] sm:$0xff]
    %v1722 = vld [vmem:[#allocation5 + $0x18] sm:$0xff]
    %v1723 = vld [vmem:[#allocation7] sm:$0x1]
    %v1725 = vlaneseq
    %v1726 = vshrl.u32 %v1725, 7
    %v1727 = vsub.s32 0, %v1726
    %v1728 = vrot.slane %v1723, %v1727
    %v1731 = vsel %vm72, %v1435, 0
    %1733 = vmatprep.subr.mxu0 0.0
    %1734 = vmatpush1.msra.mxu0 0.0
    %1735 = vmatprep.subr.mxu0 0.0
    %1736 = vmatpush1.msra.mxu0 0.0
    %1737 = vmatprep.subr.mxu0 0.0
    %1738 = vmatpush1.msra.mxu0 0.0
    %1739 = vmatprep.subr.mxu0 0.0
    %1740 = vmatpush1.msra.mxu0 0.0
    %1741 = vmatprep.subr.mxu0 0.0
    %1742 = vmatpush1.msra.mxu0 0.0
    %1743 = vmatprep.subr.mxu0 0.0
    %1744 = vmatpush1.msra.mxu0 0.0
    %1745 = vmatprep.subr.mxu0 0.0
    %1746 = vmatpush1.msra.mxu0 0.0
    %1747 = vmatprep.subr.mxu0 0.0
    %1748 = vmatpush1.msra.mxu0 0.0
    %1749 = vmatprep.subr.mxu0 0.0
    %1750 = vmatpush1.msra.mxu0 0.0
    %1751 = vmatprep.subr.mxu0 0.0
    %1752 = vmatpush1.msra.mxu0 0.0
    %1753 = vmatprep.subr.mxu0 0.0
    %1754 = vmatpush1.msra.mxu0 0.0
    %1755 = vmatprep.subr.mxu0 0.0
    %1756 = vmatpush1.msra.mxu0 0.0
    %1757 = vmatprep.subr.mxu0 0.0
    %1758 = vmatpush1.msra.mxu0 %v1722
    %1759 = vmatprep.subr.mxu0 0.0
    %1760 = vmatpush1.msra.mxu0 %v1721
    %1761 = vmatprep.subr.mxu0 0.0
    %1762 = vmatpush1.msra.mxu0 %v1720
    %1763 = vmatprep.subr.mxu0 0.0
    %1764 = vmatpush1.msra.mxu0 %v1719
    %1765 = vmatprep.subr.mxu0 0.0
    %1766 = vmatpush2.msra.mxu0 0.0
    %1767 = vmatprep.subr.mxu0 0.0
    %1768 = vmatpush2.msra.mxu0 0.0
    %1769 = vmatprep.subr.mxu0 0.0
    %1770 = vmatpush2.msra.mxu0 0.0
    %1771 = vmatprep.subr.mxu0 0.0
    %1772 = vmatpush2.msra.mxu0 0.0
    %1773 = vmatprep.subr.mxu0 0.0
    %1774 = vmatpush2.msra.mxu0 0.0
    %1775 = vmatprep.subr.mxu0 0.0
    %1776 = vmatpush2.msra.mxu0 0.0
    %1777 = vmatprep.subr.mxu0 0.0
    %1778 = vmatpush2.msra.mxu0 0.0
    %1779 = vmatprep.subr.mxu0 0.0
    %1780 = vmatpush2.msra.mxu0 0.0
    %1781 = vmatprep.subr.mxu0 0.0
    %1782 = vmatpush2.msra.mxu0 0.0
    %1783 = vmatprep.subr.mxu0 0.0
    %1784 = vmatpush2.msra.mxu0 0.0
    %1785 = vmatprep.subr.mxu0 0.0
    %1786 = vmatpush2.msra.mxu0 0.0
    %1787 = vmatprep.subr.mxu0 0.0
    %1788 = vmatpush2.msra.mxu0 0.0
    %1789 = vmatprep.subr.mxu0 0.0
    %1790 = vmatpush2.msra.mxu0 0.0
    %1791 = vmatprep.subr.mxu0 0.0
    %1792 = vmatpush2.msra.mxu0 0.0
    %1793 = vmatprep.subr.mxu0 0.0
    %1794 = vmatpush2.msra.mxu0 0.0
    %1795 = vmatprep.subr.mxu0 0.0
    %1796 = vmatpush2.msra.mxu0 0.0
    %1797 = vmatprep.mubr.f32.mxu0 0.0
    %1798 = vmatmul.mubr.f32.gmra.mxu0 %v1731
    %v1799 = vpop.f32.mrf.mxu0
    %v1800 = vadd.f32 %v1728, %v1799
    %v1801 = vpop.f32.mrf.mxu0
    %1802 = vdwg.mxu0
    %v1803 = vld [vmem:[%s146] sm:$0xff]
    %v1804 = vld [vmem:[%s146 + $0x8] sm:$0xff]
    %v1805 = vld [vmem:[%s146 + $0x10] sm:$0xff]
    %v1806 = vld [vmem:[%s146 + $0x18] sm:$0xff]
    %v1807 = vld [vmem:[%s151] sm:$0x1]
    %v1809 = vlaneseq
    %v1810 = vshrl.u32 %v1809, 7
    %v1811 = vsub.s32 0, %v1810
    %v1812 = vrot.slane %v1807, %v1811
    %1814 = vmatprep.subr.mxu0 0.0
    %1815 = vmatpush1.msra.mxu0 0.0
    %1816 = vmatprep.subr.mxu0 0.0
    %1817 = vmatpush1.msra.mxu0 0.0
    %1818 = vmatprep.subr.mxu0 0.0
    %1819 = vmatpush1.msra.mxu0 0.0
    %1820 = vmatprep.subr.mxu0 0.0
    %1821 = vmatpush1.msra.mxu0 0.0
    %1822 = vmatprep.subr.mxu0 0.0
    %1823 = vmatpush1.msra.mxu0 0.0
    %1824 = vmatprep.subr.mxu0 0.0
    %1825 = vmatpush1.msra.mxu0 0.0
    %1826 = vmatprep.subr.mxu0 0.0
    %1827 = vmatpush1.msra.mxu0 0.0
    %1828 = vmatprep.subr.mxu0 0.0
    %1829 = vmatpush1.msra.mxu0 0.0
    %1830 = vmatprep.subr.mxu0 0.0
    %1831 = vmatpush1.msra.mxu0 0.0
    %1832 = vmatprep.subr.mxu0 0.0
    %1833 = vmatpush1.msra.mxu0 0.0
    %1834 = vmatprep.subr.mxu0 0.0
    %1835 = vmatpush1.msra.mxu0 0.0
    %1836 = vmatprep.subr.mxu0 0.0
    %1837 = vmatpush1.msra.mxu0 0.0
    %1838 = vmatprep.subr.mxu0 0.0
    %1839 = vmatpush1.msra.mxu0 %v1806
    %1840 = vmatprep.subr.mxu0 0.0
    %1841 = vmatpush1.msra.mxu0 %v1805
    %1842 = vmatprep.subr.mxu0 0.0
    %1843 = vmatpush1.msra.mxu0 %v1804
    %1844 = vmatprep.subr.mxu0 0.0
    %1845 = vmatpush1.msra.mxu0 %v1803
    %1846 = vmatprep.subr.mxu0 0.0
    %1847 = vmatpush2.msra.mxu0 0.0
    %1848 = vmatprep.subr.mxu0 0.0
    %1849 = vmatpush2.msra.mxu0 0.0
    %1850 = vmatprep.subr.mxu0 0.0
    %1851 = vmatpush2.msra.mxu0 0.0
    %1852 = vmatprep.subr.mxu0 0.0
    %1853 = vmatpush2.msra.mxu0 0.0
    %1854 = vmatprep.subr.mxu0 0.0
    %1855 = vmatpush2.msra.mxu0 0.0
    %1856 = vmatprep.subr.mxu0 0.0
    %1857 = vmatpush2.msra.mxu0 0.0
    %1858 = vmatprep.subr.mxu0 0.0
    %1859 = vmatpush2.msra.mxu0 0.0
    %1860 = vmatprep.subr.mxu0 0.0
    %1861 = vmatpush2.msra.mxu0 0.0
    %1862 = vmatprep.subr.mxu0 0.0
    %1863 = vmatpush2.msra.mxu0 0.0
    %1864 = vmatprep.subr.mxu0 0.0
    %1865 = vmatpush2.msra.mxu0 0.0
    %1866 = vmatprep.subr.mxu0 0.0
    %1867 = vmatpush2.msra.mxu0 0.0
    %1868 = vmatprep.subr.mxu0 0.0
    %1869 = vmatpush2.msra.mxu0 0.0
    %1870 = vmatprep.subr.mxu0 0.0
    %1871 = vmatpush2.msra.mxu0 0.0
    %1872 = vmatprep.subr.mxu0 0.0
    %1873 = vmatpush2.msra.mxu0 0.0
    %1874 = vmatprep.subr.mxu0 0.0
    %1875 = vmatpush2.msra.mxu0 0.0
    %1876 = vmatprep.subr.mxu0 0.0
    %1877 = vmatpush2.msra.mxu0 0.0
    %1878 = vmatprep.mubr.f32.mxu0 0.0
    %1879 = vmatmul.mubr.f32.gmra.mxu0 %v1731
    %v1880 = vpop.f32.mrf.mxu0
    %v1881 = vadd.f32 %v1812, %v1880
    %v1882 = vpop.f32.mrf.mxu0
    %1883 = vdwg.mxu0
    %v1884 = vld [vmem:[%s229] sm:$0xff]
    %v1885 = vld [vmem:[%s229 + $0x8] sm:$0xff]
    %v1886 = vld [vmem:[%s229 + $0x10] sm:$0xff]
    %v1887 = vld [vmem:[%s229 + $0x18] sm:$0xff]
    %v1888 = vld [vmem:[%s234] sm:$0x1]
    %v1890 = vlaneseq
    %v1891 = vshrl.u32 %v1890, 7
    %v1892 = vsub.s32 0, %v1891
    %v1893 = vrot.slane %v1888, %v1892
    %1895 = vmatprep.subr.mxu0 0.0
    %1896 = vmatpush1.msra.mxu0 0.0
    %1897 = vmatprep.subr.mxu0 0.0
    %1898 = vmatpush1.msra.mxu0 0.0
    %1899 = vmatprep.subr.mxu0 0.0
    %1900 = vmatpush1.msra.mxu0 0.0
    %1901 = vmatprep.subr.mxu0 0.0
    %1902 = vmatpush1.msra.mxu0 0.0
    %1903 = vmatprep.subr.mxu0 0.0
    %1904 = vmatpush1.msra.mxu0 0.0
    %1905 = vmatprep.subr.mxu0 0.0
    %1906 = vmatpush1.msra.mxu0 0.0
    %1907 = vmatprep.subr.mxu0 0.0
    %1908 = vmatpush1.msra.mxu0 0.0
    %1909 = vmatprep.subr.mxu0 0.0
    %1910 = vmatpush1.msra.mxu0 0.0
    %1911 = vmatprep.subr.mxu0 0.0
    %1912 = vmatpush1.msra.mxu0 0.0
    %1913 = vmatprep.subr.mxu0 0.0
    %1914 = vmatpush1.msra.mxu0 0.0
    %1915 = vmatprep.subr.mxu0 0.0
    %1916 = vmatpush1.msra.mxu0 0.0
    %1917 = vmatprep.subr.mxu0 0.0
    %1918 = vmatpush1.msra.mxu0 0.0
    %1919 = vmatprep.subr.mxu0 0.0
    %1920 = vmatpush1.msra.mxu0 %v1887
    %1921 = vmatprep.subr.mxu0 0.0
    %1922 = vmatpush1.msra.mxu0 %v1886
    %1923 = vmatprep.subr.mxu0 0.0
    %1924 = vmatpush1.msra.mxu0 %v1885
    %1925 = vmatprep.subr.mxu0 0.0
    %1926 = vmatpush1.msra.mxu0 %v1884
    %1927 = vmatprep.subr.mxu0 0.0
    %1928 = vmatpush2.msra.mxu0 0.0
    %1929 = vmatprep.subr.mxu0 0.0
    %1930 = vmatpush2.msra.mxu0 0.0
    %1931 = vmatprep.subr.mxu0 0.0
    %1932 = vmatpush2.msra.mxu0 0.0
    %1933 = vmatprep.subr.mxu0 0.0
    %1934 = vmatpush2.msra.mxu0 0.0
    %1935 = vmatprep.subr.mxu0 0.0
    %1936 = vmatpush2.msra.mxu0 0.0
    %1937 = vmatprep.subr.mxu0 0.0
    %1938 = vmatpush2.msra.mxu0 0.0
    %1939 = vmatprep.subr.mxu0 0.0
    %1940 = vmatpush2.msra.mxu0 0.0
    %1941 = vmatprep.subr.mxu0 0.0
    %1942 = vmatpush2.msra.mxu0 0.0
    %1943 = vmatprep.subr.mxu0 0.0
    %1944 = vmatpush2.msra.mxu0 0.0
    %1945 = vmatprep.subr.mxu0 0.0
    %1946 = vmatpush2.msra.mxu0 0.0
    %1947 = vmatprep.subr.mxu0 0.0
    %1948 = vmatpush2.msra.mxu0 0.0
    %1949 = vmatprep.subr.mxu0 0.0
    %1950 = vmatpush2.msra.mxu0 0.0
    %1951 = vmatprep.subr.mxu0 0.0
    %1952 = vmatpush2.msra.mxu0 0.0
    %1953 = vmatprep.subr.mxu0 0.0
    %1954 = vmatpush2.msra.mxu0 0.0
    %1955 = vmatprep.subr.mxu0 0.0
    %1956 = vmatpush2.msra.mxu0 0.0
    %1957 = vmatprep.subr.mxu0 0.0
    %1958 = vmatpush2.msra.mxu0 0.0
    %1959 = vmatprep.mubr.f32.mxu0 0.0
    %1960 = vmatmul.mubr.f32.gmra.mxu0 %v1731
    %v1961 = vpop.f32.mrf.mxu0
    %v1962 = vadd.f32 %v1893, %v1961
    %v1963 = vpop.f32.mrf.mxu0
    %1964 = vdwg.mxu0
    %v1965 = vadd.f32 %v1714, %v1800
    %v1966 = vxor.u32 %v1965, 2147483648
    %v1967 = vmul.f32 %v1966, 1.442695
    %v1968 = vpow.pop %v1967
    %v1969 = vadd.f32 %v1968, 1.0
    %v1970 = vrcp.pop %v1969
    %v1971 = vmul.f32 1.0, %v1970
    %v1972 = vadd.f32 %v1716, %v1881
    %v1973 = vxor.u32 %v1972, 2147483648
    %v1974 = vmul.f32 %v1973, 1.442695
    %v1975 = vpow.pop %v1974
    %v1976 = vadd.f32 %v1975, 1.0
    %v1977 = vrcp.pop %v1976
    %v1978 = vmul.f32 1.0, %v1977
    %v1979 = vmul.f32 %v1971, %v1962
    %v1980 = vadd.f32 %v1718, %v1979
    %v1981 = vtanh.pop %v1980
    %v1982 = vsub.f32 1.0, %v1978
    %v1983 = vmul.f32 %v1982, %v1981
    %v1984 = vmul.f32 %v1978, %v1435
    %v1985 = vadd.f32 %v1983, %v1984
    %s1986 = scalar_lea.vmem [#allocation8], 6
    %1987 = vst.msk [vmem:[%s1986] sm:$0x3] %vm333, %v1985
    %s1988 = scalar_lea.vmem [#allocation2], 72
    %v1989 = vld [vmem:[%s1988] sm:$0x3]
    %s1990 = scalar_lea.vmem [#allocation2], 74
    %v1991 = vld [vmem:[%s1990] sm:$0x3]
    %s1992 = scalar_lea.vmem [#allocation2], 76
    %v1993 = vld [vmem:[%s1992] sm:$0x3]
    %v1994 = vld [vmem:[%s341] sm:$0xff]
    %v1995 = vld [vmem:[%s341 + $0x8] sm:$0xff]
    %v1996 = vld [vmem:[%s341 + $0x10] sm:$0xff]
    %v1997 = vld [vmem:[%s341 + $0x18] sm:$0xff]
    %v1998 = vld [vmem:[%s346] sm:$0x1]
    %v2000 = vlaneseq
    %v2001 = vshrl.u32 %v2000, 7
    %v2002 = vsub.s32 0, %v2001
    %v2003 = vrot.slane %v1998, %v2002
    %v2006 = vsel %vm72, %v1710, 0
    %2008 = vmatprep.subr.mxu0 0.0
    %2009 = vmatpush1.msra.mxu0 0.0
    %2010 = vmatprep.subr.mxu0 0.0
    %2011 = vmatpush1.msra.mxu0 0.0
    %2012 = vmatprep.subr.mxu0 0.0
    %2013 = vmatpush1.msra.mxu0 0.0
    %2014 = vmatprep.subr.mxu0 0.0
    %2015 = vmatpush1.msra.mxu0 0.0
    %2016 = vmatprep.subr.mxu0 0.0
    %2017 = vmatpush1.msra.mxu0 0.0
    %2018 = vmatprep.subr.mxu0 0.0
    %2019 = vmatpush1.msra.mxu0 0.0
    %2020 = vmatprep.subr.mxu0 0.0
    %2021 = vmatpush1.msra.mxu0 0.0
    %2022 = vmatprep.subr.mxu0 0.0
    %2023 = vmatpush1.msra.mxu0 0.0
    %2024 = vmatprep.subr.mxu0 0.0
    %2025 = vmatpush1.msra.mxu0 0.0
    %2026 = vmatprep.subr.mxu0 0.0
    %2027 = vmatpush1.msra.mxu0 0.0
    %2028 = vmatprep.subr.mxu0 0.0
    %2029 = vmatpush1.msra.mxu0 0.0
    %2030 = vmatprep.subr.mxu0 0.0
    %2031 = vmatpush1.msra.mxu0 0.0
    %2032 = vmatprep.subr.mxu0 0.0
    %2033 = vmatpush1.msra.mxu0 %v1997
    %2034 = vmatprep.subr.mxu0 0.0
    %2035 = vmatpush1.msra.mxu0 %v1996
    %2036 = vmatprep.subr.mxu0 0.0
    %2037 = vmatpush1.msra.mxu0 %v1995
    %2038 = vmatprep.subr.mxu0 0.0
    %2039 = vmatpush1.msra.mxu0 %v1994
    %2040 = vmatprep.subr.mxu0 0.0
    %2041 = vmatpush2.msra.mxu0 0.0
    %2042 = vmatprep.subr.mxu0 0.0
    %2043 = vmatpush2.msra.mxu0 0.0
    %2044 = vmatprep.subr.mxu0 0.0
    %2045 = vmatpush2.msra.mxu0 0.0
    %2046 = vmatprep.subr.mxu0 0.0
    %2047 = vmatpush2.msra.mxu0 0.0
    %2048 = vmatprep.subr.mxu0 0.0
    %2049 = vmatpush2.msra.mxu0 0.0
    %2050 = vmatprep.subr.mxu0 0.0
    %2051 = vmatpush2.msra.mxu0 0.0
    %2052 = vmatprep.subr.mxu0 0.0
    %2053 = vmatpush2.msra.mxu0 0.0
    %2054 = vmatprep.subr.mxu0 0.0
    %2055 = vmatpush2.msra.mxu0 0.0
    %2056 = vmatprep.subr.mxu0 0.0
    %2057 = vmatpush2.msra.mxu0 0.0
    %2058 = vmatprep.subr.mxu0 0.0
    %2059 = vmatpush2.msra.mxu0 0.0
    %2060 = vmatprep.subr.mxu0 0.0
    %2061 = vmatpush2.msra.mxu0 0.0
    %2062 = vmatprep.subr.mxu0 0.0
    %2063 = vmatpush2.msra.mxu0 0.0
    %2064 = vmatprep.subr.mxu0 0.0
    %2065 = vmatpush2.msra.mxu0 0.0
    %2066 = vmatprep.subr.mxu0 0.0
    %2067 = vmatpush2.msra.mxu0 0.0
    %2068 = vmatprep.subr.mxu0 0.0
    %2069 = vmatpush2.msra.mxu0 0.0
    %2070 = vmatprep.subr.mxu0 0.0
    %2071 = vmatpush2.msra.mxu0 0.0
    %2072 = vmatprep.mubr.f32.mxu0 0.0
    %2073 = vmatmul.mubr.f32.gmra.mxu0 %v2006
    %v2074 = vpop.f32.mrf.mxu0
    %v2075 = vadd.f32 %v2003, %v2074
    %v2076 = vpop.f32.mrf.mxu0
    %2077 = vdwg.mxu0
    %v2078 = vld [vmem:[%s424] sm:$0xff]
    %v2079 = vld [vmem:[%s424 + $0x8] sm:$0xff]
    %v2080 = vld [vmem:[%s424 + $0x10] sm:$0xff]
    %v2081 = vld [vmem:[%s424 + $0x18] sm:$0xff]
    %v2082 = vld [vmem:[%s429] sm:$0x1]
    %v2084 = vlaneseq
    %v2085 = vshrl.u32 %v2084, 7
    %v2086 = vsub.s32 0, %v2085
    %v2087 = vrot.slane %v2082, %v2086
    %2089 = vmatprep.subr.mxu0 0.0
    %2090 = vmatpush1.msra.mxu0 0.0
    %2091 = vmatprep.subr.mxu0 0.0
    %2092 = vmatpush1.msra.mxu0 0.0
    %2093 = vmatprep.subr.mxu0 0.0
    %2094 = vmatpush1.msra.mxu0 0.0
    %2095 = vmatprep.subr.mxu0 0.0
    %2096 = vmatpush1.msra.mxu0 0.0
    %2097 = vmatprep.subr.mxu0 0.0
    %2098 = vmatpush1.msra.mxu0 0.0
    %2099 = vmatprep.subr.mxu0 0.0
    %2100 = vmatpush1.msra.mxu0 0.0
    %2101 = vmatprep.subr.mxu0 0.0
    %2102 = vmatpush1.msra.mxu0 0.0
    %2103 = vmatprep.subr.mxu0 0.0
    %2104 = vmatpush1.msra.mxu0 0.0
    %2105 = vmatprep.subr.mxu0 0.0
    %2106 = vmatpush1.msra.mxu0 0.0
    %2107 = vmatprep.subr.mxu0 0.0
    %2108 = vmatpush1.msra.mxu0 0.0
    %2109 = vmatprep.subr.mxu0 0.0
    %2110 = vmatpush1.msra.mxu0 0.0
    %2111 = vmatprep.subr.mxu0 0.0
    %2112 = vmatpush1.msra.mxu0 0.0
    %2113 = vmatprep.subr.mxu0 0.0
    %2114 = vmatpush1.msra.mxu0 %v2081
    %2115 = vmatprep.subr.mxu0 0.0
    %2116 = vmatpush1.msra.mxu0 %v2080
    %2117 = vmatprep.subr.mxu0 0.0
    %2118 = vmatpush1.msra.mxu0 %v2079
    %2119 = vmatprep.subr.mxu0 0.0
    %2120 = vmatpush1.msra.mxu0 %v2078
    %2121 = vmatprep.subr.mxu0 0.0
    %2122 = vmatpush2.msra.mxu0 0.0
    %2123 = vmatprep.subr.mxu0 0.0
    %2124 = vmatpush2.msra.mxu0 0.0
    %2125 = vmatprep.subr.mxu0 0.0
    %2126 = vmatpush2.msra.mxu0 0.0
    %2127 = vmatprep.subr.mxu0 0.0
    %2128 = vmatpush2.msra.mxu0 0.0
    %2129 = vmatprep.subr.mxu0 0.0
    %2130 = vmatpush2.msra.mxu0 0.0
    %2131 = vmatprep.subr.mxu0 0.0
    %2132 = vmatpush2.msra.mxu0 0.0
    %2133 = vmatprep.subr.mxu0 0.0
    %2134 = vmatpush2.msra.mxu0 0.0
    %2135 = vmatprep.subr.mxu0 0.0
    %2136 = vmatpush2.msra.mxu0 0.0
    %2137 = vmatprep.subr.mxu0 0.0
    %2138 = vmatpush2.msra.mxu0 0.0
    %2139 = vmatprep.subr.mxu0 0.0
    %2140 = vmatpush2.msra.mxu0 0.0
    %2141 = vmatprep.subr.mxu0 0.0
    %2142 = vmatpush2.msra.mxu0 0.0
    %2143 = vmatprep.subr.mxu0 0.0
    %2144 = vmatpush2.msra.mxu0 0.0
    %2145 = vmatprep.subr.mxu0 0.0
    %2146 = vmatpush2.msra.mxu0 0.0
    %2147 = vmatprep.subr.mxu0 0.0
    %2148 = vmatpush2.msra.mxu0 0.0
    %2149 = vmatprep.subr.mxu0 0.0
    %2150 = vmatpush2.msra.mxu0 0.0
    %2151 = vmatprep.subr.mxu0 0.0
    %2152 = vmatpush2.msra.mxu0 0.0
    %2153 = vmatprep.mubr.f32.mxu0 0.0
    %2154 = vmatmul.mubr.f32.gmra.mxu0 %v2006
    %v2155 = vpop.f32.mrf.mxu0
    %v2156 = vadd.f32 %v2087, %v2155
    %v2157 = vpop.f32.mrf.mxu0
    %2158 = vdwg.mxu0
    %v2159 = vld [vmem:[%s507] sm:$0xff]
    %v2160 = vld [vmem:[%s507 + $0x8] sm:$0xff]
    %v2161 = vld [vmem:[%s507 + $0x10] sm:$0xff]
    %v2162 = vld [vmem:[%s507 + $0x18] sm:$0xff]
    %v2163 = vld [vmem:[%s512] sm:$0x1]
    %v2165 = vlaneseq
    %v2166 = vshrl.u32 %v2165, 7
    %v2167 = vsub.s32 0, %v2166
    %v2168 = vrot.slane %v2163, %v2167
    %2170 = vmatprep.subr.mxu0 0.0
    %2171 = vmatpush1.msra.mxu0 0.0
    %2172 = vmatprep.subr.mxu0 0.0
    %2173 = vmatpush1.msra.mxu0 0.0
    %2174 = vmatprep.subr.mxu0 0.0
    %2175 = vmatpush1.msra.mxu0 0.0
    %2176 = vmatprep.subr.mxu0 0.0
    %2177 = vmatpush1.msra.mxu0 0.0
    %2178 = vmatprep.subr.mxu0 0.0
    %2179 = vmatpush1.msra.mxu0 0.0
    %2180 = vmatprep.subr.mxu0 0.0
    %2181 = vmatpush1.msra.mxu0 0.0
    %2182 = vmatprep.subr.mxu0 0.0
    %2183 = vmatpush1.msra.mxu0 0.0
    %2184 = vmatprep.subr.mxu0 0.0
    %2185 = vmatpush1.msra.mxu0 0.0
    %2186 = vmatprep.subr.mxu0 0.0
    %2187 = vmatpush1.msra.mxu0 0.0
    %2188 = vmatprep.subr.mxu0 0.0
    %2189 = vmatpush1.msra.mxu0 0.0
    %2190 = vmatprep.subr.mxu0 0.0
    %2191 = vmatpush1.msra.mxu0 0.0
    %2192 = vmatprep.subr.mxu0 0.0
    %2193 = vmatpush1.msra.mxu0 0.0
    %2194 = vmatprep.subr.mxu0 0.0
    %2195 = vmatpush1.msra.mxu0 %v2162
    %2196 = vmatprep.subr.mxu0 0.0
    %2197 = vmatpush1.msra.mxu0 %v2161
    %2198 = vmatprep.subr.mxu0 0.0
    %2199 = vmatpush1.msra.mxu0 %v2160
    %2200 = vmatprep.subr.mxu0 0.0
    %2201 = vmatpush1.msra.mxu0 %v2159
    %2202 = vmatprep.subr.mxu0 0.0
    %2203 = vmatpush2.msra.mxu0 0.0
    %2204 = vmatprep.subr.mxu0 0.0
    %2205 = vmatpush2.msra.mxu0 0.0
    %2206 = vmatprep.subr.mxu0 0.0
    %2207 = vmatpush2.msra.mxu0 0.0
    %2208 = vmatprep.subr.mxu0 0.0
    %2209 = vmatpush2.msra.mxu0 0.0
    %2210 = vmatprep.subr.mxu0 0.0
    %2211 = vmatpush2.msra.mxu0 0.0
    %2212 = vmatprep.subr.mxu0 0.0
    %2213 = vmatpush2.msra.mxu0 0.0
    %2214 = vmatprep.subr.mxu0 0.0
    %2215 = vmatpush2.msra.mxu0 0.0
    %2216 = vmatprep.subr.mxu0 0.0
    %2217 = vmatpush2.msra.mxu0 0.0
    %2218 = vmatprep.subr.mxu0 0.0
    %2219 = vmatpush2.msra.mxu0 0.0
    %2220 = vmatprep.subr.mxu0 0.0
    %2221 = vmatpush2.msra.mxu0 0.0
    %2222 = vmatprep.subr.mxu0 0.0
    %2223 = vmatpush2.msra.mxu0 0.0
    %2224 = vmatprep.subr.mxu0 0.0
    %2225 = vmatpush2.msra.mxu0 0.0
    %2226 = vmatprep.subr.mxu0 0.0
    %2227 = vmatpush2.msra.mxu0 0.0
    %2228 = vmatprep.subr.mxu0 0.0
    %2229 = vmatpush2.msra.mxu0 0.0
    %2230 = vmatprep.subr.mxu0 0.0
    %2231 = vmatpush2.msra.mxu0 0.0
    %2232 = vmatprep.subr.mxu0 0.0
    %2233 = vmatpush2.msra.mxu0 0.0
    %2234 = vmatprep.mubr.f32.mxu0 0.0
    %2235 = vmatmul.mubr.f32.gmra.mxu0 %v2006
    %v2236 = vpop.f32.mrf.mxu0
    %v2237 = vadd.f32 %v2168, %v2236
    %v2238 = vpop.f32.mrf.mxu0
    %2239 = vdwg.mxu0
    %v2240 = vadd.f32 %v1989, %v2075
    %v2241 = vxor.u32 %v2240, 2147483648
    %v2242 = vmul.f32 %v2241, 1.442695
    %v2243 = vpow.pop %v2242
    %v2244 = vadd.f32 %v2243, 1.0
    %v2245 = vrcp.pop %v2244
    %v2246 = vmul.f32 1.0, %v2245
    %v2247 = vadd.f32 %v1991, %v2156
    %v2248 = vxor.u32 %v2247, 2147483648
    %v2249 = vmul.f32 %v2248, 1.442695
    %v2250 = vpow.pop %v2249
    %v2251 = vadd.f32 %v2250, 1.0
    %v2252 = vrcp.pop %v2251
    %v2253 = vmul.f32 1.0, %v2252
    %v2254 = vmul.f32 %v2246, %v2237
    %v2255 = vadd.f32 %v1993, %v2254
    %v2256 = vtanh.pop %v2255
    %v2257 = vsub.f32 1.0, %v2253
    %v2258 = vmul.f32 %v2257, %v2256
    %v2259 = vmul.f32 %v2253, %v1710
    %v2260 = vadd.f32 %v2258, %v2259
    %s2261 = scalar_lea.vmem [#allocation8], 24
    %2262 = vst.msk [vmem:[%s2261] sm:$0x3] %vm333, %v2260
    %s2263 = scalar_lea.vmem [#allocation2], 24
    %v2264 = vld [vmem:[%s2263] sm:$0x3]
    %s2265 = scalar_lea.vmem [#allocation2], 26
    %v2266 = vld [vmem:[%s2265] sm:$0x3]
    %s2267 = scalar_lea.vmem [#allocation2], 28
    %v2268 = vld [vmem:[%s2267] sm:$0x3]
    %v2269 = vld [vmem:[#allocation5] sm:$0xff]
    %v2270 = vld [vmem:[#allocation5 + $0x8] sm:$0xff]
    %v2271 = vld [vmem:[#allocation5 + $0x10] sm:$0xff]
    %v2272 = vld [vmem:[#allocation5 + $0x18] sm:$0xff]
    %v2273 = vld [vmem:[#allocation7] sm:$0x1]
    %v2275 = vlaneseq
    %v2276 = vshrl.u32 %v2275, 7
    %v2277 = vsub.s32 0, %v2276
    %v2278 = vrot.slane %v2273, %v2277
    %v2281 = vsel %vm72, %v1985, 0
    %2283 = vmatprep.subr.mxu0 0.0
    %2284 = vmatpush1.msra.mxu0 0.0
    %2285 = vmatprep.subr.mxu0 0.0
    %2286 = vmatpush1.msra.mxu0 0.0
    %2287 = vmatprep.subr.mxu0 0.0
    %2288 = vmatpush1.msra.mxu0 0.0
    %2289 = vmatprep.subr.mxu0 0.0
    %2290 = vmatpush1.msra.mxu0 0.0
    %2291 = vmatprep.subr.mxu0 0.0
    %2292 = vmatpush1.msra.mxu0 0.0
    %2293 = vmatprep.subr.mxu0 0.0
    %2294 = vmatpush1.msra.mxu0 0.0
    %2295 = vmatprep.subr.mxu0 0.0
    %2296 = vmatpush1.msra.mxu0 0.0
    %2297 = vmatprep.subr.mxu0 0.0
    %2298 = vmatpush1.msra.mxu0 0.0
    %2299 = vmatprep.subr.mxu0 0.0
    %2300 = vmatpush1.msra.mxu0 0.0
    %2301 = vmatprep.subr.mxu0 0.0
    %2302 = vmatpush1.msra.mxu0 0.0
    %2303 = vmatprep.subr.mxu0 0.0
    %2304 = vmatpush1.msra.mxu0 0.0
    %2305 = vmatprep.subr.mxu0 0.0
    %2306 = vmatpush1.msra.mxu0 0.0
    %2307 = vmatprep.subr.mxu0 0.0
    %2308 = vmatpush1.msra.mxu0 %v2272
    %2309 = vmatprep.subr.mxu0 0.0
    %2310 = vmatpush1.msra.mxu0 %v2271
    %2311 = vmatprep.subr.mxu0 0.0
    %2312 = vmatpush1.msra.mxu0 %v2270
    %2313 = vmatprep.subr.mxu0 0.0
    %2314 = vmatpush1.msra.mxu0 %v2269
    %2315 = vmatprep.subr.mxu0 0.0
    %2316 = vmatpush2.msra.mxu0 0.0
    %2317 = vmatprep.subr.mxu0 0.0
    %2318 = vmatpush2.msra.mxu0 0.0
    %2319 = vmatprep.subr.mxu0 0.0
    %2320 = vmatpush2.msra.mxu0 0.0
    %2321 = vmatprep.subr.mxu0 0.0
    %2322 = vmatpush2.msra.mxu0 0.0
    %2323 = vmatprep.subr.mxu0 0.0
    %2324 = vmatpush2.msra.mxu0 0.0
    %2325 = vmatprep.subr.mxu0 0.0
    %2326 = vmatpush2.msra.mxu0 0.0
    %2327 = vmatprep.subr.mxu0 0.0
    %2328 = vmatpush2.msra.mxu0 0.0
    %2329 = vmatprep.subr.mxu0 0.0
    %2330 = vmatpush2.msra.mxu0 0.0
    %2331 = vmatprep.subr.mxu0 0.0
    %2332 = vmatpush2.msra.mxu0 0.0
    %2333 = vmatprep.subr.mxu0 0.0
    %2334 = vmatpush2.msra.mxu0 0.0
    %2335 = vmatprep.subr.mxu0 0.0
    %2336 = vmatpush2.msra.mxu0 0.0
    %2337 = vmatprep.subr.mxu0 0.0
    %2338 = vmatpush2.msra.mxu0 0.0
    %2339 = vmatprep.subr.mxu0 0.0
    %2340 = vmatpush2.msra.mxu0 0.0
    %2341 = vmatprep.subr.mxu0 0.0
    %2342 = vmatpush2.msra.mxu0 0.0
    %2343 = vmatprep.subr.mxu0 0.0
    %2344 = vmatpush2.msra.mxu0 0.0
    %2345 = vmatprep.subr.mxu0 0.0
    %2346 = vmatpush2.msra.mxu0 0.0
    %2347 = vmatprep.mubr.f32.mxu0 0.0
    %2348 = vmatmul.mubr.f32.gmra.mxu0 %v2281
    %v2349 = vpop.f32.mrf.mxu0
    %v2350 = vadd.f32 %v2278, %v2349
    %v2351 = vpop.f32.mrf.mxu0
    %2352 = vdwg.mxu0
    %v2353 = vld [vmem:[%s146] sm:$0xff]
    %v2354 = vld [vmem:[%s146 + $0x8] sm:$0xff]
    %v2355 = vld [vmem:[%s146 + $0x10] sm:$0xff]
    %v2356 = vld [vmem:[%s146 + $0x18] sm:$0xff]
    %v2357 = vld [vmem:[%s151] sm:$0x1]
    %v2359 = vlaneseq
    %v2360 = vshrl.u32 %v2359, 7
    %v2361 = vsub.s32 0, %v2360
    %v2362 = vrot.slane %v2357, %v2361
    %2364 = vmatprep.subr.mxu0 0.0
    %2365 = vmatpush1.msra.mxu0 0.0
    %2366 = vmatprep.subr.mxu0 0.0
    %2367 = vmatpush1.msra.mxu0 0.0
    %2368 = vmatprep.subr.mxu0 0.0
    %2369 = vmatpush1.msra.mxu0 0.0
    %2370 = vmatprep.subr.mxu0 0.0
    %2371 = vmatpush1.msra.mxu0 0.0
    %2372 = vmatprep.subr.mxu0 0.0
    %2373 = vmatpush1.msra.mxu0 0.0
    %2374 = vmatprep.subr.mxu0 0.0
    %2375 = vmatpush1.msra.mxu0 0.0
    %2376 = vmatprep.subr.mxu0 0.0
    %2377 = vmatpush1.msra.mxu0 0.0
    %2378 = vmatprep.subr.mxu0 0.0
    %2379 = vmatpush1.msra.mxu0 0.0
    %2380 = vmatprep.subr.mxu0 0.0
    %2381 = vmatpush1.msra.mxu0 0.0
    %2382 = vmatprep.subr.mxu0 0.0
    %2383 = vmatpush1.msra.mxu0 0.0
    %2384 = vmatprep.subr.mxu0 0.0
    %2385 = vmatpush1.msra.mxu0 0.0
    %2386 = vmatprep.subr.mxu0 0.0
    %2387 = vmatpush1.msra.mxu0 0.0
    %2388 = vmatprep.subr.mxu0 0.0
    %2389 = vmatpush1.msra.mxu0 %v2356
    %2390 = vmatprep.subr.mxu0 0.0
    %2391 = vmatpush1.msra.mxu0 %v2355
    %2392 = vmatprep.subr.mxu0 0.0
    %2393 = vmatpush1.msra.mxu0 %v2354
    %2394 = vmatprep.subr.mxu0 0.0
    %2395 = vmatpush1.msra.mxu0 %v2353
    %2396 = vmatprep.subr.mxu0 0.0
    %2397 = vmatpush2.msra.mxu0 0.0
    %2398 = vmatprep.subr.mxu0 0.0
    %2399 = vmatpush2.msra.mxu0 0.0
    %2400 = vmatprep.subr.mxu0 0.0
    %2401 = vmatpush2.msra.mxu0 0.0
    %2402 = vmatprep.subr.mxu0 0.0
    %2403 = vmatpush2.msra.mxu0 0.0
    %2404 = vmatprep.subr.mxu0 0.0
    %2405 = vmatpush2.msra.mxu0 0.0
    %2406 = vmatprep.subr.mxu0 0.0
    %2407 = vmatpush2.msra.mxu0 0.0
    %2408 = vmatprep.subr.mxu0 0.0
    %2409 = vmatpush2.msra.mxu0 0.0
    %2410 = vmatprep.subr.mxu0 0.0
    %2411 = vmatpush2.msra.mxu0 0.0
    %2412 = vmatprep.subr.mxu0 0.0
    %2413 = vmatpush2.msra.mxu0 0.0
    %2414 = vmatprep.subr.mxu0 0.0
    %2415 = vmatpush2.msra.mxu0 0.0
    %2416 = vmatprep.subr.mxu0 0.0
    %2417 = vmatpush2.msra.mxu0 0.0
    %2418 = vmatprep.subr.mxu0 0.0
    %2419 = vmatpush2.msra.mxu0 0.0
    %2420 = vmatprep.subr.mxu0 0.0
    %2421 = vmatpush2.msra.mxu0 0.0
    %2422 = vmatprep.subr.mxu0 0.0
    %2423 = vmatpush2.msra.mxu0 0.0
    %2424 = vmatprep.subr.mxu0 0.0
    %2425 = vmatpush2.msra.mxu0 0.0
    %2426 = vmatprep.subr.mxu0 0.0
    %2427 = vmatpush2.msra.mxu0 0.0
    %2428 = vmatprep.mubr.f32.mxu0 0.0
    %2429 = vmatmul.mubr.f32.gmra.mxu0 %v2281
    %v2430 = vpop.f32.mrf.mxu0
    %v2431 = vadd.f32 %v2362, %v2430
    %v2432 = vpop.f32.mrf.mxu0
    %2433 = vdwg.mxu0
    %v2434 = vld [vmem:[%s229] sm:$0xff]
    %v2435 = vld [vmem:[%s229 + $0x8] sm:$0xff]
    %v2436 = vld [vmem:[%s229 + $0x10] sm:$0xff]
    %v2437 = vld [vmem:[%s229 + $0x18] sm:$0xff]
    %v2438 = vld [vmem:[%s234] sm:$0x1]
    %v2440 = vlaneseq
    %v2441 = vshrl.u32 %v2440, 7
    %v2442 = vsub.s32 0, %v2441
    %v2443 = vrot.slane %v2438, %v2442
    %2445 = vmatprep.subr.mxu0 0.0
    %2446 = vmatpush1.msra.mxu0 0.0
    %2447 = vmatprep.subr.mxu0 0.0
    %2448 = vmatpush1.msra.mxu0 0.0
    %2449 = vmatprep.subr.mxu0 0.0
    %2450 = vmatpush1.msra.mxu0 0.0
    %2451 = vmatprep.subr.mxu0 0.0
    %2452 = vmatpush1.msra.mxu0 0.0
    %2453 = vmatprep.subr.mxu0 0.0
    %2454 = vmatpush1.msra.mxu0 0.0
    %2455 = vmatprep.subr.mxu0 0.0
    %2456 = vmatpush1.msra.mxu0 0.0
    %2457 = vmatprep.subr.mxu0 0.0
    %2458 = vmatpush1.msra.mxu0 0.0
    %2459 = vmatprep.subr.mxu0 0.0
    %2460 = vmatpush1.msra.mxu0 0.0
    %2461 = vmatprep.subr.mxu0 0.0
    %2462 = vmatpush1.msra.mxu0 0.0
    %2463 = vmatprep.subr.mxu0 0.0
    %2464 = vmatpush1.msra.mxu0 0.0
    %2465 = vmatprep.subr.mxu0 0.0
    %2466 = vmatpush1.msra.mxu0 0.0
    %2467 = vmatprep.subr.mxu0 0.0
    %2468 = vmatpush1.msra.mxu0 0.0
    %2469 = vmatprep.subr.mxu0 0.0
    %2470 = vmatpush1.msra.mxu0 %v2437
    %2471 = vmatprep.subr.mxu0 0.0
    %2472 = vmatpush1.msra.mxu0 %v2436
    %2473 = vmatprep.subr.mxu0 0.0
    %2474 = vmatpush1.msra.mxu0 %v2435
    %2475 = vmatprep.subr.mxu0 0.0
    %2476 = vmatpush1.msra.mxu0 %v2434
    %2477 = vmatprep.subr.mxu0 0.0
    %2478 = vmatpush2.msra.mxu0 0.0
    %2479 = vmatprep.subr.mxu0 0.0
    %2480 = vmatpush2.msra.mxu0 0.0
    %2481 = vmatprep.subr.mxu0 0.0
    %2482 = vmatpush2.msra.mxu0 0.0
    %2483 = vmatprep.subr.mxu0 0.0
    %2484 = vmatpush2.msra.mxu0 0.0
    %2485 = vmatprep.subr.mxu0 0.0
    %2486 = vmatpush2.msra.mxu0 0.0
    %2487 = vmatprep.subr.mxu0 0.0
    %2488 = vmatpush2.msra.mxu0 0.0
    %2489 = vmatprep.subr.mxu0 0.0
    %2490 = vmatpush2.msra.mxu0 0.0
    %2491 = vmatprep.subr.mxu0 0.0
    %2492 = vmatpush2.msra.mxu0 0.0
    %2493 = vmatprep.subr.mxu0 0.0
    %2494 = vmatpush2.msra.mxu0 0.0
    %2495 = vmatprep.subr.mxu0 0.0
    %2496 = vmatpush2.msra.mxu0 0.0
    %2497 = vmatprep.subr.mxu0 0.0
    %2498 = vmatpush2.msra.mxu0 0.0
    %2499 = vmatprep.subr.mxu0 0.0
    %2500 = vmatpush2.msra.mxu0 0.0
    %2501 = vmatprep.subr.mxu0 0.0
    %2502 = vmatpush2.msra.mxu0 0.0
    %2503 = vmatprep.subr.mxu0 0.0
    %2504 = vmatpush2.msra.mxu0 0.0
    %2505 = vmatprep.subr.mxu0 0.0
    %2506 = vmatpush2.msra.mxu0 0.0
    %2507 = vmatprep.subr.mxu0 0.0
    %2508 = vmatpush2.msra.mxu0 0.0
    %2509 = vmatprep.mubr.f32.mxu0 0.0
    %2510 = vmatmul.mubr.f32.gmra.mxu0 %v2281
    %v2511 = vpop.f32.mrf.mxu0
    %v2512 = vadd.f32 %v2443, %v2511
    %v2513 = vpop.f32.mrf.mxu0
    %2514 = vdwg.mxu0
    %v2515 = vadd.f32 %v2264, %v2350
    %v2516 = vxor.u32 %v2515, 2147483648
    %v2517 = vmul.f32 %v2516, 1.442695
    %v2518 = vpow.pop %v2517
    %v2519 = vadd.f32 %v2518, 1.0
    %v2520 = vrcp.pop %v2519
    %v2521 = vmul.f32 1.0, %v2520
    %v2522 = vadd.f32 %v2266, %v2431
    %v2523 = vxor.u32 %v2522, 2147483648
    %v2524 = vmul.f32 %v2523, 1.442695
    %v2525 = vpow.pop %v2524
    %v2526 = vadd.f32 %v2525, 1.0
    %v2527 = vrcp.pop %v2526
    %v2528 = vmul.f32 1.0, %v2527
    %v2529 = vmul.f32 %v2521, %v2512
    %v2530 = vadd.f32 %v2268, %v2529
    %v2531 = vtanh.pop %v2530
    %v2532 = vsub.f32 1.0, %v2528
    %v2533 = vmul.f32 %v2532, %v2531
    %v2534 = vmul.f32 %v2528, %v1985
    %v2535 = vadd.f32 %v2533, %v2534
    %s2536 = scalar_lea.vmem [#allocation8], 8
    %2537 = vst.msk [vmem:[%s2536] sm:$0x3] %vm333, %v2535
    %s2538 = scalar_lea.vmem [#allocation2], 66
    %v2539 = vld [vmem:[%s2538] sm:$0x3]
    %s2540 = scalar_lea.vmem [#allocation2], 68
    %v2541 = vld [vmem:[%s2540] sm:$0x3]
    %s2542 = scalar_lea.vmem [#allocation2], 70
    %v2543 = vld [vmem:[%s2542] sm:$0x3]
    %v2544 = vld [vmem:[%s341] sm:$0xff]
    %v2545 = vld [vmem:[%s341 + $0x8] sm:$0xff]
    %v2546 = vld [vmem:[%s341 + $0x10] sm:$0xff]
    %v2547 = vld [vmem:[%s341 + $0x18] sm:$0xff]
    %v2548 = vld [vmem:[%s346] sm:$0x1]
    %v2550 = vlaneseq
    %v2551 = vshrl.u32 %v2550, 7
    %v2552 = vsub.s32 0, %v2551
    %v2553 = vrot.slane %v2548, %v2552
    %v2556 = vsel %vm72, %v2260, 0
    %2558 = vmatprep.subr.mxu0 0.0
    %2559 = vmatpush1.msra.mxu0 0.0
    %2560 = vmatprep.subr.mxu0 0.0
    %2561 = vmatpush1.msra.mxu0 0.0
    %2562 = vmatprep.subr.mxu0 0.0
    %2563 = vmatpush1.msra.mxu0 0.0
    %2564 = vmatprep.subr.mxu0 0.0
    %2565 = vmatpush1.msra.mxu0 0.0
    %2566 = vmatprep.subr.mxu0 0.0
    %2567 = vmatpush1.msra.mxu0 0.0
    %2568 = vmatprep.subr.mxu0 0.0
    %2569 = vmatpush1.msra.mxu0 0.0
    %2570 = vmatprep.subr.mxu0 0.0
    %2571 = vmatpush1.msra.mxu0 0.0
    %2572 = vmatprep.subr.mxu0 0.0
    %2573 = vmatpush1.msra.mxu0 0.0
    %2574 = vmatprep.subr.mxu0 0.0
    %2575 = vmatpush1.msra.mxu0 0.0
    %2576 = vmatprep.subr.mxu0 0.0
    %2577 = vmatpush1.msra.mxu0 0.0
    %2578 = vmatprep.subr.mxu0 0.0
    %2579 = vmatpush1.msra.mxu0 0.0
    %2580 = vmatprep.subr.mxu0 0.0
    %2581 = vmatpush1.msra.mxu0 0.0
    %2582 = vmatprep.subr.mxu0 0.0
    %2583 = vmatpush1.msra.mxu0 %v2547
    %2584 = vmatprep.subr.mxu0 0.0
    %2585 = vmatpush1.msra.mxu0 %v2546
    %2586 = vmatprep.subr.mxu0 0.0
    %2587 = vmatpush1.msra.mxu0 %v2545
    %2588 = vmatprep.subr.mxu0 0.0
    %2589 = vmatpush1.msra.mxu0 %v2544
    %2590 = vmatprep.subr.mxu0 0.0
    %2591 = vmatpush2.msra.mxu0 0.0
    %2592 = vmatprep.subr.mxu0 0.0
    %2593 = vmatpush2.msra.mxu0 0.0
    %2594 = vmatprep.subr.mxu0 0.0
    %2595 = vmatpush2.msra.mxu0 0.0
    %2596 = vmatprep.subr.mxu0 0.0
    %2597 = vmatpush2.msra.mxu0 0.0
    %2598 = vmatprep.subr.mxu0 0.0
    %2599 = vmatpush2.msra.mxu0 0.0
    %2600 = vmatprep.subr.mxu0 0.0
    %2601 = vmatpush2.msra.mxu0 0.0
    %2602 = vmatprep.subr.mxu0 0.0
    %2603 = vmatpush2.msra.mxu0 0.0
    %2604 = vmatprep.subr.mxu0 0.0
    %2605 = vmatpush2.msra.mxu0 0.0
    %2606 = vmatprep.subr.mxu0 0.0
    %2607 = vmatpush2.msra.mxu0 0.0
    %2608 = vmatprep.subr.mxu0 0.0
    %2609 = vmatpush2.msra.mxu0 0.0
    %2610 = vmatprep.subr.mxu0 0.0
    %2611 = vmatpush2.msra.mxu0 0.0
    %2612 = vmatprep.subr.mxu0 0.0
    %2613 = vmatpush2.msra.mxu0 0.0
    %2614 = vmatprep.subr.mxu0 0.0
    %2615 = vmatpush2.msra.mxu0 0.0
    %2616 = vmatprep.subr.mxu0 0.0
    %2617 = vmatpush2.msra.mxu0 0.0
    %2618 = vmatprep.subr.mxu0 0.0
    %2619 = vmatpush2.msra.mxu0 0.0
    %2620 = vmatprep.subr.mxu0 0.0
    %2621 = vmatpush2.msra.mxu0 0.0
    %2622 = vmatprep.mubr.f32.mxu0 0.0
    %2623 = vmatmul.mubr.f32.gmra.mxu0 %v2556
    %v2624 = vpop.f32.mrf.mxu0
    %v2625 = vadd.f32 %v2553, %v2624
    %v2626 = vpop.f32.mrf.mxu0
    %2627 = vdwg.mxu0
    %v2628 = vld [vmem:[%s424] sm:$0xff]
    %v2629 = vld [vmem:[%s424 + $0x8] sm:$0xff]
    %v2630 = vld [vmem:[%s424 + $0x10] sm:$0xff]
    %v2631 = vld [vmem:[%s424 + $0x18] sm:$0xff]
    %v2632 = vld [vmem:[%s429] sm:$0x1]
    %v2634 = vlaneseq
    %v2635 = vshrl.u32 %v2634, 7
    %v2636 = vsub.s32 0, %v2635
    %v2637 = vrot.slane %v2632, %v2636
    %2639 = vmatprep.subr.mxu0 0.0
    %2640 = vmatpush1.msra.mxu0 0.0
    %2641 = vmatprep.subr.mxu0 0.0
    %2642 = vmatpush1.msra.mxu0 0.0
    %2643 = vmatprep.subr.mxu0 0.0
    %2644 = vmatpush1.msra.mxu0 0.0
    %2645 = vmatprep.subr.mxu0 0.0
    %2646 = vmatpush1.msra.mxu0 0.0
    %2647 = vmatprep.subr.mxu0 0.0
    %2648 = vmatpush1.msra.mxu0 0.0
    %2649 = vmatprep.subr.mxu0 0.0
    %2650 = vmatpush1.msra.mxu0 0.0
    %2651 = vmatprep.subr.mxu0 0.0
    %2652 = vmatpush1.msra.mxu0 0.0
    %2653 = vmatprep.subr.mxu0 0.0
    %2654 = vmatpush1.msra.mxu0 0.0
    %2655 = vmatprep.subr.mxu0 0.0
    %2656 = vmatpush1.msra.mxu0 0.0
    %2657 = vmatprep.subr.mxu0 0.0
    %2658 = vmatpush1.msra.mxu0 0.0
    %2659 = vmatprep.subr.mxu0 0.0
    %2660 = vmatpush1.msra.mxu0 0.0
    %2661 = vmatprep.subr.mxu0 0.0
    %2662 = vmatpush1.msra.mxu0 0.0
    %2663 = vmatprep.subr.mxu0 0.0
    %2664 = vmatpush1.msra.mxu0 %v2631
    %2665 = vmatprep.subr.mxu0 0.0
    %2666 = vmatpush1.msra.mxu0 %v2630
    %2667 = vmatprep.subr.mxu0 0.0
    %2668 = vmatpush1.msra.mxu0 %v2629
    %2669 = vmatprep.subr.mxu0 0.0
    %2670 = vmatpush1.msra.mxu0 %v2628
    %2671 = vmatprep.subr.mxu0 0.0
    %2672 = vmatpush2.msra.mxu0 0.0
    %2673 = vmatprep.subr.mxu0 0.0
    %2674 = vmatpush2.msra.mxu0 0.0
    %2675 = vmatprep.subr.mxu0 0.0
    %2676 = vmatpush2.msra.mxu0 0.0
    %2677 = vmatprep.subr.mxu0 0.0
    %2678 = vmatpush2.msra.mxu0 0.0
    %2679 = vmatprep.subr.mxu0 0.0
    %2680 = vmatpush2.msra.mxu0 0.0
    %2681 = vmatprep.subr.mxu0 0.0
    %2682 = vmatpush2.msra.mxu0 0.0
    %2683 = vmatprep.subr.mxu0 0.0
    %2684 = vmatpush2.msra.mxu0 0.0
    %2685 = vmatprep.subr.mxu0 0.0
    %2686 = vmatpush2.msra.mxu0 0.0
    %2687 = vmatprep.subr.mxu0 0.0
    %2688 = vmatpush2.msra.mxu0 0.0
    %2689 = vmatprep.subr.mxu0 0.0
    %2690 = vmatpush2.msra.mxu0 0.0
    %2691 = vmatprep.subr.mxu0 0.0
    %2692 = vmatpush2.msra.mxu0 0.0
    %2693 = vmatprep.subr.mxu0 0.0
    %2694 = vmatpush2.msra.mxu0 0.0
    %2695 = vmatprep.subr.mxu0 0.0
    %2696 = vmatpush2.msra.mxu0 0.0
    %2697 = vmatprep.subr.mxu0 0.0
    %2698 = vmatpush2.msra.mxu0 0.0
    %2699 = vmatprep.subr.mxu0 0.0
    %2700 = vmatpush2.msra.mxu0 0.0
    %2701 = vmatprep.subr.mxu0 0.0
    %2702 = vmatpush2.msra.mxu0 0.0
    %2703 = vmatprep.mubr.f32.mxu0 0.0
    %2704 = vmatmul.mubr.f32.gmra.mxu0 %v2556
    %v2705 = vpop.f32.mrf.mxu0
    %v2706 = vadd.f32 %v2637, %v2705
    %v2707 = vpop.f32.mrf.mxu0
    %2708 = vdwg.mxu0
    %v2709 = vld [vmem:[%s507] sm:$0xff]
    %v2710 = vld [vmem:[%s507 + $0x8] sm:$0xff]
    %v2711 = vld [vmem:[%s507 + $0x10] sm:$0xff]
    %v2712 = vld [vmem:[%s507 + $0x18] sm:$0xff]
    %v2713 = vld [vmem:[%s512] sm:$0x1]
    %v2715 = vlaneseq
    %v2716 = vshrl.u32 %v2715, 7
    %v2717 = vsub.s32 0, %v2716
    %v2718 = vrot.slane %v2713, %v2717
    %2720 = vmatprep.subr.mxu0 0.0
    %2721 = vmatpush1.msra.mxu0 0.0
    %2722 = vmatprep.subr.mxu0 0.0
    %2723 = vmatpush1.msra.mxu0 0.0
    %2724 = vmatprep.subr.mxu0 0.0
    %2725 = vmatpush1.msra.mxu0 0.0
    %2726 = vmatprep.subr.mxu0 0.0
    %2727 = vmatpush1.msra.mxu0 0.0
    %2728 = vmatprep.subr.mxu0 0.0
    %2729 = vmatpush1.msra.mxu0 0.0
    %2730 = vmatprep.subr.mxu0 0.0
    %2731 = vmatpush1.msra.mxu0 0.0
    %2732 = vmatprep.subr.mxu0 0.0
    %2733 = vmatpush1.msra.mxu0 0.0
    %2734 = vmatprep.subr.mxu0 0.0
    %2735 = vmatpush1.msra.mxu0 0.0
    %2736 = vmatprep.subr.mxu0 0.0
    %2737 = vmatpush1.msra.mxu0 0.0
    %2738 = vmatprep.subr.mxu0 0.0
    %2739 = vmatpush1.msra.mxu0 0.0
    %2740 = vmatprep.subr.mxu0 0.0
    %2741 = vmatpush1.msra.mxu0 0.0
    %2742 = vmatprep.subr.mxu0 0.0
    %2743 = vmatpush1.msra.mxu0 0.0
    %2744 = vmatprep.subr.mxu0 0.0
    %2745 = vmatpush1.msra.mxu0 %v2712
    %2746 = vmatprep.subr.mxu0 0.0
    %2747 = vmatpush1.msra.mxu0 %v2711
    %2748 = vmatprep.subr.mxu0 0.0
    %2749 = vmatpush1.msra.mxu0 %v2710
    %2750 = vmatprep.subr.mxu0 0.0
    %2751 = vmatpush1.msra.mxu0 %v2709
    %2752 = vmatprep.subr.mxu0 0.0
    %2753 = vmatpush2.msra.mxu0 0.0
    %2754 = vmatprep.subr.mxu0 0.0
    %2755 = vmatpush2.msra.mxu0 0.0
    %2756 = vmatprep.subr.mxu0 0.0
    %2757 = vmatpush2.msra.mxu0 0.0
    %2758 = vmatprep.subr.mxu0 0.0
    %2759 = vmatpush2.msra.mxu0 0.0
    %2760 = vmatprep.subr.mxu0 0.0
    %2761 = vmatpush2.msra.mxu0 0.0
    %2762 = vmatprep.subr.mxu0 0.0
    %2763 = vmatpush2.msra.mxu0 0.0
    %2764 = vmatprep.subr.mxu0 0.0
    %2765 = vmatpush2.msra.mxu0 0.0
    %2766 = vmatprep.subr.mxu0 0.0
    %2767 = vmatpush2.msra.mxu0 0.0
    %2768 = vmatprep.subr.mxu0 0.0
    %2769 = vmatpush2.msra.mxu0 0.0
    %2770 = vmatprep.subr.mxu0 0.0
    %2771 = vmatpush2.msra.mxu0 0.0
    %2772 = vmatprep.subr.mxu0 0.0
    %2773 = vmatpush2.msra.mxu0 0.0
    %2774 = vmatprep.subr.mxu0 0.0
    %2775 = vmatpush2.msra.mxu0 0.0
    %2776 = vmatprep.subr.mxu0 0.0
    %2777 = vmatpush2.msra.mxu0 0.0
    %2778 = vmatprep.subr.mxu0 0.0
    %2779 = vmatpush2.msra.mxu0 0.0
    %2780 = vmatprep.subr.mxu0 0.0
    %2781 = vmatpush2.msra.mxu0 0.0
    %2782 = vmatprep.subr.mxu0 0.0
    %2783 = vmatpush2.msra.mxu0 0.0
    %2784 = vmatprep.mubr.f32.mxu0 0.0
    %2785 = vmatmul.mubr.f32.gmra.mxu0 %v2556
    %v2786 = vpop.f32.mrf.mxu0
    %v2787 = vadd.f32 %v2718, %v2786
    %v2788 = vpop.f32.mrf.mxu0
    %2789 = vdwg.mxu0
    %v2790 = vadd.f32 %v2539, %v2625
    %v2791 = vxor.u32 %v2790, 2147483648
    %v2792 = vmul.f32 %v2791, 1.442695
    %v2793 = vpow.pop %v2792
    %v2794 = vadd.f32 %v2793, 1.0
    %v2795 = vrcp.pop %v2794
    %v2796 = vmul.f32 1.0, %v2795
    %v2797 = vadd.f32 %v2541, %v2706
    %v2798 = vxor.u32 %v2797, 2147483648
    %v2799 = vmul.f32 %v2798, 1.442695
    %v2800 = vpow.pop %v2799
    %v2801 = vadd.f32 %v2800, 1.0
    %v2802 = vrcp.pop %v2801
    %v2803 = vmul.f32 1.0, %v2802
    %v2804 = vmul.f32 %v2796, %v2787
    %v2805 = vadd.f32 %v2543, %v2804
    %v2806 = vtanh.pop %v2805
    %v2807 = vsub.f32 1.0, %v2803
    %v2808 = vmul.f32 %v2807, %v2806
    %v2809 = vmul.f32 %v2803, %v2260
    %v2810 = vadd.f32 %v2808, %v2809
    %s2811 = scalar_lea.vmem [#allocation8], 22
    %2812 = vst.msk [vmem:[%s2811] sm:$0x3] %vm333, %v2810
    %s2813 = scalar_lea.vmem [#allocation2], 30
    %v2814 = vld [vmem:[%s2813] sm:$0x3]
    %s2815 = scalar_lea.vmem [#allocation2], 32
    %v2816 = vld [vmem:[%s2815] sm:$0x3]
    %s2817 = scalar_lea.vmem [#allocation2], 34
    %v2818 = vld [vmem:[%s2817] sm:$0x3]
    %v2819 = vld [vmem:[#allocation5] sm:$0xff]
    %v2820 = vld [vmem:[#allocation5 + $0x8] sm:$0xff]
    %v2821 = vld [vmem:[#allocation5 + $0x10] sm:$0xff]
    %v2822 = vld [vmem:[#allocation5 + $0x18] sm:$0xff]
    %v2823 = vld [vmem:[#allocation7] sm:$0x1]
    %v2825 = vlaneseq
    %v2826 = vshrl.u32 %v2825, 7
    %v2827 = vsub.s32 0, %v2826
    %v2828 = vrot.slane %v2823, %v2827
    %v2831 = vsel %vm72, %v2535, 0
    %2833 = vmatprep.subr.mxu0 0.0
    %2834 = vmatpush1.msra.mxu0 0.0
    %2835 = vmatprep.subr.mxu0 0.0
    %2836 = vmatpush1.msra.mxu0 0.0
    %2837 = vmatprep.subr.mxu0 0.0
    %2838 = vmatpush1.msra.mxu0 0.0
    %2839 = vmatprep.subr.mxu0 0.0
    %2840 = vmatpush1.msra.mxu0 0.0
    %2841 = vmatprep.subr.mxu0 0.0
    %2842 = vmatpush1.msra.mxu0 0.0
    %2843 = vmatprep.subr.mxu0 0.0
    %2844 = vmatpush1.msra.mxu0 0.0
    %2845 = vmatprep.subr.mxu0 0.0
    %2846 = vmatpush1.msra.mxu0 0.0
    %2847 = vmatprep.subr.mxu0 0.0
    %2848 = vmatpush1.msra.mxu0 0.0
    %2849 = vmatprep.subr.mxu0 0.0
    %2850 = vmatpush1.msra.mxu0 0.0
    %2851 = vmatprep.subr.mxu0 0.0
    %2852 = vmatpush1.msra.mxu0 0.0
    %2853 = vmatprep.subr.mxu0 0.0
    %2854 = vmatpush1.msra.mxu0 0.0
    %2855 = vmatprep.subr.mxu0 0.0
    %2856 = vmatpush1.msra.mxu0 0.0
    %2857 = vmatprep.subr.mxu0 0.0
    %2858 = vmatpush1.msra.mxu0 %v2822
    %2859 = vmatprep.subr.mxu0 0.0
    %2860 = vmatpush1.msra.mxu0 %v2821
    %2861 = vmatprep.subr.mxu0 0.0
    %2862 = vmatpush1.msra.mxu0 %v2820
    %2863 = vmatprep.subr.mxu0 0.0
    %2864 = vmatpush1.msra.mxu0 %v2819
    %2865 = vmatprep.subr.mxu0 0.0
    %2866 = vmatpush2.msra.mxu0 0.0
    %2867 = vmatprep.subr.mxu0 0.0
    %2868 = vmatpush2.msra.mxu0 0.0
    %2869 = vmatprep.subr.mxu0 0.0
    %2870 = vmatpush2.msra.mxu0 0.0
    %2871 = vmatprep.subr.mxu0 0.0
    %2872 = vmatpush2.msra.mxu0 0.0
    %2873 = vmatprep.subr.mxu0 0.0
    %2874 = vmatpush2.msra.mxu0 0.0
    %2875 = vmatprep.subr.mxu0 0.0
    %2876 = vmatpush2.msra.mxu0 0.0
    %2877 = vmatprep.subr.mxu0 0.0
    %2878 = vmatpush2.msra.mxu0 0.0
    %2879 = vmatprep.subr.mxu0 0.0
    %2880 = vmatpush2.msra.mxu0 0.0
    %2881 = vmatprep.subr.mxu0 0.0
    %2882 = vmatpush2.msra.mxu0 0.0
    %2883 = vmatprep.subr.mxu0 0.0
    %2884 = vmatpush2.msra.mxu0 0.0
    %2885 = vmatprep.subr.mxu0 0.0
    %2886 = vmatpush2.msra.mxu0 0.0
    %2887 = vmatprep.subr.mxu0 0.0
    %2888 = vmatpush2.msra.mxu0 0.0
    %2889 = vmatprep.subr.mxu0 0.0
    %2890 = vmatpush2.msra.mxu0 0.0
    %2891 = vmatprep.subr.mxu0 0.0
    %2892 = vmatpush2.msra.mxu0 0.0
    %2893 = vmatprep.subr.mxu0 0.0
    %2894 = vmatpush2.msra.mxu0 0.0
    %2895 = vmatprep.subr.mxu0 0.0
    %2896 = vmatpush2.msra.mxu0 0.0
    %2897 = vmatprep.mubr.f32.mxu0 0.0
    %2898 = vmatmul.mubr.f32.gmra.mxu0 %v2831
    %v2899 = vpop.f32.mrf.mxu0
    %v2900 = vadd.f32 %v2828, %v2899
    %v2901 = vpop.f32.mrf.mxu0
    %2902 = vdwg.mxu0
    %v2903 = vld [vmem:[%s146] sm:$0xff]
    %v2904 = vld [vmem:[%s146 + $0x8] sm:$0xff]
    %v2905 = vld [vmem:[%s146 + $0x10] sm:$0xff]
    %v2906 = vld [vmem:[%s146 + $0x18] sm:$0xff]
    %v2907 = vld [vmem:[%s151] sm:$0x1]
    %v2909 = vlaneseq
    %v2910 = vshrl.u32 %v2909, 7
    %v2911 = vsub.s32 0, %v2910
    %v2912 = vrot.slane %v2907, %v2911
    %2914 = vmatprep.subr.mxu0 0.0
    %2915 = vmatpush1.msra.mxu0 0.0
    %2916 = vmatprep.subr.mxu0 0.0
    %2917 = vmatpush1.msra.mxu0 0.0
    %2918 = vmatprep.subr.mxu0 0.0
    %2919 = vmatpush1.msra.mxu0 0.0
    %2920 = vmatprep.subr.mxu0 0.0
    %2921 = vmatpush1.msra.mxu0 0.0
    %2922 = vmatprep.subr.mxu0 0.0
    %2923 = vmatpush1.msra.mxu0 0.0
    %2924 = vmatprep.subr.mxu0 0.0
    %2925 = vmatpush1.msra.mxu0 0.0
    %2926 = vmatprep.subr.mxu0 0.0
    %2927 = vmatpush1.msra.mxu0 0.0
    %2928 = vmatprep.subr.mxu0 0.0
    %2929 = vmatpush1.msra.mxu0 0.0
    %2930 = vmatprep.subr.mxu0 0.0
    %2931 = vmatpush1.msra.mxu0 0.0
    %2932 = vmatprep.subr.mxu0 0.0
    %2933 = vmatpush1.msra.mxu0 0.0
    %2934 = vmatprep.subr.mxu0 0.0
    %2935 = vmatpush1.msra.mxu0 0.0
    %2936 = vmatprep.subr.mxu0 0.0
    %2937 = vmatpush1.msra.mxu0 0.0
    %2938 = vmatprep.subr.mxu0 0.0
    %2939 = vmatpush1.msra.mxu0 %v2906
    %2940 = vmatprep.subr.mxu0 0.0
    %2941 = vmatpush1.msra.mxu0 %v2905
    %2942 = vmatprep.subr.mxu0 0.0
    %2943 = vmatpush1.msra.mxu0 %v2904
    %2944 = vmatprep.subr.mxu0 0.0
    %2945 = vmatpush1.msra.mxu0 %v2903
    %2946 = vmatprep.subr.mxu0 0.0
    %2947 = vmatpush2.msra.mxu0 0.0
    %2948 = vmatprep.subr.mxu0 0.0
    %2949 = vmatpush2.msra.mxu0 0.0
    %2950 = vmatprep.subr.mxu0 0.0
    %2951 = vmatpush2.msra.mxu0 0.0
    %2952 = vmatprep.subr.mxu0 0.0
    %2953 = vmatpush2.msra.mxu0 0.0
    %2954 = vmatprep.subr.mxu0 0.0
    %2955 = vmatpush2.msra.mxu0 0.0
    %2956 = vmatprep.subr.mxu0 0.0
    %2957 = vmatpush2.msra.mxu0 0.0
    %2958 = vmatprep.subr.mxu0 0.0
    %2959 = vmatpush2.msra.mxu0 0.0
    %2960 = vmatprep.subr.mxu0 0.0
    %2961 = vmatpush2.msra.mxu0 0.0
    %2962 = vmatprep.subr.mxu0 0.0
    %2963 = vmatpush2.msra.mxu0 0.0
    %2964 = vmatprep.subr.mxu0 0.0
    %2965 = vmatpush2.msra.mxu0 0.0
    %2966 = vmatprep.subr.mxu0 0.0
    %2967 = vmatpush2.msra.mxu0 0.0
    %2968 = vmatprep.subr.mxu0 0.0
    %2969 = vmatpush2.msra.mxu0 0.0
    %2970 = vmatprep.subr.mxu0 0.0
    %2971 = vmatpush2.msra.mxu0 0.0
    %2972 = vmatprep.subr.mxu0 0.0
    %2973 = vmatpush2.msra.mxu0 0.0
    %2974 = vmatprep.subr.mxu0 0.0
    %2975 = vmatpush2.msra.mxu0 0.0
    %2976 = vmatprep.subr.mxu0 0.0
    %2977 = vmatpush2.msra.mxu0 0.0
    %2978 = vmatprep.mubr.f32.mxu0 0.0
    %2979 = vmatmul.mubr.f32.gmra.mxu0 %v2831
    %v2980 = vpop.f32.mrf.mxu0
    %v2981 = vadd.f32 %v2912, %v2980
    %v2982 = vpop.f32.mrf.mxu0
    %2983 = vdwg.mxu0
    %v2984 = vld [vmem:[%s229] sm:$0xff]
    %v2985 = vld [vmem:[%s229 + $0x8] sm:$0xff]
    %v2986 = vld [vmem:[%s229 + $0x10] sm:$0xff]
    %v2987 = vld [vmem:[%s229 + $0x18] sm:$0xff]
    %v2988 = vld [vmem:[%s234] sm:$0x1]
    %v2990 = vlaneseq
    %v2991 = vshrl.u32 %v2990, 7
    %v2992 = vsub.s32 0, %v2991
    %v2993 = vrot.slane %v2988, %v2992
    %2995 = vmatprep.subr.mxu0 0.0
    %2996 = vmatpush1.msra.mxu0 0.0
    %2997 = vmatprep.subr.mxu0 0.0
    %2998 = vmatpush1.msra.mxu0 0.0
    %2999 = vmatprep.subr.mxu0 0.0
    %3000 = vmatpush1.msra.mxu0 0.0
    %3001 = vmatprep.subr.mxu0 0.0
    %3002 = vmatpush1.msra.mxu0 0.0
    %3003 = vmatprep.subr.mxu0 0.0
    %3004 = vmatpush1.msra.mxu0 0.0
    %3005 = vmatprep.subr.mxu0 0.0
    %3006 = vmatpush1.msra.mxu0 0.0
    %3007 = vmatprep.subr.mxu0 0.0
    %3008 = vmatpush1.msra.mxu0 0.0
    %3009 = vmatprep.subr.mxu0 0.0
    %3010 = vmatpush1.msra.mxu0 0.0
    %3011 = vmatprep.subr.mxu0 0.0
    %3012 = vmatpush1.msra.mxu0 0.0
    %3013 = vmatprep.subr.mxu0 0.0
    %3014 = vmatpush1.msra.mxu0 0.0
    %3015 = vmatprep.subr.mxu0 0.0
    %3016 = vmatpush1.msra.mxu0 0.0
    %3017 = vmatprep.subr.mxu0 0.0
    %3018 = vmatpush1.msra.mxu0 0.0
    %3019 = vmatprep.subr.mxu0 0.0
    %3020 = vmatpush1.msra.mxu0 %v2987
    %3021 = vmatprep.subr.mxu0 0.0
    %3022 = vmatpush1.msra.mxu0 %v2986
    %3023 = vmatprep.subr.mxu0 0.0
    %3024 = vmatpush1.msra.mxu0 %v2985
    %3025 = vmatprep.subr.mxu0 0.0
    %3026 = vmatpush1.msra.mxu0 %v2984
    %3027 = vmatprep.subr.mxu0 0.0
    %3028 = vmatpush2.msra.mxu0 0.0
    %3029 = vmatprep.subr.mxu0 0.0
    %3030 = vmatpush2.msra.mxu0 0.0
    %3031 = vmatprep.subr.mxu0 0.0
    %3032 = vmatpush2.msra.mxu0 0.0
    %3033 = vmatprep.subr.mxu0 0.0
    %3034 = vmatpush2.msra.mxu0 0.0
    %3035 = vmatprep.subr.mxu0 0.0
    %3036 = vmatpush2.msra.mxu0 0.0
    %3037 = vmatprep.subr.mxu0 0.0
    %3038 = vmatpush2.msra.mxu0 0.0
    %3039 = vmatprep.subr.mxu0 0.0
    %3040 = vmatpush2.msra.mxu0 0.0
    %3041 = vmatprep.subr.mxu0 0.0
    %3042 = vmatpush2.msra.mxu0 0.0
    %3043 = vmatprep.subr.mxu0 0.0
    %3044 = vmatpush2.msra.mxu0 0.0
    %3045 = vmatprep.subr.mxu0 0.0
    %3046 = vmatpush2.msra.mxu0 0.0
    %3047 = vmatprep.subr.mxu0 0.0
    %3048 = vmatpush2.msra.mxu0 0.0
    %3049 = vmatprep.subr.mxu0 0.0
    %3050 = vmatpush2.msra.mxu0 0.0
    %3051 = vmatprep.subr.mxu0 0.0
    %3052 = vmatpush2.msra.mxu0 0.0
    %3053 = vmatprep.subr.mxu0 0.0
    %3054 = vmatpush2.msra.mxu0 0.0
    %3055 = vmatprep.subr.mxu0 0.0
    %3056 = vmatpush2.msra.mxu0 0.0
    %3057 = vmatprep.subr.mxu0 0.0
    %3058 = vmatpush2.msra.mxu0 0.0
    %3059 = vmatprep.mubr.f32.mxu0 0.0
    %3060 = vmatmul.mubr.f32.gmra.mxu0 %v2831
    %v3061 = vpop.f32.mrf.mxu0
    %v3062 = vadd.f32 %v2993, %v3061
    %v3063 = vpop.f32.mrf.mxu0
    %3064 = vdwg.mxu0
    %v3065 = vadd.f32 %v2814, %v2900
    %v3066 = vxor.u32 %v3065, 2147483648
    %v3067 = vmul.f32 %v3066, 1.442695
    %v3068 = vpow.pop %v3067
    %v3069 = vadd.f32 %v3068, 1.0
    %v3070 = vrcp.pop %v3069
    %v3071 = vmul.f32 1.0, %v3070
    %v3072 = vadd.f32 %v2816, %v2981
    %v3073 = vxor.u32 %v3072, 2147483648
    %v3074 = vmul.f32 %v3073, 1.442695
    %v3075 = vpow.pop %v3074
    %v3076 = vadd.f32 %v3075, 1.0
    %v3077 = vrcp.pop %v3076
    %v3078 = vmul.f32 1.0, %v3077
    %v3079 = vmul.f32 %v3071, %v3062
    %v3080 = vadd.f32 %v2818, %v3079
    %v3081 = vtanh.pop %v3080
    %v3082 = vsub.f32 1.0, %v3078
    %v3083 = vmul.f32 %v3082, %v3081
    %v3084 = vmul.f32 %v3078, %v2535
    %v3085 = vadd.f32 %v3083, %v3084
    %s3086 = scalar_lea.vmem [#allocation8], 10
    %3087 = vst.msk [vmem:[%s3086] sm:$0x3] %vm333, %v3085
    %s3088 = scalar_lea.vmem [#allocation2], 60
    %v3089 = vld [vmem:[%s3088] sm:$0x3]
    %s3090 = scalar_lea.vmem [#allocation2], 62
    %v3091 = vld [vmem:[%s3090] sm:$0x3]
    %s3092 = scalar_lea.vmem [#allocation2], 64
    %v3093 = vld [vmem:[%s3092] sm:$0x3]
    %v3094 = vld [vmem:[%s341] sm:$0xff]
    %v3095 = vld [vmem:[%s341 + $0x8] sm:$0xff]
    %v3096 = vld [vmem:[%s341 + $0x10] sm:$0xff]
    %v3097 = vld [vmem:[%s341 + $0x18] sm:$0xff]
    %v3098 = vld [vmem:[%s346] sm:$0x1]
    %v3100 = vlaneseq
    %v3101 = vshrl.u32 %v3100, 7
    %v3102 = vsub.s32 0, %v3101
    %v3103 = vrot.slane %v3098, %v3102
    %v3106 = vsel %vm72, %v2810, 0
    %3108 = vmatprep.subr.mxu0 0.0
    %3109 = vmatpush1.msra.mxu0 0.0
    %3110 = vmatprep.subr.mxu0 0.0
    %3111 = vmatpush1.msra.mxu0 0.0
    %3112 = vmatprep.subr.mxu0 0.0
    %3113 = vmatpush1.msra.mxu0 0.0
    %3114 = vmatprep.subr.mxu0 0.0
    %3115 = vmatpush1.msra.mxu0 0.0
    %3116 = vmatprep.subr.mxu0 0.0
    %3117 = vmatpush1.msra.mxu0 0.0
    %3118 = vmatprep.subr.mxu0 0.0
    %3119 = vmatpush1.msra.mxu0 0.0
    %3120 = vmatprep.subr.mxu0 0.0
    %3121 = vmatpush1.msra.mxu0 0.0
    %3122 = vmatprep.subr.mxu0 0.0
    %3123 = vmatpush1.msra.mxu0 0.0
    %3124 = vmatprep.subr.mxu0 0.0
    %3125 = vmatpush1.msra.mxu0 0.0
    %3126 = vmatprep.subr.mxu0 0.0
    %3127 = vmatpush1.msra.mxu0 0.0
    %3128 = vmatprep.subr.mxu0 0.0
    %3129 = vmatpush1.msra.mxu0 0.0
    %3130 = vmatprep.subr.mxu0 0.0
    %3131 = vmatpush1.msra.mxu0 0.0
    %3132 = vmatprep.subr.mxu0 0.0
    %3133 = vmatpush1.msra.mxu0 %v3097
    %3134 = vmatprep.subr.mxu0 0.0
    %3135 = vmatpush1.msra.mxu0 %v3096
    %3136 = vmatprep.subr.mxu0 0.0
    %3137 = vmatpush1.msra.mxu0 %v3095
    %3138 = vmatprep.subr.mxu0 0.0
    %3139 = vmatpush1.msra.mxu0 %v3094
    %3140 = vmatprep.subr.mxu0 0.0
    %3141 = vmatpush2.msra.mxu0 0.0
    %3142 = vmatprep.subr.mxu0 0.0
    %3143 = vmatpush2.msra.mxu0 0.0
    %3144 = vmatprep.subr.mxu0 0.0
    %3145 = vmatpush2.msra.mxu0 0.0
    %3146 = vmatprep.subr.mxu0 0.0
    %3147 = vmatpush2.msra.mxu0 0.0
    %3148 = vmatprep.subr.mxu0 0.0
    %3149 = vmatpush2.msra.mxu0 0.0
    %3150 = vmatprep.subr.mxu0 0.0
    %3151 = vmatpush2.msra.mxu0 0.0
    %3152 = vmatprep.subr.mxu0 0.0
    %3153 = vmatpush2.msra.mxu0 0.0
    %3154 = vmatprep.subr.mxu0 0.0
    %3155 = vmatpush2.msra.mxu0 0.0
    %3156 = vmatprep.subr.mxu0 0.0
    %3157 = vmatpush2.msra.mxu0 0.0
    %3158 = vmatprep.subr.mxu0 0.0
    %3159 = vmatpush2.msra.mxu0 0.0
    %3160 = vmatprep.subr.mxu0 0.0
    %3161 = vmatpush2.msra.mxu0 0.0
    %3162 = vmatprep.subr.mxu0 0.0
    %3163 = vmatpush2.msra.mxu0 0.0
    %3164 = vmatprep.subr.mxu0 0.0
    %3165 = vmatpush2.msra.mxu0 0.0
    %3166 = vmatprep.subr.mxu0 0.0
    %3167 = vmatpush2.msra.mxu0 0.0
    %3168 = vmatprep.subr.mxu0 0.0
    %3169 = vmatpush2.msra.mxu0 0.0
    %3170 = vmatprep.subr.mxu0 0.0
    %3171 = vmatpush2.msra.mxu0 0.0
    %3172 = vmatprep.mubr.f32.mxu0 0.0
    %3173 = vmatmul.mubr.f32.gmra.mxu0 %v3106
    %v3174 = vpop.f32.mrf.mxu0
    %v3175 = vadd.f32 %v3103, %v3174
    %v3176 = vpop.f32.mrf.mxu0
    %3177 = vdwg.mxu0
    %v3178 = vld [vmem:[%s424] sm:$0xff]
    %v3179 = vld [vmem:[%s424 + $0x8] sm:$0xff]
    %v3180 = vld [vmem:[%s424 + $0x10] sm:$0xff]
    %v3181 = vld [vmem:[%s424 + $0x18] sm:$0xff]
    %v3182 = vld [vmem:[%s429] sm:$0x1]
    %v3184 = vlaneseq
    %v3185 = vshrl.u32 %v3184, 7
    %v3186 = vsub.s32 0, %v3185
    %v3187 = vrot.slane %v3182, %v3186
    %3189 = vmatprep.subr.mxu0 0.0
    %3190 = vmatpush1.msra.mxu0 0.0
    %3191 = vmatprep.subr.mxu0 0.0
    %3192 = vmatpush1.msra.mxu0 0.0
    %3193 = vmatprep.subr.mxu0 0.0
    %3194 = vmatpush1.msra.mxu0 0.0
    %3195 = vmatprep.subr.mxu0 0.0
    %3196 = vmatpush1.msra.mxu0 0.0
    %3197 = vmatprep.subr.mxu0 0.0
    %3198 = vmatpush1.msra.mxu0 0.0
    %3199 = vmatprep.subr.mxu0 0.0
    %3200 = vmatpush1.msra.mxu0 0.0
    %3201 = vmatprep.subr.mxu0 0.0
    %3202 = vmatpush1.msra.mxu0 0.0
    %3203 = vmatprep.subr.mxu0 0.0
    %3204 = vmatpush1.msra.mxu0 0.0
    %3205 = vmatprep.subr.mxu0 0.0
    %3206 = vmatpush1.msra.mxu0 0.0
    %3207 = vmatprep.subr.mxu0 0.0
    %3208 = vmatpush1.msra.mxu0 0.0
    %3209 = vmatprep.subr.mxu0 0.0
    %3210 = vmatpush1.msra.mxu0 0.0
    %3211 = vmatprep.subr.mxu0 0.0
    %3212 = vmatpush1.msra.mxu0 0.0
    %3213 = vmatprep.subr.mxu0 0.0
    %3214 = vmatpush1.msra.mxu0 %v3181
    %3215 = vmatprep.subr.mxu0 0.0
    %3216 = vmatpush1.msra.mxu0 %v3180
    %3217 = vmatprep.subr.mxu0 0.0
    %3218 = vmatpush1.msra.mxu0 %v3179
    %3219 = vmatprep.subr.mxu0 0.0
    %3220 = vmatpush1.msra.mxu0 %v3178
    %3221 = vmatprep.subr.mxu0 0.0
    %3222 = vmatpush2.msra.mxu0 0.0
    %3223 = vmatprep.subr.mxu0 0.0
    %3224 = vmatpush2.msra.mxu0 0.0
    %3225 = vmatprep.subr.mxu0 0.0
    %3226 = vmatpush2.msra.mxu0 0.0
    %3227 = vmatprep.subr.mxu0 0.0
    %3228 = vmatpush2.msra.mxu0 0.0
    %3229 = vmatprep.subr.mxu0 0.0
    %3230 = vmatpush2.msra.mxu0 0.0
    %3231 = vmatprep.subr.mxu0 0.0
    %3232 = vmatpush2.msra.mxu0 0.0
    %3233 = vmatprep.subr.mxu0 0.0
    %3234 = vmatpush2.msra.mxu0 0.0
    %3235 = vmatprep.subr.mxu0 0.0
    %3236 = vmatpush2.msra.mxu0 0.0
    %3237 = vmatprep.subr.mxu0 0.0
    %3238 = vmatpush2.msra.mxu0 0.0
    %3239 = vmatprep.subr.mxu0 0.0
    %3240 = vmatpush2.msra.mxu0 0.0
    %3241 = vmatprep.subr.mxu0 0.0
    %3242 = vmatpush2.msra.mxu0 0.0
    %3243 = vmatprep.subr.mxu0 0.0
    %3244 = vmatpush2.msra.mxu0 0.0
    %3245 = vmatprep.subr.mxu0 0.0
    %3246 = vmatpush2.msra.mxu0 0.0
    %3247 = vmatprep.subr.mxu0 0.0
    %3248 = vmatpush2.msra.mxu0 0.0
    %3249 = vmatprep.subr.mxu0 0.0
    %3250 = vmatpush2.msra.mxu0 0.0
    %3251 = vmatprep.subr.mxu0 0.0
    %3252 = vmatpush2.msra.mxu0 0.0
    %3253 = vmatprep.mubr.f32.mxu0 0.0
    %3254 = vmatmul.mubr.f32.gmra.mxu0 %v3106
    %v3255 = vpop.f32.mrf.mxu0
    %v3256 = vadd.f32 %v3187, %v3255
    %v3257 = vpop.f32.mrf.mxu0
    %3258 = vdwg.mxu0
    %v3259 = vld [vmem:[%s507] sm:$0xff]
    %v3260 = vld [vmem:[%s507 + $0x8] sm:$0xff]
    %v3261 = vld [vmem:[%s507 + $0x10] sm:$0xff]
    %v3262 = vld [vmem:[%s507 + $0x18] sm:$0xff]
    %v3263 = vld [vmem:[%s512] sm:$0x1]
    %v3265 = vlaneseq
    %v3266 = vshrl.u32 %v3265, 7
    %v3267 = vsub.s32 0, %v3266
    %v3268 = vrot.slane %v3263, %v3267
    %3270 = vmatprep.subr.mxu0 0.0
    %3271 = vmatpush1.msra.mxu0 0.0
    %3272 = vmatprep.subr.mxu0 0.0
    %3273 = vmatpush1.msra.mxu0 0.0
    %3274 = vmatprep.subr.mxu0 0.0
    %3275 = vmatpush1.msra.mxu0 0.0
    %3276 = vmatprep.subr.mxu0 0.0
    %3277 = vmatpush1.msra.mxu0 0.0
    %3278 = vmatprep.subr.mxu0 0.0
    %3279 = vmatpush1.msra.mxu0 0.0
    %3280 = vmatprep.subr.mxu0 0.0
    %3281 = vmatpush1.msra.mxu0 0.0
    %3282 = vmatprep.subr.mxu0 0.0
    %3283 = vmatpush1.msra.mxu0 0.0
    %3284 = vmatprep.subr.mxu0 0.0
    %3285 = vmatpush1.msra.mxu0 0.0
    %3286 = vmatprep.subr.mxu0 0.0
    %3287 = vmatpush1.msra.mxu0 0.0
    %3288 = vmatprep.subr.mxu0 0.0
    %3289 = vmatpush1.msra.mxu0 0.0
    %3290 = vmatprep.subr.mxu0 0.0
    %3291 = vmatpush1.msra.mxu0 0.0
    %3292 = vmatprep.subr.mxu0 0.0
    %3293 = vmatpush1.msra.mxu0 0.0
    %3294 = vmatprep.subr.mxu0 0.0
    %3295 = vmatpush1.msra.mxu0 %v3262
    %3296 = vmatprep.subr.mxu0 0.0
    %3297 = vmatpush1.msra.mxu0 %v3261
    %3298 = vmatprep.subr.mxu0 0.0
    %3299 = vmatpush1.msra.mxu0 %v3260
    %3300 = vmatprep.subr.mxu0 0.0
    %3301 = vmatpush1.msra.mxu0 %v3259
    %3302 = vmatprep.subr.mxu0 0.0
    %3303 = vmatpush2.msra.mxu0 0.0
    %3304 = vmatprep.subr.mxu0 0.0
    %3305 = vmatpush2.msra.mxu0 0.0
    %3306 = vmatprep.subr.mxu0 0.0
    %3307 = vmatpush2.msra.mxu0 0.0
    %3308 = vmatprep.subr.mxu0 0.0
    %3309 = vmatpush2.msra.mxu0 0.0
    %3310 = vmatprep.subr.mxu0 0.0
    %3311 = vmatpush2.msra.mxu0 0.0
    %3312 = vmatprep.subr.mxu0 0.0
    %3313 = vmatpush2.msra.mxu0 0.0
    %3314 = vmatprep.subr.mxu0 0.0
    %3315 = vmatpush2.msra.mxu0 0.0
    %3316 = vmatprep.subr.mxu0 0.0
    %3317 = vmatpush2.msra.mxu0 0.0
    %3318 = vmatprep.subr.mxu0 0.0
    %3319 = vmatpush2.msra.mxu0 0.0
    %3320 = vmatprep.subr.mxu0 0.0
    %3321 = vmatpush2.msra.mxu0 0.0
    %3322 = vmatprep.subr.mxu0 0.0
    %3323 = vmatpush2.msra.mxu0 0.0
    %3324 = vmatprep.subr.mxu0 0.0
    %3325 = vmatpush2.msra.mxu0 0.0
    %3326 = vmatprep.subr.mxu0 0.0
    %3327 = vmatpush2.msra.mxu0 0.0
    %3328 = vmatprep.subr.mxu0 0.0
    %3329 = vmatpush2.msra.mxu0 0.0
    %3330 = vmatprep.subr.mxu0 0.0
    %3331 = vmatpush2.msra.mxu0 0.0
    %3332 = vmatprep.subr.mxu0 0.0
    %3333 = vmatpush2.msra.mxu0 0.0
    %3334 = vmatprep.mubr.f32.mxu0 0.0
    %3335 = vmatmul.mubr.f32.gmra.mxu0 %v3106
    %v3336 = vpop.f32.mrf.mxu0
    %v3337 = vadd.f32 %v3268, %v3336
    %v3338 = vpop.f32.mrf.mxu0
    %3339 = vdwg.mxu0
    %v3340 = vadd.f32 %v3089, %v3175
    %v3341 = vxor.u32 %v3340, 2147483648
    %v3342 = vmul.f32 %v3341, 1.442695
    %v3343 = vpow.pop %v3342
    %v3344 = vadd.f32 %v3343, 1.0
    %v3345 = vrcp.pop %v3344
    %v3346 = vmul.f32 1.0, %v3345
    %v3347 = vadd.f32 %v3091, %v3256
    %v3348 = vxor.u32 %v3347, 2147483648
    %v3349 = vmul.f32 %v3348, 1.442695
    %v3350 = vpow.pop %v3349
    %v3351 = vadd.f32 %v3350, 1.0
    %v3352 = vrcp.pop %v3351
    %v3353 = vmul.f32 1.0, %v3352
    %v3354 = vmul.f32 %v3346, %v3337
    %v3355 = vadd.f32 %v3093, %v3354
    %v3356 = vtanh.pop %v3355
    %v3357 = vsub.f32 1.0, %v3353
    %v3358 = vmul.f32 %v3357, %v3356
    %v3359 = vmul.f32 %v3353, %v2810
    %v3360 = vadd.f32 %v3358, %v3359
    %s3361 = scalar_lea.vmem [#allocation8], 20
    %3362 = vst.msk [vmem:[%s3361] sm:$0x3] %vm333, %v3360
    %s3363 = scalar_lea.vmem [#allocation2], 36
    %v3364 = vld [vmem:[%s3363] sm:$0x3]
    %s3365 = scalar_lea.vmem [#allocation2], 38
    %v3366 = vld [vmem:[%s3365] sm:$0x3]
    %s3367 = scalar_lea.vmem [#allocation2], 40
    %v3368 = vld [vmem:[%s3367] sm:$0x3]
    %v3369 = vld [vmem:[#allocation5] sm:$0xff]
    %v3370 = vld [vmem:[#allocation5 + $0x8] sm:$0xff]
    %v3371 = vld [vmem:[#allocation5 + $0x10] sm:$0xff]
    %v3372 = vld [vmem:[#allocation5 + $0x18] sm:$0xff]
    %v3373 = vld [vmem:[#allocation7] sm:$0x1]
    %v3375 = vlaneseq
    %v3376 = vshrl.u32 %v3375, 7
    %v3377 = vsub.s32 0, %v3376
    %v3378 = vrot.slane %v3373, %v3377
    %v3381 = vsel %vm72, %v3085, 0
    %3383 = vmatprep.subr.mxu0 0.0
    %3384 = vmatpush1.msra.mxu0 0.0
    %3385 = vmatprep.subr.mxu0 0.0
    %3386 = vmatpush1.msra.mxu0 0.0
    %3387 = vmatprep.subr.mxu0 0.0
    %3388 = vmatpush1.msra.mxu0 0.0
    %3389 = vmatprep.subr.mxu0 0.0
    %3390 = vmatpush1.msra.mxu0 0.0
    %3391 = vmatprep.subr.mxu0 0.0
    %3392 = vmatpush1.msra.mxu0 0.0
    %3393 = vmatprep.subr.mxu0 0.0
    %3394 = vmatpush1.msra.mxu0 0.0
    %3395 = vmatprep.subr.mxu0 0.0
    %3396 = vmatpush1.msra.mxu0 0.0
    %3397 = vmatprep.subr.mxu0 0.0
    %3398 = vmatpush1.msra.mxu0 0.0
    %3399 = vmatprep.subr.mxu0 0.0
    %3400 = vmatpush1.msra.mxu0 0.0
    %3401 = vmatprep.subr.mxu0 0.0
    %3402 = vmatpush1.msra.mxu0 0.0
    %3403 = vmatprep.subr.mxu0 0.0
    %3404 = vmatpush1.msra.mxu0 0.0
    %3405 = vmatprep.subr.mxu0 0.0
    %3406 = vmatpush1.msra.mxu0 0.0
    %3407 = vmatprep.subr.mxu0 0.0
    %3408 = vmatpush1.msra.mxu0 %v3372
    %3409 = vmatprep.subr.mxu0 0.0
    %3410 = vmatpush1.msra.mxu0 %v3371
    %3411 = vmatprep.subr.mxu0 0.0
    %3412 = vmatpush1.msra.mxu0 %v3370
    %3413 = vmatprep.subr.mxu0 0.0
    %3414 = vmatpush1.msra.mxu0 %v3369
    %3415 = vmatprep.subr.mxu0 0.0
    %3416 = vmatpush2.msra.mxu0 0.0
    %3417 = vmatprep.subr.mxu0 0.0
    %3418 = vmatpush2.msra.mxu0 0.0
    %3419 = vmatprep.subr.mxu0 0.0
    %3420 = vmatpush2.msra.mxu0 0.0
    %3421 = vmatprep.subr.mxu0 0.0
    %3422 = vmatpush2.msra.mxu0 0.0
    %3423 = vmatprep.subr.mxu0 0.0
    %3424 = vmatpush2.msra.mxu0 0.0
    %3425 = vmatprep.subr.mxu0 0.0
    %3426 = vmatpush2.msra.mxu0 0.0
    %3427 = vmatprep.subr.mxu0 0.0
    %3428 = vmatpush2.msra.mxu0 0.0
    %3429 = vmatprep.subr.mxu0 0.0
    %3430 = vmatpush2.msra.mxu0 0.0
    %3431 = vmatprep.subr.mxu0 0.0
    %3432 = vmatpush2.msra.mxu0 0.0
    %3433 = vmatprep.subr.mxu0 0.0
    %3434 = vmatpush2.msra.mxu0 0.0
    %3435 = vmatprep.subr.mxu0 0.0
    %3436 = vmatpush2.msra.mxu0 0.0
    %3437 = vmatprep.subr.mxu0 0.0
    %3438 = vmatpush2.msra.mxu0 0.0
    %3439 = vmatprep.subr.mxu0 0.0
    %3440 = vmatpush2.msra.mxu0 0.0
    %3441 = vmatprep.subr.mxu0 0.0
    %3442 = vmatpush2.msra.mxu0 0.0
    %3443 = vmatprep.subr.mxu0 0.0
    %3444 = vmatpush2.msra.mxu0 0.0
    %3445 = vmatprep.subr.mxu0 0.0
    %3446 = vmatpush2.msra.mxu0 0.0
    %3447 = vmatprep.mubr.f32.mxu0 0.0
    %3448 = vmatmul.mubr.f32.gmra.mxu0 %v3381
    %v3449 = vpop.f32.mrf.mxu0
    %v3450 = vadd.f32 %v3378, %v3449
    %v3451 = vpop.f32.mrf.mxu0
    %3452 = vdwg.mxu0
    %v3453 = vld [vmem:[%s146] sm:$0xff]
    %v3454 = vld [vmem:[%s146 + $0x8] sm:$0xff]
    %v3455 = vld [vmem:[%s146 + $0x10] sm:$0xff]
    %v3456 = vld [vmem:[%s146 + $0x18] sm:$0xff]
    %v3457 = vld [vmem:[%s151] sm:$0x1]
    %v3459 = vlaneseq
    %v3460 = vshrl.u32 %v3459, 7
    %v3461 = vsub.s32 0, %v3460
    %v3462 = vrot.slane %v3457, %v3461
    %3464 = vmatprep.subr.mxu0 0.0
    %3465 = vmatpush1.msra.mxu0 0.0
    %3466 = vmatprep.subr.mxu0 0.0
    %3467 = vmatpush1.msra.mxu0 0.0
    %3468 = vmatprep.subr.mxu0 0.0
    %3469 = vmatpush1.msra.mxu0 0.0
    %3470 = vmatprep.subr.mxu0 0.0
    %3471 = vmatpush1.msra.mxu0 0.0
    %3472 = vmatprep.subr.mxu0 0.0
    %3473 = vmatpush1.msra.mxu0 0.0
    %3474 = vmatprep.subr.mxu0 0.0
    %3475 = vmatpush1.msra.mxu0 0.0
    %3476 = vmatprep.subr.mxu0 0.0
    %3477 = vmatpush1.msra.mxu0 0.0
    %3478 = vmatprep.subr.mxu0 0.0
    %3479 = vmatpush1.msra.mxu0 0.0
    %3480 = vmatprep.subr.mxu0 0.0
    %3481 = vmatpush1.msra.mxu0 0.0
    %3482 = vmatprep.subr.mxu0 0.0
    %3483 = vmatpush1.msra.mxu0 0.0
    %3484 = vmatprep.subr.mxu0 0.0
    %3485 = vmatpush1.msra.mxu0 0.0
    %3486 = vmatprep.subr.mxu0 0.0
    %3487 = vmatpush1.msra.mxu0 0.0
    %3488 = vmatprep.subr.mxu0 0.0
    %3489 = vmatpush1.msra.mxu0 %v3456
    %3490 = vmatprep.subr.mxu0 0.0
    %3491 = vmatpush1.msra.mxu0 %v3455
    %3492 = vmatprep.subr.mxu0 0.0
    %3493 = vmatpush1.msra.mxu0 %v3454
    %3494 = vmatprep.subr.mxu0 0.0
    %3495 = vmatpush1.msra.mxu0 %v3453
    %3496 = vmatprep.subr.mxu0 0.0
    %3497 = vmatpush2.msra.mxu0 0.0
    %3498 = vmatprep.subr.mxu0 0.0
    %3499 = vmatpush2.msra.mxu0 0.0
    %3500 = vmatprep.subr.mxu0 0.0
    %3501 = vmatpush2.msra.mxu0 0.0
    %3502 = vmatprep.subr.mxu0 0.0
    %3503 = vmatpush2.msra.mxu0 0.0
    %3504 = vmatprep.subr.mxu0 0.0
    %3505 = vmatpush2.msra.mxu0 0.0
    %3506 = vmatprep.subr.mxu0 0.0
    %3507 = vmatpush2.msra.mxu0 0.0
    %3508 = vmatprep.subr.mxu0 0.0
    %3509 = vmatpush2.msra.mxu0 0.0
    %3510 = vmatprep.subr.mxu0 0.0
    %3511 = vmatpush2.msra.mxu0 0.0
    %3512 = vmatprep.subr.mxu0 0.0
    %3513 = vmatpush2.msra.mxu0 0.0
    %3514 = vmatprep.subr.mxu0 0.0
    %3515 = vmatpush2.msra.mxu0 0.0
    %3516 = vmatprep.subr.mxu0 0.0
    %3517 = vmatpush2.msra.mxu0 0.0
    %3518 = vmatprep.subr.mxu0 0.0
    %3519 = vmatpush2.msra.mxu0 0.0
    %3520 = vmatprep.subr.mxu0 0.0
    %3521 = vmatpush2.msra.mxu0 0.0
    %3522 = vmatprep.subr.mxu0 0.0
    %3523 = vmatpush2.msra.mxu0 0.0
    %3524 = vmatprep.subr.mxu0 0.0
    %3525 = vmatpush2.msra.mxu0 0.0
    %3526 = vmatprep.subr.mxu0 0.0
    %3527 = vmatpush2.msra.mxu0 0.0
    %3528 = vmatprep.mubr.f32.mxu0 0.0
    %3529 = vmatmul.mubr.f32.gmra.mxu0 %v3381
    %v3530 = vpop.f32.mrf.mxu0
    %v3531 = vadd.f32 %v3462, %v3530
    %v3532 = vpop.f32.mrf.mxu0
    %3533 = vdwg.mxu0
    %v3534 = vld [vmem:[%s229] sm:$0xff]
    %v3535 = vld [vmem:[%s229 + $0x8] sm:$0xff]
    %v3536 = vld [vmem:[%s229 + $0x10] sm:$0xff]
    %v3537 = vld [vmem:[%s229 + $0x18] sm:$0xff]
    %v3538 = vld [vmem:[%s234] sm:$0x1]
    %v3540 = vlaneseq
    %v3541 = vshrl.u32 %v3540, 7
    %v3542 = vsub.s32 0, %v3541
    %v3543 = vrot.slane %v3538, %v3542
    %3545 = vmatprep.subr.mxu0 0.0
    %3546 = vmatpush1.msra.mxu0 0.0
    %3547 = vmatprep.subr.mxu0 0.0
    %3548 = vmatpush1.msra.mxu0 0.0
    %3549 = vmatprep.subr.mxu0 0.0
    %3550 = vmatpush1.msra.mxu0 0.0
    %3551 = vmatprep.subr.mxu0 0.0
    %3552 = vmatpush1.msra.mxu0 0.0
    %3553 = vmatprep.subr.mxu0 0.0
    %3554 = vmatpush1.msra.mxu0 0.0
    %3555 = vmatprep.subr.mxu0 0.0
    %3556 = vmatpush1.msra.mxu0 0.0
    %3557 = vmatprep.subr.mxu0 0.0
    %3558 = vmatpush1.msra.mxu0 0.0
    %3559 = vmatprep.subr.mxu0 0.0
    %3560 = vmatpush1.msra.mxu0 0.0
    %3561 = vmatprep.subr.mxu0 0.0
    %3562 = vmatpush1.msra.mxu0 0.0
    %3563 = vmatprep.subr.mxu0 0.0
    %3564 = vmatpush1.msra.mxu0 0.0
    %3565 = vmatprep.subr.mxu0 0.0
    %3566 = vmatpush1.msra.mxu0 0.0
    %3567 = vmatprep.subr.mxu0 0.0
    %3568 = vmatpush1.msra.mxu0 0.0
    %3569 = vmatprep.subr.mxu0 0.0
    %3570 = vmatpush1.msra.mxu0 %v3537
    %3571 = vmatprep.subr.mxu0 0.0
    %3572 = vmatpush1.msra.mxu0 %v3536
    %3573 = vmatprep.subr.mxu0 0.0
    %3574 = vmatpush1.msra.mxu0 %v3535
    %3575 = vmatprep.subr.mxu0 0.0
    %3576 = vmatpush1.msra.mxu0 %v3534
    %3577 = vmatprep.subr.mxu0 0.0
    %3578 = vmatpush2.msra.mxu0 0.0
    %3579 = vmatprep.subr.mxu0 0.0
    %3580 = vmatpush2.msra.mxu0 0.0
    %3581 = vmatprep.subr.mxu0 0.0
    %3582 = vmatpush2.msra.mxu0 0.0
    %3583 = vmatprep.subr.mxu0 0.0
    %3584 = vmatpush2.msra.mxu0 0.0
    %3585 = vmatprep.subr.mxu0 0.0
    %3586 = vmatpush2.msra.mxu0 0.0
    %3587 = vmatprep.subr.mxu0 0.0
    %3588 = vmatpush2.msra.mxu0 0.0
    %3589 = vmatprep.subr.mxu0 0.0
    %3590 = vmatpush2.msra.mxu0 0.0
    %3591 = vmatprep.subr.mxu0 0.0
    %3592 = vmatpush2.msra.mxu0 0.0
    %3593 = vmatprep.subr.mxu0 0.0
    %3594 = vmatpush2.msra.mxu0 0.0
    %3595 = vmatprep.subr.mxu0 0.0
    %3596 = vmatpush2.msra.mxu0 0.0
    %3597 = vmatprep.subr.mxu0 0.0
    %3598 = vmatpush2.msra.mxu0 0.0
    %3599 = vmatprep.subr.mxu0 0.0
    %3600 = vmatpush2.msra.mxu0 0.0
    %3601 = vmatprep.subr.mxu0 0.0
    %3602 = vmatpush2.msra.mxu0 0.0
    %3603 = vmatprep.subr.mxu0 0.0
    %3604 = vmatpush2.msra.mxu0 0.0
    %3605 = vmatprep.subr.mxu0 0.0
    %3606 = vmatpush2.msra.mxu0 0.0
    %3607 = vmatprep.subr.mxu0 0.0
    %3608 = vmatpush2.msra.mxu0 0.0
    %3609 = vmatprep.mubr.f32.mxu0 0.0
    %3610 = vmatmul.mubr.f32.gmra.mxu0 %v3381
    %v3611 = vpop.f32.mrf.mxu0
    %v3612 = vadd.f32 %v3543, %v3611
    %v3613 = vpop.f32.mrf.mxu0
    %3614 = vdwg.mxu0
    %v3615 = vadd.f32 %v3364, %v3450
    %v3616 = vxor.u32 %v3615, 2147483648
    %v3617 = vmul.f32 %v3616, 1.442695
    %v3618 = vpow.pop %v3617
    %v3619 = vadd.f32 %v3618, 1.0
    %v3620 = vrcp.pop %v3619
    %v3621 = vmul.f32 1.0, %v3620
    %v3622 = vadd.f32 %v3366, %v3531
    %v3623 = vxor.u32 %v3622, 2147483648
    %v3624 = vmul.f32 %v3623, 1.442695
    %v3625 = vpow.pop %v3624
    %v3626 = vadd.f32 %v3625, 1.0
    %v3627 = vrcp.pop %v3626
    %v3628 = vmul.f32 1.0, %v3627
    %v3629 = vmul.f32 %v3621, %v3612
    %v3630 = vadd.f32 %v3368, %v3629
    %v3631 = vtanh.pop %v3630
    %v3632 = vsub.f32 1.0, %v3628
    %v3633 = vmul.f32 %v3632, %v3631
    %v3634 = vmul.f32 %v3628, %v3085
    %v3635 = vadd.f32 %v3633, %v3634
    %s3636 = scalar_lea.vmem [#allocation8], 12
    %3637 = vst.msk [vmem:[%s3636] sm:$0x3] %vm333, %v3635
    %s3638 = scalar_lea.vmem [#allocation2], 54
    %v3639 = vld [vmem:[%s3638] sm:$0x3]
    %s3640 = scalar_lea.vmem [#allocation2], 56
    %v3641 = vld [vmem:[%s3640] sm:$0x3]
    %s3642 = scalar_lea.vmem [#allocation2], 58
    %v3643 = vld [vmem:[%s3642] sm:$0x3]
    %v3644 = vld [vmem:[%s341] sm:$0xff]
    %v3645 = vld [vmem:[%s341 + $0x8] sm:$0xff]
    %v3646 = vld [vmem:[%s341 + $0x10] sm:$0xff]
    %v3647 = vld [vmem:[%s341 + $0x18] sm:$0xff]
    %v3648 = vld [vmem:[%s346] sm:$0x1]
    %v3650 = vlaneseq
    %v3651 = vshrl.u32 %v3650, 7
    %v3652 = vsub.s32 0, %v3651
    %v3653 = vrot.slane %v3648, %v3652
    %v3656 = vsel %vm72, %v3360, 0
    %3658 = vmatprep.subr.mxu0 0.0
    %3659 = vmatpush1.msra.mxu0 0.0
    %3660 = vmatprep.subr.mxu0 0.0
    %3661 = vmatpush1.msra.mxu0 0.0
    %3662 = vmatprep.subr.mxu0 0.0
    %3663 = vmatpush1.msra.mxu0 0.0
    %3664 = vmatprep.subr.mxu0 0.0
    %3665 = vmatpush1.msra.mxu0 0.0
    %3666 = vmatprep.subr.mxu0 0.0
    %3667 = vmatpush1.msra.mxu0 0.0
    %3668 = vmatprep.subr.mxu0 0.0
    %3669 = vmatpush1.msra.mxu0 0.0
    %3670 = vmatprep.subr.mxu0 0.0
    %3671 = vmatpush1.msra.mxu0 0.0
    %3672 = vmatprep.subr.mxu0 0.0
    %3673 = vmatpush1.msra.mxu0 0.0
    %3674 = vmatprep.subr.mxu0 0.0
    %3675 = vmatpush1.msra.mxu0 0.0
    %3676 = vmatprep.subr.mxu0 0.0
    %3677 = vmatpush1.msra.mxu0 0.0
    %3678 = vmatprep.subr.mxu0 0.0
    %3679 = vmatpush1.msra.mxu0 0.0
    %3680 = vmatprep.subr.mxu0 0.0
    %3681 = vmatpush1.msra.mxu0 0.0
    %3682 = vmatprep.subr.mxu0 0.0
    %3683 = vmatpush1.msra.mxu0 %v3647
    %3684 = vmatprep.subr.mxu0 0.0
    %3685 = vmatpush1.msra.mxu0 %v3646
    %3686 = vmatprep.subr.mxu0 0.0
    %3687 = vmatpush1.msra.mxu0 %v3645
    %3688 = vmatprep.subr.mxu0 0.0
    %3689 = vmatpush1.msra.mxu0 %v3644
    %3690 = vmatprep.subr.mxu0 0.0
    %3691 = vmatpush2.msra.mxu0 0.0
    %3692 = vmatprep.subr.mxu0 0.0
    %3693 = vmatpush2.msra.mxu0 0.0
    %3694 = vmatprep.subr.mxu0 0.0
    %3695 = vmatpush2.msra.mxu0 0.0
    %3696 = vmatprep.subr.mxu0 0.0
    %3697 = vmatpush2.msra.mxu0 0.0
    %3698 = vmatprep.subr.mxu0 0.0
    %3699 = vmatpush2.msra.mxu0 0.0
    %3700 = vmatprep.subr.mxu0 0.0
    %3701 = vmatpush2.msra.mxu0 0.0
    %3702 = vmatprep.subr.mxu0 0.0
    %3703 = vmatpush2.msra.mxu0 0.0
    %3704 = vmatprep.subr.mxu0 0.0
    %3705 = vmatpush2.msra.mxu0 0.0
    %3706 = vmatprep.subr.mxu0 0.0
    %3707 = vmatpush2.msra.mxu0 0.0
    %3708 = vmatprep.subr.mxu0 0.0
    %3709 = vmatpush2.msra.mxu0 0.0
    %3710 = vmatprep.subr.mxu0 0.0
    %3711 = vmatpush2.msra.mxu0 0.0
    %3712 = vmatprep.subr.mxu0 0.0
    %3713 = vmatpush2.msra.mxu0 0.0
    %3714 = vmatprep.subr.mxu0 0.0
    %3715 = vmatpush2.msra.mxu0 0.0
    %3716 = vmatprep.subr.mxu0 0.0
    %3717 = vmatpush2.msra.mxu0 0.0
    %3718 = vmatprep.subr.mxu0 0.0
    %3719 = vmatpush2.msra.mxu0 0.0
    %3720 = vmatprep.subr.mxu0 0.0
    %3721 = vmatpush2.msra.mxu0 0.0
    %3722 = vmatprep.mubr.f32.mxu0 0.0
    %3723 = vmatmul.mubr.f32.gmra.mxu0 %v3656
    %v3724 = vpop.f32.mrf.mxu0
    %v3725 = vadd.f32 %v3653, %v3724
    %v3726 = vpop.f32.mrf.mxu0
    %3727 = vdwg.mxu0
    %v3728 = vld [vmem:[%s424] sm:$0xff]
    %v3729 = vld [vmem:[%s424 + $0x8] sm:$0xff]
    %v3730 = vld [vmem:[%s424 + $0x10] sm:$0xff]
    %v3731 = vld [vmem:[%s424 + $0x18] sm:$0xff]
    %v3732 = vld [vmem:[%s429] sm:$0x1]
    %v3734 = vlaneseq
    %v3735 = vshrl.u32 %v3734, 7
    %v3736 = vsub.s32 0, %v3735
    %v3737 = vrot.slane %v3732, %v3736
    %3739 = vmatprep.subr.mxu0 0.0
    %3740 = vmatpush1.msra.mxu0 0.0
    %3741 = vmatprep.subr.mxu0 0.0
    %3742 = vmatpush1.msra.mxu0 0.0
    %3743 = vmatprep.subr.mxu0 0.0
    %3744 = vmatpush1.msra.mxu0 0.0
    %3745 = vmatprep.subr.mxu0 0.0
    %3746 = vmatpush1.msra.mxu0 0.0
    %3747 = vmatprep.subr.mxu0 0.0
    %3748 = vmatpush1.msra.mxu0 0.0
    %3749 = vmatprep.subr.mxu0 0.0
    %3750 = vmatpush1.msra.mxu0 0.0
    %3751 = vmatprep.subr.mxu0 0.0
    %3752 = vmatpush1.msra.mxu0 0.0
    %3753 = vmatprep.subr.mxu0 0.0
    %3754 = vmatpush1.msra.mxu0 0.0
    %3755 = vmatprep.subr.mxu0 0.0
    %3756 = vmatpush1.msra.mxu0 0.0
    %3757 = vmatprep.subr.mxu0 0.0
    %3758 = vmatpush1.msra.mxu0 0.0
    %3759 = vmatprep.subr.mxu0 0.0
    %3760 = vmatpush1.msra.mxu0 0.0
    %3761 = vmatprep.subr.mxu0 0.0
    %3762 = vmatpush1.msra.mxu0 0.0
    %3763 = vmatprep.subr.mxu0 0.0
    %3764 = vmatpush1.msra.mxu0 %v3731
    %3765 = vmatprep.subr.mxu0 0.0
    %3766 = vmatpush1.msra.mxu0 %v3730
    %3767 = vmatprep.subr.mxu0 0.0
    %3768 = vmatpush1.msra.mxu0 %v3729
    %3769 = vmatprep.subr.mxu0 0.0
    %3770 = vmatpush1.msra.mxu0 %v3728
    %3771 = vmatprep.subr.mxu0 0.0
    %3772 = vmatpush2.msra.mxu0 0.0
    %3773 = vmatprep.subr.mxu0 0.0
    %3774 = vmatpush2.msra.mxu0 0.0
    %3775 = vmatprep.subr.mxu0 0.0
    %3776 = vmatpush2.msra.mxu0 0.0
    %3777 = vmatprep.subr.mxu0 0.0
    %3778 = vmatpush2.msra.mxu0 0.0
    %3779 = vmatprep.subr.mxu0 0.0
    %3780 = vmatpush2.msra.mxu0 0.0
    %3781 = vmatprep.subr.mxu0 0.0
    %3782 = vmatpush2.msra.mxu0 0.0
    %3783 = vmatprep.subr.mxu0 0.0
    %3784 = vmatpush2.msra.mxu0 0.0
    %3785 = vmatprep.subr.mxu0 0.0
    %3786 = vmatpush2.msra.mxu0 0.0
    %3787 = vmatprep.subr.mxu0 0.0
    %3788 = vmatpush2.msra.mxu0 0.0
    %3789 = vmatprep.subr.mxu0 0.0
    %3790 = vmatpush2.msra.mxu0 0.0
    %3791 = vmatprep.subr.mxu0 0.0
    %3792 = vmatpush2.msra.mxu0 0.0
    %3793 = vmatprep.subr.mxu0 0.0
    %3794 = vmatpush2.msra.mxu0 0.0
    %3795 = vmatprep.subr.mxu0 0.0
    %3796 = vmatpush2.msra.mxu0 0.0
    %3797 = vmatprep.subr.mxu0 0.0
    %3798 = vmatpush2.msra.mxu0 0.0
    %3799 = vmatprep.subr.mxu0 0.0
    %3800 = vmatpush2.msra.mxu0 0.0
    %3801 = vmatprep.subr.mxu0 0.0
    %3802 = vmatpush2.msra.mxu0 0.0
    %3803 = vmatprep.mubr.f32.mxu0 0.0
    %3804 = vmatmul.mubr.f32.gmra.mxu0 %v3656
    %v3805 = vpop.f32.mrf.mxu0
    %v3806 = vadd.f32 %v3737, %v3805
    %v3807 = vpop.f32.mrf.mxu0
    %3808 = vdwg.mxu0
    %v3809 = vld [vmem:[%s507] sm:$0xff]
    %v3810 = vld [vmem:[%s507 + $0x8] sm:$0xff]
    %v3811 = vld [vmem:[%s507 + $0x10] sm:$0xff]
    %v3812 = vld [vmem:[%s507 + $0x18] sm:$0xff]
    %v3813 = vld [vmem:[%s512] sm:$0x1]
    %v3815 = vlaneseq
    %v3816 = vshrl.u32 %v3815, 7
    %v3817 = vsub.s32 0, %v3816
    %v3818 = vrot.slane %v3813, %v3817
    %3820 = vmatprep.subr.mxu0 0.0
    %3821 = vmatpush1.msra.mxu0 0.0
    %3822 = vmatprep.subr.mxu0 0.0
    %3823 = vmatpush1.msra.mxu0 0.0
    %3824 = vmatprep.subr.mxu0 0.0
    %3825 = vmatpush1.msra.mxu0 0.0
    %3826 = vmatprep.subr.mxu0 0.0
    %3827 = vmatpush1.msra.mxu0 0.0
    %3828 = vmatprep.subr.mxu0 0.0
    %3829 = vmatpush1.msra.mxu0 0.0
    %3830 = vmatprep.subr.mxu0 0.0
    %3831 = vmatpush1.msra.mxu0 0.0
    %3832 = vmatprep.subr.mxu0 0.0
    %3833 = vmatpush1.msra.mxu0 0.0
    %3834 = vmatprep.subr.mxu0 0.0
    %3835 = vmatpush1.msra.mxu0 0.0
    %3836 = vmatprep.subr.mxu0 0.0
    %3837 = vmatpush1.msra.mxu0 0.0
    %3838 = vmatprep.subr.mxu0 0.0
    %3839 = vmatpush1.msra.mxu0 0.0
    %3840 = vmatprep.subr.mxu0 0.0
    %3841 = vmatpush1.msra.mxu0 0.0
    %3842 = vmatprep.subr.mxu0 0.0
    %3843 = vmatpush1.msra.mxu0 0.0
    %3844 = vmatprep.subr.mxu0 0.0
    %3845 = vmatpush1.msra.mxu0 %v3812
    %3846 = vmatprep.subr.mxu0 0.0
    %3847 = vmatpush1.msra.mxu0 %v3811
    %3848 = vmatprep.subr.mxu0 0.0
    %3849 = vmatpush1.msra.mxu0 %v3810
    %3850 = vmatprep.subr.mxu0 0.0
    %3851 = vmatpush1.msra.mxu0 %v3809
    %3852 = vmatprep.subr.mxu0 0.0
    %3853 = vmatpush2.msra.mxu0 0.0
    %3854 = vmatprep.subr.mxu0 0.0
    %3855 = vmatpush2.msra.mxu0 0.0
    %3856 = vmatprep.subr.mxu0 0.0
    %3857 = vmatpush2.msra.mxu0 0.0
    %3858 = vmatprep.subr.mxu0 0.0
    %3859 = vmatpush2.msra.mxu0 0.0
    %3860 = vmatprep.subr.mxu0 0.0
    %3861 = vmatpush2.msra.mxu0 0.0
    %3862 = vmatprep.subr.mxu0 0.0
    %3863 = vmatpush2.msra.mxu0 0.0
    %3864 = vmatprep.subr.mxu0 0.0
    %3865 = vmatpush2.msra.mxu0 0.0
    %3866 = vmatprep.subr.mxu0 0.0
    %3867 = vmatpush2.msra.mxu0 0.0
    %3868 = vmatprep.subr.mxu0 0.0
    %3869 = vmatpush2.msra.mxu0 0.0
    %3870 = vmatprep.subr.mxu0 0.0
    %3871 = vmatpush2.msra.mxu0 0.0
    %3872 = vmatprep.subr.mxu0 0.0
    %3873 = vmatpush2.msra.mxu0 0.0
    %3874 = vmatprep.subr.mxu0 0.0
    %3875 = vmatpush2.msra.mxu0 0.0
    %3876 = vmatprep.subr.mxu0 0.0
    %3877 = vmatpush2.msra.mxu0 0.0
    %3878 = vmatprep.subr.mxu0 0.0
    %3879 = vmatpush2.msra.mxu0 0.0
    %3880 = vmatprep.subr.mxu0 0.0
    %3881 = vmatpush2.msra.mxu0 0.0
    %3882 = vmatprep.subr.mxu0 0.0
    %3883 = vmatpush2.msra.mxu0 0.0
    %3884 = vmatprep.mubr.f32.mxu0 0.0
    %3885 = vmatmul.mubr.f32.gmra.mxu0 %v3656
    %v3886 = vpop.f32.mrf.mxu0
    %v3887 = vadd.f32 %v3818, %v3886
    %v3888 = vpop.f32.mrf.mxu0
    %3889 = vdwg.mxu0
    %v3890 = vadd.f32 %v3639, %v3725
    %v3891 = vxor.u32 %v3890, 2147483648
    %v3892 = vmul.f32 %v3891, 1.442695
    %v3893 = vpow.pop %v3892
    %v3894 = vadd.f32 %v3893, 1.0
    %v3895 = vrcp.pop %v3894
    %v3896 = vmul.f32 1.0, %v3895
    %v3897 = vadd.f32 %v3641, %v3806
    %v3898 = vxor.u32 %v3897, 2147483648
    %v3899 = vmul.f32 %v3898, 1.442695
    %v3900 = vpow.pop %v3899
    %v3901 = vadd.f32 %v3900, 1.0
    %v3902 = vrcp.pop %v3901
    %v3903 = vmul.f32 1.0, %v3902
    %v3904 = vmul.f32 %v3896, %v3887
    %v3905 = vadd.f32 %v3643, %v3904
    %v3906 = vtanh.pop %v3905
    %v3907 = vsub.f32 1.0, %v3903
    %v3908 = vmul.f32 %v3907, %v3906
    %v3909 = vmul.f32 %v3903, %v3360
    %v3910 = vadd.f32 %v3908, %v3909
    %s3911 = scalar_lea.vmem [#allocation8], 18
    %3912 = vst.msk [vmem:[%s3911] sm:$0x3] %vm333, %v3910
    %s3913 = scalar_lea.vmem [#allocation2], 42
    %v3914 = vld [vmem:[%s3913] sm:$0x3]
    %s3915 = scalar_lea.vmem [#allocation2], 44
    %v3916 = vld [vmem:[%s3915] sm:$0x3]
    %s3917 = scalar_lea.vmem [#allocation2], 46
    %v3918 = vld [vmem:[%s3917] sm:$0x3]
    %v3919 = vld [vmem:[#allocation5] sm:$0xff]
    %v3920 = vld [vmem:[#allocation5 + $0x8] sm:$0xff]
    %v3921 = vld [vmem:[#allocation5 + $0x10] sm:$0xff]
    %v3922 = vld [vmem:[#allocation5 + $0x18] sm:$0xff]
    %v3923 = vld [vmem:[#allocation7] sm:$0x1]
    %v3925 = vlaneseq
    %v3926 = vshrl.u32 %v3925, 7
    %v3927 = vsub.s32 0, %v3926
    %v3928 = vrot.slane %v3923, %v3927
    %v3931 = vsel %vm72, %v3635, 0
    %3933 = vmatprep.subr.mxu0 0.0
    %3934 = vmatpush1.msra.mxu0 0.0
    %3935 = vmatprep.subr.mxu0 0.0
    %3936 = vmatpush1.msra.mxu0 0.0
    %3937 = vmatprep.subr.mxu0 0.0
    %3938 = vmatpush1.msra.mxu0 0.0
    %3939 = vmatprep.subr.mxu0 0.0
    %3940 = vmatpush1.msra.mxu0 0.0
    %3941 = vmatprep.subr.mxu0 0.0
    %3942 = vmatpush1.msra.mxu0 0.0
    %3943 = vmatprep.subr.mxu0 0.0
    %3944 = vmatpush1.msra.mxu0 0.0
    %3945 = vmatprep.subr.mxu0 0.0
    %3946 = vmatpush1.msra.mxu0 0.0
    %3947 = vmatprep.subr.mxu0 0.0
    %3948 = vmatpush1.msra.mxu0 0.0
    %3949 = vmatprep.subr.mxu0 0.0
    %3950 = vmatpush1.msra.mxu0 0.0
    %3951 = vmatprep.subr.mxu0 0.0
    %3952 = vmatpush1.msra.mxu0 0.0
    %3953 = vmatprep.subr.mxu0 0.0
    %3954 = vmatpush1.msra.mxu0 0.0
    %3955 = vmatprep.subr.mxu0 0.0
    %3956 = vmatpush1.msra.mxu0 0.0
    %3957 = vmatprep.subr.mxu0 0.0
    %3958 = vmatpush1.msra.mxu0 %v3922
    %3959 = vmatprep.subr.mxu0 0.0
    %3960 = vmatpush1.msra.mxu0 %v3921
    %3961 = vmatprep.subr.mxu0 0.0
    %3962 = vmatpush1.msra.mxu0 %v3920
    %3963 = vmatprep.subr.mxu0 0.0
    %3964 = vmatpush1.msra.mxu0 %v3919
    %3965 = vmatprep.subr.mxu0 0.0
    %3966 = vmatpush2.msra.mxu0 0.0
    %3967 = vmatprep.subr.mxu0 0.0
    %3968 = vmatpush2.msra.mxu0 0.0
    %3969 = vmatprep.subr.mxu0 0.0
    %3970 = vmatpush2.msra.mxu0 0.0
    %3971 = vmatprep.subr.mxu0 0.0
    %3972 = vmatpush2.msra.mxu0 0.0
    %3973 = vmatprep.subr.mxu0 0.0
    %3974 = vmatpush2.msra.mxu0 0.0
    %3975 = vmatprep.subr.mxu0 0.0
    %3976 = vmatpush2.msra.mxu0 0.0
    %3977 = vmatprep.subr.mxu0 0.0
    %3978 = vmatpush2.msra.mxu0 0.0
    %3979 = vmatprep.subr.mxu0 0.0
    %3980 = vmatpush2.msra.mxu0 0.0
    %3981 = vmatprep.subr.mxu0 0.0
    %3982 = vmatpush2.msra.mxu0 0.0
    %3983 = vmatprep.subr.mxu0 0.0
    %3984 = vmatpush2.msra.mxu0 0.0
    %3985 = vmatprep.subr.mxu0 0.0
    %3986 = vmatpush2.msra.mxu0 0.0
    %3987 = vmatprep.subr.mxu0 0.0
    %3988 = vmatpush2.msra.mxu0 0.0
    %3989 = vmatprep.subr.mxu0 0.0
    %3990 = vmatpush2.msra.mxu0 0.0
    %3991 = vmatprep.subr.mxu0 0.0
    %3992 = vmatpush2.msra.mxu0 0.0
    %3993 = vmatprep.subr.mxu0 0.0
    %3994 = vmatpush2.msra.mxu0 0.0
    %3995 = vmatprep.subr.mxu0 0.0
    %3996 = vmatpush2.msra.mxu0 0.0
    %3997 = vmatprep.mubr.f32.mxu0 0.0
    %3998 = vmatmul.mubr.f32.gmra.mxu0 %v3931
    %v3999 = vpop.f32.mrf.mxu0
    %v4000 = vadd.f32 %v3928, %v3999
    %v4001 = vpop.f32.mrf.mxu0
    %4002 = vdwg.mxu0
    %v4003 = vld [vmem:[%s146] sm:$0xff]
    %v4004 = vld [vmem:[%s146 + $0x8] sm:$0xff]
    %v4005 = vld [vmem:[%s146 + $0x10] sm:$0xff]
    %v4006 = vld [vmem:[%s146 + $0x18] sm:$0xff]
    %v4007 = vld [vmem:[%s151] sm:$0x1]
    %v4009 = vlaneseq
    %v4010 = vshrl.u32 %v4009, 7
    %v4011 = vsub.s32 0, %v4010
    %v4012 = vrot.slane %v4007, %v4011
    %4014 = vmatprep.subr.mxu0 0.0
    %4015 = vmatpush1.msra.mxu0 0.0
    %4016 = vmatprep.subr.mxu0 0.0
    %4017 = vmatpush1.msra.mxu0 0.0
    %4018 = vmatprep.subr.mxu0 0.0
    %4019 = vmatpush1.msra.mxu0 0.0
    %4020 = vmatprep.subr.mxu0 0.0
    %4021 = vmatpush1.msra.mxu0 0.0
    %4022 = vmatprep.subr.mxu0 0.0
    %4023 = vmatpush1.msra.mxu0 0.0
    %4024 = vmatprep.subr.mxu0 0.0
    %4025 = vmatpush1.msra.mxu0 0.0
    %4026 = vmatprep.subr.mxu0 0.0
    %4027 = vmatpush1.msra.mxu0 0.0
    %4028 = vmatprep.subr.mxu0 0.0
    %4029 = vmatpush1.msra.mxu0 0.0
    %4030 = vmatprep.subr.mxu0 0.0
    %4031 = vmatpush1.msra.mxu0 0.0
    %4032 = vmatprep.subr.mxu0 0.0
    %4033 = vmatpush1.msra.mxu0 0.0
    %4034 = vmatprep.subr.mxu0 0.0
    %4035 = vmatpush1.msra.mxu0 0.0
    %4036 = vmatprep.subr.mxu0 0.0
    %4037 = vmatpush1.msra.mxu0 0.0
    %4038 = vmatprep.subr.mxu0 0.0
    %4039 = vmatpush1.msra.mxu0 %v4006
    %4040 = vmatprep.subr.mxu0 0.0
    %4041 = vmatpush1.msra.mxu0 %v4005
    %4042 = vmatprep.subr.mxu0 0.0
    %4043 = vmatpush1.msra.mxu0 %v4004
    %4044 = vmatprep.subr.mxu0 0.0
    %4045 = vmatpush1.msra.mxu0 %v4003
    %4046 = vmatprep.subr.mxu0 0.0
    %4047 = vmatpush2.msra.mxu0 0.0
    %4048 = vmatprep.subr.mxu0 0.0
    %4049 = vmatpush2.msra.mxu0 0.0
    %4050 = vmatprep.subr.mxu0 0.0
    %4051 = vmatpush2.msra.mxu0 0.0
    %4052 = vmatprep.subr.mxu0 0.0
    %4053 = vmatpush2.msra.mxu0 0.0
    %4054 = vmatprep.subr.mxu0 0.0
    %4055 = vmatpush2.msra.mxu0 0.0
    %4056 = vmatprep.subr.mxu0 0.0
    %4057 = vmatpush2.msra.mxu0 0.0
    %4058 = vmatprep.subr.mxu0 0.0
    %4059 = vmatpush2.msra.mxu0 0.0
    %4060 = vmatprep.subr.mxu0 0.0
    %4061 = vmatpush2.msra.mxu0 0.0
    %4062 = vmatprep.subr.mxu0 0.0
    %4063 = vmatpush2.msra.mxu0 0.0
    %4064 = vmatprep.subr.mxu0 0.0
    %4065 = vmatpush2.msra.mxu0 0.0
    %4066 = vmatprep.subr.mxu0 0.0
    %4067 = vmatpush2.msra.mxu0 0.0
    %4068 = vmatprep.subr.mxu0 0.0
    %4069 = vmatpush2.msra.mxu0 0.0
    %4070 = vmatprep.subr.mxu0 0.0
    %4071 = vmatpush2.msra.mxu0 0.0
    %4072 = vmatprep.subr.mxu0 0.0
    %4073 = vmatpush2.msra.mxu0 0.0
    %4074 = vmatprep.subr.mxu0 0.0
    %4075 = vmatpush2.msra.mxu0 0.0
    %4076 = vmatprep.subr.mxu0 0.0
    %4077 = vmatpush2.msra.mxu0 0.0
    %4078 = vmatprep.mubr.f32.mxu0 0.0
    %4079 = vmatmul.mubr.f32.gmra.mxu0 %v3931
    %v4080 = vpop.f32.mrf.mxu0
    %v4081 = vadd.f32 %v4012, %v4080
    %v4082 = vpop.f32.mrf.mxu0
    %4083 = vdwg.mxu0
    %v4084 = vld [vmem:[%s229] sm:$0xff]
    %v4085 = vld [vmem:[%s229 + $0x8] sm:$0xff]
    %v4086 = vld [vmem:[%s229 + $0x10] sm:$0xff]
    %v4087 = vld [vmem:[%s229 + $0x18] sm:$0xff]
    %v4088 = vld [vmem:[%s234] sm:$0x1]
    %v4090 = vlaneseq
    %v4091 = vshrl.u32 %v4090, 7
    %v4092 = vsub.s32 0, %v4091
    %v4093 = vrot.slane %v4088, %v4092
    %4095 = vmatprep.subr.mxu0 0.0
    %4096 = vmatpush1.msra.mxu0 0.0
    %4097 = vmatprep.subr.mxu0 0.0
    %4098 = vmatpush1.msra.mxu0 0.0
    %4099 = vmatprep.subr.mxu0 0.0
    %4100 = vmatpush1.msra.mxu0 0.0
    %4101 = vmatprep.subr.mxu0 0.0
    %4102 = vmatpush1.msra.mxu0 0.0
    %4103 = vmatprep.subr.mxu0 0.0
    %4104 = vmatpush1.msra.mxu0 0.0
    %4105 = vmatprep.subr.mxu0 0.0
    %4106 = vmatpush1.msra.mxu0 0.0
    %4107 = vmatprep.subr.mxu0 0.0
    %4108 = vmatpush1.msra.mxu0 0.0
    %4109 = vmatprep.subr.mxu0 0.0
    %4110 = vmatpush1.msra.mxu0 0.0
    %4111 = vmatprep.subr.mxu0 0.0
    %4112 = vmatpush1.msra.mxu0 0.0
    %4113 = vmatprep.subr.mxu0 0.0
    %4114 = vmatpush1.msra.mxu0 0.0
    %4115 = vmatprep.subr.mxu0 0.0
    %4116 = vmatpush1.msra.mxu0 0.0
    %4117 = vmatprep.subr.mxu0 0.0
    %4118 = vmatpush1.msra.mxu0 0.0
    %4119 = vmatprep.subr.mxu0 0.0
    %4120 = vmatpush1.msra.mxu0 %v4087
    %4121 = vmatprep.subr.mxu0 0.0
    %4122 = vmatpush1.msra.mxu0 %v4086
    %4123 = vmatprep.subr.mxu0 0.0
    %4124 = vmatpush1.msra.mxu0 %v4085
    %4125 = vmatprep.subr.mxu0 0.0
    %4126 = vmatpush1.msra.mxu0 %v4084
    %4127 = vmatprep.subr.mxu0 0.0
    %4128 = vmatpush2.msra.mxu0 0.0
    %4129 = vmatprep.subr.mxu0 0.0
    %4130 = vmatpush2.msra.mxu0 0.0
    %4131 = vmatprep.subr.mxu0 0.0
    %4132 = vmatpush2.msra.mxu0 0.0
    %4133 = vmatprep.subr.mxu0 0.0
    %4134 = vmatpush2.msra.mxu0 0.0
    %4135 = vmatprep.subr.mxu0 0.0
    %4136 = vmatpush2.msra.mxu0 0.0
    %4137 = vmatprep.subr.mxu0 0.0
    %4138 = vmatpush2.msra.mxu0 0.0
    %4139 = vmatprep.subr.mxu0 0.0
    %4140 = vmatpush2.msra.mxu0 0.0
    %4141 = vmatprep.subr.mxu0 0.0
    %4142 = vmatpush2.msra.mxu0 0.0
    %4143 = vmatprep.subr.mxu0 0.0
    %4144 = vmatpush2.msra.mxu0 0.0
    %4145 = vmatprep.subr.mxu0 0.0
    %4146 = vmatpush2.msra.mxu0 0.0
    %4147 = vmatprep.subr.mxu0 0.0
    %4148 = vmatpush2.msra.mxu0 0.0
    %4149 = vmatprep.subr.mxu0 0.0
    %4150 = vmatpush2.msra.mxu0 0.0
    %4151 = vmatprep.subr.mxu0 0.0
    %4152 = vmatpush2.msra.mxu0 0.0
    %4153 = vmatprep.subr.mxu0 0.0
    %4154 = vmatpush2.msra.mxu0 0.0
    %4155 = vmatprep.subr.mxu0 0.0
    %4156 = vmatpush2.msra.mxu0 0.0
    %4157 = vmatprep.subr.mxu0 0.0
    %4158 = vmatpush2.msra.mxu0 0.0
    %4159 = vmatprep.mubr.f32.mxu0 0.0
    %4160 = vmatmul.mubr.f32.gmra.mxu0 %v3931
    %v4161 = vpop.f32.mrf.mxu0
    %v4162 = vadd.f32 %v4093, %v4161
    %v4163 = vpop.f32.mrf.mxu0
    %4164 = vdwg.mxu0
    %v4165 = vadd.f32 %v3914, %v4000
    %v4166 = vxor.u32 %v4165, 2147483648
    %v4167 = vmul.f32 %v4166, 1.442695
    %v4168 = vpow.pop %v4167
    %v4169 = vadd.f32 %v4168, 1.0
    %v4170 = vrcp.pop %v4169
    %v4171 = vmul.f32 1.0, %v4170
    %v4172 = vadd.f32 %v3916, %v4081
    %v4173 = vxor.u32 %v4172, 2147483648
    %v4174 = vmul.f32 %v4173, 1.442695
    %v4175 = vpow.pop %v4174
    %v4176 = vadd.f32 %v4175, 1.0
    %v4177 = vrcp.pop %v4176
    %v4178 = vmul.f32 1.0, %v4177
    %v4179 = vmul.f32 %v4171, %v4162
    %v4180 = vadd.f32 %v3918, %v4179
    %v4181 = vtanh.pop %v4180
    %v4182 = vsub.f32 1.0, %v4178
    %v4183 = vmul.f32 %v4182, %v4181
    %v4184 = vmul.f32 %v4178, %v3635
    %v4185 = vadd.f32 %v4183, %v4184
    %s4186 = scalar_lea.vmem [#allocation8], 14
    %4187 = vst.msk [vmem:[%s4186] sm:$0x3] %vm333, %v4185
    %s4188 = scalar_lea.vmem [#allocation2], 48
    %v4189 = vld [vmem:[%s4188] sm:$0x3]
    %s4190 = scalar_lea.vmem [#allocation2], 50
    %v4191 = vld [vmem:[%s4190] sm:$0x3]
    %s4192 = scalar_lea.vmem [#allocation2], 52
    %v4193 = vld [vmem:[%s4192] sm:$0x3]
    %v4194 = vld [vmem:[%s341] sm:$0xff]
    %v4195 = vld [vmem:[%s341 + $0x8] sm:$0xff]
    %v4196 = vld [vmem:[%s341 + $0x10] sm:$0xff]
    %v4197 = vld [vmem:[%s341 + $0x18] sm:$0xff]
    %v4198 = vld [vmem:[%s346] sm:$0x1]
    %v4200 = vlaneseq
    %v4201 = vshrl.u32 %v4200, 7
    %v4202 = vsub.s32 0, %v4201
    %v4203 = vrot.slane %v4198, %v4202
    %v4206 = vsel %vm72, %v3910, 0
    %4208 = vmatprep.subr.mxu0 0.0
    %4209 = vmatpush1.msra.mxu0 0.0
    %4210 = vmatprep.subr.mxu0 0.0
    %4211 = vmatpush1.msra.mxu0 0.0
    %4212 = vmatprep.subr.mxu0 0.0
    %4213 = vmatpush1.msra.mxu0 0.0
    %4214 = vmatprep.subr.mxu0 0.0
    %4215 = vmatpush1.msra.mxu0 0.0
    %4216 = vmatprep.subr.mxu0 0.0
    %4217 = vmatpush1.msra.mxu0 0.0
    %4218 = vmatprep.subr.mxu0 0.0
    %4219 = vmatpush1.msra.mxu0 0.0
    %4220 = vmatprep.subr.mxu0 0.0
    %4221 = vmatpush1.msra.mxu0 0.0
    %4222 = vmatprep.subr.mxu0 0.0
    %4223 = vmatpush1.msra.mxu0 0.0
    %4224 = vmatprep.subr.mxu0 0.0
    %4225 = vmatpush1.msra.mxu0 0.0
    %4226 = vmatprep.subr.mxu0 0.0
    %4227 = vmatpush1.msra.mxu0 0.0
    %4228 = vmatprep.subr.mxu0 0.0
    %4229 = vmatpush1.msra.mxu0 0.0
    %4230 = vmatprep.subr.mxu0 0.0
    %4231 = vmatpush1.msra.mxu0 0.0
    %4232 = vmatprep.subr.mxu0 0.0
    %4233 = vmatpush1.msra.mxu0 %v4197
    %4234 = vmatprep.subr.mxu0 0.0
    %4235 = vmatpush1.msra.mxu0 %v4196
    %4236 = vmatprep.subr.mxu0 0.0
    %4237 = vmatpush1.msra.mxu0 %v4195
    %4238 = vmatprep.subr.mxu0 0.0
    %4239 = vmatpush1.msra.mxu0 %v4194
    %4240 = vmatprep.subr.mxu0 0.0
    %4241 = vmatpush2.msra.mxu0 0.0
    %4242 = vmatprep.subr.mxu0 0.0
    %4243 = vmatpush2.msra.mxu0 0.0
    %4244 = vmatprep.subr.mxu0 0.0
    %4245 = vmatpush2.msra.mxu0 0.0
    %4246 = vmatprep.subr.mxu0 0.0
    %4247 = vmatpush2.msra.mxu0 0.0
    %4248 = vmatprep.subr.mxu0 0.0
    %4249 = vmatpush2.msra.mxu0 0.0
    %4250 = vmatprep.subr.mxu0 0.0
    %4251 = vmatpush2.msra.mxu0 0.0
    %4252 = vmatprep.subr.mxu0 0.0
    %4253 = vmatpush2.msra.mxu0 0.0
    %4254 = vmatprep.subr.mxu0 0.0
    %4255 = vmatpush2.msra.mxu0 0.0
    %4256 = vmatprep.subr.mxu0 0.0
    %4257 = vmatpush2.msra.mxu0 0.0
    %4258 = vmatprep.subr.mxu0 0.0
    %4259 = vmatpush2.msra.mxu0 0.0
    %4260 = vmatprep.subr.mxu0 0.0
    %4261 = vmatpush2.msra.mxu0 0.0
    %4262 = vmatprep.subr.mxu0 0.0
    %4263 = vmatpush2.msra.mxu0 0.0
    %4264 = vmatprep.subr.mxu0 0.0
    %4265 = vmatpush2.msra.mxu0 0.0
    %4266 = vmatprep.subr.mxu0 0.0
    %4267 = vmatpush2.msra.mxu0 0.0
    %4268 = vmatprep.subr.mxu0 0.0
    %4269 = vmatpush2.msra.mxu0 0.0
    %4270 = vmatprep.subr.mxu0 0.0
    %4271 = vmatpush2.msra.mxu0 0.0
    %4272 = vmatprep.mubr.f32.mxu0 0.0
    %4273 = vmatmul.mubr.f32.gmra.mxu0 %v4206
    %v4274 = vpop.f32.mrf.mxu0
    %v4275 = vadd.f32 %v4203, %v4274
    %v4276 = vpop.f32.mrf.mxu0
    %4277 = vdwg.mxu0
    %v4278 = vld [vmem:[%s424] sm:$0xff]
    %v4279 = vld [vmem:[%s424 + $0x8] sm:$0xff]
    %v4280 = vld [vmem:[%s424 + $0x10] sm:$0xff]
    %v4281 = vld [vmem:[%s424 + $0x18] sm:$0xff]
    %v4282 = vld [vmem:[%s429] sm:$0x1]
    %v4284 = vlaneseq
    %v4285 = vshrl.u32 %v4284, 7
    %v4286 = vsub.s32 0, %v4285
    %v4287 = vrot.slane %v4282, %v4286
    %4289 = vmatprep.subr.mxu0 0.0
    %4290 = vmatpush1.msra.mxu0 0.0
    %4291 = vmatprep.subr.mxu0 0.0
    %4292 = vmatpush1.msra.mxu0 0.0
    %4293 = vmatprep.subr.mxu0 0.0
    %4294 = vmatpush1.msra.mxu0 0.0
    %4295 = vmatprep.subr.mxu0 0.0
    %4296 = vmatpush1.msra.mxu0 0.0
    %4297 = vmatprep.subr.mxu0 0.0
    %4298 = vmatpush1.msra.mxu0 0.0
    %4299 = vmatprep.subr.mxu0 0.0
    %4300 = vmatpush1.msra.mxu0 0.0
    %4301 = vmatprep.subr.mxu0 0.0
    %4302 = vmatpush1.msra.mxu0 0.0
    %4303 = vmatprep.subr.mxu0 0.0
    %4304 = vmatpush1.msra.mxu0 0.0
    %4305 = vmatprep.subr.mxu0 0.0
    %4306 = vmatpush1.msra.mxu0 0.0
    %4307 = vmatprep.subr.mxu0 0.0
    %4308 = vmatpush1.msra.mxu0 0.0
    %4309 = vmatprep.subr.mxu0 0.0
    %4310 = vmatpush1.msra.mxu0 0.0
    %4311 = vmatprep.subr.mxu0 0.0
    %4312 = vmatpush1.msra.mxu0 0.0
    %4313 = vmatprep.subr.mxu0 0.0
    %4314 = vmatpush1.msra.mxu0 %v4281
    %4315 = vmatprep.subr.mxu0 0.0
    %4316 = vmatpush1.msra.mxu0 %v4280
    %4317 = vmatprep.subr.mxu0 0.0
    %4318 = vmatpush1.msra.mxu0 %v4279
    %4319 = vmatprep.subr.mxu0 0.0
    %4320 = vmatpush1.msra.mxu0 %v4278
    %4321 = vmatprep.subr.mxu0 0.0
    %4322 = vmatpush2.msra.mxu0 0.0
    %4323 = vmatprep.subr.mxu0 0.0
    %4324 = vmatpush2.msra.mxu0 0.0
    %4325 = vmatprep.subr.mxu0 0.0
    %4326 = vmatpush2.msra.mxu0 0.0
    %4327 = vmatprep.subr.mxu0 0.0
    %4328 = vmatpush2.msra.mxu0 0.0
    %4329 = vmatprep.subr.mxu0 0.0
    %4330 = vmatpush2.msra.mxu0 0.0
    %4331 = vmatprep.subr.mxu0 0.0
    %4332 = vmatpush2.msra.mxu0 0.0
    %4333 = vmatprep.subr.mxu0 0.0
    %4334 = vmatpush2.msra.mxu0 0.0
    %4335 = vmatprep.subr.mxu0 0.0
    %4336 = vmatpush2.msra.mxu0 0.0
    %4337 = vmatprep.subr.mxu0 0.0
    %4338 = vmatpush2.msra.mxu0 0.0
    %4339 = vmatprep.subr.mxu0 0.0
    %4340 = vmatpush2.msra.mxu0 0.0
    %4341 = vmatprep.subr.mxu0 0.0
    %4342 = vmatpush2.msra.mxu0 0.0
    %4343 = vmatprep.subr.mxu0 0.0
    %4344 = vmatpush2.msra.mxu0 0.0
    %4345 = vmatprep.subr.mxu0 0.0
    %4346 = vmatpush2.msra.mxu0 0.0
    %4347 = vmatprep.subr.mxu0 0.0
    %4348 = vmatpush2.msra.mxu0 0.0
    %4349 = vmatprep.subr.mxu0 0.0
    %4350 = vmatpush2.msra.mxu0 0.0
    %4351 = vmatprep.subr.mxu0 0.0
    %4352 = vmatpush2.msra.mxu0 0.0
    %4353 = vmatprep.mubr.f32.mxu0 0.0
    %4354 = vmatmul.mubr.f32.gmra.mxu0 %v4206
    %v4355 = vpop.f32.mrf.mxu0
    %v4356 = vadd.f32 %v4287, %v4355
    %v4357 = vpop.f32.mrf.mxu0
    %4358 = vdwg.mxu0
    %v4359 = vld [vmem:[%s507] sm:$0xff]
    %v4360 = vld [vmem:[%s507 + $0x8] sm:$0xff]
    %v4361 = vld [vmem:[%s507 + $0x10] sm:$0xff]
    %v4362 = vld [vmem:[%s507 + $0x18] sm:$0xff]
    %v4363 = vld [vmem:[%s512] sm:$0x1]
    %v4365 = vlaneseq
    %v4366 = vshrl.u32 %v4365, 7
    %v4367 = vsub.s32 0, %v4366
    %v4368 = vrot.slane %v4363, %v4367
    %4370 = vmatprep.subr.mxu0 0.0
    %4371 = vmatpush1.msra.mxu0 0.0
    %4372 = vmatprep.subr.mxu0 0.0
    %4373 = vmatpush1.msra.mxu0 0.0
    %4374 = vmatprep.subr.mxu0 0.0
    %4375 = vmatpush1.msra.mxu0 0.0
    %4376 = vmatprep.subr.mxu0 0.0
    %4377 = vmatpush1.msra.mxu0 0.0
    %4378 = vmatprep.subr.mxu0 0.0
    %4379 = vmatpush1.msra.mxu0 0.0
    %4380 = vmatprep.subr.mxu0 0.0
    %4381 = vmatpush1.msra.mxu0 0.0
    %4382 = vmatprep.subr.mxu0 0.0
    %4383 = vmatpush1.msra.mxu0 0.0
    %4384 = vmatprep.subr.mxu0 0.0
    %4385 = vmatpush1.msra.mxu0 0.0
    %4386 = vmatprep.subr.mxu0 0.0
    %4387 = vmatpush1.msra.mxu0 0.0
    %4388 = vmatprep.subr.mxu0 0.0
    %4389 = vmatpush1.msra.mxu0 0.0
    %4390 = vmatprep.subr.mxu0 0.0
    %4391 = vmatpush1.msra.mxu0 0.0
    %4392 = vmatprep.subr.mxu0 0.0
    %4393 = vmatpush1.msra.mxu0 0.0
    %4394 = vmatprep.subr.mxu0 0.0
    %4395 = vmatpush1.msra.mxu0 %v4362
    %4396 = vmatprep.subr.mxu0 0.0
    %4397 = vmatpush1.msra.mxu0 %v4361
    %4398 = vmatprep.subr.mxu0 0.0
    %4399 = vmatpush1.msra.mxu0 %v4360
    %4400 = vmatprep.subr.mxu0 0.0
    %4401 = vmatpush1.msra.mxu0 %v4359
    %4402 = vmatprep.subr.mxu0 0.0
    %4403 = vmatpush2.msra.mxu0 0.0
    %4404 = vmatprep.subr.mxu0 0.0
    %4405 = vmatpush2.msra.mxu0 0.0
    %4406 = vmatprep.subr.mxu0 0.0
    %4407 = vmatpush2.msra.mxu0 0.0
    %4408 = vmatprep.subr.mxu0 0.0
    %4409 = vmatpush2.msra.mxu0 0.0
    %4410 = vmatprep.subr.mxu0 0.0
    %4411 = vmatpush2.msra.mxu0 0.0
    %4412 = vmatprep.subr.mxu0 0.0
    %4413 = vmatpush2.msra.mxu0 0.0
    %4414 = vmatprep.subr.mxu0 0.0
    %4415 = vmatpush2.msra.mxu0 0.0
    %4416 = vmatprep.subr.mxu0 0.0
    %4417 = vmatpush2.msra.mxu0 0.0
    %4418 = vmatprep.subr.mxu0 0.0
    %4419 = vmatpush2.msra.mxu0 0.0
    %4420 = vmatprep.subr.mxu0 0.0
    %4421 = vmatpush2.msra.mxu0 0.0
    %4422 = vmatprep.subr.mxu0 0.0
    %4423 = vmatpush2.msra.mxu0 0.0
    %4424 = vmatprep.subr.mxu0 0.0
    %4425 = vmatpush2.msra.mxu0 0.0
    %4426 = vmatprep.subr.mxu0 0.0
    %4427 = vmatpush2.msra.mxu0 0.0
    %4428 = vmatprep.subr.mxu0 0.0
    %4429 = vmatpush2.msra.mxu0 0.0
    %4430 = vmatprep.subr.mxu0 0.0
    %4431 = vmatpush2.msra.mxu0 0.0
    %4432 = vmatprep.subr.mxu0 0.0
    %4433 = vmatpush2.msra.mxu0 0.0
    %4434 = vmatprep.mubr.f32.mxu0 0.0
    %4435 = vmatmul.mubr.f32.gmra.mxu0 %v4206
    %v4436 = vpop.f32.mrf.mxu0
    %v4437 = vadd.f32 %v4368, %v4436
    %v4438 = vpop.f32.mrf.mxu0
    %4439 = vdwg.mxu0
    %v4440 = vadd.f32 %v4189, %v4275
    %v4441 = vxor.u32 %v4440, 2147483648
    %v4442 = vmul.f32 %v4441, 1.442695
    %v4443 = vpow.pop %v4442
    %v4444 = vadd.f32 %v4443, 1.0
    %v4445 = vrcp.pop %v4444
    %v4446 = vmul.f32 1.0, %v4445
    %v4447 = vadd.f32 %v4191, %v4356
    %v4448 = vxor.u32 %v4447, 2147483648
    %v4449 = vmul.f32 %v4448, 1.442695
    %v4450 = vpow.pop %v4449
    %v4451 = vadd.f32 %v4450, 1.0
    %v4452 = vrcp.pop %v4451
    %v4453 = vmul.f32 1.0, %v4452
    %v4454 = vmul.f32 %v4446, %v4437
    %v4455 = vadd.f32 %v4193, %v4454
    %v4456 = vtanh.pop %v4455
    %v4457 = vsub.f32 1.0, %v4453
    %v4458 = vmul.f32 %v4457, %v4456
    %v4459 = vmul.f32 %v4453, %v3910
    %v4460 = vadd.f32 %v4458, %v4459
    %s4461 = scalar_lea.vmem [#allocation8], 16
    %4462 = vst.msk [vmem:[%s4461] sm:$0x3] %vm333, %v4460
    // Predicated region
    $region26: #{tpu_custom_call.1} parent=1 // pred_check
      _
    $region27: #{tpu_custom_call.1} parent=1 // pred_check_branch
      %4464 = sbr.rel (0) target = $region29
    $region28: #{tpu_custom_call.1} parent=1 // pred_region
      %s4466 = ssub.s32 512, 512
      %4467 = vsyncadd [#allocation4], %s4466
      %s4468 = sshll.u32 [#allocation8], 4
      %s4469 = int_to_ptr.vmem [resolvable:$true] %s4468
      %4474 = dma.vmem_to_hbm [thread:$0]  %s4469, 512, %s3, [#allocation4], 32, 32, 2
    $region29: #{tpu_custom_call.1} parent=1 // pred_fallthru
      _
    // Predicated region
    $region30: #{tpu_custom_call.1} parent=1 // pred_check
      _
    $region31: #{tpu_custom_call.1} parent=1 // pred_check_branch
      %4476 = sbr.rel (0) target = $region33
    $region32: #{tpu_custom_call.1} parent=1 // pred_region
      %4477 = dma.done [#allocation4], 512
    $region33: #{tpu_custom_call.1} parent=1 // pred_fallthru
      _
    %4478 = vsyncpa [#allocation3], 1
    %4479 = vsyncpa [#allocation6], 1
    %4480 = vsyncpa [#allocation4], 1

</llo_original>
